<compile_context>
chip_gen: v7x
topology: tpu7x:2x2x1
jax: 0.10.0
libtpu: 0.0.40
codegen_flags: <defaults>
</compile_context>

<pallas_src>
import functools

import jax
import jax.numpy as jnp
from jax import lax
from jax.experimental import pallas as pl
from jax.experimental.pallas import tpu as pltpu

_INV_SQRT2 = 0.7071067811865476


def _gelu(x):
    # exact (erf-based) GELU, matching torch.nn.GELU() default
    return 0.5 * x * (1.0 + lax.erf(x * _INV_SQRT2))


def _layer_norm(x, w, b, eps=1e-5):
    mu = jnp.mean(x, axis=-1, keepdims=True)
    var = jnp.mean(jnp.square(x - mu), axis=-1, keepdims=True)
    return (x - mu) * lax.rsqrt(var + eps) * w + b


def _full(shape):
    # full-array VMEM block, constant across the (single-step) grid.
    # TODO(synk): for real BERT sizes (H=768, S=512, FF=3072) switch to
    # (8,128)-tiled row blocks + vmem_limit_bytes to stay inside v7x's 64 MiB.
    return pl.BlockSpec(shape, lambda *args: (0,) * len(shape))


_ARB = pltpu.CompilerParams(dimension_semantics=("arbitrary",))


# ------------------------------ Pallas kernels ------------------------------

def branch_kernel(x_ref, wl_ref, bl_ref, wo_ref, bo_ref,
                  wm1_ref, bm1_ref, wm2_ref, bm2_ref,
                  wly_ref, bly_ref,
                  norm_ref, pool_ref, cls_ref, *, softmax_axis):
    """Fused image/text branch:  Linear->GELU->Linear, F.normalize(dim=1),
    attention pooling over tokens 1..S-1 plus the CLS residual."""
    x = x_ref[...]                                                     # (L,S,Din)
    h = _gelu(jnp.einsum('lsd,dh->lsh', x, wl_ref[...],
                         preferred_element_type=jnp.float32) + bl_ref[...])
    y = jnp.einsum('lsh,ho->lso', h, wo_ref[...],
                   preferred_element_type=jnp.float32) + bo_ref[...]   # (L,S,H)

    # F.normalize(..., p=2, dim=1, eps=1e-12): normalize over the sequence axis
    n = jnp.sqrt(jnp.sum(y * y, axis=1, keepdims=True))                # (L,1,H)
    y = y / jnp.maximum(n, 1e-12)
    norm_ref[...] = y
    cls = y[:, 0, :]                                                   # (L,H)
    cls_ref[...] = cls

    # attention pooling over tokens 1..S-1 (token 0 masked out, no offset slice)
    hm = _gelu(jnp.einsum('lsh,ho->lso', y, wm1_ref[...],
                          preferred_element_type=jnp.float32) + bm1_ref[...])
    logits = jnp.einsum('lsh,ho->lso', hm, wm2_ref[...],
                        preferred_element_type=jnp.float32) + bm2_ref[...]  # (L,S,1)
    keep = lax.broadcasted_iota(jnp.int32, (logits.shape[1], 1), 0) >= 1    # (S,1)
    if softmax_axis == 0:
        # PyTorch legacy default dim=0 for 3-D F.softmax without dim (image)
        a = jnp.where(keep, jax.nn.softmax(logits, axis=0), 0.0)
    else:
        a = jax.nn.softmax(jnp.where(keep, logits, -1e30), axis=1)
    f2 = jnp.einsum('lsh,ho->lso', y, wly_ref[...],
                    preferred_element_type=jnp.float32) + bly_ref[...]      # (L,S,H)
    pool_ref[...] = jnp.sum(a * f2, axis=1) + cls


def loss_kernel(icls_ref, txt_ref, msk_ref, cap_ref, img_ref, pos_ref, posf_ref,
                R_ref, C_ref, D_ref, hsum_ref, hexp_ref,
                wq_ref, bq_ref, wk_ref, bk_ref, wv_ref, bv_ref,
                wo_ref, bo_ref, ln1w_ref, ln1b_ref,
                fw1_ref, fb1_ref, fw2_ref, fb2_ref, ln2w_ref, ln2b_ref,
                wc1_ref, bc1_ref, wc0_ref, bc0_ref,
                o_ref, *, num_heads, temp):
    """Single-step fused kernel: cross-modal fusion for ALL L*L (image, text)
    pairs (pair p = i*L + j), the 2-way classifier, both Info_NCE directions
    on the ITM logits, the diagonal ITM cross-entropy, and the pre-fusion
    cosine Info_NCE.  Writes the total loss as a (1,1) array.

    Heads are handled with block-diagonal sum/expand matrices (no per-head
    lane slicing, single contractions)."""
    q_in = icls_ref[...]                      # (P,1,H)  image-CLS per pair
    kv = txt_ref[...]                         # (P,S,H)  text tokens per pair
    msk = msk_ref[...]                        # (P,S,1)  additive key-pad mask
    H = q_in.shape[-1]
    scale = 1.0 / float(H // num_heads) ** 0.5

    Q = jnp.einsum('psh,ho->pso', q_in, wq_ref[...],
                   preferred_element_type=jnp.float32) + bq_ref[...]   # (P,1,H)
    K = jnp.einsum('psh,ho->pso', kv, wk_ref[...],
                   preferred_element_type=jnp.float32) + bk_ref[...]   # (P,S,H)
    V = jnp.einsum('psh,ho->pso', kv, wv_ref[...],
                   preferred_element_type=jnp.float32) + bv_ref[...]

    # per-head scores via block-diagonal head-sum matrix (H, nh)
    E = Q * K                                                          # (P,S,H)
    s = jnp.einsum('psh,hn->psn', E, hsum_ref[...],
                   preferred_element_type=jnp.float32) * scale + msk   # (P,S,nh)
    a = jax.nn.softmax(s, axis=1)                                      # over keys
    pe = jnp.einsum('psn,nh->psh', a, hexp_ref[...],
                    preferred_element_type=jnp.float32)                # (P,S,H)
    ctx = jnp.sum(pe * V, axis=1, keepdims=True)                       # (P,1,H)
    attn = jnp.einsum('psh,ho->pso', ctx, wo_ref[...],
                      preferred_element_type=jnp.float32) + bo_ref[...]

    x = _layer_norm(q_in + attn, ln1w_ref[...], ln1b_ref[...])         # residual 1
    ff = _gelu(jnp.einsum('psh,hf->psf', x, fw1_ref[...],
                          preferred_element_type=jnp.float32) + fb1_ref[...])
    ff = jnp.einsum('psf,fh->psh', ff, fw2_ref[...],
                    preferred_element_type=jnp.float32) + fb2_ref[...]
    y = _layer_norm(x + ff, ln2w_ref[...], ln2b_ref[...])              # (P,1,H)

    # 2-way classifier logits per pair
    s1 = jnp.sum(y * wc1_ref[...], axis=-1) + bc1_ref[...]             # (P,1) class 1
    s0 = jnp.sum(y * wc0_ref[...], axis=-1) + bc0_ref[...]             # (P,1) class 0

    # ---- Info_NCE on scores_itm (rows = images, cols = texts), stabilized ----
    z = s1 * (1.0 / temp)
    m = jnp.max(z, axis=0, keepdims=True)       # global max cancels in the ratio
    e = jnp.exp(z - m)                                                  # (P,1)
    epos = posf_ref[...] * e
    Rm = R_ref[...]
    Cm = C_ref[...]
    row_all = jnp.dot(Rm, e, preferred_element_type=jnp.float32)        # (L,1)
    row_pos = jnp.dot(Rm, epos, preferred_element_type=jnp.float32)
    col_all = jnp.dot(Cm, e, preferred_element_type=jnp.float32)
    col_pos = jnp.dot(Cm, epos, preferred_element_type=jnp.float32)
    loss_contr = -(jnp.sum(jnp.log(row_pos / row_all), axis=0, keepdims=True)
                   + jnp.sum(jnp.log(col_pos / col_all), axis=0, keepdims=True))

    # ---- ITM cross-entropy on diagonal pairs, target class 1 ----
    Dm = D_ref[...]
    d1 = jnp.dot(Dm, s1, preferred_element_type=jnp.float32)            # (L,1)
    d0 = jnp.dot(Dm, s0, preferred_element_type=jnp.float32)
    mm = jnp.maximum(d0, d1)
    lse = mm + jnp.log(jnp.exp(d0 - mm) + jnp.exp(d1 - mm))
    loss_itm = jnp.sum(lse - d1, axis=0, keepdims=True) * (1.0 / d1.shape[0])

    # ---- pre-fusion contrastive loss on cosine(cap_out, img_out) ----
    ca = cap_ref[...]                                                   # (L,H)
    im = img_ref[...]                                                   # (L,H)
    pos = pos_ref[...]                                                  # (L,L)
    dots = lax.dot_general(ca, im, (((1,), (1,)), ((), ())),
                           preferred_element_type=jnp.float32)          # (L,L)
    na = jnp.maximum(jnp.sqrt(jnp.sum(ca * ca, axis=1, keepdims=True)), 1e-8)
    nb = jnp.maximum(jnp.sqrt(jnp.sum(im * im, axis=1, keepdims=True)), 1e-8)
    den = lax.dot_general(na, nb, (((1,), (1,)), ((), ())),
                          preferred_element_type=jnp.float32)
    zb = (dots / den) * (1.0 / temp)
    mr = jnp.max(zb, axis=1, keepdims=True)
    er = jnp.exp(zb - mr)
    lbf_r = -jnp.sum(jnp.log(jnp.sum(pos * er, axis=1, keepdims=True)
                             / jnp.sum(er, axis=1, keepdims=True)),
                     axis=0, keepdims=True)
    mc = jnp.max(zb, axis=0, keepdims=True)
    ec = jnp.exp(zb - mc)
    lbf_c = -jnp.sum(jnp.log(jnp.sum(pos * ec, axis=0, keepdims=True)
                             / jnp.sum(ec, axis=0, keepdims=True)),
                     axis=1, keepdims=True)

    o_ref[...] = lbf_r + lbf_c + loss_contr + loss_itm


# ------------------------------ wrappers (glue) ------------------------------

def fused_branch(x, w_lin, b_lin, w_out, b_out, w_m1, b_m1, w_m2, b_m2,
                 w_ly, b_ly, softmax_axis):
    L, S, _ = x.shape
    H = w_lin.shape[1]
    args = [x.astype(jnp.float32), w_lin, b_lin, w_out, b_out,
            w_m1, b_m1, w_m2, b_m2, w_ly, b_ly]
    kernel = functools.partial(branch_kernel, softmax_axis=softmax_axis)
    out_shape = (jax.ShapeDtypeStruct((L, S, H), jnp.float32),
                 jax.ShapeDtypeStruct((L, H), jnp.float32),
                 jax.ShapeDtypeStruct((L, H), jnp.float32))
    return pl.pallas_call(
        kernel,
        grid=(1,),
        in_specs=[_full(a.shape) for a in args],
        out_specs=(_full((L, S, H)), _full((L, H)), _full((L, H))),
        out_shape=out_shape,
        compiler_params=_ARB,
    )(*args)


def fused_loss(icls_p, txt_p, mask_p, cap_out, img_out, pos, posflat,
               Rsel, Csel, Dsel, hsum, hexp, weights, num_heads, temp):
    args = [icls_p, txt_p, mask_p, cap_out, img_out, pos, posflat,
            Rsel, Csel, Dsel, hsum, hexp] + list(weights)
    kernel = functools.partial(loss_kernel, num_heads=num_heads, temp=temp)
    out = pl.pallas_call(
        kernel,
        grid=(1,),
        in_specs=[_full(a.shape) for a in args],
        out_specs=_full((1, 1)),
        out_shape=jax.ShapeDtypeStruct((1, 1), jnp.float32),
        compiler_params=_ARB,
    )(*args)
    return out[0, 0]


# ------------------------------ parameters ------------------------------

def init_params(key, image_dim, cap_emd, hidden, ff, vocab):
    ks = iter(jax.random.split(key, 16))

    def w(shape):
        return 0.02 * jax.random.normal(next(ks), shape, jnp.float32)

    def z(shape):
        return jnp.zeros(shape, jnp.float32)

    p = {
        # image_network
        'img_lin_w': w((hidden, image_dim)), 'img_lin_b': z((hidden,)),
        'img_out_w': w((hidden, hidden)), 'img_out_b': z((hidden,)),
        # text_network
        'txt_lin_w': w((hidden, cap_emd)), 'txt_lin_b': z((hidden,)),
        'txt_out_w': w((hidden, hidden)), 'txt_out_b': z((hidden,)),
        # image_mlp / image_layer
        'img_mlp_w1': w((hidden, hidden)), 'img_mlp_b1': z((hidden,)),
        'img_mlp_w2': w((1, hidden)), 'img_mlp_b2': z((1,)),
        'img_layer_w': w((hidden, hidden)), 'img_layer_b': z((hidden,)),
        # cap_mlp / cap_layer
        'cap_mlp_w1': w((hidden, hidden)), 'cap_mlp_b1': z((hidden,)),
        'cap_mlp_w2': w((1, hidden)), 'cap_mlp_b2': z((1,)),
        'cap_layer_w': w((hidden, hidden)), 'cap_layer_b': z((hidden,)),
        # cross_modal_fusion (shared by the 6 identically-initialized clones)
        'in_proj_w': w((3 * hidden, hidden)), 'in_proj_b': z((3 * hidden,)),
        'out_proj_w': w((hidden, hidden)), 'out_proj_b': z((hidden,)),
        'ln1_w': jnp.ones((hidden,), jnp.float32), 'ln1_b': z((hidden,)),
        'ff_w1': w((ff, hidden)), 'ff_b1': z((ff,)),
        'ff_w2': w((hidden, ff)), 'ff_b2': z((hidden,)),
        'ln2_w': jnp.ones((hidden,), jnp.float32), 'ln2_b': z((hidden,)),
        # final classifier
        'cls_w': w((2, hidden)), 'cls_b': z((2,)),
        # TODO(synk): deterministic stand-in for the pretrained BERT text encoder.
        'bert_emb': w((vocab, cap_emd)),
    }
    return p


# ------------------------------ forward ------------------------------

@jax.jit
def classifier_forward(params, img_inputs, input_ids, attention_mask, ids):
    L = img_inputs.shape[0]
    H = params['img_out_w'].shape[0]
    P = L * L
    f32 = jnp.float32
    nh = 4

    pos_idx = (ids[:, None] == ids[None, :]).astype(f32)
    # key_padding_mask_bool == True where padded -> additive -inf-like mask
    addmask = jnp.where(attention_mask == 0, -1e30, 0.0).astype(f32)   # (L,S_txt)

    # ---- image branch (softmax legacy dim=0) ----
    _img_norm, img_out, img_cls = fused_branch(
        img_inputs,
        params['img_lin_w'].T, params['img_lin_b'][None, :],
        params['img_out_w'].T, params['img_out_b'][None, :],
        params['img_mlp_w1'].T, params['img_mlp_b1'][None, :],
        params['img_mlp_w2'].T, params['img_mlp_b2'][None, :],
        params['img_layer_w'].T, params['img_layer_b'][None, :],
        softmax_axis=0)

    # ---- text branch (BERT stub + text_network; softmax dim=1) ----
    text_hidden = params['bert_emb'][input_ids]          # stub last_hidden_state
    txt_norm, cap_out, _txt_cls = fused_branch(
        text_hidden,
        params['txt_lin_w'].T, params['txt_lin_b'][None, :],
        params['txt_out_w'].T, params['txt_out_b'][None, :],
        params['cap_mlp_w1'].T, params['cap_mlp_b1'][None, :],
        params['cap_mlp_w2'].T, params['cap_mlp_b2'][None, :],
        params['cap_layer_w'].T, params['cap_layer_b'][None, :],
        softmax_axis=1)

    # ---- pair expansion for the fused ITM + loss kernel (pair p = i*L + j) ----
    icls_p = jnp.repeat(img_cls, L, axis=0)[:, None, :]          # (P,1,H) image i
    txt_p = jnp.tile(txt_norm, (L, 1, 1))                        # (P,S,H) text j
    mask_p = jnp.tile(addmask, (L, 1))[:, :, None]               # (P,S,1)
    posflat = pos_idx.reshape(P, 1)
    eyeL = jnp.eye(L, dtype=f32)
    Rsel = jnp.kron(eyeL, jnp.ones((1, L), f32))                 # (L,P) row sums
    Csel = jnp.kron(jnp.ones((1, L), f32), eyeL)                 # (L,P) col sums
    Dsel = jax.nn.one_hot(jnp.arange(L) * (L + 1), P, dtype=f32)  # (L,P) diagonal
    hd = H // nh
    hsum = jnp.kron(jnp.eye(nh, dtype=f32), jnp.ones((hd, 1), f32))  # (H,nh)
    hexp = hsum.T                                                    # (nh,H)

    weights = (
        params['in_proj_w'][:H].T, params['in_proj_b'][:H][None, :],
        params['in_proj_w'][H:2 * H].T, params['in_proj_b'][H:2 * H][None, :],
        params['in_proj_w'][2 * H:].T, params['in_proj_b'][2 * H:][None, :],
        params['out_proj_w'].T, params['out_proj_b'][None, :],
        params['ln1_w'][None, :], params['ln1_b'][None, :],
        params['ff_w1'].T, params['ff_b1'][None, :],
        params['ff_w2'].T, params['ff_b2'][None, :],
        params['ln2_w'][None, :], params['ln2_b'][None, :],
        params['cls_w'][1][None, :], params['cls_b'][1].reshape(1, 1),
        params['cls_w'][0][None, :], params['cls_b'][0].reshape(1, 1),
    )

    return fused_loss(icls_p, txt_p, mask_p, cap_out, img_out, pos_idx, posflat,
                      Rsel, Csel, Dsel, hsum, hexp, weights,
                      num_heads=nh, temp=0.05)


# ------------------------------ main ------------------------------

if __name__ == "__main__":
    L, S_IMG, S_TXT = 4, 5, 8
    IMAGE_DIM, CAP_EMD, HIDDEN, FF, VOCAB = 64, 64, 32, 1024, 100

    key = jax.random.PRNGKey(0)
    k_param, k_img, k_ids = jax.random.split(key, 3)
    params = init_params(k_param, IMAGE_DIM, CAP_EMD, HIDDEN, FF, VOCAB)

    img_inputs = jax.random.normal(k_img, (L, S_IMG, IMAGE_DIM), jnp.float32)
    input_ids = jax.random.randint(k_ids, (L, S_TXT), 0, VOCAB)
    lengths = jnp.array([8, 6, 5, 7], dtype=jnp.int32)
    attention_mask = (jnp.arange(S_TXT)[None, :] < lengths[:, None]).astype(jnp.int32)
    ids = jnp.array([0, 1, 0, 2], dtype=jnp.int32)

    loss = classifier_forward(params, img_inputs, input_ids, attention_mask, ids)
    loss = jax.block_until_ready(loss)
    assert bool(jnp.isfinite(loss)), "loss is not finite"
    print("KERNEL_OK")
</pallas_src>

<mosaic_0001>
module attributes {stable_mosaic.version = 11 : i64} {
  func.func @branch_kernel(%arg0: i32, %arg1: memref<4x5x64xf32, #tpu.memory_space<vmem>>, %arg2: memref<64x32xf32, #tpu.memory_space<vmem>>, %arg3: memref<1x32xf32, #tpu.memory_space<vmem>>, %arg4: memref<32x32xf32, #tpu.memory_space<vmem>>, %arg5: memref<1x32xf32, #tpu.memory_space<vmem>>, %arg6: memref<32x32xf32, #tpu.memory_space<vmem>>, %arg7: memref<1x32xf32, #tpu.memory_space<vmem>>, %arg8: memref<32x1xf32, #tpu.memory_space<vmem>>, %arg9: memref<1x1xf32, #tpu.memory_space<vmem>>, %arg10: memref<32x32xf32, #tpu.memory_space<vmem>>, %arg11: memref<1x32xf32, #tpu.memory_space<vmem>>, %arg12: memref<4x5x32xf32, #tpu.memory_space<vmem>>, %arg13: memref<4x32xf32, #tpu.memory_space<vmem>>, %arg14: memref<4x32xf32, #tpu.memory_space<vmem>>) attributes {dimension_semantics = [#tpu.dimension_semantics<arbitrary>], iteration_bounds = array<i64: 1>, scalar_prefetch = 0 : i64, scratch_operands = 0 : i64, tpu.core_type = #tpu.core_type<tc>, window_params = [{pipeline_mode = #tpu.pipeline_mode<synchronous>, transform_indices = @transform_0, window_bounds = array<i64: 4, 5, 64>}, {pipeline_mode = #tpu.pipeline_mode<synchronous>, transform_indices = @transform_1, window_bounds = array<i64: 64, 32>}, {pipeline_mode = #tpu.pipeline_mode<synchronous>, transform_indices = @transform_2, window_bounds = array<i64: 1, 32>}, {pipeline_mode = #tpu.pipeline_mode<synchronous>, transform_indices = @transform_3, window_bounds = array<i64: 32, 32>}, {pipeline_mode = #tpu.pipeline_mode<synchronous>, transform_indices = @transform_4, window_bounds = array<i64: 1, 32>}, {pipeline_mode = #tpu.pipeline_mode<synchronous>, transform_indices = @transform_5, window_bounds = array<i64: 32, 32>}, {pipeline_mode = #tpu.pipeline_mode<synchronous>, transform_indices = @transform_6, window_bounds = array<i64: 1, 32>}, {pipeline_mode = #tpu.pipeline_mode<synchronous>, transform_indices = @transform_7, window_bounds = array<i64: 32, 1>}, {pipeline_mode = #tpu.pipeline_mode<synchronous>, transform_indices = @transform_8, window_bounds = array<i64: 1, 1>}, {pipeline_mode = #tpu.pipeline_mode<synchronous>, transform_indices = @transform_9, window_bounds = array<i64: 32, 32>}, {pipeline_mode = #tpu.pipeline_mode<synchronous>, transform_indices = @transform_10, window_bounds = array<i64: 1, 32>}, {pipeline_mode = #tpu.pipeline_mode<synchronous>, transform_indices = @transform_11, window_bounds = array<i64: 4, 5, 32>}, {pipeline_mode = #tpu.pipeline_mode<synchronous>, transform_indices = @transform_12, window_bounds = array<i64: 4, 32>}, {pipeline_mode = #tpu.pipeline_mode<synchronous>, transform_indices = @transform_13, window_bounds = array<i64: 4, 32>}]} {
    %c0 = arith.constant 0 : index
    %c0_0 = arith.constant 0 : index
    %c0_1 = arith.constant 0 : index
    %0 = vector.load %arg1[%c0, %c0_0, %c0_1] : memref<4x5x64xf32, #tpu.memory_space<vmem>>, vector<4x5x64xf32>
    %c0_2 = arith.constant 0 : index
    %c0_3 = arith.constant 0 : index
    %1 = vector.load %arg2[%c0_2, %c0_3] : memref<64x32xf32, #tpu.memory_space<vmem>>, vector<64x32xf32>
    "tpu.trace_start"() <{level = 10 : i32, message = "lsd,dh->lsh"}> : () -> ()
    %cst = arith.constant dense<0.000000e+00> : vector<4x5x32xf32>
    %2 = tpu.matmul %0, %1, %cst {dimension_numbers = #tpu.dot_dimension_numbers<[2], [0], [0, 1], [1], [0, 0, 0, 1, 1, 1], [], []>} : vector<4x5x64xf32>, vector<64x32xf32>, vector<4x5x32xf32> -> vector<4x5x32xf32>
    "tpu.trace_stop"() : () -> ()
    %c0_4 = arith.constant 0 : index
    %c0_5 = arith.constant 0 : index
    %3 = vector.load %arg3[%c0_4, %c0_5] : memref<1x32xf32, #tpu.memory_space<vmem>>, vector<1x32xf32>
    %4 = vector.shape_cast %3 : vector<1x32xf32> to vector<1x1x32xf32>
    %5 = vector.broadcast %4 : vector<1x1x32xf32> to vector<4x5x32xf32>
    %6 = arith.addf %2, %5 : vector<4x5x32xf32>
    %cst_6 = arith.constant 5.000000e-01 : f32
    %7 = vector.broadcast %cst_6 : f32 to vector<4x5x32xf32>
    %8 = arith.mulf %7, %6 : vector<4x5x32xf32>
    %cst_7 = arith.constant 0.707106769 : f32
    %9 = vector.broadcast %cst_7 : f32 to vector<4x5x32xf32>
    %10 = arith.mulf %6, %9 : vector<4x5x32xf32>
    %11 = math.erf %10 : vector<4x5x32xf32>
    %cst_8 = arith.constant 1.000000e+00 : f32
    %12 = vector.broadcast %cst_8 : f32 to vector<4x5x32xf32>
    %13 = arith.addf %12, %11 : vector<4x5x32xf32>
    %14 = arith.mulf %8, %13 : vector<4x5x32xf32>
    %c0_9 = arith.constant 0 : index
    %c0_10 = arith.constant 0 : index
    %15 = vector.load %arg4[%c0_9, %c0_10] : memref<32x32xf32, #tpu.memory_space<vmem>>, vector<32x32xf32>
    "tpu.trace_start"() <{level = 10 : i32, message = "lsh,ho->lso"}> : () -> ()
    %cst_11 = arith.constant dense<0.000000e+00> : vector<4x5x32xf32>
    %16 = tpu.matmul %14, %15, %cst_11 {dimension_numbers = #tpu.dot_dimension_numbers<[2], [0], [0, 1], [1], [0, 0, 0, 1, 1, 1], [], []>} : vector<4x5x32xf32>, vector<32x32xf32>, vector<4x5x32xf32> -> vector<4x5x32xf32>
    "tpu.trace_stop"() : () -> ()
    %c0_12 = arith.constant 0 : index
    %c0_13 = arith.constant 0 : index
    %17 = vector.load %arg5[%c0_12, %c0_13] : memref<1x32xf32, #tpu.memory_space<vmem>>, vector<1x32xf32>
    %18 = vector.shape_cast %17 : vector<1x32xf32> to vector<1x1x32xf32>
    %19 = vector.broadcast %18 : vector<1x1x32xf32> to vector<4x5x32xf32>
    %20 = arith.addf %16, %19 : vector<4x5x32xf32>
    %21 = arith.mulf %20, %20 : vector<4x5x32xf32>
    %cst_14 = arith.constant dense<0.000000e+00> : vector<4x32xf32>
    %22 = vector.multi_reduction <add>, %21, %cst_14 [1] : vector<4x5x32xf32> to vector<4x32xf32>
    %23 = vector.shape_cast %22 : vector<4x32xf32> to vector<4x1x32xf32>
    %24 = math.sqrt %23 : vector<4x1x32xf32>
    %cst_15 = arith.constant 9.99999996E-13 : f32
    %25 = vector.broadcast %cst_15 : f32 to vector<4x1x32xf32>
    %26 = arith.maximumf %24, %25 : vector<4x1x32xf32>
    %27 = vector.broadcast %26 : vector<4x1x32xf32> to vector<4x5x32xf32>
    %28 = arith.divf %20, %27 : vector<4x5x32xf32>
    %c0_16 = arith.constant 0 : index
    %c0_17 = arith.constant 0 : index
    %c0_18 = arith.constant 0 : index
    %29 = vector.load %arg12[%c0_16, %c0_17, %c0_18] : memref<4x5x32xf32, #tpu.memory_space<vmem>>, vector<4x5x32xf32>
    tpu.vector_store %arg12[%c0_16, %c0_17, %c0_18], %28 {strides = array<i32>} : memref<4x5x32xf32, #tpu.memory_space<vmem>>, vector<4x5x32xf32>,
    %30 = vector.extract_strided_slice %28 {offsets = [0, 0, 0], sizes = [4, 1, 32], strides = [1, 1, 1]} : vector<4x5x32xf32> to vector<4x1x32xf32>
    %31 = vector.shape_cast %30 : vector<4x1x32xf32> to vector<4x32xf32>
    %c0_19 = arith.constant 0 : index
    %c0_20 = arith.constant 0 : index
    %32 = vector.load %arg14[%c0_19, %c0_20] : memref<4x32xf32, #tpu.memory_space<vmem>>, vector<4x32xf32>
    tpu.vector_store %arg14[%c0_19, %c0_20], %31 {strides = array<i32>} : memref<4x32xf32, #tpu.memory_space<vmem>>, vector<4x32xf32>,
    %c0_21 = arith.constant 0 : index
    %c0_22 = arith.constant 0 : index
    %33 = vector.load %arg6[%c0_21, %c0_22] : memref<32x32xf32, #tpu.memory_space<vmem>>, vector<32x32xf32>
    "tpu.trace_start"() <{level = 10 : i32, message = "lsh,ho->lso"}> : () -> ()
    %cst_23 = arith.constant dense<0.000000e+00> : vector<4x5x32xf32>
    %34 = tpu.matmul %28, %33, %cst_23 {dimension_numbers = #tpu.dot_dimension_numbers<[2], [0], [0, 1], [1], [0, 0, 0, 1, 1, 1], [], []>} : vector<4x5x32xf32>, vector<32x32xf32>, vector<4x5x32xf32> -> vector<4x5x32xf32>
    "tpu.trace_stop"() : () -> ()
    %c0_24 = arith.constant 0 : index
    %c0_25 = arith.constant 0 : index
    %35 = vector.load %arg7[%c0_24, %c0_25] : memref<1x32xf32, #tpu.memory_space<vmem>>, vector<1x32xf32>
    %36 = vector.shape_cast %35 : vector<1x32xf32> to vector<1x1x32xf32>
    %37 = vector.broadcast %36 : vector<1x1x32xf32> to vector<4x5x32xf32>
    %38 = arith.addf %34, %37 : vector<4x5x32xf32>
    %cst_26 = arith.constant 5.000000e-01 : f32
    %39 = vector.broadcast %cst_26 : f32 to vector<4x5x32xf32>
    %40 = arith.mulf %39, %38 : vector<4x5x32xf32>
    %cst_27 = arith.constant 0.707106769 : f32
    %41 = vector.broadcast %cst_27 : f32 to vector<4x5x32xf32>
    %42 = arith.mulf %38, %41 : vector<4x5x32xf32>
    %43 = math.erf %42 : vector<4x5x32xf32>
    %cst_28 = arith.constant 1.000000e+00 : f32
    %44 = vector.broadcast %cst_28 : f32 to vector<4x5x32xf32>
    %45 = arith.addf %44, %43 : vector<4x5x32xf32>
    %46 = arith.mulf %40, %45 : vector<4x5x32xf32>
    %c0_29 = arith.constant 0 : index
    %c0_30 = arith.constant 0 : index
    %47 = vector.load %arg8[%c0_29, %c0_30] : memref<32x1xf32, #tpu.memory_space<vmem>>, vector<32x1xf32>
    "tpu.trace_start"() <{level = 10 : i32, message = "lsh,ho->lso"}> : () -> ()
    %cst_31 = arith.constant dense<0.000000e+00> : vector<4x5x1xf32>
    %48 = tpu.matmul %46, %47, %cst_31 {dimension_numbers = #tpu.dot_dimension_numbers<[2], [0], [0, 1], [1], [0, 0, 0, 1, 1, 1], [], []>} : vector<4x5x32xf32>, vector<32x1xf32>, vector<4x5x1xf32> -> vector<4x5x1xf32>
    "tpu.trace_stop"() : () -> ()
    %c0_32 = arith.constant 0 : index
    %c0_33 = arith.constant 0 : index
    %49 = vector.load %arg9[%c0_32, %c0_33] : memref<1x1xf32, #tpu.memory_space<vmem>>, vector<1x1xf32>
    %50 = vector.shape_cast %49 : vector<1x1xf32> to vector<1x1x1xf32>
    %51 = vector.broadcast %50 : vector<1x1x1xf32> to vector<4x5x1xf32>
    %52 = arith.addf %48, %51 : vector<4x5x1xf32>
    %53 = tpu.iota {dimensions = array<i32: 0>} : vector<5x1xi32>
    %c1_i32 = arith.constant 1 : i32
    %54 = vector.broadcast %c1_i32 : i32 to vector<5x1xi32>
    %55 = arith.cmpi sge, %53, %54 : vector<5x1xi32>
    %cst_34 = arith.constant dense<0xFF800000> : vector<5x1xf32>
    %56 = vector.multi_reduction <maximumf>, %52, %cst_34 [0] : vector<4x5x1xf32> to vector<5x1xf32>
    %cst_35 = arith.constant 0xFF800000 : f32
    %57 = vector.broadcast %cst_35 : f32 to vector<5x1xf32>
    %58 = arith.maximumf %57, %56 : vector<5x1xf32>
    %59 = vector.shape_cast %58 : vector<5x1xf32> to vector<1x5x1xf32>
    %60 = vector.broadcast %59 : vector<1x5x1xf32> to vector<4x5x1xf32>
    %61 = arith.subf %52, %60 : vector<4x5x1xf32>
    %62 = math.exp %61 : vector<4x5x1xf32>
    %cst_36 = arith.constant dense<0.000000e+00> : vector<5x1xf32>
    %63 = vector.multi_reduction <add>, %62, %cst_36 [0] : vector<4x5x1xf32> to vector<5x1xf32>
    %64 = vector.shape_cast %63 : vector<5x1xf32> to vector<1x5x1xf32>
    %65 = vector.broadcast %64 : vector<1x5x1xf32> to vector<4x5x1xf32>
    %66 = arith.divf %62, %65 : vector<4x5x1xf32>
    %cst_37 = arith.constant 0.000000e+00 : f32
    %67 = vector.shape_cast %55 : vector<5x1xi1> to vector<1x5x1xi1>
    %68 = vector.broadcast %67 : vector<1x5x1xi1> to vector<4x5x1xi1>
    %69 = vector.broadcast %cst_37 : f32 to vector<4x5x1xf32>
    %70 = arith.select %68, %66, %69 : vector<4x5x1xi1>, vector<4x5x1xf32>
    %c0_38 = arith.constant 0 : index
    %c0_39 = arith.constant 0 : index
    %71 = vector.load %arg10[%c0_38, %c0_39] : memref<32x32xf32, #tpu.memory_space<vmem>>, vector<32x32xf32>
    "tpu.trace_start"() <{level = 10 : i32, message = "lsh,ho->lso"}> : () -> ()
    %cst_40 = arith.constant dense<0.000000e+00> : vector<4x5x32xf32>
    %72 = tpu.matmul %28, %71, %cst_40 {dimension_numbers = #tpu.dot_dimension_numbers<[2], [0], [0, 1], [1], [0, 0, 0, 1, 1, 1], [], []>} : vector<4x5x32xf32>, vector<32x32xf32>, vector<4x5x32xf32> -> vector<4x5x32xf32>
    "tpu.trace_stop"() : () -> ()
    %c0_41 = arith.constant 0 : index
    %c0_42 = arith.constant 0 : index
    %73 = vector.load %arg11[%c0_41, %c0_42] : memref<1x32xf32, #tpu.memory_space<vmem>>, vector<1x32xf32>
    %74 = vector.shape_cast %73 : vector<1x32xf32> to vector<1x1x32xf32>
    %75 = vector.broadcast %74 : vector<1x1x32xf32> to vector<4x5x32xf32>
    %76 = arith.addf %72, %75 : vector<4x5x32xf32>
    %77 = vector.broadcast %70 : vector<4x5x1xf32> to vector<4x5x32xf32>
    %78 = arith.mulf %77, %76 : vector<4x5x32xf32>
    %cst_43 = arith.constant dense<0.000000e+00> : vector<4x32xf32>
    %79 = vector.multi_reduction <add>, %78, %cst_43 [1] : vector<4x5x32xf32> to vector<4x32xf32>
    %80 = arith.addf %79, %31 : vector<4x32xf32>
    %c0_44 = arith.constant 0 : index
    %c0_45 = arith.constant 0 : index
    %81 = vector.load %arg13[%c0_44, %c0_45] : memref<4x32xf32, #tpu.memory_space<vmem>>, vector<4x32xf32>
    tpu.vector_store %arg13[%c0_44, %c0_45], %80 {strides = array<i32>} : memref<4x32xf32, #tpu.memory_space<vmem>>, vector<4x32xf32>,
    return
  }
  func.func @transform_0(%arg0: i32) -> (i32, i32, i32) {
    %c0_i32 = arith.constant 0 : i32
    %c0_i32_0 = arith.constant 0 : i32
    %c0_i32_1 = arith.constant 0 : i32
    %c0_i32_2 = arith.constant 0 : i32
    return %c0_i32, %c0_i32_0, %c0_i32_1 : i32, i32, i32
  }
  func.func @transform_1(%arg0: i32) -> (i32, i32) {
    %c0_i32 = arith.constant 0 : i32
    %c0_i32_0 = arith.constant 0 : i32
    %c0_i32_1 = arith.constant 0 : i32
    return %c0_i32, %c0_i32_0 : i32, i32
  }
  func.func @transform_2(%arg0: i32) -> (i32, i32) {
    %c0_i32 = arith.constant 0 : i32
    %c0_i32_0 = arith.constant 0 : i32
    %c0_i32_1 = arith.constant 0 : i32
    return %c0_i32, %c0_i32_0 : i32, i32
  }
  func.func @transform_3(%arg0: i32) -> (i32, i32) {
    %c0_i32 = arith.constant 0 : i32
    %c0_i32_0 = arith.constant 0 : i32
    %c0_i32_1 = arith.constant 0 : i32
    return %c0_i32, %c0_i32_0 : i32, i32
  }
  func.func @transform_4(%arg0: i32) -> (i32, i32) {
    %c0_i32 = arith.constant 0 : i32
    %c0_i32_0 = arith.constant 0 : i32
    %c0_i32_1 = arith.constant 0 : i32
    return %c0_i32, %c0_i32_0 : i32, i32
  }
  func.func @transform_5(%arg0: i32) -> (i32, i32) {
    %c0_i32 = arith.constant 0 : i32
    %c0_i32_0 = arith.constant 0 : i32
    %c0_i32_1 = arith.constant 0 : i32
    return %c0_i32, %c0_i32_0 : i32, i32
  }
  func.func @transform_6(%arg0: i32) -> (i32, i32) {
    %c0_i32 = arith.constant 0 : i32
    %c0_i32_0 = arith.constant 0 : i32
    %c0_i32_1 = arith.constant 0 : i32
    return %c0_i32, %c0_i32_0 : i32, i32
  }
  func.func @transform_7(%arg0: i32) -> (i32, i32) {
    %c0_i32 = arith.constant 0 : i32
    %c0_i32_0 = arith.constant 0 : i32
    %c0_i32_1 = arith.constant 0 : i32
    return %c0_i32, %c0_i32_0 : i32, i32
  }
  func.func @transform_8(%arg0: i32) -> (i32, i32) {
    %c0_i32 = arith.constant 0 : i32
    %c0_i32_0 = arith.constant 0 : i32
    %c0_i32_1 = arith.constant 0 : i32
    return %c0_i32, %c0_i32_0 : i32, i32
  }
  func.func @transform_9(%arg0: i32) -> (i32, i32) {
    %c0_i32 = arith.constant 0 : i32
    %c0_i32_0 = arith.constant 0 : i32
    %c0_i32_1 = arith.constant 0 : i32
    return %c0_i32, %c0_i32_0 : i32, i32
  }
  func.func @transform_10(%arg0: i32) -> (i32, i32) {
    %c0_i32 = arith.constant 0 : i32
    %c0_i32_0 = arith.constant 0 : i32
    %c0_i32_1 = arith.constant 0 : i32
    return %c0_i32, %c0_i32_0 : i32, i32
  }
  func.func @transform_11(%arg0: i32) -> (i32, i32, i32) {
    %c0_i32 = arith.constant 0 : i32
    %c0_i32_0 = arith.constant 0 : i32
    %c0_i32_1 = arith.constant 0 : i32
    %c0_i32_2 = arith.constant 0 : i32
    return %c0_i32, %c0_i32_0, %c0_i32_1 : i32, i32, i32
  }
  func.func @transform_12(%arg0: i32) -> (i32, i32) {
    %c0_i32 = arith.constant 0 : i32
    %c0_i32_0 = arith.constant 0 : i32
    %c0_i32_1 = arith.constant 0 : i32
    return %c0_i32, %c0_i32_0 : i32, i32
  }
  func.func @transform_13(%arg0: i32) -> (i32, i32) {
    %c0_i32 = arith.constant 0 : i32
    %c0_i32_0 = arith.constant 0 : i32
    %c0_i32_1 = arith.constant 0 : i32
    return %c0_i32, %c0_i32_0 : i32, i32
  }
}

module attributes {stable_mosaic.version = 11 : i64} {
  func.func @branch_kernel(%arg0: i32, %arg1: memref<4x8x64xf32, #tpu.memory_space<vmem>>, %arg2: memref<64x32xf32, #tpu.memory_space<vmem>>, %arg3: memref<1x32xf32, #tpu.memory_space<vmem>>, %arg4: memref<32x32xf32, #tpu.memory_space<vmem>>, %arg5: memref<1x32xf32, #tpu.memory_space<vmem>>, %arg6: memref<32x32xf32, #tpu.memory_space<vmem>>, %arg7: memref<1x32xf32, #tpu.memory_space<vmem>>, %arg8: memref<32x1xf32, #tpu.memory_space<vmem>>, %arg9: memref<1x1xf32, #tpu.memory_space<vmem>>, %arg10: memref<32x32xf32, #tpu.memory_space<vmem>>, %arg11: memref<1x32xf32, #tpu.memory_space<vmem>>, %arg12: memref<4x8x32xf32, #tpu.memory_space<vmem>>, %arg13: memref<4x32xf32, #tpu.memory_space<vmem>>, %arg14: memref<4x32xf32, #tpu.memory_space<vmem>>) attributes {dimension_semantics = [#tpu.dimension_semantics<arbitrary>], iteration_bounds = array<i64: 1>, scalar_prefetch = 0 : i64, scratch_operands = 0 : i64, tpu.core_type = #tpu.core_type<tc>, window_params = [{pipeline_mode = #tpu.pipeline_mode<synchronous>, transform_indices = @transform_0, window_bounds = array<i64: 4, 8, 64>}, {pipeline_mode = #tpu.pipeline_mode<synchronous>, transform_indices = @transform_1, window_bounds = array<i64: 64, 32>}, {pipeline_mode = #tpu.pipeline_mode<synchronous>, transform_indices = @transform_2, window_bounds = array<i64: 1, 32>}, {pipeline_mode = #tpu.pipeline_mode<synchronous>, transform_indices = @transform_3, window_bounds = array<i64: 32, 32>}, {pipeline_mode = #tpu.pipeline_mode<synchronous>, transform_indices = @transform_4, window_bounds = array<i64: 1, 32>}, {pipeline_mode = #tpu.pipeline_mode<synchronous>, transform_indices = @transform_5, window_bounds = array<i64: 32, 32>}, {pipeline_mode = #tpu.pipeline_mode<synchronous>, transform_indices = @transform_6, window_bounds = array<i64: 1, 32>}, {pipeline_mode = #tpu.pipeline_mode<synchronous>, transform_indices = @transform_7, window_bounds = array<i64: 32, 1>}, {pipeline_mode = #tpu.pipeline_mode<synchronous>, transform_indices = @transform_8, window_bounds = array<i64: 1, 1>}, {pipeline_mode = #tpu.pipeline_mode<synchronous>, transform_indices = @transform_9, window_bounds = array<i64: 32, 32>}, {pipeline_mode = #tpu.pipeline_mode<synchronous>, transform_indices = @transform_10, window_bounds = array<i64: 1, 32>}, {pipeline_mode = #tpu.pipeline_mode<synchronous>, transform_indices = @transform_11, window_bounds = array<i64: 4, 8, 32>}, {pipeline_mode = #tpu.pipeline_mode<synchronous>, transform_indices = @transform_12, window_bounds = array<i64: 4, 32>}, {pipeline_mode = #tpu.pipeline_mode<synchronous>, transform_indices = @transform_13, window_bounds = array<i64: 4, 32>}]} {
    %c0 = arith.constant 0 : index
    %c0_0 = arith.constant 0 : index
    %c0_1 = arith.constant 0 : index
    %0 = vector.load %arg1[%c0, %c0_0, %c0_1] : memref<4x8x64xf32, #tpu.memory_space<vmem>>, vector<4x8x64xf32>
    %c0_2 = arith.constant 0 : index
    %c0_3 = arith.constant 0 : index
    %1 = vector.load %arg2[%c0_2, %c0_3] : memref<64x32xf32, #tpu.memory_space<vmem>>, vector<64x32xf32>
    "tpu.trace_start"() <{level = 10 : i32, message = "lsd,dh->lsh"}> : () -> ()
    %cst = arith.constant dense<0.000000e+00> : vector<4x8x32xf32>
    %2 = tpu.matmul %0, %1, %cst {dimension_numbers = #tpu.dot_dimension_numbers<[2], [0], [0, 1], [1], [0, 0, 0, 1, 1, 1], [], []>} : vector<4x8x64xf32>, vector<64x32xf32>, vector<4x8x32xf32> -> vector<4x8x32xf32>
    "tpu.trace_stop"() : () -> ()
    %c0_4 = arith.constant 0 : index
    %c0_5 = arith.constant 0 : index
    %3 = vector.load %arg3[%c0_4, %c0_5] : memref<1x32xf32, #tpu.memory_space<vmem>>, vector<1x32xf32>
    %4 = vector.shape_cast %3 : vector<1x32xf32> to vector<1x1x32xf32>
    %5 = vector.broadcast %4 : vector<1x1x32xf32> to vector<4x8x32xf32>
    %6 = arith.addf %2, %5 : vector<4x8x32xf32>
    %cst_6 = arith.constant 5.000000e-01 : f32
    %7 = vector.broadcast %cst_6 : f32 to vector<4x8x32xf32>
    %8 = arith.mulf %7, %6 : vector<4x8x32xf32>
    %cst_7 = arith.constant 0.707106769 : f32
    %9 = vector.broadcast %cst_7 : f32 to vector<4x8x32xf32>
    %10 = arith.mulf %6, %9 : vector<4x8x32xf32>
    %11 = math.erf %10 : vector<4x8x32xf32>
    %cst_8 = arith.constant 1.000000e+00 : f32
    %12 = vector.broadcast %cst_8 : f32 to vector<4x8x32xf32>
    %13 = arith.addf %12, %11 : vector<4x8x32xf32>
    %14 = arith.mulf %8, %13 : vector<4x8x32xf32>
    %c0_9 = arith.constant 0 : index
    %c0_10 = arith.constant 0 : index
    %15 = vector.load %arg4[%c0_9, %c0_10] : memref<32x32xf32, #tpu.memory_space<vmem>>, vector<32x32xf32>
    "tpu.trace_start"() <{level = 10 : i32, message = "lsh,ho->lso"}> : () -> ()
    %cst_11 = arith.constant dense<0.000000e+00> : vector<4x8x32xf32>
    %16 = tpu.matmul %14, %15, %cst_11 {dimension_numbers = #tpu.dot_dimension_numbers<[2], [0], [0, 1], [1], [0, 0, 0, 1, 1, 1], [], []>} : vector<4x8x32xf32>, vector<32x32xf32>, vector<4x8x32xf32> -> vector<4x8x32xf32>
    "tpu.trace_stop"() : () -> ()
    %c0_12 = arith.constant 0 : index
    %c0_13 = arith.constant 0 : index
    %17 = vector.load %arg5[%c0_12, %c0_13] : memref<1x32xf32, #tpu.memory_space<vmem>>, vector<1x32xf32>
    %18 = vector.shape_cast %17 : vector<1x32xf32> to vector<1x1x32xf32>
    %19 = vector.broadcast %18 : vector<1x1x32xf32> to vector<4x8x32xf32>
    %20 = arith.addf %16, %19 : vector<4x8x32xf32>
    %21 = arith.mulf %20, %20 : vector<4x8x32xf32>
    %cst_14 = arith.constant dense<0.000000e+00> : vector<4x32xf32>
    %22 = vector.multi_reduction <add>, %21, %cst_14 [1] : vector<4x8x32xf32> to vector<4x32xf32>
    %23 = vector.shape_cast %22 : vector<4x32xf32> to vector<4x1x32xf32>
    %24 = math.sqrt %23 : vector<4x1x32xf32>
    %cst_15 = arith.constant 9.99999996E-13 : f32
    %25 = vector.broadcast %cst_15 : f32 to vector<4x1x32xf32>
    %26 = arith.maximumf %24, %25 : vector<4x1x32xf32>
    %27 = vector.broadcast %26 : vector<4x1x32xf32> to vector<4x8x32xf32>
    %28 = arith.divf %20, %27 : vector<4x8x32xf32>
    %c0_16 = arith.constant 0 : index
    %c0_17 = arith.constant 0 : index
    %c0_18 = arith.constant 0 : index
    %29 = vector.load %arg12[%c0_16, %c0_17, %c0_18] : memref<4x8x32xf32, #tpu.memory_space<vmem>>, vector<4x8x32xf32>
    tpu.vector_store %arg12[%c0_16, %c0_17, %c0_18], %28 {strides = array<i32>} : memref<4x8x32xf32, #tpu.memory_space<vmem>>, vector<4x8x32xf32>,
    %30 = vector.extract_strided_slice %28 {offsets = [0, 0, 0], sizes = [4, 1, 32], strides = [1, 1, 1]} : vector<4x8x32xf32> to vector<4x1x32xf32>
    %31 = vector.shape_cast %30 : vector<4x1x32xf32> to vector<4x32xf32>
    %c0_19 = arith.constant 0 : index
    %c0_20 = arith.constant 0 : index
    %32 = vector.load %arg14[%c0_19, %c0_20] : memref<4x32xf32, #tpu.memory_space<vmem>>, vector<4x32xf32>
    tpu.vector_store %arg14[%c0_19, %c0_20], %31 {strides = array<i32>} : memref<4x32xf32, #tpu.memory_space<vmem>>, vector<4x32xf32>,
    %c0_21 = arith.constant 0 : index
    %c0_22 = arith.constant 0 : index
    %33 = vector.load %arg6[%c0_21, %c0_22] : memref<32x32xf32, #tpu.memory_space<vmem>>, vector<32x32xf32>
    "tpu.trace_start"() <{level = 10 : i32, message = "lsh,ho->lso"}> : () -> ()
    %cst_23 = arith.constant dense<0.000000e+00> : vector<4x8x32xf32>
    %34 = tpu.matmul %28, %33, %cst_23 {dimension_numbers = #tpu.dot_dimension_numbers<[2], [0], [0, 1], [1], [0, 0, 0, 1, 1, 1], [], []>} : vector<4x8x32xf32>, vector<32x32xf32>, vector<4x8x32xf32> -> vector<4x8x32xf32>
    "tpu.trace_stop"() : () -> ()
    %c0_24 = arith.constant 0 : index
    %c0_25 = arith.constant 0 : index
    %35 = vector.load %arg7[%c0_24, %c0_25] : memref<1x32xf32, #tpu.memory_space<vmem>>, vector<1x32xf32>
    %36 = vector.shape_cast %35 : vector<1x32xf32> to vector<1x1x32xf32>
    %37 = vector.broadcast %36 : vector<1x1x32xf32> to vector<4x8x32xf32>
    %38 = arith.addf %34, %37 : vector<4x8x32xf32>
    %cst_26 = arith.constant 5.000000e-01 : f32
    %39 = vector.broadcast %cst_26 : f32 to vector<4x8x32xf32>
    %40 = arith.mulf %39, %38 : vector<4x8x32xf32>
    %cst_27 = arith.constant 0.707106769 : f32
    %41 = vector.broadcast %cst_27 : f32 to vector<4x8x32xf32>
    %42 = arith.mulf %38, %41 : vector<4x8x32xf32>
    %43 = math.erf %42 : vector<4x8x32xf32>
    %cst_28 = arith.constant 1.000000e+00 : f32
    %44 = vector.broadcast %cst_28 : f32 to vector<4x8x32xf32>
    %45 = arith.addf %44, %43 : vector<4x8x32xf32>
    %46 = arith.mulf %40, %45 : vector<4x8x32xf32>
    %c0_29 = arith.constant 0 : index
    %c0_30 = arith.constant 0 : index
    %47 = vector.load %arg8[%c0_29, %c0_30] : memref<32x1xf32, #tpu.memory_space<vmem>>, vector<32x1xf32>
    "tpu.trace_start"() <{level = 10 : i32, message = "lsh,ho->lso"}> : () -> ()
    %cst_31 = arith.constant dense<0.000000e+00> : vector<4x8x1xf32>
    %48 = tpu.matmul %46, %47, %cst_31 {dimension_numbers = #tpu.dot_dimension_numbers<[2], [0], [0, 1], [1], [0, 0, 0, 1, 1, 1], [], []>} : vector<4x8x32xf32>, vector<32x1xf32>, vector<4x8x1xf32> -> vector<4x8x1xf32>
    "tpu.trace_stop"() : () -> ()
    %c0_32 = arith.constant 0 : index
    %c0_33 = arith.constant 0 : index
    %49 = vector.load %arg9[%c0_32, %c0_33] : memref<1x1xf32, #tpu.memory_space<vmem>>, vector<1x1xf32>
    %50 = vector.shape_cast %49 : vector<1x1xf32> to vector<1x1x1xf32>
    %51 = vector.broadcast %50 : vector<1x1x1xf32> to vector<4x8x1xf32>
    %52 = arith.addf %48, %51 : vector<4x8x1xf32>
    %53 = tpu.iota {dimensions = array<i32: 0>} : vector<8x1xi32>
    %c1_i32 = arith.constant 1 : i32
    %54 = vector.broadcast %c1_i32 : i32 to vector<8x1xi32>
    %55 = arith.cmpi sge, %53, %54 : vector<8x1xi32>
    %cst_34 = arith.constant -1.000000e+30 : f32
    %56 = vector.shape_cast %55 : vector<8x1xi1> to vector<1x8x1xi1>
    %57 = vector.broadcast %56 : vector<1x8x1xi1> to vector<4x8x1xi1>
    %58 = vector.broadcast %cst_34 : f32 to vector<4x8x1xf32>
    %59 = arith.select %57, %52, %58 : vector<4x8x1xi1>, vector<4x8x1xf32>
    %cst_35 = arith.constant dense<0xFF800000> : vector<4x1xf32>
    %60 = vector.multi_reduction <maximumf>, %59, %cst_35 [1] : vector<4x8x1xf32> to vector<4x1xf32>
    %cst_36 = arith.constant 0xFF800000 : f32
    %61 = vector.broadcast %cst_36 : f32 to vector<4x1xf32>
    %62 = arith.maximumf %61, %60 : vector<4x1xf32>
    %63 = vector.shape_cast %62 : vector<4x1xf32> to vector<4x1x1xf32>
    %64 = vector.broadcast %63 : vector<4x1x1xf32> to vector<4x8x1xf32>
    %65 = arith.subf %59, %64 : vector<4x8x1xf32>
    %66 = math.exp %65 : vector<4x8x1xf32>
    %cst_37 = arith.constant dense<0.000000e+00> : vector<4x1xf32>
    %67 = vector.multi_reduction <add>, %66, %cst_37 [1] : vector<4x8x1xf32> to vector<4x1xf32>
    %68 = vector.shape_cast %67 : vector<4x1xf32> to vector<4x1x1xf32>
    %69 = vector.broadcast %68 : vector<4x1x1xf32> to vector<4x8x1xf32>
    %70 = arith.divf %66, %69 : vector<4x8x1xf32>
    %c0_38 = arith.constant 0 : index
    %c0_39 = arith.constant 0 : index
    %71 = vector.load %arg10[%c0_38, %c0_39] : memref<32x32xf32, #tpu.memory_space<vmem>>, vector<32x32xf32>
    "tpu.trace_start"() <{level = 10 : i32, message = "lsh,ho->lso"}> : () -> ()
    %cst_40 = arith.constant dense<0.000000e+00> : vector<4x8x32xf32>
    %72 = tpu.matmul %28, %71, %cst_40 {dimension_numbers = #tpu.dot_dimension_numbers<[2], [0], [0, 1], [1], [0, 0, 0, 1, 1, 1], [], []>} : vector<4x8x32xf32>, vector<32x32xf32>, vector<4x8x32xf32> -> vector<4x8x32xf32>
    "tpu.trace_stop"() : () -> ()
    %c0_41 = arith.constant 0 : index
    %c0_42 = arith.constant 0 : index
    %73 = vector.load %arg11[%c0_41, %c0_42] : memref<1x32xf32, #tpu.memory_space<vmem>>, vector<1x32xf32>
    %74 = vector.shape_cast %73 : vector<1x32xf32> to vector<1x1x32xf32>
    %75 = vector.broadcast %74 : vector<1x1x32xf32> to vector<4x8x32xf32>
    %76 = arith.addf %72, %75 : vector<4x8x32xf32>
    %77 = vector.broadcast %70 : vector<4x8x1xf32> to vector<4x8x32xf32>
    %78 = arith.mulf %77, %76 : vector<4x8x32xf32>
    %cst_43 = arith.constant dense<0.000000e+00> : vector<4x32xf32>
    %79 = vector.multi_reduction <add>, %78, %cst_43 [1] : vector<4x8x32xf32> to vector<4x32xf32>
    %80 = arith.addf %79, %31 : vector<4x32xf32>
    %c0_44 = arith.constant 0 : index
    %c0_45 = arith.constant 0 : index
    %81 = vector.load %arg13[%c0_44, %c0_45] : memref<4x32xf32, #tpu.memory_space<vmem>>, vector<4x32xf32>
    tpu.vector_store %arg13[%c0_44, %c0_45], %80 {strides = array<i32>} : memref<4x32xf32, #tpu.memory_space<vmem>>, vector<4x32xf32>,
    return
  }
  func.func @transform_0(%arg0: i32) -> (i32, i32, i32) {
    %c0_i32 = arith.constant 0 : i32
    %c0_i32_0 = arith.constant 0 : i32
    %c0_i32_1 = arith.constant 0 : i32
    %c0_i32_2 = arith.constant 0 : i32
    return %c0_i32, %c0_i32_0, %c0_i32_1 : i32, i32, i32
  }
  func.func @transform_1(%arg0: i32) -> (i32, i32) {
    %c0_i32 = arith.constant 0 : i32
    %c0_i32_0 = arith.constant 0 : i32
    %c0_i32_1 = arith.constant 0 : i32
    return %c0_i32, %c0_i32_0 : i32, i32
  }
  func.func @transform_2(%arg0: i32) -> (i32, i32) {
    %c0_i32 = arith.constant 0 : i32
    %c0_i32_0 = arith.constant 0 : i32
    %c0_i32_1 = arith.constant 0 : i32
    return %c0_i32, %c0_i32_0 : i32, i32
  }
  func.func @transform_3(%arg0: i32) -> (i32, i32) {
    %c0_i32 = arith.constant 0 : i32
    %c0_i32_0 = arith.constant 0 : i32
    %c0_i32_1 = arith.constant 0 : i32
    return %c0_i32, %c0_i32_0 : i32, i32
  }
  func.func @transform_4(%arg0: i32) -> (i32, i32) {
    %c0_i32 = arith.constant 0 : i32
    %c0_i32_0 = arith.constant 0 : i32
    %c0_i32_1 = arith.constant 0 : i32
    return %c0_i32, %c0_i32_0 : i32, i32
  }
  func.func @transform_5(%arg0: i32) -> (i32, i32) {
    %c0_i32 = arith.constant 0 : i32
    %c0_i32_0 = arith.constant 0 : i32
    %c0_i32_1 = arith.constant 0 : i32
    return %c0_i32, %c0_i32_0 : i32, i32
  }
  func.func @transform_6(%arg0: i32) -> (i32, i32) {
    %c0_i32 = arith.constant 0 : i32
    %c0_i32_0 = arith.constant 0 : i32
    %c0_i32_1 = arith.constant 0 : i32
    return %c0_i32, %c0_i32_0 : i32, i32
  }
  func.func @transform_7(%arg0: i32) -> (i32, i32) {
    %c0_i32 = arith.constant 0 : i32
    %c0_i32_0 = arith.constant 0 : i32
    %c0_i32_1 = arith.constant 0 : i32
    return %c0_i32, %c0_i32_0 : i32, i32
  }
  func.func @transform_8(%arg0: i32) -> (i32, i32) {
    %c0_i32 = arith.constant 0 : i32
    %c0_i32_0 = arith.constant 0 : i32
    %c0_i32_1 = arith.constant 0 : i32
    return %c0_i32, %c0_i32_0 : i32, i32
  }
  func.func @transform_9(%arg0: i32) -> (i32, i32) {
    %c0_i32 = arith.constant 0 : i32
    %c0_i32_0 = arith.constant 0 : i32
    %c0_i32_1 = arith.constant 0 : i32
    return %c0_i32, %c0_i32_0 : i32, i32
  }
  func.func @transform_10(%arg0: i32) -> (i32, i32) {
    %c0_i32 = arith.constant 0 : i32
    %c0_i32_0 = arith.constant 0 : i32
    %c0_i32_1 = arith.constant 0 : i32
    return %c0_i32, %c0_i32_0 : i32, i32
  }
  func.func @transform_11(%arg0: i32) -> (i32, i32, i32) {
    %c0_i32 = arith.constant 0 : i32
    %c0_i32_0 = arith.constant 0 : i32
    %c0_i32_1 = arith.constant 0 : i32
    %c0_i32_2 = arith.constant 0 : i32
    return %c0_i32, %c0_i32_0, %c0_i32_1 : i32, i32, i32
  }
  func.func @transform_12(%arg0: i32) -> (i32, i32) {
    %c0_i32 = arith.constant 0 : i32
    %c0_i32_0 = arith.constant 0 : i32
    %c0_i32_1 = arith.constant 0 : i32
    return %c0_i32, %c0_i32_0 : i32, i32
  }
  func.func @transform_13(%arg0: i32) -> (i32, i32) {
    %c0_i32 = arith.constant 0 : i32
    %c0_i32_0 = arith.constant 0 : i32
    %c0_i32_1 = arith.constant 0 : i32
    return %c0_i32, %c0_i32_0 : i32, i32
  }
}

module attributes {stable_mosaic.version = 11 : i64} {
  func.func @loss_kernel(%arg0: i32, %arg1: memref<16x1x32xf32, #tpu.memory_space<vmem>>, %arg2: memref<16x8x32xf32, #tpu.memory_space<vmem>>, %arg3: memref<16x8x1xf32, #tpu.memory_space<vmem>>, %arg4: memref<4x32xf32, #tpu.memory_space<vmem>>, %arg5: memref<4x32xf32, #tpu.memory_space<vmem>>, %arg6: memref<4x4xf32, #tpu.memory_space<vmem>>, %arg7: memref<16x1xf32, #tpu.memory_space<vmem>>, %arg8: memref<4x16xf32, #tpu.memory_space<vmem>>, %arg9: memref<4x16xf32, #tpu.memory_space<vmem>>, %arg10: memref<4x16xf32, #tpu.memory_space<vmem>>, %arg11: memref<32x4xf32, #tpu.memory_space<vmem>>, %arg12: memref<4x32xf32, #tpu.memory_space<vmem>>, %arg13: memref<32x32xf32, #tpu.memory_space<vmem>>, %arg14: memref<1x32xf32, #tpu.memory_space<vmem>>, %arg15: memref<32x32xf32, #tpu.memory_space<vmem>>, %arg16: memref<1x32xf32, #tpu.memory_space<vmem>>, %arg17: memref<32x32xf32, #tpu.memory_space<vmem>>, %arg18: memref<1x32xf32, #tpu.memory_space<vmem>>, %arg19: memref<32x32xf32, #tpu.memory_space<vmem>>, %arg20: memref<1x32xf32, #tpu.memory_space<vmem>>, %arg21: memref<1x32xf32, #tpu.memory_space<vmem>>, %arg22: memref<1x32xf32, #tpu.memory_space<vmem>>, %arg23: memref<32x1024xf32, #tpu.memory_space<vmem>>, %arg24: memref<1x1024xf32, #tpu.memory_space<vmem>>, %arg25: memref<1024x32xf32, #tpu.memory_space<vmem>>, %arg26: memref<1x32xf32, #tpu.memory_space<vmem>>, %arg27: memref<1x32xf32, #tpu.memory_space<vmem>>, %arg28: memref<1x32xf32, #tpu.memory_space<vmem>>, %arg29: memref<1x32xf32, #tpu.memory_space<vmem>>, %arg30: memref<1x1xf32, #tpu.memory_space<vmem>>, %arg31: memref<1x32xf32, #tpu.memory_space<vmem>>, %arg32: memref<1x1xf32, #tpu.memory_space<vmem>>, %arg33: memref<1x1xf32, #tpu.memory_space<vmem>>) attributes {dimension_semantics = [#tpu.dimension_semantics<arbitrary>], iteration_bounds = array<i64: 1>, scalar_prefetch = 0 : i64, scratch_operands = 0 : i64, tpu.core_type = #tpu.core_type<tc>, window_params = [{pipeline_mode = #tpu.pipeline_mode<synchronous>, transform_indices = @transform_0, window_bounds = array<i64: 16, 1, 32>}, {pipeline_mode = #tpu.pipeline_mode<synchronous>, transform_indices = @transform_1, window_bounds = array<i64: 16, 8, 32>}, {pipeline_mode = #tpu.pipeline_mode<synchronous>, transform_indices = @transform_2, window_bounds = array<i64: 16, 8, 1>}, {pipeline_mode = #tpu.pipeline_mode<synchronous>, transform_indices = @transform_3, window_bounds = array<i64: 4, 32>}, {pipeline_mode = #tpu.pipeline_mode<synchronous>, transform_indices = @transform_4, window_bounds = array<i64: 4, 32>}, {pipeline_mode = #tpu.pipeline_mode<synchronous>, transform_indices = @transform_5, window_bounds = array<i64: 4, 4>}, {pipeline_mode = #tpu.pipeline_mode<synchronous>, transform_indices = @transform_6, window_bounds = array<i64: 16, 1>}, {pipeline_mode = #tpu.pipeline_mode<synchronous>, transform_indices = @transform_7, window_bounds = array<i64: 4, 16>}, {pipeline_mode = #tpu.pipeline_mode<synchronous>, transform_indices = @transform_8, window_bounds = array<i64: 4, 16>}, {pipeline_mode = #tpu.pipeline_mode<synchronous>, transform_indices = @transform_9, window_bounds = array<i64: 4, 16>}, {pipeline_mode = #tpu.pipeline_mode<synchronous>, transform_indices = @transform_10, window_bounds = array<i64: 32, 4>}, {pipeline_mode = #tpu.pipeline_mode<synchronous>, transform_indices = @transform_11, window_bounds = array<i64: 4, 32>}, {pipeline_mode = #tpu.pipeline_mode<synchronous>, transform_indices = @transform_12, window_bounds = array<i64: 32, 32>}, {pipeline_mode = #tpu.pipeline_mode<synchronous>, transform_indices = @transform_13, window_bounds = array<i64: 1, 32>}, {pipeline_mode = #tpu.pipeline_mode<synchronous>, transform_indices = @transform_14, window_bounds = array<i64: 32, 32>}, {pipeline_mode = #tpu.pipeline_mode<synchronous>, transform_indices = @transform_15, window_bounds = array<i64: 1, 32>}, {pipeline_mode = #tpu.pipeline_mode<synchronous>, transform_indices = @transform_16, window_bounds = array<i64: 32, 32>}, {pipeline_mode = #tpu.pipeline_mode<synchronous>, transform_indices = @transform_17, window_bounds = array<i64: 1, 32>}, {pipeline_mode = #tpu.pipeline_mode<synchronous>, transform_indices = @transform_18, window_bounds = array<i64: 32, 32>}, {pipeline_mode = #tpu.pipeline_mode<synchronous>, transform_indices = @transform_19, window_bounds = array<i64: 1, 32>}, {pipeline_mode = #tpu.pipeline_mode<synchronous>, transform_indices = @transform_20, window_bounds = array<i64: 1, 32>}, {pipeline_mode = #tpu.pipeline_mode<synchronous>, transform_indices = @transform_21, window_bounds = array<i64: 1, 32>}, {pipeline_mode = #tpu.pipeline_mode<synchronous>, transform_indices = @transform_22, window_bounds = array<i64: 32, 1024>}, {pipeline_mode = #tpu.pipeline_mode<synchronous>, transform_indices = @transform_23, window_bounds = array<i64: 1, 1024>}, {pipeline_mode = #tpu.pipeline_mode<synchronous>, transform_indices = @transform_24, window_bounds = array<i64: 1024, 32>}, {pipeline_mode = #tpu.pipeline_mode<synchronous>, transform_indices = @transform_25, window_bounds = array<i64: 1, 32>}, {pipeline_mode = #tpu.pipeline_mode<synchronous>, transform_indices = @transform_26, window_bounds = array<i64: 1, 32>}, {pipeline_mode = #tpu.pipeline_mode<synchronous>, transform_indices = @transform_27, window_bounds = array<i64: 1, 32>}, {pipeline_mode = #tpu.pipeline_mode<synchronous>, transform_indices = @transform_28, window_bounds = array<i64: 1, 32>}, {pipeline_mode = #tpu.pipeline_mode<synchronous>, transform_indices = @transform_29, window_bounds = array<i64: 1, 1>}, {pipeline_mode = #tpu.pipeline_mode<synchronous>, transform_indices = @transform_30, window_bounds = array<i64: 1, 32>}, {pipeline_mode = #tpu.pipeline_mode<synchronous>, transform_indices = @transform_31, window_bounds = array<i64: 1, 1>}, {pipeline_mode = #tpu.pipeline_mode<synchronous>, transform_indices = @transform_32, window_bounds = array<i64: 1, 1>}]} {
    %c0 = arith.constant 0 : index
    %c0_0 = arith.constant 0 : index
    %c0_1 = arith.constant 0 : index
    %0 = vector.load %arg1[%c0, %c0_0, %c0_1] : memref<16x1x32xf32, #tpu.memory_space<vmem>>, vector<16x1x32xf32>
    %c0_2 = arith.constant 0 : index
    %c0_3 = arith.constant 0 : index
    %c0_4 = arith.constant 0 : index
    %1 = vector.load %arg2[%c0_2, %c0_3, %c0_4] : memref<16x8x32xf32, #tpu.memory_space<vmem>>, vector<16x8x32xf32>
    %c0_5 = arith.constant 0 : index
    %c0_6 = arith.constant 0 : index
    %c0_7 = arith.constant 0 : index
    %2 = vector.load %arg3[%c0_5, %c0_6, %c0_7] : memref<16x8x1xf32, #tpu.memory_space<vmem>>, vector<16x8x1xf32>
    %c0_8 = arith.constant 0 : index
    %c0_9 = arith.constant 0 : index
    %3 = vector.load %arg13[%c0_8, %c0_9] : memref<32x32xf32, #tpu.memory_space<vmem>>, vector<32x32xf32>
    "tpu.trace_start"() <{level = 10 : i32, message = "psh,ho->pso"}> : () -> ()
    %cst = arith.constant dense<0.000000e+00> : vector<16x1x32xf32>
    %4 = tpu.matmul %0, %3, %cst {dimension_numbers = #tpu.dot_dimension_numbers<[2], [0], [0, 1], [1], [0, 0, 0, 1, 1, 1], [], []>} : vector<16x1x32xf32>, vector<32x32xf32>, vector<16x1x32xf32> -> vector<16x1x32xf32>
    "tpu.trace_stop"() : () -> ()
    %c0_10 = arith.constant 0 : index
    %c0_11 = arith.constant 0 : index
    %5 = vector.load %arg14[%c0_10, %c0_11] : memref<1x32xf32, #tpu.memory_space<vmem>>, vector<1x32xf32>
    %6 = vector.shape_cast %5 : vector<1x32xf32> to vector<1x1x32xf32>
    %7 = vector.broadcast %6 : vector<1x1x32xf32> to vector<16x1x32xf32>
    %8 = arith.addf %4, %7 : vector<16x1x32xf32>
    %c0_12 = arith.constant 0 : index
    %c0_13 = arith.constant 0 : index
    %9 = vector.load %arg15[%c0_12, %c0_13] : memref<32x32xf32, #tpu.memory_space<vmem>>, vector<32x32xf32>
    "tpu.trace_start"() <{level = 10 : i32, message = "psh,ho->pso"}> : () -> ()
    %cst_14 = arith.constant dense<0.000000e+00> : vector<16x8x32xf32>
    %10 = tpu.matmul %1, %9, %cst_14 {dimension_numbers = #tpu.dot_dimension_numbers<[2], [0], [0, 1], [1], [0, 0, 0, 1, 1, 1], [], []>} : vector<16x8x32xf32>, vector<32x32xf32>, vector<16x8x32xf32> -> vector<16x8x32xf32>
    "tpu.trace_stop"() : () -> ()
    %c0_15 = arith.constant 0 : index
    %c0_16 = arith.constant 0 : index
    %11 = vector.load %arg16[%c0_15, %c0_16] : memref<1x32xf32, #tpu.memory_space<vmem>>, vector<1x32xf32>
    %12 = vector.shape_cast %11 : vector<1x32xf32> to vector<1x1x32xf32>
    %13 = vector.broadcast %12 : vector<1x1x32xf32> to vector<16x8x32xf32>
    %14 = arith.addf %10, %13 : vector<16x8x32xf32>
    %c0_17 = arith.constant 0 : index
    %c0_18 = arith.constant 0 : index
    %15 = vector.load %arg17[%c0_17, %c0_18] : memref<32x32xf32, #tpu.memory_space<vmem>>, vector<32x32xf32>
    "tpu.trace_start"() <{level = 10 : i32, message = "psh,ho->pso"}> : () -> ()
    %cst_19 = arith.constant dense<0.000000e+00> : vector<16x8x32xf32>
    %16 = tpu.matmul %1, %15, %cst_19 {dimension_numbers = #tpu.dot_dimension_numbers<[2], [0], [0, 1], [1], [0, 0, 0, 1, 1, 1], [], []>} : vector<16x8x32xf32>, vector<32x32xf32>, vector<16x8x32xf32> -> vector<16x8x32xf32>
    "tpu.trace_stop"() : () -> ()
    %c0_20 = arith.constant 0 : index
    %c0_21 = arith.constant 0 : index
    %17 = vector.load %arg18[%c0_20, %c0_21] : memref<1x32xf32, #tpu.memory_space<vmem>>, vector<1x32xf32>
    %18 = vector.shape_cast %17 : vector<1x32xf32> to vector<1x1x32xf32>
    %19 = vector.broadcast %18 : vector<1x1x32xf32> to vector<16x8x32xf32>
    %20 = arith.addf %16, %19 : vector<16x8x32xf32>
    %21 = vector.broadcast %8 : vector<16x1x32xf32> to vector<16x8x32xf32>
    %22 = arith.mulf %21, %14 : vector<16x8x32xf32>
    %c0_22 = arith.constant 0 : index
    %c0_23 = arith.constant 0 : index
    %23 = vector.load %arg11[%c0_22, %c0_23] : memref<32x4xf32, #tpu.memory_space<vmem>>, vector<32x4xf32>
    "tpu.trace_start"() <{level = 10 : i32, message = "psh,hn->psn"}> : () -> ()
    %cst_24 = arith.constant dense<0.000000e+00> : vector<16x8x4xf32>
    %24 = tpu.matmul %22, %23, %cst_24 {dimension_numbers = #tpu.dot_dimension_numbers<[2], [0], [0, 1], [1], [0, 0, 0, 1, 1, 1], [], []>} : vector<16x8x32xf32>, vector<32x4xf32>, vector<16x8x4xf32> -> vector<16x8x4xf32>
    "tpu.trace_stop"() : () -> ()
    %cst_25 = arith.constant 0.353553385 : f32
    %25 = vector.broadcast %cst_25 : f32 to vector<16x8x4xf32>
    %26 = arith.mulf %24, %25 : vector<16x8x4xf32>
    %27 = vector.broadcast %2 : vector<16x8x1xf32> to vector<16x8x4xf32>
    %28 = arith.addf %26, %27 : vector<16x8x4xf32>
    %cst_26 = arith.constant dense<0xFF800000> : vector<16x4xf32>
    %29 = vector.multi_reduction <maximumf>, %28, %cst_26 [1] : vector<16x8x4xf32> to vector<16x4xf32>
    %cst_27 = arith.constant 0xFF800000 : f32
    %30 = vector.broadcast %cst_27 : f32 to vector<16x4xf32>
    %31 = arith.maximumf %30, %29 : vector<16x4xf32>
    %32 = vector.shape_cast %31 : vector<16x4xf32> to vector<16x1x4xf32>
    %33 = vector.broadcast %32 : vector<16x1x4xf32> to vector<16x8x4xf32>
    %34 = arith.subf %28, %33 : vector<16x8x4xf32>
    %35 = math.exp %34 : vector<16x8x4xf32>
    %cst_28 = arith.constant dense<0.000000e+00> : vector<16x4xf32>
    %36 = vector.multi_reduction <add>, %35, %cst_28 [1] : vector<16x8x4xf32> to vector<16x4xf32>
    %37 = vector.shape_cast %36 : vector<16x4xf32> to vector<16x1x4xf32>
    %38 = vector.broadcast %37 : vector<16x1x4xf32> to vector<16x8x4xf32>
    %39 = arith.divf %35, %38 : vector<16x8x4xf32>
    %c0_29 = arith.constant 0 : index
    %c0_30 = arith.constant 0 : index
    %40 = vector.load %arg12[%c0_29, %c0_30] : memref<4x32xf32, #tpu.memory_space<vmem>>, vector<4x32xf32>
    "tpu.trace_start"() <{level = 10 : i32, message = "psn,nh->psh"}> : () -> ()
    %cst_31 = arith.constant dense<0.000000e+00> : vector<16x8x32xf32>
    %41 = tpu.matmul %39, %40, %cst_31 {dimension_numbers = #tpu.dot_dimension_numbers<[2], [0], [0, 1], [1], [0, 0, 0, 1, 1, 1], [], []>} : vector<16x8x4xf32>, vector<4x32xf32>, vector<16x8x32xf32> -> vector<16x8x32xf32>
    "tpu.trace_stop"() : () -> ()
    %42 = arith.mulf %41, %20 : vector<16x8x32xf32>
    %cst_32 = arith.constant dense<0.000000e+00> : vector<16x32xf32>
    %43 = vector.multi_reduction <add>, %42, %cst_32 [1] : vector<16x8x32xf32> to vector<16x32xf32>
    %44 = vector.shape_cast %43 : vector<16x32xf32> to vector<16x1x32xf32>
    %c0_33 = arith.constant 0 : index
    %c0_34 = arith.constant 0 : index
    %45 = vector.load %arg19[%c0_33, %c0_34] : memref<32x32xf32, #tpu.memory_space<vmem>>, vector<32x32xf32>
    "tpu.trace_start"() <{level = 10 : i32, message = "psh,ho->pso"}> : () -> ()
    %cst_35 = arith.constant dense<0.000000e+00> : vector<16x1x32xf32>
    %46 = tpu.matmul %44, %45, %cst_35 {dimension_numbers = #tpu.dot_dimension_numbers<[2], [0], [0, 1], [1], [0, 0, 0, 1, 1, 1], [], []>} : vector<16x1x32xf32>, vector<32x32xf32>, vector<16x1x32xf32> -> vector<16x1x32xf32>
    "tpu.trace_stop"() : () -> ()
    %c0_36 = arith.constant 0 : index
    %c0_37 = arith.constant 0 : index
    %47 = vector.load %arg20[%c0_36, %c0_37] : memref<1x32xf32, #tpu.memory_space<vmem>>, vector<1x32xf32>
    %48 = vector.shape_cast %47 : vector<1x32xf32> to vector<1x1x32xf32>
    %49 = vector.broadcast %48 : vector<1x1x32xf32> to vector<16x1x32xf32>
    %50 = arith.addf %46, %49 : vector<16x1x32xf32>
    %51 = arith.addf %0, %50 : vector<16x1x32xf32>
    %c0_38 = arith.constant 0 : index
    %c0_39 = arith.constant 0 : index
    %52 = vector.load %arg21[%c0_38, %c0_39] : memref<1x32xf32, #tpu.memory_space<vmem>>, vector<1x32xf32>
    %c0_40 = arith.constant 0 : index
    %c0_41 = arith.constant 0 : index
    %53 = vector.load %arg22[%c0_40, %c0_41] : memref<1x32xf32, #tpu.memory_space<vmem>>, vector<1x32xf32>
    %cst_42 = arith.constant dense<0.000000e+00> : vector<16x1xf32>
    %54 = vector.multi_reduction <add>, %51, %cst_42 [2] : vector<16x1x32xf32> to vector<16x1xf32>
    %55 = vector.shape_cast %54 : vector<16x1xf32> to vector<16x1x1xf32>
    %cst_43 = arith.constant 3.200000e+01 : f32
    %56 = vector.broadcast %cst_43 : f32 to vector<16x1x1xf32>
    %57 = arith.divf %55, %56 : vector<16x1x1xf32>
    %58 = vector.broadcast %57 : vector<16x1x1xf32> to vector<16x1x32xf32>
    %59 = arith.subf %51, %58 : vector<16x1x32xf32>
    %60 = arith.mulf %59, %59 : vector<16x1x32xf32>
    %cst_44 = arith.constant dense<0.000000e+00> : vector<16x1xf32>
    %61 = vector.multi_reduction <add>, %60, %cst_44 [2] : vector<16x1x32xf32> to vector<16x1xf32>
    %62 = vector.shape_cast %61 : vector<16x1xf32> to vector<16x1x1xf32>
    %cst_45 = arith.constant 3.200000e+01 : f32
    %63 = vector.broadcast %cst_45 : f32 to vector<16x1x1xf32>
    %64 = arith.divf %62, %63 : vector<16x1x1xf32>
    %65 = vector.broadcast %57 : vector<16x1x1xf32> to vector<16x1x32xf32>
    %66 = arith.subf %51, %65 : vector<16x1x32xf32>
    %cst_46 = arith.constant 9.99999974E-6 : f32
    %67 = vector.broadcast %cst_46 : f32 to vector<16x1x1xf32>
    %68 = arith.addf %64, %67 : vector<16x1x1xf32>
    %69 = math.rsqrt %68 : vector<16x1x1xf32>
    %70 = vector.broadcast %69 : vector<16x1x1xf32> to vector<16x1x32xf32>
    %71 = arith.mulf %66, %70 : vector<16x1x32xf32>
    %72 = vector.shape_cast %52 : vector<1x32xf32> to vector<1x1x32xf32>
    %73 = vector.broadcast %72 : vector<1x1x32xf32> to vector<16x1x32xf32>
    %74 = arith.mulf %71, %73 : vector<16x1x32xf32>
    %75 = vector.shape_cast %53 : vector<1x32xf32> to vector<1x1x32xf32>
    %76 = vector.broadcast %75 : vector<1x1x32xf32> to vector<16x1x32xf32>
    %77 = arith.addf %74, %76 : vector<16x1x32xf32>
    %c0_47 = arith.constant 0 : index
    %c0_48 = arith.constant 0 : index
    %78 = vector.load %arg23[%c0_47, %c0_48] : memref<32x1024xf32, #tpu.memory_space<vmem>>, vector<32x1024xf32>
    "tpu.trace_start"() <{level = 10 : i32, message = "psh,hf->psf"}> : () -> ()
    %cst_49 = arith.constant dense<0.000000e+00> : vector<16x1x1024xf32>
    %79 = tpu.matmul %77, %78, %cst_49 {dimension_numbers = #tpu.dot_dimension_numbers<[2], [0], [0, 1], [1], [0, 0, 0, 1, 1, 1], [], []>} : vector<16x1x32xf32>, vector<32x1024xf32>, vector<16x1x1024xf32> -> vector<16x1x1024xf32>
    "tpu.trace_stop"() : () -> ()
    %c0_50 = arith.constant 0 : index
    %c0_51 = arith.constant 0 : index
    %80 = vector.load %arg24[%c0_50, %c0_51] : memref<1x1024xf32, #tpu.memory_space<vmem>>, vector<1x1024xf32>
    %81 = vector.shape_cast %80 : vector<1x1024xf32> to vector<1x1x1024xf32>
    %82 = vector.broadcast %81 : vector<1x1x1024xf32> to vector<16x1x1024xf32>
    %83 = arith.addf %79, %82 : vector<16x1x1024xf32>
    %cst_52 = arith.constant 5.000000e-01 : f32
    %84 = vector.broadcast %cst_52 : f32 to vector<16x1x1024xf32>
    %85 = arith.mulf %84, %83 : vector<16x1x1024xf32>
    %cst_53 = arith.constant 0.707106769 : f32
    %86 = vector.broadcast %cst_53 : f32 to vector<16x1x1024xf32>
    %87 = arith.mulf %83, %86 : vector<16x1x1024xf32>
    %88 = math.erf %87 : vector<16x1x1024xf32>
    %cst_54 = arith.constant 1.000000e+00 : f32
    %89 = vector.broadcast %cst_54 : f32 to vector<16x1x1024xf32>
    %90 = arith.addf %89, %88 : vector<16x1x1024xf32>
    %91 = arith.mulf %85, %90 : vector<16x1x1024xf32>
    %c0_55 = arith.constant 0 : index
    %c0_56 = arith.constant 0 : index
    %92 = vector.load %arg25[%c0_55, %c0_56] : memref<1024x32xf32, #tpu.memory_space<vmem>>, vector<1024x32xf32>
    "tpu.trace_start"() <{level = 10 : i32, message = "psf,fh->psh"}> : () -> ()
    %cst_57 = arith.constant dense<0.000000e+00> : vector<16x1x32xf32>
    %93 = tpu.matmul %91, %92, %cst_57 {dimension_numbers = #tpu.dot_dimension_numbers<[2], [0], [0, 1], [1], [0, 0, 0, 1, 1, 1], [], []>} : vector<16x1x1024xf32>, vector<1024x32xf32>, vector<16x1x32xf32> -> vector<16x1x32xf32>
    "tpu.trace_stop"() : () -> ()
    %c0_58 = arith.constant 0 : index
    %c0_59 = arith.constant 0 : index
    %94 = vector.load %arg26[%c0_58, %c0_59] : memref<1x32xf32, #tpu.memory_space<vmem>>, vector<1x32xf32>
    %95 = vector.shape_cast %94 : vector<1x32xf32> to vector<1x1x32xf32>
    %96 = vector.broadcast %95 : vector<1x1x32xf32> to vector<16x1x32xf32>
    %97 = arith.addf %93, %96 : vector<16x1x32xf32>
    %98 = arith.addf %77, %97 : vector<16x1x32xf32>
    %c0_60 = arith.constant 0 : index
    %c0_61 = arith.constant 0 : index
    %99 = vector.load %arg27[%c0_60, %c0_61] : memref<1x32xf32, #tpu.memory_space<vmem>>, vector<1x32xf32>
    %c0_62 = arith.constant 0 : index
    %c0_63 = arith.constant 0 : index
    %100 = vector.load %arg28[%c0_62, %c0_63] : memref<1x32xf32, #tpu.memory_space<vmem>>, vector<1x32xf32>
    %cst_64 = arith.constant dense<0.000000e+00> : vector<16x1xf32>
    %101 = vector.multi_reduction <add>, %98, %cst_64 [2] : vector<16x1x32xf32> to vector<16x1xf32>
    %102 = vector.shape_cast %101 : vector<16x1xf32> to vector<16x1x1xf32>
    %cst_65 = arith.constant 3.200000e+01 : f32
    %103 = vector.broadcast %cst_65 : f32 to vector<16x1x1xf32>
    %104 = arith.divf %102, %103 : vector<16x1x1xf32>
    %105 = vector.broadcast %104 : vector<16x1x1xf32> to vector<16x1x32xf32>
    %106 = arith.subf %98, %105 : vector<16x1x32xf32>
    %107 = arith.mulf %106, %106 : vector<16x1x32xf32>
    %cst_66 = arith.constant dense<0.000000e+00> : vector<16x1xf32>
    %108 = vector.multi_reduction <add>, %107, %cst_66 [2] : vector<16x1x32xf32> to vector<16x1xf32>
    %109 = vector.shape_cast %108 : vector<16x1xf32> to vector<16x1x1xf32>
    %cst_67 = arith.constant 3.200000e+01 : f32
    %110 = vector.broadcast %cst_67 : f32 to vector<16x1x1xf32>
    %111 = arith.divf %109, %110 : vector<16x1x1xf32>
    %112 = vector.broadcast %104 : vector<16x1x1xf32> to vector<16x1x32xf32>
    %113 = arith.subf %98, %112 : vector<16x1x32xf32>
    %cst_68 = arith.constant 9.99999974E-6 : f32
    %114 = vector.broadcast %cst_68 : f32 to vector<16x1x1xf32>
    %115 = arith.addf %111, %114 : vector<16x1x1xf32>
    %116 = math.rsqrt %115 : vector<16x1x1xf32>
    %117 = vector.broadcast %116 : vector<16x1x1xf32> to vector<16x1x32xf32>
    %118 = arith.mulf %113, %117 : vector<16x1x32xf32>
    %119 = vector.shape_cast %99 : vector<1x32xf32> to vector<1x1x32xf32>
    %120 = vector.broadcast %119 : vector<1x1x32xf32> to vector<16x1x32xf32>
    %121 = arith.mulf %118, %120 : vector<16x1x32xf32>
    %122 = vector.shape_cast %100 : vector<1x32xf32> to vector<1x1x32xf32>
    %123 = vector.broadcast %122 : vector<1x1x32xf32> to vector<16x1x32xf32>
    %124 = arith.addf %121, %123 : vector<16x1x32xf32>
    %c0_69 = arith.constant 0 : index
    %c0_70 = arith.constant 0 : index
    %125 = vector.load %arg29[%c0_69, %c0_70] : memref<1x32xf32, #tpu.memory_space<vmem>>, vector<1x32xf32>
    %126 = vector.shape_cast %125 : vector<1x32xf32> to vector<1x1x32xf32>
    %127 = vector.broadcast %126 : vector<1x1x32xf32> to vector<16x1x32xf32>
    %128 = arith.mulf %124, %127 : vector<16x1x32xf32>
    %cst_71 = arith.constant dense<0.000000e+00> : vector<16x1xf32>
    %129 = vector.multi_reduction <add>, %128, %cst_71 [2] : vector<16x1x32xf32> to vector<16x1xf32>
    %c0_72 = arith.constant 0 : index
    %c0_73 = arith.constant 0 : index
    %130 = vector.load %arg30[%c0_72, %c0_73] : memref<1x1xf32, #tpu.memory_space<vmem>>, vector<1x1xf32>
    %131 = vector.broadcast %130 : vector<1x1xf32> to vector<16x1xf32>
    %132 = arith.addf %129, %131 : vector<16x1xf32>
    %c0_74 = arith.constant 0 : index
    %c0_75 = arith.constant 0 : index
    %133 = vector.load %arg31[%c0_74, %c0_75] : memref<1x32xf32, #tpu.memory_space<vmem>>, vector<1x32xf32>
    %134 = vector.shape_cast %133 : vector<1x32xf32> to vector<1x1x32xf32>
    %135 = vector.broadcast %134 : vector<1x1x32xf32> to vector<16x1x32xf32>
    %136 = arith.mulf %124, %135 : vector<16x1x32xf32>
    %cst_76 = arith.constant dense<0.000000e+00> : vector<16x1xf32>
    %137 = vector.multi_reduction <add>, %136, %cst_76 [2] : vector<16x1x32xf32> to vector<16x1xf32>
    %c0_77 = arith.constant 0 : index
    %c0_78 = arith.constant 0 : index
    %138 = vector.load %arg32[%c0_77, %c0_78] : memref<1x1xf32, #tpu.memory_space<vmem>>, vector<1x1xf32>
    %139 = vector.broadcast %138 : vector<1x1xf32> to vector<16x1xf32>
    %140 = arith.addf %137, %139 : vector<16x1xf32>
    %cst_79 = arith.constant 2.000000e+01 : f32
    %141 = vector.broadcast %cst_79 : f32 to vector<16x1xf32>
    %142 = arith.mulf %132, %141 : vector<16x1xf32>
    %cst_80 = arith.constant dense<0xFF800000> : vector<1xf32>
    %143 = vector.multi_reduction <maximumf>, %142, %cst_80 [0] : vector<16x1xf32> to vector<1xf32>
    %144 = vector.shape_cast %143 : vector<1xf32> to vector<1x1xf32>
    %145 = vector.broadcast %144 : vector<1x1xf32> to vector<16x1xf32>
    %146 = arith.subf %142, %145 : vector<16x1xf32>
    %147 = math.exp %146 : vector<16x1xf32>
    %c0_81 = arith.constant 0 : index
    %c0_82 = arith.constant 0 : index
    %148 = vector.load %arg7[%c0_81, %c0_82] : memref<16x1xf32, #tpu.memory_space<vmem>>, vector<16x1xf32>
    %149 = arith.mulf %148, %147 : vector<16x1xf32>
    %c0_83 = arith.constant 0 : index
    %c0_84 = arith.constant 0 : index
    %150 = vector.load %arg8[%c0_83, %c0_84] : memref<4x16xf32, #tpu.memory_space<vmem>>, vector<4x16xf32>
    %c0_85 = arith.constant 0 : index
    %c0_86 = arith.constant 0 : index
    %151 = vector.load %arg9[%c0_85, %c0_86] : memref<4x16xf32, #tpu.memory_space<vmem>>, vector<4x16xf32>
    %cst_87 = arith.constant dense<0.000000e+00> : vector<4x1xf32>
    %152 = tpu.matmul %150, %147, %cst_87 {dimension_numbers = #tpu.dot_dimension_numbers<[1], [0], [0], [1], [0, 0, 1, 1], [], []>} : vector<4x16xf32>, vector<16x1xf32>, vector<4x1xf32> -> vector<4x1xf32>
    %cst_88 = arith.constant dense<0.000000e+00> : vector<4x1xf32>
    %153 = tpu.matmul %150, %149, %cst_88 {dimension_numbers = #tpu.dot_dimension_numbers<[1], [0], [0], [1], [0, 0, 1, 1], [], []>} : vector<4x16xf32>, vector<16x1xf32>, vector<4x1xf32> -> vector<4x1xf32>
    %cst_89 = arith.constant dense<0.000000e+00> : vector<4x1xf32>
    %154 = tpu.matmul %151, %147, %cst_89 {dimension_numbers = #tpu.dot_dimension_numbers<[1], [0], [0], [1], [0, 0, 1, 1], [], []>} : vector<4x16xf32>, vector<16x1xf32>, vector<4x1xf32> -> vector<4x1xf32>
    %cst_90 = arith.constant dense<0.000000e+00> : vector<4x1xf32>
    %155 = tpu.matmul %151, %149, %cst_90 {dimension_numbers = #tpu.dot_dimension_numbers<[1], [0], [0], [1], [0, 0, 1, 1], [], []>} : vector<4x16xf32>, vector<16x1xf32>, vector<4x1xf32> -> vector<4x1xf32>
    %156 = arith.divf %153, %152 : vector<4x1xf32>
    %157 = math.log %156 : vector<4x1xf32>
    %cst_91 = arith.constant dense<0.000000e+00> : vector<1xf32>
    %158 = vector.multi_reduction <add>, %157, %cst_91 [0] : vector<4x1xf32> to vector<1xf32>
    %159 = vector.shape_cast %158 : vector<1xf32> to vector<1x1xf32>
    %160 = arith.divf %155, %154 : vector<4x1xf32>
    %161 = math.log %160 : vector<4x1xf32>
    %cst_92 = arith.constant dense<0.000000e+00> : vector<1xf32>
    %162 = vector.multi_reduction <add>, %161, %cst_92 [0] : vector<4x1xf32> to vector<1xf32>
    %163 = vector.shape_cast %162 : vector<1xf32> to vector<1x1xf32>
    %164 = arith.addf %159, %163 : vector<1x1xf32>
    %cst_93 = arith.constant 0.000000e+00 : f32
    %165 = vector.broadcast %cst_93 : f32 to vector<1x1xf32>
    %166 = arith.subf %165, %164 : vector<1x1xf32>
    %c0_94 = arith.constant 0 : index
    %c0_95 = arith.constant 0 : index
    %167 = vector.load %arg10[%c0_94, %c0_95] : memref<4x16xf32, #tpu.memory_space<vmem>>, vector<4x16xf32>
    %cst_96 = arith.constant dense<0.000000e+00> : vector<4x1xf32>
    %168 = tpu.matmul %167, %132, %cst_96 {dimension_numbers = #tpu.dot_dimension_numbers<[1], [0], [0], [1], [0, 0, 1, 1], [], []>} : vector<4x16xf32>, vector<16x1xf32>, vector<4x1xf32> -> vector<4x1xf32>
    %cst_97 = arith.constant dense<0.000000e+00> : vector<4x1xf32>
    %169 = tpu.matmul %167, %140, %cst_97 {dimension_numbers = #tpu.dot_dimension_numbers<[1], [0], [0], [1], [0, 0, 1, 1], [], []>} : vector<4x16xf32>, vector<16x1xf32>, vector<4x1xf32> -> vector<4x1xf32>
    %170 = arith.maximumf %169, %168 : vector<4x1xf32>
    %171 = arith.subf %169, %170 : vector<4x1xf32>
    %172 = math.exp %171 : vector<4x1xf32>
    %173 = arith.subf %168, %170 : vector<4x1xf32>
    %174 = math.exp %173 : vector<4x1xf32>
    %175 = arith.addf %172, %174 : vector<4x1xf32>
    %176 = math.log %175 : vector<4x1xf32>
    %177 = arith.addf %170, %176 : vector<4x1xf32>
    %178 = arith.subf %177, %168 : vector<4x1xf32>
    %cst_98 = arith.constant dense<0.000000e+00> : vector<1xf32>
    %179 = vector.multi_reduction <add>, %178, %cst_98 [0] : vector<4x1xf32> to vector<1xf32>
    %180 = vector.shape_cast %179 : vector<1xf32> to vector<1x1xf32>
    %cst_99 = arith.constant 2.500000e-01 : f32
    %181 = vector.broadcast %cst_99 : f32 to vector<1x1xf32>
    %182 = arith.mulf %180, %181 : vector<1x1xf32>
    %c0_100 = arith.constant 0 : index
    %c0_101 = arith.constant 0 : index
    %183 = vector.load %arg4[%c0_100, %c0_101] : memref<4x32xf32, #tpu.memory_space<vmem>>, vector<4x32xf32>
    %c0_102 = arith.constant 0 : index
    %c0_103 = arith.constant 0 : index
    %184 = vector.load %arg5[%c0_102, %c0_103] : memref<4x32xf32, #tpu.memory_space<vmem>>, vector<4x32xf32>
    %c0_104 = arith.constant 0 : index
    %c0_105 = arith.constant 0 : index
    %185 = vector.load %arg6[%c0_104, %c0_105] : memref<4x4xf32, #tpu.memory_space<vmem>>, vector<4x4xf32>
    %cst_106 = arith.constant dense<0.000000e+00> : vector<4x4xf32>
    %186 = tpu.matmul %183, %184, %cst_106 {dimension_numbers = #tpu.dot_dimension_numbers<[1], [1], [0], [0], [0, 0, 1, 0], [], []>} : vector<4x32xf32>, vector<4x32xf32>, vector<4x4xf32> -> vector<4x4xf32>
    %187 = arith.mulf %183, %183 : vector<4x32xf32>
    %cst_107 = arith.constant dense<0.000000e+00> : vector<4xf32>
    %188 = vector.multi_reduction <add>, %187, %cst_107 [1] : vector<4x32xf32> to vector<4xf32>
    %189 = vector.shape_cast %188 : vector<4xf32> to vector<4x1xf32>
    %190 = math.sqrt %189 : vector<4x1xf32>
    %cst_108 = arith.constant 9.99999993E-9 : f32
    %191 = vector.broadcast %cst_108 : f32 to vector<4x1xf32>
    %192 = arith.maximumf %190, %191 : vector<4x1xf32>
    %193 = arith.mulf %184, %184 : vector<4x32xf32>
    %cst_109 = arith.constant dense<0.000000e+00> : vector<4xf32>
    %194 = vector.multi_reduction <add>, %193, %cst_109 [1] : vector<4x32xf32> to vector<4xf32>
    %195 = vector.shape_cast %194 : vector<4xf32> to vector<4x1xf32>
    %196 = math.sqrt %195 : vector<4x1xf32>
    %cst_110 = arith.constant 9.99999993E-9 : f32
    %197 = vector.broadcast %cst_110 : f32 to vector<4x1xf32>
    %198 = arith.maximumf %196, %197 : vector<4x1xf32>
    %cst_111 = arith.constant dense<0.000000e+00> : vector<4x4xf32>
    %199 = tpu.matmul %192, %198, %cst_111 {dimension_numbers = #tpu.dot_dimension_numbers<[1], [1], [0], [0], [0, 0, 1, 0], [], []>} : vector<4x1xf32>, vector<4x1xf32>, vector<4x4xf32> -> vector<4x4xf32>
    %200 = arith.divf %186, %199 : vector<4x4xf32>
    %cst_112 = arith.constant 2.000000e+01 : f32
    %201 = vector.broadcast %cst_112 : f32 to vector<4x4xf32>
    %202 = arith.mulf %200, %201 : vector<4x4xf32>
    %cst_113 = arith.constant dense<0xFF800000> : vector<4xf32>
    %203 = vector.multi_reduction <maximumf>, %202, %cst_113 [1] : vector<4x4xf32> to vector<4xf32>
    %204 = vector.shape_cast %203 : vector<4xf32> to vector<4x1xf32>
    %205 = vector.broadcast %204 : vector<4x1xf32> to vector<4x4xf32>
    %206 = arith.subf %202, %205 : vector<4x4xf32>
    %207 = math.exp %206 : vector<4x4xf32>
    %208 = arith.mulf %185, %207 : vector<4x4xf32>
    %cst_114 = arith.constant dense<0.000000e+00> : vector<4xf32>
    %209 = vector.multi_reduction <add>, %208, %cst_114 [1] : vector<4x4xf32> to vector<4xf32>
    %210 = vector.shape_cast %209 : vector<4xf32> to vector<4x1xf32>
    %cst_115 = arith.constant dense<0.000000e+00> : vector<4xf32>
    %211 = vector.multi_reduction <add>, %207, %cst_115 [1] : vector<4x4xf32> to vector<4xf32>
    %212 = vector.shape_cast %211 : vector<4xf32> to vector<4x1xf32>
    %213 = arith.divf %210, %212 : vector<4x1xf32>
    %214 = math.log %213 : vector<4x1xf32>
    %cst_116 = arith.constant dense<0.000000e+00> : vector<1xf32>
    %215 = vector.multi_reduction <add>, %214, %cst_116 [0] : vector<4x1xf32> to vector<1xf32>
    %216 = vector.shape_cast %215 : vector<1xf32> to vector<1x1xf32>
    %cst_117 = arith.constant 0.000000e+00 : f32
    %217 = vector.broadcast %cst_117 : f32 to vector<1x1xf32>
    %218 = arith.subf %217, %216 : vector<1x1xf32>
    %cst_118 = arith.constant dense<0xFF800000> : vector<4xf32>
    %219 = vector.multi_reduction <maximumf>, %202, %cst_118 [0] : vector<4x4xf32> to vector<4xf32>
    %220 = vector.shape_cast %219 : vector<4xf32> to vector<1x4xf32>
    %221 = vector.broadcast %220 : vector<1x4xf32> to vector<4x4xf32>
    %222 = arith.subf %202, %221 : vector<4x4xf32>
    %223 = math.exp %222 : vector<4x4xf32>
    %224 = arith.mulf %185, %223 : vector<4x4xf32>
    %cst_119 = arith.constant dense<0.000000e+00> : vector<4xf32>
    %225 = vector.multi_reduction <add>, %224, %cst_119 [0] : vector<4x4xf32> to vector<4xf32>
    %226 = vector.shape_cast %225 : vector<4xf32> to vector<1x4xf32>
    %cst_120 = arith.constant dense<0.000000e+00> : vector<4xf32>
    %227 = vector.multi_reduction <add>, %223, %cst_120 [0] : vector<4x4xf32> to vector<4xf32>
    %228 = vector.shape_cast %227 : vector<4xf32> to vector<1x4xf32>
    %229 = arith.divf %226, %228 : vector<1x4xf32>
    %230 = math.log %229 : vector<1x4xf32>
    %cst_121 = arith.constant dense<0.000000e+00> : vector<1xf32>
    %231 = vector.multi_reduction <add>, %230, %cst_121 [1] : vector<1x4xf32> to vector<1xf32>
    %232 = vector.shape_cast %231 : vector<1xf32> to vector<1x1xf32>
    %cst_122 = arith.constant 0.000000e+00 : f32
    %233 = vector.broadcast %cst_122 : f32 to vector<1x1xf32>
    %234 = arith.subf %233, %232 : vector<1x1xf32>
    %235 = arith.addf %218, %234 : vector<1x1xf32>
    %236 = arith.addf %235, %166 : vector<1x1xf32>
    %237 = arith.addf %236, %182 : vector<1x1xf32>
    %c0_123 = arith.constant 0 : index
    %c0_124 = arith.constant 0 : index
    %238 = vector.load %arg33[%c0_123, %c0_124] : memref<1x1xf32, #tpu.memory_space<vmem>>, vector<1x1xf32>
    tpu.vector_store %arg33[%c0_123, %c0_124], %237 {strides = array<i32>} : memref<1x1xf32, #tpu.memory_space<vmem>>, vector<1x1xf32>,
    return
  }
  func.func @transform_0(%arg0: i32) -> (i32, i32, i32) {
    %c0_i32 = arith.constant 0 : i32
    %c0_i32_0 = arith.constant 0 : i32
    %c0_i32_1 = arith.constant 0 : i32
    %c0_i32_2 = arith.constant 0 : i32
    return %c0_i32, %c0_i32_0, %c0_i32_1 : i32, i32, i32
  }
  func.func @transform_1(%arg0: i32) -> (i32, i32, i32) {
    %c0_i32 = arith.constant 0 : i32
    %c0_i32_0 = arith.constant 0 : i32
    %c0_i32_1 = arith.constant 0 : i32
    %c0_i32_2 = arith.constant 0 : i32
    return %c0_i32, %c0_i32_0, %c0_i32_1 : i32, i32, i32
  }
  func.func @transform_2(%arg0: i32) -> (i32, i32, i32) {
    %c0_i32 = arith.constant 0 : i32
    %c0_i32_0 = arith.constant 0 : i32
    %c0_i32_1 = arith.constant 0 : i32
    %c0_i32_2 = arith.constant 0 : i32
    return %c0_i32, %c0_i32_0, %c0_i32_1 : i32, i32, i32
  }
  func.func @transform_3(%arg0: i32) -> (i32, i32) {
    %c0_i32 = arith.constant 0 : i32
    %c0_i32_0 = arith.constant 0 : i32
    %c0_i32_1 = arith.constant 0 : i32
    return %c0_i32, %c0_i32_0 : i32, i32
  }
  func.func @transform_4(%arg0: i32) -> (i32, i32) {
    %c0_i32 = arith.constant 0 : i32
    %c0_i32_0 = arith.constant 0 : i32
    %c0_i32_1 = arith.constant 0 : i32
    return %c0_i32, %c0_i32_0 : i32, i32
  }
  func.func @transform_5(%arg0: i32) -> (i32, i32) {
    %c0_i32 = arith.constant 0 : i32
    %c0_i32_0 = arith.constant 0 : i32
    %c0_i32_1 = arith.constant 0 : i32
    return %c0_i32, %c0_i32_0 : i32, i32
  }
  func.func @transform_6(%arg0: i32) -> (i32, i32) {
    %c0_i32 = arith.constant 0 : i32
    %c0_i32_0 = arith.constant 0 : i32
    %c0_i32_1 = arith.constant 0 : i32
    return %c0_i32, %c0_i32_0 : i32, i32
  }
  func.func @transform_7(%arg0: i32) -> (i32, i32) {
    %c0_i32 = arith.constant 0 : i32
    %c0_i32_0 = arith.constant 0 : i32
    %c0_i32_1 = arith.constant 0 : i32
    return %c0_i32, %c0_i32_0 : i32, i32
  }
  func.func @transform_8(%arg0: i32) -> (i32, i32) {
    %c0_i32 = arith.constant 0 : i32
    %c0_i32_0 = arith.constant 0 : i32
    %c0_i32_1 = arith.constant 0 : i32
    return %c0_i32, %c0_i32_0 : i32, i32
  }
  func.func @transform_9(%arg0: i32) -> (i32, i32) {
    %c0_i32 = arith.constant 0 : i32
    %c0_i32_0 = arith.constant 0 : i32
    %c0_i32_1 = arith.constant 0 : i32
    return %c0_i32, %c0_i32_0 : i32, i32
  }
  func.func @transform_10(%arg0: i32) -> (i32, i32) {
    %c0_i32 = arith.constant 0 : i32
    %c0_i32_0 = arith.constant 0 : i32
    %c0_i32_1 = arith.constant 0 : i32
    return %c0_i32, %c0_i32_0 : i32, i32
  }
  func.func @transform_11(%arg0: i32) -> (i32, i32) {
    %c0_i32 = arith.constant 0 : i32
    %c0_i32_0 = arith.constant 0 : i32
    %c0_i32_1 = arith.constant 0 : i32
    return %c0_i32, %c0_i32_0 : i32, i32
  }
  func.func @transform_12(%arg0: i32) -> (i32, i32) {
    %c0_i32 = arith.constant 0 : i32
    %c0_i32_0 = arith.constant 0 : i32
    %c0_i32_1 = arith.constant 0 : i32
    return %c0_i32, %c0_i32_0 : i32, i32
  }
  func.func @transform_13(%arg0: i32) -> (i32, i32) {
    %c0_i32 = arith.constant 0 : i32
    %c0_i32_0 = arith.constant 0 : i32
    %c0_i32_1 = arith.constant 0 : i32
    return %c0_i32, %c0_i32_0 : i32, i32
  }
  func.func @transform_14(%arg0: i32) -> (i32, i32) {
    %c0_i32 = arith.constant 0 : i32
    %c0_i32_0 = arith.constant 0 : i32
    %c0_i32_1 = arith.constant 0 : i32
    return %c0_i32, %c0_i32_0 : i32, i32
  }
  func.func @transform_15(%arg0: i32) -> (i32, i32) {
    %c0_i32 = arith.constant 0 : i32
    %c0_i32_0 = arith.constant 0 : i32
    %c0_i32_1 = arith.constant 0 : i32
    return %c0_i32, %c0_i32_0 : i32, i32
  }
  func.func @transform_16(%arg0: i32) -> (i32, i32) {
    %c0_i32 = arith.constant 0 : i32
    %c0_i32_0 = arith.constant 0 : i32
    %c0_i32_1 = arith.constant 0 : i32
    return %c0_i32, %c0_i32_0 : i32, i32
  }
  func.func @transform_17(%arg0: i32) -> (i32, i32) {
    %c0_i32 = arith.constant 0 : i32
    %c0_i32_0 = arith.constant 0 : i32
    %c0_i32_1 = arith.constant 0 : i32
    return %c0_i32, %c0_i32_0 : i32, i32
  }
  func.func @transform_18(%arg0: i32) -> (i32, i32) {
    %c0_i32 = arith.constant 0 : i32
    %c0_i32_0 = arith.constant 0 : i32
    %c0_i32_1 = arith.constant 0 : i32
    return %c0_i32, %c0_i32_0 : i32, i32
  }
  func.func @transform_19(%arg0: i32) -> (i32, i32) {
    %c0_i32 = arith.constant 0 : i32
    %c0_i32_0 = arith.constant 0 : i32
    %c0_i32_1 = arith.constant 0 : i32
    return %c0_i32, %c0_i32_0 : i32, i32
  }
  func.func @transform_20(%arg0: i32) -> (i32, i32) {
    %c0_i32 = arith.constant 0 : i32
    %c0_i32_0 = arith.constant 0 : i32
    %c0_i32_1 = arith.constant 0 : i32
    return %c0_i32, %c0_i32_0 : i32, i32
  }
  func.func @transform_21(%arg0: i32) -> (i32, i32) {
    %c0_i32 = arith.constant 0 : i32
    %c0_i32_0 = arith.constant 0 : i32
    %c0_i32_1 = arith.constant 0 : i32
    return %c0_i32, %c0_i32_0 : i32, i32
  }
  func.func @transform_22(%arg0: i32) -> (i32, i32) {
    %c0_i32 = arith.constant 0 : i32
    %c0_i32_0 = arith.constant 0 : i32
    %c0_i32_1 = arith.constant 0 : i32
    return %c0_i32, %c0_i32_0 : i32, i32
  }
  func.func @transform_23(%arg0: i32) -> (i32, i32) {
    %c0_i32 = arith.constant 0 : i32
    %c0_i32_0 = arith.constant 0 : i32
    %c0_i32_1 = arith.constant 0 : i32
    return %c0_i32, %c0_i32_0 : i32, i32
  }
  func.func @transform_24(%arg0: i32) -> (i32, i32) {
    %c0_i32 = arith.constant 0 : i32
    %c0_i32_0 = arith.constant 0 : i32
    %c0_i32_1 = arith.constant 0 : i32
    return %c0_i32, %c0_i32_0 : i32, i32
  }
  func.func @transform_25(%arg0: i32) -> (i32, i32) {
    %c0_i32 = arith.constant 0 : i32
    %c0_i32_0 = arith.constant 0 : i32
    %c0_i32_1 = arith.constant 0 : i32
    return %c0_i32, %c0_i32_0 : i32, i32
  }
  func.func @transform_26(%arg0: i32) -> (i32, i32) {
    %c0_i32 = arith.constant 0 : i32
    %c0_i32_0 = arith.constant 0 : i32
    %c0_i32_1 = arith.constant 0 : i32
    return %c0_i32, %c0_i32_0 : i32, i32
  }
  func.func @transform_27(%arg0: i32) -> (i32, i32) {
    %c0_i32 = arith.constant 0 : i32
    %c0_i32_0 = arith.constant 0 : i32
    %c0_i32_1 = arith.constant 0 : i32
    return %c0_i32, %c0_i32_0 : i32, i32
  }
  func.func @transform_28(%arg0: i32) -> (i32, i32) {
    %c0_i32 = arith.constant 0 : i32
    %c0_i32_0 = arith.constant 0 : i32
    %c0_i32_1 = arith.constant 0 : i32
    return %c0_i32, %c0_i32_0 : i32, i32
  }
  func.func @transform_29(%arg0: i32) -> (i32, i32) {
    %c0_i32 = arith.constant 0 : i32
    %c0_i32_0 = arith.constant 0 : i32
    %c0_i32_1 = arith.constant 0 : i32
    return %c0_i32, %c0_i32_0 : i32, i32
  }
  func.func @transform_30(%arg0: i32) -> (i32, i32) {
    %c0_i32 = arith.constant 0 : i32
    %c0_i32_0 = arith.constant 0 : i32
    %c0_i32_1 = arith.constant 0 : i32
    return %c0_i32, %c0_i32_0 : i32, i32
  }
  func.func @transform_31(%arg0: i32) -> (i32, i32) {
    %c0_i32 = arith.constant 0 : i32
    %c0_i32_0 = arith.constant 0 : i32
    %c0_i32_1 = arith.constant 0 : i32
    return %c0_i32, %c0_i32_0 : i32, i32
  }
  func.func @transform_32(%arg0: i32) -> (i32, i32) {
    %c0_i32 = arith.constant 0 : i32
    %c0_i32_0 = arith.constant 0 : i32
    %c0_i32_1 = arith.constant 0 : i32
    return %c0_i32, %c0_i32_0 : i32, i32
  }
}

</mosaic_0001>

<llo_original>
// kernel: classifier_forward.4
$region0: #{classifier_forward.4}
  #allocation0 [shape = 'u32[]', space=smem, size = 0x4, offset = 0x4, fixed_abs, tag = 'smem constant byte address 0x4 - core index']
  #allocation1 [shape = 'u32[144,128]{1,0:T(1,128)}', space=vmem, size = 0x12000, scoped, tag = 'internal scratch']
  #allocation2 [shape = 'f32[1,1]{1,0:T(1,128)S(1)}', space=vmem, size = 0x200, scoped, tag = 'scoped memory for classifier_forward.4']
  %s0 = inlined_call_operand.vmem [shape: f32[4,8,64], index: 0, kind: input, shape index: {}]
  %s1 = inlined_call_operand.vmem [shape: f32[64,32], index: 1, kind: input, shape index: {}]
  %s2 = inlined_call_operand.vmem [shape: f32[1,32], index: 2, kind: input, shape index: {}]
  %s3 = inlined_call_operand.vmem [shape: f32[32,32], index: 3, kind: input, shape index: {}]
  %s4 = inlined_call_operand.vmem [shape: f32[1,32], index: 4, kind: input, shape index: {}]
  %s5 = inlined_call_operand.vmem [shape: f32[32,32], index: 5, kind: input, shape index: {}]
  %s6 = inlined_call_operand.vmem [shape: f32[1,32], index: 6, kind: input, shape index: {}]
  %s7 = inlined_call_operand.vmem [shape: f32[32,1], index: 7, kind: input, shape index: {}]
  %s8 = inlined_call_operand.<no memory space> [shape: f32[1,1], index: 8, kind: input, shape index: {}]
  %s9 = inlined_call_operand.vmem [shape: f32[32,32], index: 9, kind: input, shape index: {}]
  %s10 = inlined_call_operand.vmem [shape: f32[1,32], index: 10, kind: input, shape index: {}]
  %s11 = inlined_call_operand.vmem [shape: f32[4,8,32], index: 11, kind: output, shape index: {0}]
  %s12 = inlined_call_operand.vmem [shape: f32[4,32], index: 12, kind: output, shape index: {1}]
  %s13 = inlined_call_operand.hbm [shape: f32[4,32], index: 13, kind: output, shape index: {2}]
  %14 = xla_tuple %s11, %s12, %s13
  %s15 = sld [smem:[#allocation0]]
  $region70: #{classifier_forward.4} parent=0
    _
  %s17 = ssub.s32 1, %s15
  %s18 = scalar_select 0, %s17, %s15
  %v19 = vstv %s8
  %20 = vst [vmem:[#allocation2] sm:$0x1] %v19
  $region1: #{classifier_forward.4} parent=0
    #allocation3 [shape = 'u8[2048]{0}', space=vmem, size = 0x800, scoped, tag = 'output window, operand 2, single buffered']
    #allocation4 [shape = 's32[1]{0}', space=sflag, size = 0x4, scoped, tag = 'scoped memory for classifier_forward.4']
    %21 = vsyncpa [#allocation4], 0
    // Predicated region
    $region2: #{classifier_forward.4} parent=1 // pred_check
      _
    $region3: #{classifier_forward.4} parent=1 // pred_check_branch
      %23 = sbr.rel (0) target = $region5
    $region4: #{classifier_forward.4} parent=1 // pred_region
      _
    $region5: #{classifier_forward.4} parent=1 // pred_fallthru
      _
    // Predicated region
    $region6: #{classifier_forward.4} parent=1 // pred_check
      _
    $region7: #{classifier_forward.4} parent=1 // pred_check_branch
      %25 = sbr.rel (0) target = $region9
    $region8: #{classifier_forward.4} parent=1 // pred_region
      _
    $region9: #{classifier_forward.4} parent=1 // pred_fallthru
      _
    // Predicated region
    $region10: #{classifier_forward.4} parent=1 // pred_check
      _
    $region11: #{classifier_forward.4} parent=1 // pred_check_branch
      %27 = sbr.rel (0) target = $region13
    $region12: #{classifier_forward.4} parent=1 // pred_region
      _
    $region13: #{classifier_forward.4} parent=1 // pred_fallthru
      _
    // Predicated region
    $region14: #{classifier_forward.4} parent=1 // pred_check
      _
    $region15: #{classifier_forward.4} parent=1 // pred_check_branch
      %29 = sbr.rel (0) target = $region17
    $region16: #{classifier_forward.4} parent=1 // pred_region
      _
    $region17: #{classifier_forward.4} parent=1 // pred_fallthru
      _
    // Predicated region
    $region18: #{classifier_forward.4} parent=1 // pred_check
      _
    $region19: #{classifier_forward.4} parent=1 // pred_check_branch
      %31 = sbr.rel (0) target = $region21
    $region20: #{classifier_forward.4} parent=1 // pred_region
      _
    $region21: #{classifier_forward.4} parent=1 // pred_fallthru
      _
    // Predicated region
    $region22: #{classifier_forward.4} parent=1 // pred_check
      _
    $region23: #{classifier_forward.4} parent=1 // pred_check_branch
      %33 = sbr.rel (0) target = $region25
    $region24: #{classifier_forward.4} parent=1 // pred_region
      _
    $region25: #{classifier_forward.4} parent=1 // pred_fallthru
      _
    // Predicated region
    $region26: #{classifier_forward.4} parent=1 // pred_check
      _
    $region27: #{classifier_forward.4} parent=1 // pred_check_branch
      %35 = sbr.rel (0) target = $region29
    $region28: #{classifier_forward.4} parent=1 // pred_region
      _
    $region29: #{classifier_forward.4} parent=1 // pred_fallthru
      _
    // Predicated region
    $region30: #{classifier_forward.4} parent=1 // pred_check
      _
    $region31: #{classifier_forward.4} parent=1 // pred_check_branch
      %37 = sbr.rel (0) target = $region33
    $region32: #{classifier_forward.4} parent=1 // pred_region
      _
    $region33: #{classifier_forward.4} parent=1 // pred_fallthru
      _
    // Predicated region
    $region34: #{classifier_forward.4} parent=1 // pred_check
      _
    $region35: #{classifier_forward.4} parent=1 // pred_check_branch
      %39 = sbr.rel (0) target = $region37
    $region36: #{classifier_forward.4} parent=1 // pred_region
      _
    $region37: #{classifier_forward.4} parent=1 // pred_fallthru
      _
    // Predicated region
    $region38: #{classifier_forward.4} parent=1 // pred_check
      _
    $region39: #{classifier_forward.4} parent=1 // pred_check_branch
      %41 = sbr.rel (0) target = $region41
    $region40: #{classifier_forward.4} parent=1 // pred_region
      _
    $region41: #{classifier_forward.4} parent=1 // pred_fallthru
      _
    // Predicated region
    $region42: #{classifier_forward.4} parent=1 // pred_check
      _
    $region43: #{classifier_forward.4} parent=1 // pred_check_branch
      %43 = sbr.rel (0) target = $region45
    $region44: #{classifier_forward.4} parent=1 // pred_region
      _
    $region45: #{classifier_forward.4} parent=1 // pred_fallthru
      _
    %v44 = vld [vmem:[%s0] sm:$0xff]
    %v45 = vld [vmem:[%s0 + $0x8] sm:$0xff]
    %v46 = vld [vmem:[%s0 + $0x10] sm:$0xff]
    %v47 = vld [vmem:[%s0 + $0x18] sm:$0xff]
    %v48 = vld [vmem:[%s1] sm:$0xff]
    %v49 = vld [vmem:[%s1 + $0x8] sm:$0xff]
    %v50 = vld [vmem:[%s1 + $0x10] sm:$0xff]
    %v51 = vld [vmem:[%s1 + $0x18] sm:$0xff]
    %v52 = vld [vmem:[%s1 + $0x20] sm:$0xff]
    %v53 = vld [vmem:[%s1 + $0x28] sm:$0xff]
    %v54 = vld [vmem:[%s1 + $0x30] sm:$0xff]
    %v55 = vld [vmem:[%s1 + $0x38] sm:$0xff]
    %v56 = vld [vmem:[%s2] sm:$0x1]
    %v58 = vlaneseq
    %v59 = vshrl.u32 %v58, 7
    %v60 = vsub.s32 0, %v59
    %v61 = vrot.slane %v56, %v60
    %vm63 = vcmask 523264
    %v65 = vsel %vm63, %v44, 0
    %v68 = vsel %vm63, %v45, 0
    %v71 = vsel %vm63, %v46, 0
    %v74 = vsel %vm63, %v47, 0
    %76 = vmatprep.subr.mxu0 0.0
    %77 = vmatpush1.msra.mxu0 %v48
    %78 = vmatprep.subr.mxu0 0.0
    %79 = vmatpush1.msra.mxu0 %v49
    %80 = vmatprep.subr.mxu0 0.0
    %81 = vmatpush1.msra.mxu0 %v50
    %82 = vmatprep.subr.mxu0 0.0
    %83 = vmatpush1.msra.mxu0 %v51
    %84 = vmatprep.subr.mxu0 0.0
    %85 = vmatpush1.msra.mxu0 %v52
    %86 = vmatprep.subr.mxu0 0.0
    %87 = vmatpush1.msra.mxu0 %v53
    %88 = vmatprep.subr.mxu0 0.0
    %89 = vmatpush1.msra.mxu0 %v54
    %90 = vmatprep.subr.mxu0 0.0
    %91 = vmatpush1.msra.mxu0 %v55
    %92 = vmatprep.subr.mxu0 0.0
    %93 = vmatpush1.msra.mxu0 0.0
    %94 = vmatprep.subr.mxu0 0.0
    %95 = vmatpush1.msra.mxu0 0.0
    %96 = vmatprep.subr.mxu0 0.0
    %97 = vmatpush1.msra.mxu0 0.0
    %98 = vmatprep.subr.mxu0 0.0
    %99 = vmatpush1.msra.mxu0 0.0
    %100 = vmatprep.subr.mxu0 0.0
    %101 = vmatpush1.msra.mxu0 0.0
    %102 = vmatprep.subr.mxu0 0.0
    %103 = vmatpush1.msra.mxu0 0.0
    %104 = vmatprep.subr.mxu0 0.0
    %105 = vmatpush1.msra.mxu0 0.0
    %106 = vmatprep.subr.mxu0 0.0
    %107 = vmatpush1.msra.mxu0 0.0
    %108 = vmatprep.subr.mxu0 0.0
    %109 = vmatpush1.msra.mxu0 0.0
    %110 = vmatprep.subr.mxu0 0.0
    %111 = vmatpush1.msra.mxu0 0.0
    %112 = vmatprep.subr.mxu0 0.0
    %113 = vmatpush1.msra.mxu0 0.0
    %114 = vmatprep.subr.mxu0 0.0
    %115 = vmatpush1.msra.mxu0 0.0
    %116 = vmatprep.subr.mxu0 0.0
    %117 = vmatpush1.msra.mxu0 0.0
    %118 = vmatprep.subr.mxu0 0.0
    %119 = vmatpush1.msra.mxu0 0.0
    %120 = vmatprep.subr.mxu0 0.0
    %121 = vmatpush1.msra.mxu0 0.0
    %122 = vmatprep.subr.mxu0 0.0
    %123 = vmatpush1.msra.mxu0 0.0
    %124 = vmatprep.subr.mxu0 0.0
    %125 = vmatpush1.msra.mxu0 0.0
    %126 = vmatprep.subr.mxu0 0.0
    %127 = vmatpush1.msra.mxu0 0.0
    %128 = vmatprep.subr.mxu0 0.0
    %129 = vmatpush1.msra.mxu0 0.0
    %130 = vmatprep.subr.mxu0 0.0
    %131 = vmatpush1.msra.mxu0 0.0
    %132 = vmatprep.subr.mxu0 0.0
    %133 = vmatpush1.msra.mxu0 0.0
    %134 = vmatprep.subr.mxu0 0.0
    %135 = vmatpush1.msra.mxu0 0.0
    %136 = vmatprep.subr.mxu0 0.0
    %137 = vmatpush1.msra.mxu0 0.0
    %138 = vmatprep.subr.mxu0 0.0
    %139 = vmatpush1.msra.mxu0 0.0
    %140 = vmatprep.mubr.f32.mxu0 0.0
    %141 = vmatmul.mubr.f32.gmra.mrb[0].mxu0 %v65
    %v142 = vpop.f32.mrb[0].mxu0
    %v143 = vadd.f32 %v61, %v142
    %v144 = vpop.f32.mrb[0].mxu0
    %145 = vmatprep.mubr.f32.mxu0 0.0
    %146 = vmatmul.mubr.f32.gmra.mrb[0].mxu0 %v68
    %v147 = vpop.f32.mrb[0].mxu0
    %v148 = vadd.f32 %v61, %v147
    %v149 = vpop.f32.mrb[0].mxu0
    %150 = vmatprep.mubr.f32.mxu0 0.0
    %151 = vmatmul.mubr.f32.gmra.mrb[0].mxu0 %v71
    %v152 = vpop.f32.mrb[0].mxu0
    %v153 = vadd.f32 %v61, %v152
    %v154 = vpop.f32.mrb[0].mxu0
    %155 = vmatprep.mubr.f32.mxu0 0.0
    %156 = vmatmul.mubr.f32.gmra.mrb[0].mxu0 %v74
    %v157 = vpop.f32.mrb[0].mxu0
    %v158 = vadd.f32 %v61, %v157
    %v159 = vpop.f32.mrb[0].mxu0
    %160 = vdwg.mxu0
    %v161 = vmul.f32 %v143, 0.5
    %v162 = vmul.f32 %v148, 0.5
    %v163 = vmul.f32 %v153, 0.5
    %v164 = vmul.f32 %v158, 0.5
    %v165 = vmul.f32 %v143, 0.70710677
    %v166 = vmul.f32 %v148, 0.70710677
    %v167 = vmul.f32 %v153, 0.70710677
    %v168 = vmul.f32 %v158, 0.70710677
    %v169 = verf.f32.pop %v165
    %v170 = verf.f32.pop %v166
    %v171 = verf.f32.pop %v167
    %v172 = verf.f32.pop %v168
    %v173 = vadd.f32 %v169, 1.0
    %v174 = vadd.f32 %v170, 1.0
    %v175 = vadd.f32 %v171, 1.0
    %v176 = vadd.f32 %v172, 1.0
    %v177 = vmul.f32 %v161, %v173
    %v178 = vmul.f32 %v162, %v174
    %v179 = vmul.f32 %v163, %v175
    %v180 = vmul.f32 %v164, %v176
    %v181 = vld [vmem:[%s3] sm:$0xff]
    %v182 = vld [vmem:[%s3 + $0x8] sm:$0xff]
    %v183 = vld [vmem:[%s3 + $0x10] sm:$0xff]
    %v184 = vld [vmem:[%s3 + $0x18] sm:$0xff]
    %v185 = vld [vmem:[%s4] sm:$0x1]
    %v187 = vlaneseq
    %v188 = vshrl.u32 %v187, 7
    %v189 = vsub.s32 0, %v188
    %v190 = vrot.slane %v185, %v189
    %vm192 = vcmask 261120
    %v194 = vsel %vm192, %v177, 0
    %v197 = vsel %vm192, %v178, 0
    %v200 = vsel %vm192, %v179, 0
    %v203 = vsel %vm192, %v180, 0
    %205 = vmatprep.subr.mxu0 0.0
    %206 = vmatpush1.msra.mxu0 %v181
    %207 = vmatprep.subr.mxu0 0.0
    %208 = vmatpush1.msra.mxu0 %v182
    %209 = vmatprep.subr.mxu0 0.0
    %210 = vmatpush1.msra.mxu0 %v183
    %211 = vmatprep.subr.mxu0 0.0
    %212 = vmatpush1.msra.mxu0 %v184
    %213 = vmatprep.subr.mxu0 0.0
    %214 = vmatpush1.msra.mxu0 0.0
    %215 = vmatprep.subr.mxu0 0.0
    %216 = vmatpush1.msra.mxu0 0.0
    %217 = vmatprep.subr.mxu0 0.0
    %218 = vmatpush1.msra.mxu0 0.0
    %219 = vmatprep.subr.mxu0 0.0
    %220 = vmatpush1.msra.mxu0 0.0
    %221 = vmatprep.subr.mxu0 0.0
    %222 = vmatpush1.msra.mxu0 0.0
    %223 = vmatprep.subr.mxu0 0.0
    %224 = vmatpush1.msra.mxu0 0.0
    %225 = vmatprep.subr.mxu0 0.0
    %226 = vmatpush1.msra.mxu0 0.0
    %227 = vmatprep.subr.mxu0 0.0
    %228 = vmatpush1.msra.mxu0 0.0
    %229 = vmatprep.subr.mxu0 0.0
    %230 = vmatpush1.msra.mxu0 0.0
    %231 = vmatprep.subr.mxu0 0.0
    %232 = vmatpush1.msra.mxu0 0.0
    %233 = vmatprep.subr.mxu0 0.0
    %234 = vmatpush1.msra.mxu0 0.0
    %235 = vmatprep.subr.mxu0 0.0
    %236 = vmatpush1.msra.mxu0 0.0
    %237 = vmatprep.subr.mxu0 0.0
    %238 = vmatpush1.msra.mxu0 0.0
    %239 = vmatprep.subr.mxu0 0.0
    %240 = vmatpush1.msra.mxu0 0.0
    %241 = vmatprep.subr.mxu0 0.0
    %242 = vmatpush1.msra.mxu0 0.0
    %243 = vmatprep.subr.mxu0 0.0
    %244 = vmatpush1.msra.mxu0 0.0
    %245 = vmatprep.subr.mxu0 0.0
    %246 = vmatpush1.msra.mxu0 0.0
    %247 = vmatprep.subr.mxu0 0.0
    %248 = vmatpush1.msra.mxu0 0.0
    %249 = vmatprep.subr.mxu0 0.0
    %250 = vmatpush1.msra.mxu0 0.0
    %251 = vmatprep.subr.mxu0 0.0
    %252 = vmatpush1.msra.mxu0 0.0
    %253 = vmatprep.subr.mxu0 0.0
    %254 = vmatpush1.msra.mxu0 0.0
    %255 = vmatprep.subr.mxu0 0.0
    %256 = vmatpush1.msra.mxu0 0.0
    %257 = vmatprep.subr.mxu0 0.0
    %258 = vmatpush1.msra.mxu0 0.0
    %259 = vmatprep.subr.mxu0 0.0
    %260 = vmatpush1.msra.mxu0 0.0
    %261 = vmatprep.subr.mxu0 0.0
    %262 = vmatpush1.msra.mxu0 0.0
    %263 = vmatprep.subr.mxu0 0.0
    %264 = vmatpush1.msra.mxu0 0.0
    %265 = vmatprep.subr.mxu0 0.0
    %266 = vmatpush1.msra.mxu0 0.0
    %267 = vmatprep.subr.mxu0 0.0
    %268 = vmatpush1.msra.mxu0 0.0
    %269 = vmatprep.mubr.f32.mxu0 0.0
    %270 = vmatmul.mubr.f32.gmra.mrb[0].mxu0 %v194
    %v271 = vpop.f32.mrb[0].mxu0
    %v272 = vadd.f32 %v190, %v271
    %v273 = vpop.f32.mrb[0].mxu0
    %274 = vmatprep.mubr.f32.mxu0 0.0
    %275 = vmatmul.mubr.f32.gmra.mrb[0].mxu0 %v197
    %v276 = vpop.f32.mrb[0].mxu0
    %v277 = vadd.f32 %v190, %v276
    %v278 = vpop.f32.mrb[0].mxu0
    %279 = vmatprep.mubr.f32.mxu0 0.0
    %280 = vmatmul.mubr.f32.gmra.mrb[0].mxu0 %v200
    %v281 = vpop.f32.mrb[0].mxu0
    %v282 = vadd.f32 %v190, %v281
    %v283 = vpop.f32.mrb[0].mxu0
    %284 = vmatprep.mubr.f32.mxu0 0.0
    %285 = vmatmul.mubr.f32.gmra.mrb[0].mxu0 %v203
    %v286 = vpop.f32.mrb[0].mxu0
    %v287 = vadd.f32 %v190, %v286
    %v288 = vpop.f32.mrb[0].mxu0
    %289 = vdwg.mxu0
    %v290 = vmul.f32 %v272, %v272
    %v291 = vmul.f32 %v277, %v277
    %v292 = vmul.f32 %v282, %v282
    %v293 = vmul.f32 %v287, %v287
    %v294 = vsel %vm192, %v290, 0.0
    %v295 = vrot.slane %v294, 4
    %v296 = vadd.f32 %v294, %v295
    %v297 = vrot.slane %v296, 2
    %v298 = vadd.f32 %v296, %v297
    %v299 = vrot.slane %v298, 1
    %v300 = vadd.f32 %v298, %v299
    %v301 = vsel %vm192, %v291, 0.0
    %v302 = vrot.slane %v301, 4
    %v303 = vadd.f32 %v301, %v302
    %v304 = vrot.slane %v303, 2
    %v305 = vadd.f32 %v303, %v304
    %v306 = vrot.slane %v305, 1
    %v307 = vadd.f32 %v305, %v306
    %v308 = vsel %vm192, %v292, 0.0
    %v309 = vrot.slane %v308, 4
    %v310 = vadd.f32 %v308, %v309
    %v311 = vrot.slane %v310, 2
    %v312 = vadd.f32 %v310, %v311
    %v313 = vrot.slane %v312, 1
    %v314 = vadd.f32 %v312, %v313
    %v315 = vsel %vm192, %v293, 0.0
    %v316 = vrot.slane %v315, 4
    %v317 = vadd.f32 %v315, %v316
    %v318 = vrot.slane %v317, 2
    %v319 = vadd.f32 %v317, %v318
    %v320 = vrot.slane %v319, 1
    %v321 = vadd.f32 %v319, %v320
    %v322 = vrsqrt.pop %v300
    %v323 = vmul.f32 %v300, %v322
    %vm324 = vcmp.eq.f32.partialorder %v300, inf
    %v325 = vsel %vm324, %v300, %v323
    %vm326 = vcmp.eq.f32.partialorder %v300, 0.0
    %v327 = vand.u32 %v300, 2147483648
    %v328 = vsel %vm326, %v327, %v325
    %v329 = vrsqrt.pop %v307
    %v330 = vmul.f32 %v307, %v329
    %vm331 = vcmp.eq.f32.partialorder %v307, inf
    %v332 = vsel %vm331, %v307, %v330
    %vm333 = vcmp.eq.f32.partialorder %v307, 0.0
    %v334 = vand.u32 %v307, 2147483648
    %v335 = vsel %vm333, %v334, %v332
    %v336 = vrsqrt.pop %v314
    %v337 = vmul.f32 %v314, %v336
    %vm338 = vcmp.eq.f32.partialorder %v314, inf
    %v339 = vsel %vm338, %v314, %v337
    %vm340 = vcmp.eq.f32.partialorder %v314, 0.0
    %v341 = vand.u32 %v314, 2147483648
    %v342 = vsel %vm340, %v341, %v339
    %v343 = vrsqrt.pop %v321
    %v344 = vmul.f32 %v321, %v343
    %vm345 = vcmp.eq.f32.partialorder %v321, inf
    %v346 = vsel %vm345, %v321, %v344
    %vm347 = vcmp.eq.f32.partialorder %v321, 0.0
    %v348 = vand.u32 %v321, 2147483648
    %v349 = vsel %vm347, %v348, %v346
    %v350 = vmax.f32 %v328, 1e-12
    %v351 = vmax.f32 %v335, 1e-12
    %v352 = vmax.f32 %v342, 1e-12
    %v353 = vmax.f32 %v349, 1e-12
    %v354 = vrcp.pop %v350
    %v355 = vmul.f32 %v272, %v354
    %v356 = vrcp.pop %v351
    %v357 = vmul.f32 %v277, %v356
    %v358 = vrcp.pop %v352
    %v359 = vmul.f32 %v282, %v358
    %v360 = vrcp.pop %v353
    %v361 = vmul.f32 %v287, %v360
    %362 = vst.msk [vmem:[%s11] sm:$0xff] %vm192, %v355
    %363 = vst.msk [vmem:[%s11 + $0x8] sm:$0xff] %vm192, %v357
    %364 = vst.msk [vmem:[%s11 + $0x10] sm:$0xff] %vm192, %v359
    %365 = vst.msk [vmem:[%s11 + $0x18] sm:$0xff] %vm192, %v361
    %v370 = vrot.slane %v357, 7
    %vm371 = vcmask 1041409
    %v372 = vsel %vm371, %v370, %v355
    %v373 = vrot.slane %v359, 6
    %vm374 = vcmask 1042434
    %v375 = vsel %vm374, %v373, %v372
    %v376 = vrot.slane %v361, 5
    %vm377 = vcmask 1043459
    %v378 = vsel %vm377, %v376, %v375
    %vm380 = vcmask 257024
    %381 = vst.msk [vmem:[#allocation3] sm:$0xf] %vm380, %v378
    %v382 = vld [vmem:[%s5] sm:$0xff]
    %v383 = vld [vmem:[%s5 + $0x8] sm:$0xff]
    %v384 = vld [vmem:[%s5 + $0x10] sm:$0xff]
    %v385 = vld [vmem:[%s5 + $0x18] sm:$0xff]
    %v386 = vld [vmem:[%s6] sm:$0x1]
    %v388 = vlaneseq
    %v389 = vshrl.u32 %v388, 7
    %v390 = vsub.s32 0, %v389
    %v391 = vrot.slane %v386, %v390
    %v393 = vsel %vm192, %v355, 0
    %v395 = vsel %vm192, %v357, 0
    %v397 = vsel %vm192, %v359, 0
    %v399 = vsel %vm192, %v361, 0
    %401 = vmatprep.subr.mxu0 0.0
    %402 = vmatpush1.msra.mxu0 %v382
    %403 = vmatprep.subr.mxu0 0.0
    %404 = vmatpush1.msra.mxu0 %v383
    %405 = vmatprep.subr.mxu0 0.0
    %406 = vmatpush1.msra.mxu0 %v384
    %407 = vmatprep.subr.mxu0 0.0
    %408 = vmatpush1.msra.mxu0 %v385
    %409 = vmatprep.subr.mxu0 0.0
    %410 = vmatpush1.msra.mxu0 0.0
    %411 = vmatprep.subr.mxu0 0.0
    %412 = vmatpush1.msra.mxu0 0.0
    %413 = vmatprep.subr.mxu0 0.0
    %414 = vmatpush1.msra.mxu0 0.0
    %415 = vmatprep.subr.mxu0 0.0
    %416 = vmatpush1.msra.mxu0 0.0
    %417 = vmatprep.subr.mxu0 0.0
    %418 = vmatpush1.msra.mxu0 0.0
    %419 = vmatprep.subr.mxu0 0.0
    %420 = vmatpush1.msra.mxu0 0.0
    %421 = vmatprep.subr.mxu0 0.0
    %422 = vmatpush1.msra.mxu0 0.0
    %423 = vmatprep.subr.mxu0 0.0
    %424 = vmatpush1.msra.mxu0 0.0
    %425 = vmatprep.subr.mxu0 0.0
    %426 = vmatpush1.msra.mxu0 0.0
    %427 = vmatprep.subr.mxu0 0.0
    %428 = vmatpush1.msra.mxu0 0.0
    %429 = vmatprep.subr.mxu0 0.0
    %430 = vmatpush1.msra.mxu0 0.0
    %431 = vmatprep.subr.mxu0 0.0
    %432 = vmatpush1.msra.mxu0 0.0
    %433 = vmatprep.subr.mxu0 0.0
    %434 = vmatpush1.msra.mxu0 0.0
    %435 = vmatprep.subr.mxu0 0.0
    %436 = vmatpush1.msra.mxu0 0.0
    %437 = vmatprep.subr.mxu0 0.0
    %438 = vmatpush1.msra.mxu0 0.0
    %439 = vmatprep.subr.mxu0 0.0
    %440 = vmatpush1.msra.mxu0 0.0
    %441 = vmatprep.subr.mxu0 0.0
    %442 = vmatpush1.msra.mxu0 0.0
    %443 = vmatprep.subr.mxu0 0.0
    %444 = vmatpush1.msra.mxu0 0.0
    %445 = vmatprep.subr.mxu0 0.0
    %446 = vmatpush1.msra.mxu0 0.0
    %447 = vmatprep.subr.mxu0 0.0
    %448 = vmatpush1.msra.mxu0 0.0
    %449 = vmatprep.subr.mxu0 0.0
    %450 = vmatpush1.msra.mxu0 0.0
    %451 = vmatprep.subr.mxu0 0.0
    %452 = vmatpush1.msra.mxu0 0.0
    %453 = vmatprep.subr.mxu0 0.0
    %454 = vmatpush1.msra.mxu0 0.0
    %455 = vmatprep.subr.mxu0 0.0
    %456 = vmatpush1.msra.mxu0 0.0
    %457 = vmatprep.subr.mxu0 0.0
    %458 = vmatpush1.msra.mxu0 0.0
    %459 = vmatprep.subr.mxu0 0.0
    %460 = vmatpush1.msra.mxu0 0.0
    %461 = vmatprep.subr.mxu0 0.0
    %462 = vmatpush1.msra.mxu0 0.0
    %463 = vmatprep.subr.mxu0 0.0
    %464 = vmatpush1.msra.mxu0 0.0
    %465 = vmatprep.mubr.f32.mxu0 0.0
    %466 = vmatmul.mubr.f32.gmra.mrb[0].mxu0 %v393
    %v467 = vpop.f32.mrb[0].mxu0
    %v468 = vadd.f32 %v391, %v467
    %v469 = vpop.f32.mrb[0].mxu0
    %470 = vmatprep.mubr.f32.mxu0 0.0
    %471 = vmatmul.mubr.f32.gmra.mrb[0].mxu0 %v395
    %v472 = vpop.f32.mrb[0].mxu0
    %v473 = vadd.f32 %v391, %v472
    %v474 = vpop.f32.mrb[0].mxu0
    %475 = vmatprep.mubr.f32.mxu0 0.0
    %476 = vmatmul.mubr.f32.gmra.mrb[0].mxu0 %v397
    %v477 = vpop.f32.mrb[0].mxu0
    %v478 = vadd.f32 %v391, %v477
    %v479 = vpop.f32.mrb[0].mxu0
    %480 = vmatprep.mubr.f32.mxu0 0.0
    %481 = vmatmul.mubr.f32.gmra.mrb[0].mxu0 %v399
    %v482 = vpop.f32.mrb[0].mxu0
    %v483 = vadd.f32 %v391, %v482
    %v484 = vpop.f32.mrb[0].mxu0
    %485 = vdwg.mxu0
    %v486 = vmul.f32 %v468, 0.5
    %v487 = vmul.f32 %v473, 0.5
    %v488 = vmul.f32 %v478, 0.5
    %v489 = vmul.f32 %v483, 0.5
    %v490 = vmul.f32 %v468, 0.70710677
    %v491 = vmul.f32 %v473, 0.70710677
    %v492 = vmul.f32 %v478, 0.70710677
    %v493 = vmul.f32 %v483, 0.70710677
    %v494 = verf.f32.pop %v490
    %v495 = verf.f32.pop %v491
    %v496 = verf.f32.pop %v492
    %v497 = verf.f32.pop %v493
    %v498 = vadd.f32 %v494, 1.0
    %v499 = vadd.f32 %v495, 1.0
    %v500 = vadd.f32 %v496, 1.0
    %v501 = vadd.f32 %v497, 1.0
    %v502 = vmul.f32 %v486, %v498
    %v503 = vmul.f32 %v487, %v499
    %v504 = vmul.f32 %v488, %v500
    %v505 = vmul.f32 %v489, %v501
    %v506 = vld [vmem:[%s7] sm:$0xff]
    %v507 = vld [vmem:[%s7 + $0x8] sm:$0xff]
    %v508 = vld [vmem:[%s7 + $0x10] sm:$0xff]
    %v509 = vld [vmem:[%s7 + $0x18] sm:$0xff]
    %v510 = vld [vmem:[#allocation2] sm:$0x1]
    %v512 = vlaneseq
    %v513 = vshrl.u32 %v512, 7
    %v514 = vsub.s32 0, %v513
    %v515 = vrot.slane %v510, %v514
    %v518 = vsel %vm192, %v502, 0
    %v521 = vsel %vm192, %v503, 0
    %v524 = vsel %vm192, %v504, 0
    %v527 = vsel %vm192, %v505, 0
    %529 = vmatprep.subr.mxu0 0.0
    %530 = vmatpush1.msra.mxu0 %v506
    %531 = vmatprep.subr.mxu0 0.0
    %532 = vmatpush1.msra.mxu0 %v507
    %533 = vmatprep.subr.mxu0 0.0
    %534 = vmatpush1.msra.mxu0 %v508
    %535 = vmatprep.subr.mxu0 0.0
    %536 = vmatpush1.msra.mxu0 %v509
    %537 = vmatprep.subr.mxu0 0.0
    %538 = vmatpush1.msra.mxu0 0.0
    %539 = vmatprep.subr.mxu0 0.0
    %540 = vmatpush1.msra.mxu0 0.0
    %541 = vmatprep.subr.mxu0 0.0
    %542 = vmatpush1.msra.mxu0 0.0
    %543 = vmatprep.subr.mxu0 0.0
    %544 = vmatpush1.msra.mxu0 0.0
    %545 = vmatprep.subr.mxu0 0.0
    %546 = vmatpush1.msra.mxu0 0.0
    %547 = vmatprep.subr.mxu0 0.0
    %548 = vmatpush1.msra.mxu0 0.0
    %549 = vmatprep.subr.mxu0 0.0
    %550 = vmatpush1.msra.mxu0 0.0
    %551 = vmatprep.subr.mxu0 0.0
    %552 = vmatpush1.msra.mxu0 0.0
    %553 = vmatprep.subr.mxu0 0.0
    %554 = vmatpush1.msra.mxu0 0.0
    %555 = vmatprep.subr.mxu0 0.0
    %556 = vmatpush1.msra.mxu0 0.0
    %557 = vmatprep.subr.mxu0 0.0
    %558 = vmatpush1.msra.mxu0 0.0
    %559 = vmatprep.subr.mxu0 0.0
    %560 = vmatpush1.msra.mxu0 0.0
    %561 = vmatprep.subr.mxu0 0.0
    %562 = vmatpush1.msra.mxu0 0.0
    %563 = vmatprep.subr.mxu0 0.0
    %564 = vmatpush1.msra.mxu0 0.0
    %565 = vmatprep.subr.mxu0 0.0
    %566 = vmatpush1.msra.mxu0 0.0
    %567 = vmatprep.subr.mxu0 0.0
    %568 = vmatpush1.msra.mxu0 0.0
    %569 = vmatprep.subr.mxu0 0.0
    %570 = vmatpush1.msra.mxu0 0.0
    %571 = vmatprep.subr.mxu0 0.0
    %572 = vmatpush1.msra.mxu0 0.0
    %573 = vmatprep.subr.mxu0 0.0
    %574 = vmatpush1.msra.mxu0 0.0
    %575 = vmatprep.subr.mxu0 0.0
    %576 = vmatpush1.msra.mxu0 0.0
    %577 = vmatprep.subr.mxu0 0.0
    %578 = vmatpush1.msra.mxu0 0.0
    %579 = vmatprep.subr.mxu0 0.0
    %580 = vmatpush1.msra.mxu0 0.0
    %581 = vmatprep.subr.mxu0 0.0
    %582 = vmatpush1.msra.mxu0 0.0
    %583 = vmatprep.subr.mxu0 0.0
    %584 = vmatpush1.msra.mxu0 0.0
    %585 = vmatprep.subr.mxu0 0.0
    %586 = vmatpush1.msra.mxu0 0.0
    %587 = vmatprep.subr.mxu0 0.0
    %588 = vmatpush1.msra.mxu0 0.0
    %589 = vmatprep.subr.mxu0 0.0
    %590 = vmatpush1.msra.mxu0 0.0
    %591 = vmatprep.subr.mxu0 0.0
    %592 = vmatpush1.msra.mxu0 0.0
    %593 = vmatprep.mubr.f32.mxu0 0.0
    %594 = vmatmul.mubr.f32.gmra.mrb[0].mxu0 %v518
    %v595 = vpop.f32.mrb[0].mxu0
    %v596 = vadd.f32 %v515, %v595
    %v597 = vpop.f32.mrb[0].mxu0
    %598 = vmatprep.mubr.f32.mxu0 0.0
    %599 = vmatmul.mubr.f32.gmra.mrb[0].mxu0 %v521
    %v600 = vpop.f32.mrb[0].mxu0
    %v601 = vadd.f32 %v515, %v600
    %v602 = vpop.f32.mrb[0].mxu0
    %603 = vmatprep.mubr.f32.mxu0 0.0
    %604 = vmatmul.mubr.f32.gmra.mrb[0].mxu0 %v524
    %v605 = vpop.f32.mrb[0].mxu0
    %v606 = vadd.f32 %v515, %v605
    %v607 = vpop.f32.mrb[0].mxu0
    %608 = vmatprep.mubr.f32.mxu0 0.0
    %609 = vmatmul.mubr.f32.gmra.mrb[0].mxu0 %v527
    %v610 = vpop.f32.mrb[0].mxu0
    %v611 = vadd.f32 %v515, %v610
    %v612 = vpop.f32.mrb[0].mxu0
    %613 = vdwg.mxu0
    %v614 = vlaneseq
    %v615 = vshrl.u32 %v614, 7
    %vm616 = vcmp.ge.s32.totalorder %v615, 1
    %v617 = vsel %vm616, 1, 0
    %vm618 = vcmp.eq.s32.totalorder %v617, 1
    %v619 = vsel %vm618, %v596, -1e+30
    %v620 = vsel %vm618, %v601, -1e+30
    %v621 = vsel %vm618, %v606, -1e+30
    %v622 = vsel %vm618, %v611, -1e+30
    %vm623 = vcmask 7168
    %v624 = vsel %vm623, %v619, -inf
    %v625 = vrot.slane %v624, 4
    %v626 = vmax.f32 %v624, %v625
    %v627 = vrot.slane %v626, 2
    %v628 = vmax.f32 %v626, %v627
    %v629 = vrot.slane %v628, 1
    %v630 = vmax.f32 %v628, %v629
    %v631 = vsel %vm623, %v620, -inf
    %v632 = vrot.slane %v631, 4
    %v633 = vmax.f32 %v631, %v632
    %v634 = vrot.slane %v633, 2
    %v635 = vmax.f32 %v633, %v634
    %v636 = vrot.slane %v635, 1
    %v637 = vmax.f32 %v635, %v636
    %v638 = vsel %vm623, %v621, -inf
    %v639 = vrot.slane %v638, 4
    %v640 = vmax.f32 %v638, %v639
    %v641 = vrot.slane %v640, 2
    %v642 = vmax.f32 %v640, %v641
    %v643 = vrot.slane %v642, 1
    %v644 = vmax.f32 %v642, %v643
    %v645 = vsel %vm623, %v622, -inf
    %v646 = vrot.slane %v645, 4
    %v647 = vmax.f32 %v645, %v646
    %v648 = vrot.slane %v647, 2
    %v649 = vmax.f32 %v647, %v648
    %v650 = vrot.slane %v649, 1
    %v651 = vmax.f32 %v649, %v650
    %v652 = vsub.f32 %v619, %v630
    %v653 = vsub.f32 %v620, %v637
    %v654 = vsub.f32 %v621, %v644
    %v655 = vsub.f32 %v622, %v651
    %v656 = vmul.f32 %v652, 1.442695
    %v657 = vpow.pop %v656
    %v658 = vmul.f32 %v653, 1.442695
    %v659 = vpow.pop %v658
    %v660 = vmul.f32 %v654, 1.442695
    %v661 = vpow.pop %v660
    %v662 = vmul.f32 %v655, 1.442695
    %v663 = vpow.pop %v662
    %v664 = vsel %vm623, %v657, 0.0
    %v665 = vrot.slane %v664, 4
    %v666 = vadd.f32 %v664, %v665
    %v667 = vrot.slane %v666, 2
    %v668 = vadd.f32 %v666, %v667
    %v669 = vrot.slane %v668, 1
    %v670 = vadd.f32 %v668, %v669
    %v671 = vsel %vm623, %v659, 0.0
    %v672 = vrot.slane %v671, 4
    %v673 = vadd.f32 %v671, %v672
    %v674 = vrot.slane %v673, 2
    %v675 = vadd.f32 %v673, %v674
    %v676 = vrot.slane %v675, 1
    %v677 = vadd.f32 %v675, %v676
    %v678 = vsel %vm623, %v661, 0.0
    %v679 = vrot.slane %v678, 4
    %v680 = vadd.f32 %v678, %v679
    %v681 = vrot.slane %v680, 2
    %v682 = vadd.f32 %v680, %v681
    %v683 = vrot.slane %v682, 1
    %v684 = vadd.f32 %v682, %v683
    %v685 = vsel %vm623, %v663, 0.0
    %v686 = vrot.slane %v685, 4
    %v687 = vadd.f32 %v685, %v686
    %v688 = vrot.slane %v687, 2
    %v689 = vadd.f32 %v687, %v688
    %v690 = vrot.slane %v689, 1
    %v691 = vadd.f32 %v689, %v690
    %v692 = vrcp.pop %v670
    %v693 = vmul.f32 %v657, %v692
    %v694 = vrcp.pop %v677
    %v695 = vmul.f32 %v659, %v694
    %v696 = vrcp.pop %v684
    %v697 = vmul.f32 %v661, %v696
    %v698 = vrcp.pop %v691
    %v699 = vmul.f32 %v663, %v698
    %v700 = vld [vmem:[%s9] sm:$0xff]
    %v701 = vld [vmem:[%s9 + $0x8] sm:$0xff]
    %v702 = vld [vmem:[%s9 + $0x10] sm:$0xff]
    %v703 = vld [vmem:[%s9 + $0x18] sm:$0xff]
    %v704 = vld [vmem:[%s10] sm:$0x1]
    %v706 = vlaneseq
    %v707 = vshrl.u32 %v706, 7
    %v708 = vsub.s32 0, %v707
    %v709 = vrot.slane %v704, %v708
    %711 = vmatprep.subr.mxu0 0.0
    %712 = vmatpush1.msra.mxu0 %v700
    %713 = vmatprep.subr.mxu0 0.0
    %714 = vmatpush1.msra.mxu0 %v701
    %715 = vmatprep.subr.mxu0 0.0
    %716 = vmatpush1.msra.mxu0 %v702
    %717 = vmatprep.subr.mxu0 0.0
    %718 = vmatpush1.msra.mxu0 %v703
    %719 = vmatprep.subr.mxu0 0.0
    %720 = vmatpush1.msra.mxu0 0.0
    %721 = vmatprep.subr.mxu0 0.0
    %722 = vmatpush1.msra.mxu0 0.0
    %723 = vmatprep.subr.mxu0 0.0
    %724 = vmatpush1.msra.mxu0 0.0
    %725 = vmatprep.subr.mxu0 0.0
    %726 = vmatpush1.msra.mxu0 0.0
    %727 = vmatprep.subr.mxu0 0.0
    %728 = vmatpush1.msra.mxu0 0.0
    %729 = vmatprep.subr.mxu0 0.0
    %730 = vmatpush1.msra.mxu0 0.0
    %731 = vmatprep.subr.mxu0 0.0
    %732 = vmatpush1.msra.mxu0 0.0
    %733 = vmatprep.subr.mxu0 0.0
    %734 = vmatpush1.msra.mxu0 0.0
    %735 = vmatprep.subr.mxu0 0.0
    %736 = vmatpush1.msra.mxu0 0.0
    %737 = vmatprep.subr.mxu0 0.0
    %738 = vmatpush1.msra.mxu0 0.0
    %739 = vmatprep.subr.mxu0 0.0
    %740 = vmatpush1.msra.mxu0 0.0
    %741 = vmatprep.subr.mxu0 0.0
    %742 = vmatpush1.msra.mxu0 0.0
    %743 = vmatprep.subr.mxu0 0.0
    %744 = vmatpush1.msra.mxu0 0.0
    %745 = vmatprep.subr.mxu0 0.0
    %746 = vmatpush1.msra.mxu0 0.0
    %747 = vmatprep.subr.mxu0 0.0
    %748 = vmatpush1.msra.mxu0 0.0
    %749 = vmatprep.subr.mxu0 0.0
    %750 = vmatpush1.msra.mxu0 0.0
    %751 = vmatprep.subr.mxu0 0.0
    %752 = vmatpush1.msra.mxu0 0.0
    %753 = vmatprep.subr.mxu0 0.0
    %754 = vmatpush1.msra.mxu0 0.0
    %755 = vmatprep.subr.mxu0 0.0
    %756 = vmatpush1.msra.mxu0 0.0
    %757 = vmatprep.subr.mxu0 0.0
    %758 = vmatpush1.msra.mxu0 0.0
    %759 = vmatprep.subr.mxu0 0.0
    %760 = vmatpush1.msra.mxu0 0.0
    %761 = vmatprep.subr.mxu0 0.0
    %762 = vmatpush1.msra.mxu0 0.0
    %763 = vmatprep.subr.mxu0 0.0
    %764 = vmatpush1.msra.mxu0 0.0
    %765 = vmatprep.subr.mxu0 0.0
    %766 = vmatpush1.msra.mxu0 0.0
    %767 = vmatprep.subr.mxu0 0.0
    %768 = vmatpush1.msra.mxu0 0.0
    %769 = vmatprep.subr.mxu0 0.0
    %770 = vmatpush1.msra.mxu0 0.0
    %771 = vmatprep.subr.mxu0 0.0
    %772 = vmatpush1.msra.mxu0 0.0
    %773 = vmatprep.subr.mxu0 0.0
    %774 = vmatpush1.msra.mxu0 0.0
    %775 = vmatprep.mubr.f32.mxu0 0.0
    %776 = vmatmul.mubr.f32.gmra.mrb[0].mxu0 %v393
    %v777 = vpop.f32.mrb[0].mxu0
    %v778 = vadd.f32 %v709, %v777
    %v779 = vpop.f32.mrb[0].mxu0
    %780 = vmatprep.mubr.f32.mxu0 0.0
    %781 = vmatmul.mubr.f32.gmra.mrb[0].mxu0 %v395
    %v782 = vpop.f32.mrb[0].mxu0
    %v783 = vadd.f32 %v709, %v782
    %v784 = vpop.f32.mrb[0].mxu0
    %785 = vmatprep.mubr.f32.mxu0 0.0
    %786 = vmatmul.mubr.f32.gmra.mrb[0].mxu0 %v397
    %v787 = vpop.f32.mrb[0].mxu0
    %v788 = vadd.f32 %v709, %v787
    %v789 = vpop.f32.mrb[0].mxu0
    %790 = vmatprep.mubr.f32.mxu0 0.0
    %791 = vmatmul.mubr.f32.gmra.mrb[0].mxu0 %v399
    %v792 = vpop.f32.mrb[0].mxu0
    %v793 = vadd.f32 %v709, %v792
    %v794 = vpop.f32.mrb[0].mxu0
    %795 = vdwg.mxu0
    %797 = vset.pattern.permute.xlu0 0
    %798 = vperm.xlu0 %797, %v693
    %v799 = vpop.permute.xlu0 %798
    %802 = vset.pattern.permute.xlu0 0
    %803 = vperm.xlu0 %802, %v695
    %v804 = vpop.permute.xlu0 %803
    %807 = vset.pattern.permute.xlu0 0
    %808 = vperm.xlu0 %807, %v697
    %v809 = vpop.permute.xlu0 %808
    %812 = vset.pattern.permute.xlu0 0
    %813 = vperm.xlu0 %812, %v699
    %v814 = vpop.permute.xlu0 %813
    %v816 = vmul.f32 %v799, %v778
    %v817 = vmul.f32 %v804, %v783
    %v818 = vmul.f32 %v809, %v788
    %v819 = vmul.f32 %v814, %v793
    %v820 = vsel %vm192, %v816, 0.0
    %v821 = vrot.slane %v820, 4
    %v822 = vadd.f32 %v820, %v821
    %v823 = vrot.slane %v822, 2
    %v824 = vadd.f32 %v822, %v823
    %v825 = vrot.slane %v824, 1
    %v826 = vadd.f32 %v824, %v825
    %v827 = vsel %vm192, %v817, 0.0
    %v828 = vrot.slane %v827, 4
    %v829 = vadd.f32 %v827, %v828
    %v830 = vrot.slane %v829, 2
    %v831 = vadd.f32 %v829, %v830
    %v832 = vrot.slane %v831, 1
    %v833 = vadd.f32 %v831, %v832
    %v834 = vsel %vm192, %v818, 0.0
    %v835 = vrot.slane %v834, 4
    %v836 = vadd.f32 %v834, %v835
    %v837 = vrot.slane %v836, 2
    %v838 = vadd.f32 %v836, %v837
    %v839 = vrot.slane %v838, 1
    %v840 = vadd.f32 %v838, %v839
    %v841 = vsel %vm192, %v819, 0.0
    %v842 = vrot.slane %v841, 4
    %v843 = vadd.f32 %v841, %v842
    %v844 = vrot.slane %v843, 2
    %v845 = vadd.f32 %v843, %v844
    %v846 = vrot.slane %v845, 1
    %v847 = vadd.f32 %v845, %v846
    %v848 = vadd.f32 %v826, %v355
    %v849 = vadd.f32 %v833, %v357
    %v850 = vadd.f32 %v840, %v359
    %v851 = vadd.f32 %v847, %v361
    %v856 = vrot.slane %v849, 7
    %v857 = vsel %vm371, %v856, %v848
    %v858 = vrot.slane %v850, 6
    %v859 = vsel %vm374, %v858, %v857
    %v860 = vrot.slane %v851, 5
    %v861 = vsel %vm377, %v860, %v859
    %863 = vst.msk [vmem:[%s12] sm:$0xf] %vm380, %v861
    // Predicated region
    $region46: #{classifier_forward.4} parent=1 // pred_check
      _
    $region47: #{classifier_forward.4} parent=1 // pred_check_branch
      %865 = sbr.rel (0) target = $region49
    $region48: #{classifier_forward.4} parent=1 // pred_region
      _
    $region49: #{classifier_forward.4} parent=1 // pred_fallthru
      _
    // Predicated region
    $region50: #{classifier_forward.4} parent=1 // pred_check
      _
    $region51: #{classifier_forward.4} parent=1 // pred_check_branch
      %867 = sbr.rel (0) target = $region53
    $region52: #{classifier_forward.4} parent=1 // pred_region
      _
    $region53: #{classifier_forward.4} parent=1 // pred_fallthru
      _
    // Predicated region
    $region54: #{classifier_forward.4} parent=1 // pred_check
      _
    $region55: #{classifier_forward.4} parent=1 // pred_check_branch
      %869 = sbr.rel (0) target = $region57
    $region56: #{classifier_forward.4} parent=1 // pred_region
      %s871 = ssub.s32 64, 64
      %872 = vsyncadd [#allocation4], %s871
      %s874 = sshll.u32 [#allocation3], 4
      %s875 = int_to_ptr.vmem [resolvable:$true] %s874
      %877 = dma.vmem_to_hbm [thread:$0]  %s875, 64, %s13, [#allocation4]
    $region57: #{classifier_forward.4} parent=1 // pred_fallthru
      _
    // Predicated region
    $region58: #{classifier_forward.4} parent=1 // pred_check
      _
    $region59: #{classifier_forward.4} parent=1 // pred_check_branch
      %879 = sbr.rel (0) target = $region61
    $region60: #{classifier_forward.4} parent=1 // pred_region
      _
    $region61: #{classifier_forward.4} parent=1 // pred_fallthru
      _
    // Predicated region
    $region62: #{classifier_forward.4} parent=1 // pred_check
      _
    $region63: #{classifier_forward.4} parent=1 // pred_check_branch
      %881 = sbr.rel (0) target = $region65
    $region64: #{classifier_forward.4} parent=1 // pred_region
      _
    $region65: #{classifier_forward.4} parent=1 // pred_fallthru
      _
    // Predicated region
    $region66: #{classifier_forward.4} parent=1 // pred_check
      _
    $region67: #{classifier_forward.4} parent=1 // pred_check_branch
      %883 = sbr.rel (0) target = $region69
    $region68: #{classifier_forward.4} parent=1 // pred_region
      %884 = dma.done [#allocation4], 64
    $region69: #{classifier_forward.4} parent=1 // pred_fallthru
      _
    %885 = vsyncpa [#allocation4], 1

// kernel: classifier_forward.3
$region0: #{classifier_forward.3}
  #allocation0 [shape = 'u32[]', space=smem, size = 0x4, offset = 0x4, fixed_abs, tag = 'smem constant byte address 0x4 - core index']
  #allocation1 [shape = 'u32[144,128]{1,0:T(1,128)}', space=vmem, size = 0x12000, scoped, tag = 'internal scratch']
  #allocation2 [shape = 'f32[1,1]{1,0:T(1,128)S(1)}', space=vmem, size = 0x200, scoped, tag = 'scoped memory for classifier_forward.3']
  %s0 = inlined_call_operand.vmem [shape: f32[4,5,64], index: 0, kind: input, shape index: {}]
  %s1 = inlined_call_operand.vmem [shape: f32[64,32], index: 1, kind: input, shape index: {}]
  %s2 = inlined_call_operand.vmem [shape: f32[1,32], index: 2, kind: input, shape index: {}]
  %s3 = inlined_call_operand.vmem [shape: f32[32,32], index: 3, kind: input, shape index: {}]
  %s4 = inlined_call_operand.vmem [shape: f32[1,32], index: 4, kind: input, shape index: {}]
  %s5 = inlined_call_operand.vmem [shape: f32[32,32], index: 5, kind: input, shape index: {}]
  %s6 = inlined_call_operand.vmem [shape: f32[1,32], index: 6, kind: input, shape index: {}]
  %s7 = inlined_call_operand.vmem [shape: f32[32,1], index: 7, kind: input, shape index: {}]
  %s8 = inlined_call_operand.<no memory space> [shape: f32[1,1], index: 8, kind: input, shape index: {}]
  %s9 = inlined_call_operand.vmem [shape: f32[32,32], index: 9, kind: input, shape index: {}]
  %s10 = inlined_call_operand.vmem [shape: f32[1,32], index: 10, kind: input, shape index: {}]
  %s11 = inlined_call_operand.hbm [shape: f32[4,5,32], index: 11, kind: output, shape index: {0}]
  %s12 = inlined_call_operand.vmem [shape: f32[4,32], index: 12, kind: output, shape index: {1}]
  %s13 = inlined_call_operand.vmem [shape: f32[4,32], index: 13, kind: output, shape index: {2}]
  %14 = xla_tuple %s11, %s12, %s13
  %s15 = sld [smem:[#allocation0]]
  $region70: #{classifier_forward.3} parent=0
    _
  %s17 = ssub.s32 1, %s15
  %s18 = scalar_select 0, %s17, %s15
  %v19 = vstv %s8
  %20 = vst [vmem:[#allocation2] sm:$0x1] %v19
  $region1: #{classifier_forward.3} parent=0
    #allocation3 [shape = 'u8[16384]{0}', space=vmem, size = 0x4000, scoped, tag = 'output window, operand 0, single buffered']
    #allocation4 [shape = 's32[1]{0}', space=sflag, size = 0x4, scoped, tag = 'scoped memory for classifier_forward.3']
    %21 = vsyncpa [#allocation4], 0
    // Predicated region
    $region2: #{classifier_forward.3} parent=1 // pred_check
      _
    $region3: #{classifier_forward.3} parent=1 // pred_check_branch
      %23 = sbr.rel (0) target = $region5
    $region4: #{classifier_forward.3} parent=1 // pred_region
      _
    $region5: #{classifier_forward.3} parent=1 // pred_fallthru
      _
    // Predicated region
    $region6: #{classifier_forward.3} parent=1 // pred_check
      _
    $region7: #{classifier_forward.3} parent=1 // pred_check_branch
      %25 = sbr.rel (0) target = $region9
    $region8: #{classifier_forward.3} parent=1 // pred_region
      _
    $region9: #{classifier_forward.3} parent=1 // pred_fallthru
      _
    // Predicated region
    $region10: #{classifier_forward.3} parent=1 // pred_check
      _
    $region11: #{classifier_forward.3} parent=1 // pred_check_branch
      %27 = sbr.rel (0) target = $region13
    $region12: #{classifier_forward.3} parent=1 // pred_region
      _
    $region13: #{classifier_forward.3} parent=1 // pred_fallthru
      _
    // Predicated region
    $region14: #{classifier_forward.3} parent=1 // pred_check
      _
    $region15: #{classifier_forward.3} parent=1 // pred_check_branch
      %29 = sbr.rel (0) target = $region17
    $region16: #{classifier_forward.3} parent=1 // pred_region
      _
    $region17: #{classifier_forward.3} parent=1 // pred_fallthru
      _
    // Predicated region
    $region18: #{classifier_forward.3} parent=1 // pred_check
      _
    $region19: #{classifier_forward.3} parent=1 // pred_check_branch
      %31 = sbr.rel (0) target = $region21
    $region20: #{classifier_forward.3} parent=1 // pred_region
      _
    $region21: #{classifier_forward.3} parent=1 // pred_fallthru
      _
    // Predicated region
    $region22: #{classifier_forward.3} parent=1 // pred_check
      _
    $region23: #{classifier_forward.3} parent=1 // pred_check_branch
      %33 = sbr.rel (0) target = $region25
    $region24: #{classifier_forward.3} parent=1 // pred_region
      _
    $region25: #{classifier_forward.3} parent=1 // pred_fallthru
      _
    // Predicated region
    $region26: #{classifier_forward.3} parent=1 // pred_check
      _
    $region27: #{classifier_forward.3} parent=1 // pred_check_branch
      %35 = sbr.rel (0) target = $region29
    $region28: #{classifier_forward.3} parent=1 // pred_region
      _
    $region29: #{classifier_forward.3} parent=1 // pred_fallthru
      _
    // Predicated region
    $region30: #{classifier_forward.3} parent=1 // pred_check
      _
    $region31: #{classifier_forward.3} parent=1 // pred_check_branch
      %37 = sbr.rel (0) target = $region33
    $region32: #{classifier_forward.3} parent=1 // pred_region
      _
    $region33: #{classifier_forward.3} parent=1 // pred_fallthru
      _
    // Predicated region
    $region34: #{classifier_forward.3} parent=1 // pred_check
      _
    $region35: #{classifier_forward.3} parent=1 // pred_check_branch
      %39 = sbr.rel (0) target = $region37
    $region36: #{classifier_forward.3} parent=1 // pred_region
      _
    $region37: #{classifier_forward.3} parent=1 // pred_fallthru
      _
    // Predicated region
    $region38: #{classifier_forward.3} parent=1 // pred_check
      _
    $region39: #{classifier_forward.3} parent=1 // pred_check_branch
      %41 = sbr.rel (0) target = $region41
    $region40: #{classifier_forward.3} parent=1 // pred_region
      _
    $region41: #{classifier_forward.3} parent=1 // pred_fallthru
      _
    // Predicated region
    $region42: #{classifier_forward.3} parent=1 // pred_check
      _
    $region43: #{classifier_forward.3} parent=1 // pred_check_branch
      %43 = sbr.rel (0) target = $region45
    $region44: #{classifier_forward.3} parent=1 // pred_region
      _
    $region45: #{classifier_forward.3} parent=1 // pred_fallthru
      _
    %v44 = vld [vmem:[%s0] sm:$0x1f]
    %v45 = vld [vmem:[%s0 + $0x8] sm:$0x1f]
    %v46 = vld [vmem:[%s0 + $0x10] sm:$0x1f]
    %v47 = vld [vmem:[%s0 + $0x18] sm:$0x1f]
    %v48 = vld [vmem:[%s1] sm:$0xff]
    %v49 = vld [vmem:[%s1 + $0x8] sm:$0xff]
    %v50 = vld [vmem:[%s1 + $0x10] sm:$0xff]
    %v51 = vld [vmem:[%s1 + $0x18] sm:$0xff]
    %v52 = vld [vmem:[%s1 + $0x20] sm:$0xff]
    %v53 = vld [vmem:[%s1 + $0x28] sm:$0xff]
    %v54 = vld [vmem:[%s1 + $0x30] sm:$0xff]
    %v55 = vld [vmem:[%s1 + $0x38] sm:$0xff]
    %v56 = vld [vmem:[%s2] sm:$0x1]
    %v58 = vlaneseq
    %v59 = vshrl.u32 %v58, 7
    %v60 = vsub.s32 0, %v59
    %v61 = vrot.slane %v56, %v60
    %v66 = vcombine.high %v44, %v44
    %v68 = vunpack.c.l.s4 1966171168
    %v69 = vunpack.c.0.s8 %v68
    %v70 = vlaneseq
    %v71 = vshrl.u32 %v70, 7
    %v72 = vsub.s32 %v69, %v71
    %v73 = vrot.slane %v44, %v72
    %v75 = vunpack.c.l.s4 1966171168
    %v76 = vunpack.c.0.s8 %v75
    %v77 = vlaneseq
    %v78 = vshrl.u32 %v77, 7
    %v79 = vsub.s32 %v76, %v78
    %v80 = vrot.slane %v66, %v79
    %v81 = vcombine.high %v73, %v73
    %v83 = vunpack.c.l.s4 1966171168
    %v84 = vunpack.c.0.s8 %v83
    %v85 = vlaneseq
    %v86 = vshrl.u32 %v85, 7
    %v87 = vsub.s32 %v84, %v86
    %v88 = vrot.slane %v73, %v87
    %v90 = vunpack.c.l.s4 1966171168
    %v91 = vunpack.c.0.s8 %v90
    %v92 = vlaneseq
    %v93 = vshrl.u32 %v92, 7
    %v94 = vsub.s32 %v91, %v93
    %v95 = vrot.slane %v80, %v94
    %v97 = vunpack.c.l.s4 1966171168
    %v98 = vunpack.c.0.s8 %v97
    %v99 = vlaneseq
    %v100 = vshrl.u32 %v99, 7
    %v101 = vsub.s32 %v98, %v100
    %v102 = vrot.slane %v81, %v101
    %v103 = vcombine.high %v88, %v88
    %v104 = vcombine.high %v102, %v102
    %v105 = vcombine.high %v45, %v45
    %v107 = vunpack.c.l.s4 1966171168
    %v108 = vunpack.c.0.s8 %v107
    %v109 = vlaneseq
    %v110 = vshrl.u32 %v109, 7
    %v111 = vsub.s32 %v108, %v110
    %v112 = vrot.slane %v45, %v111
    %v114 = vunpack.c.l.s4 1966171168
    %v115 = vunpack.c.0.s8 %v114
    %v116 = vlaneseq
    %v117 = vshrl.u32 %v116, 7
    %v118 = vsub.s32 %v115, %v117
    %v119 = vrot.slane %v105, %v118
    %v120 = vcombine.high %v112, %v112
    %v122 = vunpack.c.l.s4 1966171168
    %v123 = vunpack.c.0.s8 %v122
    %v124 = vlaneseq
    %v125 = vshrl.u32 %v124, 7
    %v126 = vsub.s32 %v123, %v125
    %v127 = vrot.slane %v112, %v126
    %v129 = vunpack.c.l.s4 1966171168
    %v130 = vunpack.c.0.s8 %v129
    %v131 = vlaneseq
    %v132 = vshrl.u32 %v131, 7
    %v133 = vsub.s32 %v130, %v132
    %v134 = vrot.slane %v119, %v133
    %v136 = vunpack.c.l.s4 1966171168
    %v137 = vunpack.c.0.s8 %v136
    %v138 = vlaneseq
    %v139 = vshrl.u32 %v138, 7
    %v140 = vsub.s32 %v137, %v139
    %v141 = vrot.slane %v120, %v140
    %v142 = vcombine.high %v127, %v127
    %v143 = vcombine.high %v141, %v141
    %v144 = vcombine.high %v46, %v46
    %v146 = vunpack.c.l.s4 1966171168
    %v147 = vunpack.c.0.s8 %v146
    %v148 = vlaneseq
    %v149 = vshrl.u32 %v148, 7
    %v150 = vsub.s32 %v147, %v149
    %v151 = vrot.slane %v46, %v150
    %v153 = vunpack.c.l.s4 1966171168
    %v154 = vunpack.c.0.s8 %v153
    %v155 = vlaneseq
    %v156 = vshrl.u32 %v155, 7
    %v157 = vsub.s32 %v154, %v156
    %v158 = vrot.slane %v144, %v157
    %v159 = vcombine.high %v151, %v151
    %v161 = vunpack.c.l.s4 1966171168
    %v162 = vunpack.c.0.s8 %v161
    %v163 = vlaneseq
    %v164 = vshrl.u32 %v163, 7
    %v165 = vsub.s32 %v162, %v164
    %v166 = vrot.slane %v151, %v165
    %v168 = vunpack.c.l.s4 1966171168
    %v169 = vunpack.c.0.s8 %v168
    %v170 = vlaneseq
    %v171 = vshrl.u32 %v170, 7
    %v172 = vsub.s32 %v169, %v171
    %v173 = vrot.slane %v158, %v172
    %v175 = vunpack.c.l.s4 1966171168
    %v176 = vunpack.c.0.s8 %v175
    %v177 = vlaneseq
    %v178 = vshrl.u32 %v177, 7
    %v179 = vsub.s32 %v176, %v178
    %v180 = vrot.slane %v159, %v179
    %v181 = vcombine.high %v166, %v166
    %v182 = vcombine.high %v180, %v180
    %v183 = vcombine.high %v47, %v47
    %v185 = vunpack.c.l.s4 1966171168
    %v186 = vunpack.c.0.s8 %v185
    %v187 = vlaneseq
    %v188 = vshrl.u32 %v187, 7
    %v189 = vsub.s32 %v186, %v188
    %v190 = vrot.slane %v47, %v189
    %v192 = vunpack.c.l.s4 1966171168
    %v193 = vunpack.c.0.s8 %v192
    %v194 = vlaneseq
    %v195 = vshrl.u32 %v194, 7
    %v196 = vsub.s32 %v193, %v195
    %v197 = vrot.slane %v183, %v196
    %v198 = vcombine.high %v190, %v190
    %v200 = vunpack.c.l.s4 1966171168
    %v201 = vunpack.c.0.s8 %v200
    %v202 = vlaneseq
    %v203 = vshrl.u32 %v202, 7
    %v204 = vsub.s32 %v201, %v203
    %v205 = vrot.slane %v190, %v204
    %v207 = vunpack.c.l.s4 1966171168
    %v208 = vunpack.c.0.s8 %v207
    %v209 = vlaneseq
    %v210 = vshrl.u32 %v209, 7
    %v211 = vsub.s32 %v208, %v210
    %v212 = vrot.slane %v197, %v211
    %v214 = vunpack.c.l.s4 1966171168
    %v215 = vunpack.c.0.s8 %v214
    %v216 = vlaneseq
    %v217 = vshrl.u32 %v216, 7
    %v218 = vsub.s32 %v215, %v217
    %v219 = vrot.slane %v198, %v218
    %v220 = vcombine.high %v205, %v205
    %v221 = vcombine.high %v219, %v219
    %v222 = vcombine.high %v61, %v61
    %v224 = vunpack.c.l.s4 1966171168
    %v225 = vunpack.c.0.s8 %v224
    %v226 = vlaneseq
    %v227 = vshrl.u32 %v226, 7
    %v228 = vsub.s32 %v225, %v227
    %v229 = vrot.slane %v61, %v228
    %v231 = vunpack.c.l.s4 1966171168
    %v232 = vunpack.c.0.s8 %v231
    %v233 = vlaneseq
    %v234 = vshrl.u32 %v233, 7
    %v235 = vsub.s32 %v232, %v234
    %v236 = vrot.slane %v222, %v235
    %v237 = vcombine.high %v229, %v229
    %v239 = vunpack.c.l.s4 1966171168
    %v240 = vunpack.c.0.s8 %v239
    %v241 = vlaneseq
    %v242 = vshrl.u32 %v241, 7
    %v243 = vsub.s32 %v240, %v242
    %v244 = vrot.slane %v229, %v243
    %v246 = vunpack.c.l.s4 1966171168
    %v247 = vunpack.c.0.s8 %v246
    %v248 = vlaneseq
    %v249 = vshrl.u32 %v248, 7
    %v250 = vsub.s32 %v247, %v249
    %v251 = vrot.slane %v236, %v250
    %v253 = vunpack.c.l.s4 1966171168
    %v254 = vunpack.c.0.s8 %v253
    %v255 = vlaneseq
    %v256 = vshrl.u32 %v255, 7
    %v257 = vsub.s32 %v254, %v256
    %v258 = vrot.slane %v237, %v257
    %v259 = vcombine.high %v244, %v244
    %v260 = vcombine.high %v258, %v258
    %v261 = vcombine.low %v88, %v102
    %v262 = vcombine.low %v103, %v104
    %v263 = vcombine.low %v95, %v127
    %v264 = vcombine.low %v141, %v142
    %v266 = vunpack.c.l.s4 1966171168
    %v267 = vunpack.c.0.s8 %v266
    %v268 = vlaneseq
    %v269 = vshrl.u32 %v268, 7
    %v270 = vsub.s32 %v267, %v269
    %v271 = vrot.slane %v261, %v270
    %v273 = vunpack.c.l.s4 1966171168
    %v274 = vunpack.c.0.s8 %v273
    %v275 = vlaneseq
    %v276 = vshrl.u32 %v275, 7
    %v277 = vsub.s32 %v274, %v276
    %v278 = vrot.slane %v262, %v277
    %v280 = vunpack.c.l.s4 1966171168
    %v281 = vunpack.c.0.s8 %v280
    %v282 = vlaneseq
    %v283 = vshrl.u32 %v282, 7
    %v284 = vsub.s32 %v281, %v283
    %v285 = vrot.slane %v263, %v284
    %v287 = vunpack.c.l.s4 1966171168
    %v288 = vunpack.c.0.s8 %v287
    %v289 = vlaneseq
    %v290 = vshrl.u32 %v289, 7
    %v291 = vsub.s32 %v288, %v290
    %v292 = vrot.slane %v264, %v291
    %v293 = vcombine.low %v271, %v278
    %v294 = vcombine.low %v285, %v292
    %v296 = vunpack.c.l.s4 1966171168
    %v297 = vunpack.c.0.s8 %v296
    %v298 = vlaneseq
    %v299 = vshrl.u32 %v298, 7
    %v300 = vsub.s32 %v297, %v299
    %v301 = vrot.slane %v293, %v300
    %v303 = vunpack.c.l.s4 1966171168
    %v304 = vunpack.c.0.s8 %v303
    %v305 = vlaneseq
    %v306 = vshrl.u32 %v305, 7
    %v307 = vsub.s32 %v304, %v306
    %v308 = vrot.slane %v294, %v307
    %v309 = vcombine.low %v301, %v308
    %v310 = vcombine.low %v143, %v134
    %v311 = vcombine.low %v166, %v180
    %v312 = vcombine.low %v181, %v182
    %v313 = vcombine.low %v173, %v205
    %v315 = vunpack.c.l.s4 1966171168
    %v316 = vunpack.c.0.s8 %v315
    %v317 = vlaneseq
    %v318 = vshrl.u32 %v317, 7
    %v319 = vsub.s32 %v316, %v318
    %v320 = vrot.slane %v310, %v319
    %v322 = vunpack.c.l.s4 1966171168
    %v323 = vunpack.c.0.s8 %v322
    %v324 = vlaneseq
    %v325 = vshrl.u32 %v324, 7
    %v326 = vsub.s32 %v323, %v325
    %v327 = vrot.slane %v311, %v326
    %v329 = vunpack.c.l.s4 1966171168
    %v330 = vunpack.c.0.s8 %v329
    %v331 = vlaneseq
    %v332 = vshrl.u32 %v331, 7
    %v333 = vsub.s32 %v330, %v332
    %v334 = vrot.slane %v312, %v333
    %v336 = vunpack.c.l.s4 1966171168
    %v337 = vunpack.c.0.s8 %v336
    %v338 = vlaneseq
    %v339 = vshrl.u32 %v338, 7
    %v340 = vsub.s32 %v337, %v339
    %v341 = vrot.slane %v313, %v340
    %v342 = vcombine.low %v320, %v327
    %v343 = vcombine.low %v334, %v341
    %v345 = vunpack.c.l.s4 1966171168
    %v346 = vunpack.c.0.s8 %v345
    %v347 = vlaneseq
    %v348 = vshrl.u32 %v347, 7
    %v349 = vsub.s32 %v346, %v348
    %v350 = vrot.slane %v342, %v349
    %v352 = vunpack.c.l.s4 1966171168
    %v353 = vunpack.c.0.s8 %v352
    %v354 = vlaneseq
    %v355 = vshrl.u32 %v354, 7
    %v356 = vsub.s32 %v353, %v355
    %v357 = vrot.slane %v343, %v356
    %v358 = vcombine.low %v350, %v357
    %v359 = vcombine.low %v219, %v220
    %v360 = vcombine.low %v221, %v212
    %v362 = vunpack.c.l.s4 1966171168
    %v363 = vunpack.c.0.s8 %v362
    %v364 = vlaneseq
    %v365 = vshrl.u32 %v364, 7
    %v366 = vsub.s32 %v363, %v365
    %v367 = vrot.slane %v359, %v366
    %v369 = vunpack.c.l.s4 1966171168
    %v370 = vunpack.c.0.s8 %v369
    %v371 = vlaneseq
    %v372 = vshrl.u32 %v371, 7
    %v373 = vsub.s32 %v370, %v372
    %v374 = vrot.slane %v360, %v373
    %v375 = vcombine.low %v367, %v374
    %v377 = vunpack.c.l.s4 1966171168
    %v378 = vunpack.c.0.s8 %v377
    %v379 = vlaneseq
    %v380 = vshrl.u32 %v379, 7
    %v381 = vsub.s32 %v378, %v380
    %v382 = vrot.slane %v375, %v381
    %v383 = vcombine.low %v244, %v258
    %v384 = vcombine.low %v259, %v260
    %v385 = vcombine.low %v251, %v244
    %v386 = vcombine.low %v258, %v259
    %v388 = vunpack.c.l.s4 1966171168
    %v389 = vunpack.c.0.s8 %v388
    %v390 = vlaneseq
    %v391 = vshrl.u32 %v390, 7
    %v392 = vsub.s32 %v389, %v391
    %v393 = vrot.slane %v383, %v392
    %v395 = vunpack.c.l.s4 1966171168
    %v396 = vunpack.c.0.s8 %v395
    %v397 = vlaneseq
    %v398 = vshrl.u32 %v397, 7
    %v399 = vsub.s32 %v396, %v398
    %v400 = vrot.slane %v384, %v399
    %v402 = vunpack.c.l.s4 1966171168
    %v403 = vunpack.c.0.s8 %v402
    %v404 = vlaneseq
    %v405 = vshrl.u32 %v404, 7
    %v406 = vsub.s32 %v403, %v405
    %v407 = vrot.slane %v385, %v406
    %v409 = vunpack.c.l.s4 1966171168
    %v410 = vunpack.c.0.s8 %v409
    %v411 = vlaneseq
    %v412 = vshrl.u32 %v411, 7
    %v413 = vsub.s32 %v410, %v412
    %v414 = vrot.slane %v386, %v413
    %v415 = vcombine.low %v393, %v400
    %v416 = vcombine.low %v407, %v414
    %v418 = vunpack.c.l.s4 1966171168
    %v419 = vunpack.c.0.s8 %v418
    %v420 = vlaneseq
    %v421 = vshrl.u32 %v420, 7
    %v422 = vsub.s32 %v419, %v421
    %v423 = vrot.slane %v415, %v422
    %v425 = vunpack.c.l.s4 1966171168
    %v426 = vunpack.c.0.s8 %v425
    %v427 = vlaneseq
    %v428 = vshrl.u32 %v427, 7
    %v429 = vsub.s32 %v426, %v428
    %v430 = vrot.slane %v416, %v429
    %v431 = vcombine.low %v423, %v430
    %v432 = vcombine.low %v260, %v251
    %v434 = vunpack.c.l.s4 1966171168
    %v435 = vunpack.c.0.s8 %v434
    %v436 = vlaneseq
    %v437 = vshrl.u32 %v436, 7
    %v438 = vsub.s32 %v435, %v437
    %v439 = vrot.slane %v432, %v438
    %v440 = vcombine.low %v439, %v393
    %v441 = vcombine.low %v400, %v407
    %v443 = vunpack.c.l.s4 1966171168
    %v444 = vunpack.c.0.s8 %v443
    %v445 = vlaneseq
    %v446 = vshrl.u32 %v445, 7
    %v447 = vsub.s32 %v444, %v446
    %v448 = vrot.slane %v440, %v447
    %v450 = vunpack.c.l.s4 1966171168
    %v451 = vunpack.c.0.s8 %v450
    %v452 = vlaneseq
    %v453 = vshrl.u32 %v452, 7
    %v454 = vsub.s32 %v451, %v453
    %v455 = vrot.slane %v441, %v454
    %v456 = vcombine.low %v448, %v455
    %v457 = vcombine.low %v414, %v439
    %v459 = vunpack.c.l.s4 1966171168
    %v460 = vunpack.c.0.s8 %v459
    %v461 = vlaneseq
    %v462 = vshrl.u32 %v461, 7
    %v463 = vsub.s32 %v460, %v462
    %v464 = vrot.slane %v457, %v463
    %vm468 = vcmask 523264
    %v469 = vsel %vm468, %v309, 0
    %v471 = vsel %vm468, %v358, 0
    %v473 = vsel %vm468, %v382, 0
    %475 = vmatprep.subr.mxu0 0.0
    %476 = vmatpush1.msra.mxu0 %v48
    %477 = vmatprep.subr.mxu0 0.0
    %478 = vmatpush1.msra.mxu0 %v49
    %479 = vmatprep.subr.mxu0 0.0
    %480 = vmatpush1.msra.mxu0 %v50
    %481 = vmatprep.subr.mxu0 0.0
    %482 = vmatpush1.msra.mxu0 %v51
    %483 = vmatprep.subr.mxu0 0.0
    %484 = vmatpush1.msra.mxu0 %v52
    %485 = vmatprep.subr.mxu0 0.0
    %486 = vmatpush1.msra.mxu0 %v53
    %487 = vmatprep.subr.mxu0 0.0
    %488 = vmatpush1.msra.mxu0 %v54
    %489 = vmatprep.subr.mxu0 0.0
    %490 = vmatpush1.msra.mxu0 %v55
    %491 = vmatprep.subr.mxu0 0.0
    %492 = vmatpush1.msra.mxu0 0.0
    %493 = vmatprep.subr.mxu0 0.0
    %494 = vmatpush1.msra.mxu0 0.0
    %495 = vmatprep.subr.mxu0 0.0
    %496 = vmatpush1.msra.mxu0 0.0
    %497 = vmatprep.subr.mxu0 0.0
    %498 = vmatpush1.msra.mxu0 0.0
    %499 = vmatprep.subr.mxu0 0.0
    %500 = vmatpush1.msra.mxu0 0.0
    %501 = vmatprep.subr.mxu0 0.0
    %502 = vmatpush1.msra.mxu0 0.0
    %503 = vmatprep.subr.mxu0 0.0
    %504 = vmatpush1.msra.mxu0 0.0
    %505 = vmatprep.subr.mxu0 0.0
    %506 = vmatpush1.msra.mxu0 0.0
    %507 = vmatprep.subr.mxu0 0.0
    %508 = vmatpush1.msra.mxu0 0.0
    %509 = vmatprep.subr.mxu0 0.0
    %510 = vmatpush1.msra.mxu0 0.0
    %511 = vmatprep.subr.mxu0 0.0
    %512 = vmatpush1.msra.mxu0 0.0
    %513 = vmatprep.subr.mxu0 0.0
    %514 = vmatpush1.msra.mxu0 0.0
    %515 = vmatprep.subr.mxu0 0.0
    %516 = vmatpush1.msra.mxu0 0.0
    %517 = vmatprep.subr.mxu0 0.0
    %518 = vmatpush1.msra.mxu0 0.0
    %519 = vmatprep.subr.mxu0 0.0
    %520 = vmatpush1.msra.mxu0 0.0
    %521 = vmatprep.subr.mxu0 0.0
    %522 = vmatpush1.msra.mxu0 0.0
    %523 = vmatprep.subr.mxu0 0.0
    %524 = vmatpush1.msra.mxu0 0.0
    %525 = vmatprep.subr.mxu0 0.0
    %526 = vmatpush1.msra.mxu0 0.0
    %527 = vmatprep.subr.mxu0 0.0
    %528 = vmatpush1.msra.mxu0 0.0
    %529 = vmatprep.subr.mxu0 0.0
    %530 = vmatpush1.msra.mxu0 0.0
    %531 = vmatprep.subr.mxu0 0.0
    %532 = vmatpush1.msra.mxu0 0.0
    %533 = vmatprep.subr.mxu0 0.0
    %534 = vmatpush1.msra.mxu0 0.0
    %535 = vmatprep.subr.mxu0 0.0
    %536 = vmatpush1.msra.mxu0 0.0
    %537 = vmatprep.subr.mxu0 0.0
    %538 = vmatpush1.msra.mxu0 0.0
    %539 = vmatprep.mubr.f32.mxu0 0.0
    %540 = vmatmul.mubr.f32.gmra.mrb[0].mxu0 %v469
    %v541 = vpop.f32.mrb[0].mxu0
    %v542 = vadd.f32 %v431, %v541
    %v543 = vpop.f32.mrb[0].mxu0
    %544 = vmatprep.mubr.f32.mxu0 0.0
    %545 = vmatmul.mubr.f32.gmra.mrb[0].mxu0 %v471
    %v546 = vpop.f32.mrb[0].mxu0
    %v547 = vadd.f32 %v456, %v546
    %v548 = vpop.f32.mrb[0].mxu0
    %549 = vmatprep.mubr.f32.mxu0 0.0
    %550 = vmatmul.mubr.f32.gmra.mrb[0].mxu0 %v473
    %v551 = vpop.f32.mrb[0].mxu0
    %v552 = vadd.f32 %v464, %v551
    %v553 = vpop.f32.mrb[0].mxu0
    %554 = vdwg.mxu0
    %v558 = vcombine.high %v542, %v542
    %v560 = vunpack.c.l.s4 1966171168
    %v561 = vunpack.c.0.s8 %v560
    %v562 = vlaneseq
    %v563 = vshrl.u32 %v562, 7
    %v564 = vsub.s32 %v561, %v563
    %v565 = vrot.slane %v542, %v564
    %v567 = vunpack.c.l.s4 1966171168
    %v568 = vunpack.c.0.s8 %v567
    %v569 = vlaneseq
    %v570 = vshrl.u32 %v569, 7
    %v571 = vsub.s32 %v568, %v570
    %v572 = vrot.slane %v558, %v571
    %v573 = vcombine.high %v565, %v565
    %v574 = vcombine.high %v572, %v572
    %v576 = vunpack.c.l.s4 1966171168
    %v577 = vunpack.c.0.s8 %v576
    %v578 = vlaneseq
    %v579 = vshrl.u32 %v578, 7
    %v580 = vsub.s32 %v577, %v579
    %v581 = vrot.slane %v565, %v580
    %v583 = vunpack.c.l.s4 1966171168
    %v584 = vunpack.c.0.s8 %v583
    %v585 = vlaneseq
    %v586 = vshrl.u32 %v585, 7
    %v587 = vsub.s32 %v584, %v586
    %v588 = vrot.slane %v572, %v587
    %v590 = vunpack.c.l.s4 1966171168
    %v591 = vunpack.c.0.s8 %v590
    %v592 = vlaneseq
    %v593 = vshrl.u32 %v592, 7
    %v594 = vsub.s32 %v591, %v593
    %v595 = vrot.slane %v573, %v594
    %v597 = vunpack.c.l.s4 1966171168
    %v598 = vunpack.c.0.s8 %v597
    %v599 = vlaneseq
    %v600 = vshrl.u32 %v599, 7
    %v601 = vsub.s32 %v598, %v600
    %v602 = vrot.slane %v574, %v601
    %v603 = vcombine.high %v581, %v581
    %v604 = vcombine.high %v588, %v588
    %v605 = vcombine.high %v595, %v595
    %v606 = vcombine.high %v602, %v602
    %v607 = vcombine.high %v547, %v547
    %v609 = vunpack.c.l.s4 1966171168
    %v610 = vunpack.c.0.s8 %v609
    %v611 = vlaneseq
    %v612 = vshrl.u32 %v611, 7
    %v613 = vsub.s32 %v610, %v612
    %v614 = vrot.slane %v547, %v613
    %v616 = vunpack.c.l.s4 1966171168
    %v617 = vunpack.c.0.s8 %v616
    %v618 = vlaneseq
    %v619 = vshrl.u32 %v618, 7
    %v620 = vsub.s32 %v617, %v619
    %v621 = vrot.slane %v607, %v620
    %v622 = vcombine.high %v614, %v614
    %v623 = vcombine.high %v621, %v621
    %v625 = vunpack.c.l.s4 1966171168
    %v626 = vunpack.c.0.s8 %v625
    %v627 = vlaneseq
    %v628 = vshrl.u32 %v627, 7
    %v629 = vsub.s32 %v626, %v628
    %v630 = vrot.slane %v614, %v629
    %v632 = vunpack.c.l.s4 1966171168
    %v633 = vunpack.c.0.s8 %v632
    %v634 = vlaneseq
    %v635 = vshrl.u32 %v634, 7
    %v636 = vsub.s32 %v633, %v635
    %v637 = vrot.slane %v621, %v636
    %v639 = vunpack.c.l.s4 1966171168
    %v640 = vunpack.c.0.s8 %v639
    %v641 = vlaneseq
    %v642 = vshrl.u32 %v641, 7
    %v643 = vsub.s32 %v640, %v642
    %v644 = vrot.slane %v622, %v643
    %v646 = vunpack.c.l.s4 1966171168
    %v647 = vunpack.c.0.s8 %v646
    %v648 = vlaneseq
    %v649 = vshrl.u32 %v648, 7
    %v650 = vsub.s32 %v647, %v649
    %v651 = vrot.slane %v623, %v650
    %v652 = vcombine.high %v630, %v630
    %v653 = vcombine.high %v637, %v637
    %v654 = vcombine.high %v644, %v644
    %v655 = vcombine.high %v651, %v651
    %v657 = vunpack.c.l.s4 1966171168
    %v658 = vunpack.c.0.s8 %v657
    %v659 = vlaneseq
    %v660 = vshrl.u32 %v659, 7
    %v661 = vsub.s32 %v658, %v660
    %v662 = vrot.slane %v552, %v661
    %v663 = vcombine.high %v662, %v662
    %v665 = vunpack.c.l.s4 1966171168
    %v666 = vunpack.c.0.s8 %v665
    %v667 = vlaneseq
    %v668 = vshrl.u32 %v667, 7
    %v669 = vsub.s32 %v666, %v668
    %v670 = vrot.slane %v662, %v669
    %v672 = vunpack.c.l.s4 1966171168
    %v673 = vunpack.c.0.s8 %v672
    %v674 = vlaneseq
    %v675 = vshrl.u32 %v674, 7
    %v676 = vsub.s32 %v673, %v675
    %v677 = vrot.slane %v663, %v676
    %v678 = vcombine.high %v670, %v670
    %v679 = vcombine.high %v677, %v677
    %v700 = vmul.f32 %v581, 0.5
    %v701 = vmul.f32 %v595, 0.5
    %v702 = vmul.f32 %v603, 0.5
    %v703 = vmul.f32 %v605, 0.5
    %v704 = vmul.f32 %v588, 0.5
    %v705 = vmul.f32 %v602, 0.5
    %v706 = vmul.f32 %v604, 0.5
    %v707 = vmul.f32 %v606, 0.5
    %v708 = vmul.f32 %v630, 0.5
    %v709 = vmul.f32 %v644, 0.5
    %v710 = vmul.f32 %v652, 0.5
    %v711 = vmul.f32 %v654, 0.5
    %v712 = vmul.f32 %v637, 0.5
    %v713 = vmul.f32 %v651, 0.5
    %v714 = vmul.f32 %v653, 0.5
    %v715 = vmul.f32 %v655, 0.5
    %v716 = vmul.f32 %v670, 0.5
    %v717 = vmul.f32 %v677, 0.5
    %v718 = vmul.f32 %v678, 0.5
    %v719 = vmul.f32 %v679, 0.5
    %v720 = vmul.f32 %v581, 0.70710677
    %v721 = vmul.f32 %v595, 0.70710677
    %v722 = vmul.f32 %v603, 0.70710677
    %v723 = vmul.f32 %v605, 0.70710677
    %v724 = vmul.f32 %v588, 0.70710677
    %v725 = vmul.f32 %v602, 0.70710677
    %v726 = vmul.f32 %v604, 0.70710677
    %v727 = vmul.f32 %v606, 0.70710677
    %v728 = vmul.f32 %v630, 0.70710677
    %v729 = vmul.f32 %v644, 0.70710677
    %v730 = vmul.f32 %v652, 0.70710677
    %v731 = vmul.f32 %v654, 0.70710677
    %v732 = vmul.f32 %v637, 0.70710677
    %v733 = vmul.f32 %v651, 0.70710677
    %v734 = vmul.f32 %v653, 0.70710677
    %v735 = vmul.f32 %v655, 0.70710677
    %v736 = vmul.f32 %v670, 0.70710677
    %v737 = vmul.f32 %v677, 0.70710677
    %v738 = vmul.f32 %v678, 0.70710677
    %v739 = vmul.f32 %v679, 0.70710677
    %v740 = verf.f32.pop %v720
    %v741 = verf.f32.pop %v721
    %v742 = verf.f32.pop %v722
    %v743 = verf.f32.pop %v723
    %v744 = verf.f32.pop %v724
    %v745 = verf.f32.pop %v725
    %v746 = verf.f32.pop %v726
    %v747 = verf.f32.pop %v727
    %v748 = verf.f32.pop %v728
    %v749 = verf.f32.pop %v729
    %v750 = verf.f32.pop %v730
    %v751 = verf.f32.pop %v731
    %v752 = verf.f32.pop %v732
    %v753 = verf.f32.pop %v733
    %v754 = verf.f32.pop %v734
    %v755 = verf.f32.pop %v735
    %v756 = verf.f32.pop %v736
    %v757 = verf.f32.pop %v737
    %v758 = verf.f32.pop %v738
    %v759 = verf.f32.pop %v739
    %v760 = vadd.f32 %v740, 1.0
    %v761 = vadd.f32 %v741, 1.0
    %v762 = vadd.f32 %v742, 1.0
    %v763 = vadd.f32 %v743, 1.0
    %v764 = vadd.f32 %v744, 1.0
    %v765 = vadd.f32 %v745, 1.0
    %v766 = vadd.f32 %v746, 1.0
    %v767 = vadd.f32 %v747, 1.0
    %v768 = vadd.f32 %v748, 1.0
    %v769 = vadd.f32 %v749, 1.0
    %v770 = vadd.f32 %v750, 1.0
    %v771 = vadd.f32 %v751, 1.0
    %v772 = vadd.f32 %v752, 1.0
    %v773 = vadd.f32 %v753, 1.0
    %v774 = vadd.f32 %v754, 1.0
    %v775 = vadd.f32 %v755, 1.0
    %v776 = vadd.f32 %v756, 1.0
    %v777 = vadd.f32 %v757, 1.0
    %v778 = vadd.f32 %v758, 1.0
    %v779 = vadd.f32 %v759, 1.0
    %v780 = vmul.f32 %v700, %v760
    %v781 = vmul.f32 %v701, %v761
    %v782 = vmul.f32 %v702, %v762
    %v783 = vmul.f32 %v703, %v763
    %v784 = vmul.f32 %v704, %v764
    %v785 = vmul.f32 %v705, %v765
    %v786 = vmul.f32 %v706, %v766
    %v787 = vmul.f32 %v707, %v767
    %v788 = vmul.f32 %v708, %v768
    %v789 = vmul.f32 %v709, %v769
    %v790 = vmul.f32 %v710, %v770
    %v791 = vmul.f32 %v711, %v771
    %v792 = vmul.f32 %v712, %v772
    %v793 = vmul.f32 %v713, %v773
    %v794 = vmul.f32 %v714, %v774
    %v795 = vmul.f32 %v715, %v775
    %v796 = vmul.f32 %v716, %v776
    %v797 = vmul.f32 %v717, %v777
    %v798 = vmul.f32 %v718, %v778
    %v799 = vmul.f32 %v719, %v779
    %v800 = vld [vmem:[%s3] sm:$0xff]
    %v801 = vld [vmem:[%s3 + $0x8] sm:$0xff]
    %v802 = vld [vmem:[%s3 + $0x10] sm:$0xff]
    %v803 = vld [vmem:[%s3 + $0x18] sm:$0xff]
    %v804 = vld [vmem:[%s4] sm:$0x1]
    %v806 = vlaneseq
    %v807 = vshrl.u32 %v806, 7
    %v808 = vsub.s32 0, %v807
    %v809 = vrot.slane %v804, %v808
    %v810 = vcombine.high %v809, %v809
    %v812 = vunpack.c.l.s4 1966171168
    %v813 = vunpack.c.0.s8 %v812
    %v814 = vlaneseq
    %v815 = vshrl.u32 %v814, 7
    %v816 = vsub.s32 %v813, %v815
    %v817 = vrot.slane %v809, %v816
    %v819 = vunpack.c.l.s4 1966171168
    %v820 = vunpack.c.0.s8 %v819
    %v821 = vlaneseq
    %v822 = vshrl.u32 %v821, 7
    %v823 = vsub.s32 %v820, %v822
    %v824 = vrot.slane %v810, %v823
    %v825 = vcombine.high %v817, %v817
    %v827 = vunpack.c.l.s4 1966171168
    %v828 = vunpack.c.0.s8 %v827
    %v829 = vlaneseq
    %v830 = vshrl.u32 %v829, 7
    %v831 = vsub.s32 %v828, %v830
    %v832 = vrot.slane %v817, %v831
    %v834 = vunpack.c.l.s4 1966171168
    %v835 = vunpack.c.0.s8 %v834
    %v836 = vlaneseq
    %v837 = vshrl.u32 %v836, 7
    %v838 = vsub.s32 %v835, %v837
    %v839 = vrot.slane %v824, %v838
    %v841 = vunpack.c.l.s4 1966171168
    %v842 = vunpack.c.0.s8 %v841
    %v843 = vlaneseq
    %v844 = vshrl.u32 %v843, 7
    %v845 = vsub.s32 %v842, %v844
    %v846 = vrot.slane %v825, %v845
    %v847 = vcombine.high %v832, %v832
    %v848 = vcombine.high %v846, %v846
    %v869 = vcombine.low %v780, %v781
    %v870 = vcombine.low %v782, %v783
    %v871 = vcombine.low %v784, %v785
    %v872 = vcombine.low %v786, %v787
    %v874 = vunpack.c.l.s4 1966171168
    %v875 = vunpack.c.0.s8 %v874
    %v876 = vlaneseq
    %v877 = vshrl.u32 %v876, 7
    %v878 = vsub.s32 %v875, %v877
    %v879 = vrot.slane %v869, %v878
    %v881 = vunpack.c.l.s4 1966171168
    %v882 = vunpack.c.0.s8 %v881
    %v883 = vlaneseq
    %v884 = vshrl.u32 %v883, 7
    %v885 = vsub.s32 %v882, %v884
    %v886 = vrot.slane %v870, %v885
    %v888 = vunpack.c.l.s4 1966171168
    %v889 = vunpack.c.0.s8 %v888
    %v890 = vlaneseq
    %v891 = vshrl.u32 %v890, 7
    %v892 = vsub.s32 %v889, %v891
    %v893 = vrot.slane %v871, %v892
    %v895 = vunpack.c.l.s4 1966171168
    %v896 = vunpack.c.0.s8 %v895
    %v897 = vlaneseq
    %v898 = vshrl.u32 %v897, 7
    %v899 = vsub.s32 %v896, %v898
    %v900 = vrot.slane %v872, %v899
    %v901 = vcombine.low %v879, %v886
    %v902 = vcombine.low %v893, %v900
    %v904 = vunpack.c.l.s4 1966171168
    %v905 = vunpack.c.0.s8 %v904
    %v906 = vlaneseq
    %v907 = vshrl.u32 %v906, 7
    %v908 = vsub.s32 %v905, %v907
    %v909 = vrot.slane %v901, %v908
    %v911 = vunpack.c.l.s4 1966171168
    %v912 = vunpack.c.0.s8 %v911
    %v913 = vlaneseq
    %v914 = vshrl.u32 %v913, 7
    %v915 = vsub.s32 %v912, %v914
    %v916 = vrot.slane %v902, %v915
    %v917 = vcombine.low %v909, %v916
    %v918 = vcombine.low %v788, %v789
    %v919 = vcombine.low %v790, %v791
    %v920 = vcombine.low %v792, %v793
    %v921 = vcombine.low %v794, %v795
    %v923 = vunpack.c.l.s4 1966171168
    %v924 = vunpack.c.0.s8 %v923
    %v925 = vlaneseq
    %v926 = vshrl.u32 %v925, 7
    %v927 = vsub.s32 %v924, %v926
    %v928 = vrot.slane %v918, %v927
    %v930 = vunpack.c.l.s4 1966171168
    %v931 = vunpack.c.0.s8 %v930
    %v932 = vlaneseq
    %v933 = vshrl.u32 %v932, 7
    %v934 = vsub.s32 %v931, %v933
    %v935 = vrot.slane %v919, %v934
    %v937 = vunpack.c.l.s4 1966171168
    %v938 = vunpack.c.0.s8 %v937
    %v939 = vlaneseq
    %v940 = vshrl.u32 %v939, 7
    %v941 = vsub.s32 %v938, %v940
    %v942 = vrot.slane %v920, %v941
    %v944 = vunpack.c.l.s4 1966171168
    %v945 = vunpack.c.0.s8 %v944
    %v946 = vlaneseq
    %v947 = vshrl.u32 %v946, 7
    %v948 = vsub.s32 %v945, %v947
    %v949 = vrot.slane %v921, %v948
    %v950 = vcombine.low %v928, %v935
    %v951 = vcombine.low %v942, %v949
    %v953 = vunpack.c.l.s4 1966171168
    %v954 = vunpack.c.0.s8 %v953
    %v955 = vlaneseq
    %v956 = vshrl.u32 %v955, 7
    %v957 = vsub.s32 %v954, %v956
    %v958 = vrot.slane %v950, %v957
    %v960 = vunpack.c.l.s4 1966171168
    %v961 = vunpack.c.0.s8 %v960
    %v962 = vlaneseq
    %v963 = vshrl.u32 %v962, 7
    %v964 = vsub.s32 %v961, %v963
    %v965 = vrot.slane %v951, %v964
    %v966 = vcombine.low %v958, %v965
    %v967 = vcombine.low %v796, %v797
    %v968 = vcombine.low %v798, %v799
    %v970 = vunpack.c.l.s4 1966171168
    %v971 = vunpack.c.0.s8 %v970
    %v972 = vlaneseq
    %v973 = vshrl.u32 %v972, 7
    %v974 = vsub.s32 %v971, %v973
    %v975 = vrot.slane %v967, %v974
    %v977 = vunpack.c.l.s4 1966171168
    %v978 = vunpack.c.0.s8 %v977
    %v979 = vlaneseq
    %v980 = vshrl.u32 %v979, 7
    %v981 = vsub.s32 %v978, %v980
    %v982 = vrot.slane %v968, %v981
    %v983 = vcombine.low %v975, %v982
    %v985 = vunpack.c.l.s4 1966171168
    %v986 = vunpack.c.0.s8 %v985
    %v987 = vlaneseq
    %v988 = vshrl.u32 %v987, 7
    %v989 = vsub.s32 %v986, %v988
    %v990 = vrot.slane %v983, %v989
    %v991 = vcombine.low %v832, %v846
    %v992 = vcombine.low %v847, %v848
    %v993 = vcombine.low %v839, %v832
    %v994 = vcombine.low %v846, %v847
    %v996 = vunpack.c.l.s4 1966171168
    %v997 = vunpack.c.0.s8 %v996
    %v998 = vlaneseq
    %v999 = vshrl.u32 %v998, 7
    %v1000 = vsub.s32 %v997, %v999
    %v1001 = vrot.slane %v991, %v1000
    %v1003 = vunpack.c.l.s4 1966171168
    %v1004 = vunpack.c.0.s8 %v1003
    %v1005 = vlaneseq
    %v1006 = vshrl.u32 %v1005, 7
    %v1007 = vsub.s32 %v1004, %v1006
    %v1008 = vrot.slane %v992, %v1007
    %v1010 = vunpack.c.l.s4 1966171168
    %v1011 = vunpack.c.0.s8 %v1010
    %v1012 = vlaneseq
    %v1013 = vshrl.u32 %v1012, 7
    %v1014 = vsub.s32 %v1011, %v1013
    %v1015 = vrot.slane %v993, %v1014
    %v1017 = vunpack.c.l.s4 1966171168
    %v1018 = vunpack.c.0.s8 %v1017
    %v1019 = vlaneseq
    %v1020 = vshrl.u32 %v1019, 7
    %v1021 = vsub.s32 %v1018, %v1020
    %v1022 = vrot.slane %v994, %v1021
    %v1023 = vcombine.low %v1001, %v1008
    %v1024 = vcombine.low %v1015, %v1022
    %v1026 = vunpack.c.l.s4 1966171168
    %v1027 = vunpack.c.0.s8 %v1026
    %v1028 = vlaneseq
    %v1029 = vshrl.u32 %v1028, 7
    %v1030 = vsub.s32 %v1027, %v1029
    %v1031 = vrot.slane %v1023, %v1030
    %v1033 = vunpack.c.l.s4 1966171168
    %v1034 = vunpack.c.0.s8 %v1033
    %v1035 = vlaneseq
    %v1036 = vshrl.u32 %v1035, 7
    %v1037 = vsub.s32 %v1034, %v1036
    %v1038 = vrot.slane %v1024, %v1037
    %v1039 = vcombine.low %v1031, %v1038
    %v1040 = vcombine.low %v848, %v839
    %v1042 = vunpack.c.l.s4 1966171168
    %v1043 = vunpack.c.0.s8 %v1042
    %v1044 = vlaneseq
    %v1045 = vshrl.u32 %v1044, 7
    %v1046 = vsub.s32 %v1043, %v1045
    %v1047 = vrot.slane %v1040, %v1046
    %v1048 = vcombine.low %v1047, %v1001
    %v1049 = vcombine.low %v1008, %v1015
    %v1051 = vunpack.c.l.s4 1966171168
    %v1052 = vunpack.c.0.s8 %v1051
    %v1053 = vlaneseq
    %v1054 = vshrl.u32 %v1053, 7
    %v1055 = vsub.s32 %v1052, %v1054
    %v1056 = vrot.slane %v1048, %v1055
    %v1058 = vunpack.c.l.s4 1966171168
    %v1059 = vunpack.c.0.s8 %v1058
    %v1060 = vlaneseq
    %v1061 = vshrl.u32 %v1060, 7
    %v1062 = vsub.s32 %v1059, %v1061
    %v1063 = vrot.slane %v1049, %v1062
    %v1064 = vcombine.low %v1056, %v1063
    %v1065 = vcombine.low %v1022, %v1047
    %v1067 = vunpack.c.l.s4 1966171168
    %v1068 = vunpack.c.0.s8 %v1067
    %v1069 = vlaneseq
    %v1070 = vshrl.u32 %v1069, 7
    %v1071 = vsub.s32 %v1068, %v1070
    %v1072 = vrot.slane %v1065, %v1071
    %vm1076 = vcmask 261120
    %v1077 = vsel %vm1076, %v917, 0
    %v1079 = vsel %vm1076, %v966, 0
    %v1081 = vsel %vm1076, %v990, 0
    %1083 = vmatprep.subr.mxu0 0.0
    %1084 = vmatpush1.msra.mxu0 %v800
    %1085 = vmatprep.subr.mxu0 0.0
    %1086 = vmatpush1.msra.mxu0 %v801
    %1087 = vmatprep.subr.mxu0 0.0
    %1088 = vmatpush1.msra.mxu0 %v802
    %1089 = vmatprep.subr.mxu0 0.0
    %1090 = vmatpush1.msra.mxu0 %v803
    %1091 = vmatprep.subr.mxu0 0.0
    %1092 = vmatpush1.msra.mxu0 0.0
    %1093 = vmatprep.subr.mxu0 0.0
    %1094 = vmatpush1.msra.mxu0 0.0
    %1095 = vmatprep.subr.mxu0 0.0
    %1096 = vmatpush1.msra.mxu0 0.0
    %1097 = vmatprep.subr.mxu0 0.0
    %1098 = vmatpush1.msra.mxu0 0.0
    %1099 = vmatprep.subr.mxu0 0.0
    %1100 = vmatpush1.msra.mxu0 0.0
    %1101 = vmatprep.subr.mxu0 0.0
    %1102 = vmatpush1.msra.mxu0 0.0
    %1103 = vmatprep.subr.mxu0 0.0
    %1104 = vmatpush1.msra.mxu0 0.0
    %1105 = vmatprep.subr.mxu0 0.0
    %1106 = vmatpush1.msra.mxu0 0.0
    %1107 = vmatprep.subr.mxu0 0.0
    %1108 = vmatpush1.msra.mxu0 0.0
    %1109 = vmatprep.subr.mxu0 0.0
    %1110 = vmatpush1.msra.mxu0 0.0
    %1111 = vmatprep.subr.mxu0 0.0
    %1112 = vmatpush1.msra.mxu0 0.0
    %1113 = vmatprep.subr.mxu0 0.0
    %1114 = vmatpush1.msra.mxu0 0.0
    %1115 = vmatprep.subr.mxu0 0.0
    %1116 = vmatpush1.msra.mxu0 0.0
    %1117 = vmatprep.subr.mxu0 0.0
    %1118 = vmatpush1.msra.mxu0 0.0
    %1119 = vmatprep.subr.mxu0 0.0
    %1120 = vmatpush1.msra.mxu0 0.0
    %1121 = vmatprep.subr.mxu0 0.0
    %1122 = vmatpush1.msra.mxu0 0.0
    %1123 = vmatprep.subr.mxu0 0.0
    %1124 = vmatpush1.msra.mxu0 0.0
    %1125 = vmatprep.subr.mxu0 0.0
    %1126 = vmatpush1.msra.mxu0 0.0
    %1127 = vmatprep.subr.mxu0 0.0
    %1128 = vmatpush1.msra.mxu0 0.0
    %1129 = vmatprep.subr.mxu0 0.0
    %1130 = vmatpush1.msra.mxu0 0.0
    %1131 = vmatprep.subr.mxu0 0.0
    %1132 = vmatpush1.msra.mxu0 0.0
    %1133 = vmatprep.subr.mxu0 0.0
    %1134 = vmatpush1.msra.mxu0 0.0
    %1135 = vmatprep.subr.mxu0 0.0
    %1136 = vmatpush1.msra.mxu0 0.0
    %1137 = vmatprep.subr.mxu0 0.0
    %1138 = vmatpush1.msra.mxu0 0.0
    %1139 = vmatprep.subr.mxu0 0.0
    %1140 = vmatpush1.msra.mxu0 0.0
    %1141 = vmatprep.subr.mxu0 0.0
    %1142 = vmatpush1.msra.mxu0 0.0
    %1143 = vmatprep.subr.mxu0 0.0
    %1144 = vmatpush1.msra.mxu0 0.0
    %1145 = vmatprep.subr.mxu0 0.0
    %1146 = vmatpush1.msra.mxu0 0.0
    %1147 = vmatprep.mubr.f32.mxu0 0.0
    %1148 = vmatmul.mubr.f32.gmra.mrb[0].mxu0 %v1077
    %v1149 = vpop.f32.mrb[0].mxu0
    %v1150 = vadd.f32 %v1039, %v1149
    %v1151 = vpop.f32.mrb[0].mxu0
    %1152 = vmatprep.mubr.f32.mxu0 0.0
    %1153 = vmatmul.mubr.f32.gmra.mrb[0].mxu0 %v1079
    %v1154 = vpop.f32.mrb[0].mxu0
    %v1155 = vadd.f32 %v1064, %v1154
    %v1156 = vpop.f32.mrb[0].mxu0
    %1157 = vmatprep.mubr.f32.mxu0 0.0
    %1158 = vmatmul.mubr.f32.gmra.mrb[0].mxu0 %v1081
    %v1159 = vpop.f32.mrb[0].mxu0
    %v1160 = vadd.f32 %v1072, %v1159
    %v1161 = vpop.f32.mrb[0].mxu0
    %1162 = vdwg.mxu0
    %v1166 = vcombine.high %v1150, %v1150
    %v1168 = vunpack.c.l.s4 1966171168
    %v1169 = vunpack.c.0.s8 %v1168
    %v1170 = vlaneseq
    %v1171 = vshrl.u32 %v1170, 7
    %v1172 = vsub.s32 %v1169, %v1171
    %v1173 = vrot.slane %v1150, %v1172
    %v1175 = vunpack.c.l.s4 1966171168
    %v1176 = vunpack.c.0.s8 %v1175
    %v1177 = vlaneseq
    %v1178 = vshrl.u32 %v1177, 7
    %v1179 = vsub.s32 %v1176, %v1178
    %v1180 = vrot.slane %v1166, %v1179
    %v1181 = vcombine.high %v1173, %v1173
    %v1182 = vcombine.high %v1180, %v1180
    %v1184 = vunpack.c.l.s4 1966171168
    %v1185 = vunpack.c.0.s8 %v1184
    %v1186 = vlaneseq
    %v1187 = vshrl.u32 %v1186, 7
    %v1188 = vsub.s32 %v1185, %v1187
    %v1189 = vrot.slane %v1173, %v1188
    %v1191 = vunpack.c.l.s4 1966171168
    %v1192 = vunpack.c.0.s8 %v1191
    %v1193 = vlaneseq
    %v1194 = vshrl.u32 %v1193, 7
    %v1195 = vsub.s32 %v1192, %v1194
    %v1196 = vrot.slane %v1180, %v1195
    %v1198 = vunpack.c.l.s4 1966171168
    %v1199 = vunpack.c.0.s8 %v1198
    %v1200 = vlaneseq
    %v1201 = vshrl.u32 %v1200, 7
    %v1202 = vsub.s32 %v1199, %v1201
    %v1203 = vrot.slane %v1181, %v1202
    %v1205 = vunpack.c.l.s4 1966171168
    %v1206 = vunpack.c.0.s8 %v1205
    %v1207 = vlaneseq
    %v1208 = vshrl.u32 %v1207, 7
    %v1209 = vsub.s32 %v1206, %v1208
    %v1210 = vrot.slane %v1182, %v1209
    %v1211 = vcombine.high %v1189, %v1189
    %v1212 = vcombine.high %v1196, %v1196
    %v1213 = vcombine.high %v1203, %v1203
    %v1214 = vcombine.high %v1210, %v1210
    %v1215 = vcombine.high %v1155, %v1155
    %v1217 = vunpack.c.l.s4 1966171168
    %v1218 = vunpack.c.0.s8 %v1217
    %v1219 = vlaneseq
    %v1220 = vshrl.u32 %v1219, 7
    %v1221 = vsub.s32 %v1218, %v1220
    %v1222 = vrot.slane %v1155, %v1221
    %v1224 = vunpack.c.l.s4 1966171168
    %v1225 = vunpack.c.0.s8 %v1224
    %v1226 = vlaneseq
    %v1227 = vshrl.u32 %v1226, 7
    %v1228 = vsub.s32 %v1225, %v1227
    %v1229 = vrot.slane %v1215, %v1228
    %v1230 = vcombine.high %v1222, %v1222
    %v1231 = vcombine.high %v1229, %v1229
    %v1233 = vunpack.c.l.s4 1966171168
    %v1234 = vunpack.c.0.s8 %v1233
    %v1235 = vlaneseq
    %v1236 = vshrl.u32 %v1235, 7
    %v1237 = vsub.s32 %v1234, %v1236
    %v1238 = vrot.slane %v1222, %v1237
    %v1240 = vunpack.c.l.s4 1966171168
    %v1241 = vunpack.c.0.s8 %v1240
    %v1242 = vlaneseq
    %v1243 = vshrl.u32 %v1242, 7
    %v1244 = vsub.s32 %v1241, %v1243
    %v1245 = vrot.slane %v1229, %v1244
    %v1247 = vunpack.c.l.s4 1966171168
    %v1248 = vunpack.c.0.s8 %v1247
    %v1249 = vlaneseq
    %v1250 = vshrl.u32 %v1249, 7
    %v1251 = vsub.s32 %v1248, %v1250
    %v1252 = vrot.slane %v1230, %v1251
    %v1254 = vunpack.c.l.s4 1966171168
    %v1255 = vunpack.c.0.s8 %v1254
    %v1256 = vlaneseq
    %v1257 = vshrl.u32 %v1256, 7
    %v1258 = vsub.s32 %v1255, %v1257
    %v1259 = vrot.slane %v1231, %v1258
    %v1260 = vcombine.high %v1238, %v1238
    %v1261 = vcombine.high %v1245, %v1245
    %v1262 = vcombine.high %v1252, %v1252
    %v1263 = vcombine.high %v1259, %v1259
    %v1265 = vunpack.c.l.s4 1966171168
    %v1266 = vunpack.c.0.s8 %v1265
    %v1267 = vlaneseq
    %v1268 = vshrl.u32 %v1267, 7
    %v1269 = vsub.s32 %v1266, %v1268
    %v1270 = vrot.slane %v1160, %v1269
    %v1271 = vcombine.high %v1270, %v1270
    %v1273 = vunpack.c.l.s4 1966171168
    %v1274 = vunpack.c.0.s8 %v1273
    %v1275 = vlaneseq
    %v1276 = vshrl.u32 %v1275, 7
    %v1277 = vsub.s32 %v1274, %v1276
    %v1278 = vrot.slane %v1270, %v1277
    %v1280 = vunpack.c.l.s4 1966171168
    %v1281 = vunpack.c.0.s8 %v1280
    %v1282 = vlaneseq
    %v1283 = vshrl.u32 %v1282, 7
    %v1284 = vsub.s32 %v1281, %v1283
    %v1285 = vrot.slane %v1271, %v1284
    %v1286 = vcombine.high %v1278, %v1278
    %v1287 = vcombine.high %v1285, %v1285
    %v1308 = vmul.f32 %v1189, %v1189
    %v1309 = vmul.f32 %v1203, %v1203
    %v1310 = vmul.f32 %v1211, %v1211
    %v1311 = vmul.f32 %v1213, %v1213
    %v1312 = vmul.f32 %v1196, %v1196
    %v1313 = vmul.f32 %v1210, %v1210
    %v1314 = vmul.f32 %v1212, %v1212
    %v1315 = vmul.f32 %v1214, %v1214
    %v1316 = vmul.f32 %v1238, %v1238
    %v1317 = vmul.f32 %v1252, %v1252
    %v1318 = vmul.f32 %v1260, %v1260
    %v1319 = vmul.f32 %v1262, %v1262
    %v1320 = vmul.f32 %v1245, %v1245
    %v1321 = vmul.f32 %v1259, %v1259
    %v1322 = vmul.f32 %v1261, %v1261
    %v1323 = vmul.f32 %v1263, %v1263
    %v1324 = vmul.f32 %v1278, %v1278
    %v1325 = vmul.f32 %v1285, %v1285
    %v1326 = vmul.f32 %v1286, %v1286
    %v1327 = vmul.f32 %v1287, %v1287
    %v1348 = vcombine.low %v1308, %v1309
    %v1349 = vcombine.low %v1310, %v1311
    %v1351 = vunpack.c.l.s4 1966171168
    %v1352 = vunpack.c.0.s8 %v1351
    %v1353 = vlaneseq
    %v1354 = vshrl.u32 %v1353, 7
    %v1355 = vsub.s32 %v1352, %v1354
    %v1356 = vrot.slane %v1348, %v1355
    %v1358 = vunpack.c.l.s4 1966171168
    %v1359 = vunpack.c.0.s8 %v1358
    %v1360 = vlaneseq
    %v1361 = vshrl.u32 %v1360, 7
    %v1362 = vsub.s32 %v1359, %v1361
    %v1363 = vrot.slane %v1349, %v1362
    %v1365 = vunpack.c.l.s4 1966171168
    %v1366 = vunpack.c.0.s8 %v1365
    %v1367 = vlaneseq
    %v1368 = vshrl.u32 %v1367, 7
    %v1369 = vsub.s32 %v1366, %v1368
    %v1370 = vrot.slane %v1312, %v1369
    %v1371 = vcombine.low %v1356, %v1363
    %v1373 = vunpack.c.l.s4 1966171168
    %v1374 = vunpack.c.0.s8 %v1373
    %v1375 = vlaneseq
    %v1376 = vshrl.u32 %v1375, 7
    %v1377 = vsub.s32 %v1374, %v1376
    %v1378 = vrot.slane %v1371, %v1377
    %v1380 = vunpack.c.l.s4 1966171168
    %v1381 = vunpack.c.0.s8 %v1380
    %v1382 = vlaneseq
    %v1383 = vshrl.u32 %v1382, 7
    %v1384 = vsub.s32 %v1381, %v1383
    %v1385 = vrot.slane %v1370, %v1384
    %v1386 = vcombine.low %v1378, %v1385
    %v1387 = vcombine.low %v1313, %v1314
    %v1388 = vcombine.low %v1315, %v1316
    %v1390 = vunpack.c.l.s4 1966171168
    %v1391 = vunpack.c.0.s8 %v1390
    %v1392 = vlaneseq
    %v1393 = vshrl.u32 %v1392, 7
    %v1394 = vsub.s32 %v1391, %v1393
    %v1395 = vrot.slane %v1387, %v1394
    %v1397 = vunpack.c.l.s4 1966171168
    %v1398 = vunpack.c.0.s8 %v1397
    %v1399 = vlaneseq
    %v1400 = vshrl.u32 %v1399, 7
    %v1401 = vsub.s32 %v1398, %v1400
    %v1402 = vrot.slane %v1388, %v1401
    %v1404 = vunpack.c.l.s4 1966171168
    %v1405 = vunpack.c.0.s8 %v1404
    %v1406 = vlaneseq
    %v1407 = vshrl.u32 %v1406, 7
    %v1408 = vsub.s32 %v1405, %v1407
    %v1409 = vrot.slane %v1317, %v1408
    %v1410 = vcombine.low %v1395, %v1402
    %v1412 = vunpack.c.l.s4 1966171168
    %v1413 = vunpack.c.0.s8 %v1412
    %v1414 = vlaneseq
    %v1415 = vshrl.u32 %v1414, 7
    %v1416 = vsub.s32 %v1413, %v1415
    %v1417 = vrot.slane %v1410, %v1416
    %v1419 = vunpack.c.l.s4 1966171168
    %v1420 = vunpack.c.0.s8 %v1419
    %v1421 = vlaneseq
    %v1422 = vshrl.u32 %v1421, 7
    %v1423 = vsub.s32 %v1420, %v1422
    %v1424 = vrot.slane %v1409, %v1423
    %v1425 = vcombine.low %v1417, %v1424
    %v1426 = vcombine.low %v1318, %v1319
    %v1427 = vcombine.low %v1320, %v1321
    %v1429 = vunpack.c.l.s4 1966171168
    %v1430 = vunpack.c.0.s8 %v1429
    %v1431 = vlaneseq
    %v1432 = vshrl.u32 %v1431, 7
    %v1433 = vsub.s32 %v1430, %v1432
    %v1434 = vrot.slane %v1426, %v1433
    %v1436 = vunpack.c.l.s4 1966171168
    %v1437 = vunpack.c.0.s8 %v1436
    %v1438 = vlaneseq
    %v1439 = vshrl.u32 %v1438, 7
    %v1440 = vsub.s32 %v1437, %v1439
    %v1441 = vrot.slane %v1427, %v1440
    %v1443 = vunpack.c.l.s4 1966171168
    %v1444 = vunpack.c.0.s8 %v1443
    %v1445 = vlaneseq
    %v1446 = vshrl.u32 %v1445, 7
    %v1447 = vsub.s32 %v1444, %v1446
    %v1448 = vrot.slane %v1322, %v1447
    %v1449 = vcombine.low %v1434, %v1441
    %v1451 = vunpack.c.l.s4 1966171168
    %v1452 = vunpack.c.0.s8 %v1451
    %v1453 = vlaneseq
    %v1454 = vshrl.u32 %v1453, 7
    %v1455 = vsub.s32 %v1452, %v1454
    %v1456 = vrot.slane %v1449, %v1455
    %v1458 = vunpack.c.l.s4 1966171168
    %v1459 = vunpack.c.0.s8 %v1458
    %v1460 = vlaneseq
    %v1461 = vshrl.u32 %v1460, 7
    %v1462 = vsub.s32 %v1459, %v1461
    %v1463 = vrot.slane %v1448, %v1462
    %v1464 = vcombine.low %v1456, %v1463
    %v1465 = vcombine.low %v1323, %v1324
    %v1466 = vcombine.low %v1325, %v1326
    %v1468 = vunpack.c.l.s4 1966171168
    %v1469 = vunpack.c.0.s8 %v1468
    %v1470 = vlaneseq
    %v1471 = vshrl.u32 %v1470, 7
    %v1472 = vsub.s32 %v1469, %v1471
    %v1473 = vrot.slane %v1465, %v1472
    %v1475 = vunpack.c.l.s4 1966171168
    %v1476 = vunpack.c.0.s8 %v1475
    %v1477 = vlaneseq
    %v1478 = vshrl.u32 %v1477, 7
    %v1479 = vsub.s32 %v1476, %v1478
    %v1480 = vrot.slane %v1466, %v1479
    %v1482 = vunpack.c.l.s4 1966171168
    %v1483 = vunpack.c.0.s8 %v1482
    %v1484 = vlaneseq
    %v1485 = vshrl.u32 %v1484, 7
    %v1486 = vsub.s32 %v1483, %v1485
    %v1487 = vrot.slane %v1327, %v1486
    %v1488 = vcombine.low %v1473, %v1480
    %v1490 = vunpack.c.l.s4 1966171168
    %v1491 = vunpack.c.0.s8 %v1490
    %v1492 = vlaneseq
    %v1493 = vshrl.u32 %v1492, 7
    %v1494 = vsub.s32 %v1491, %v1493
    %v1495 = vrot.slane %v1488, %v1494
    %v1497 = vunpack.c.l.s4 1966171168
    %v1498 = vunpack.c.0.s8 %v1497
    %v1499 = vlaneseq
    %v1500 = vshrl.u32 %v1499, 7
    %v1501 = vsub.s32 %v1498, %v1500
    %v1502 = vrot.slane %v1487, %v1501
    %v1503 = vcombine.low %v1495, %v1502
    %vm1508 = vcmask 258048
    %v1509 = vsel %vm1508, %v1386, 0.0
    %v1510 = vrot.slane %v1509, 4
    %v1511 = vadd.f32 %v1509, %v1510
    %v1512 = vrot.slane %v1511, 2
    %v1513 = vadd.f32 %v1511, %v1512
    %v1514 = vrot.slane %v1513, 1
    %v1515 = vadd.f32 %v1513, %v1514
    %v1516 = vsel %vm1508, %v1425, 0.0
    %v1517 = vrot.slane %v1516, 4
    %v1518 = vadd.f32 %v1516, %v1517
    %v1519 = vrot.slane %v1518, 2
    %v1520 = vadd.f32 %v1518, %v1519
    %v1521 = vrot.slane %v1520, 1
    %v1522 = vadd.f32 %v1520, %v1521
    %v1523 = vsel %vm1508, %v1464, 0.0
    %v1524 = vrot.slane %v1523, 4
    %v1525 = vadd.f32 %v1523, %v1524
    %v1526 = vrot.slane %v1525, 2
    %v1527 = vadd.f32 %v1525, %v1526
    %v1528 = vrot.slane %v1527, 1
    %v1529 = vadd.f32 %v1527, %v1528
    %v1530 = vsel %vm1508, %v1503, 0.0
    %v1531 = vrot.slane %v1530, 4
    %v1532 = vadd.f32 %v1530, %v1531
    %v1533 = vrot.slane %v1532, 2
    %v1534 = vadd.f32 %v1532, %v1533
    %v1535 = vrot.slane %v1534, 1
    %v1536 = vadd.f32 %v1534, %v1535
    %v1537 = vrsqrt.pop %v1515
    %v1538 = vmul.f32 %v1515, %v1537
    %vm1539 = vcmp.eq.f32.partialorder %v1515, inf
    %v1540 = vsel %vm1539, %v1515, %v1538
    %vm1541 = vcmp.eq.f32.partialorder %v1515, 0.0
    %v1542 = vand.u32 %v1515, 2147483648
    %v1543 = vsel %vm1541, %v1542, %v1540
    %v1544 = vrsqrt.pop %v1522
    %v1545 = vmul.f32 %v1522, %v1544
    %vm1546 = vcmp.eq.f32.partialorder %v1522, inf
    %v1547 = vsel %vm1546, %v1522, %v1545
    %vm1548 = vcmp.eq.f32.partialorder %v1522, 0.0
    %v1549 = vand.u32 %v1522, 2147483648
    %v1550 = vsel %vm1548, %v1549, %v1547
    %v1551 = vrsqrt.pop %v1529
    %v1552 = vmul.f32 %v1529, %v1551
    %vm1553 = vcmp.eq.f32.partialorder %v1529, inf
    %v1554 = vsel %vm1553, %v1529, %v1552
    %vm1555 = vcmp.eq.f32.partialorder %v1529, 0.0
    %v1556 = vand.u32 %v1529, 2147483648
    %v1557 = vsel %vm1555, %v1556, %v1554
    %v1558 = vrsqrt.pop %v1536
    %v1559 = vmul.f32 %v1536, %v1558
    %vm1560 = vcmp.eq.f32.partialorder %v1536, inf
    %v1561 = vsel %vm1560, %v1536, %v1559
    %vm1562 = vcmp.eq.f32.partialorder %v1536, 0.0
    %v1563 = vand.u32 %v1536, 2147483648
    %v1564 = vsel %vm1562, %v1563, %v1561
    %v1565 = vmax.f32 %v1543, 1e-12
    %v1566 = vmax.f32 %v1550, 1e-12
    %v1567 = vmax.f32 %v1557, 1e-12
    %v1568 = vmax.f32 %v1564, 1e-12
    %v1573 = vcombine.high %v1565, %v1565
    %v1575 = vunpack.c.l.s4 1966171168
    %v1576 = vunpack.c.0.s8 %v1575
    %v1577 = vlaneseq
    %v1578 = vshrl.u32 %v1577, 7
    %v1579 = vsub.s32 %v1576, %v1578
    %v1580 = vrot.slane %v1565, %v1579
    %v1582 = vunpack.c.l.s4 1966171168
    %v1583 = vunpack.c.0.s8 %v1582
    %v1584 = vlaneseq
    %v1585 = vshrl.u32 %v1584, 7
    %v1586 = vsub.s32 %v1583, %v1585
    %v1587 = vrot.slane %v1573, %v1586
    %v1588 = vcombine.high %v1580, %v1580
    %v1590 = vunpack.c.l.s4 1966171168
    %v1591 = vunpack.c.0.s8 %v1590
    %v1592 = vlaneseq
    %v1593 = vshrl.u32 %v1592, 7
    %v1594 = vsub.s32 %v1591, %v1593
    %v1595 = vrot.slane %v1580, %v1594
    %v1597 = vunpack.c.l.s4 1966171168
    %v1598 = vunpack.c.0.s8 %v1597
    %v1599 = vlaneseq
    %v1600 = vshrl.u32 %v1599, 7
    %v1601 = vsub.s32 %v1598, %v1600
    %v1602 = vrot.slane %v1587, %v1601
    %v1604 = vunpack.c.l.s4 1966171168
    %v1605 = vunpack.c.0.s8 %v1604
    %v1606 = vlaneseq
    %v1607 = vshrl.u32 %v1606, 7
    %v1608 = vsub.s32 %v1605, %v1607
    %v1609 = vrot.slane %v1588, %v1608
    %v1610 = vcombine.high %v1595, %v1595
    %v1611 = vcombine.high %v1609, %v1609
    %v1612 = vcombine.high %v1566, %v1566
    %v1614 = vunpack.c.l.s4 1966171168
    %v1615 = vunpack.c.0.s8 %v1614
    %v1616 = vlaneseq
    %v1617 = vshrl.u32 %v1616, 7
    %v1618 = vsub.s32 %v1615, %v1617
    %v1619 = vrot.slane %v1566, %v1618
    %v1621 = vunpack.c.l.s4 1966171168
    %v1622 = vunpack.c.0.s8 %v1621
    %v1623 = vlaneseq
    %v1624 = vshrl.u32 %v1623, 7
    %v1625 = vsub.s32 %v1622, %v1624
    %v1626 = vrot.slane %v1612, %v1625
    %v1627 = vcombine.high %v1619, %v1619
    %v1629 = vunpack.c.l.s4 1966171168
    %v1630 = vunpack.c.0.s8 %v1629
    %v1631 = vlaneseq
    %v1632 = vshrl.u32 %v1631, 7
    %v1633 = vsub.s32 %v1630, %v1632
    %v1634 = vrot.slane %v1619, %v1633
    %v1636 = vunpack.c.l.s4 1966171168
    %v1637 = vunpack.c.0.s8 %v1636
    %v1638 = vlaneseq
    %v1639 = vshrl.u32 %v1638, 7
    %v1640 = vsub.s32 %v1637, %v1639
    %v1641 = vrot.slane %v1626, %v1640
    %v1643 = vunpack.c.l.s4 1966171168
    %v1644 = vunpack.c.0.s8 %v1643
    %v1645 = vlaneseq
    %v1646 = vshrl.u32 %v1645, 7
    %v1647 = vsub.s32 %v1644, %v1646
    %v1648 = vrot.slane %v1627, %v1647
    %v1649 = vcombine.high %v1634, %v1634
    %v1650 = vcombine.high %v1648, %v1648
    %v1651 = vcombine.high %v1567, %v1567
    %v1653 = vunpack.c.l.s4 1966171168
    %v1654 = vunpack.c.0.s8 %v1653
    %v1655 = vlaneseq
    %v1656 = vshrl.u32 %v1655, 7
    %v1657 = vsub.s32 %v1654, %v1656
    %v1658 = vrot.slane %v1567, %v1657
    %v1660 = vunpack.c.l.s4 1966171168
    %v1661 = vunpack.c.0.s8 %v1660
    %v1662 = vlaneseq
    %v1663 = vshrl.u32 %v1662, 7
    %v1664 = vsub.s32 %v1661, %v1663
    %v1665 = vrot.slane %v1651, %v1664
    %v1666 = vcombine.high %v1658, %v1658
    %v1668 = vunpack.c.l.s4 1966171168
    %v1669 = vunpack.c.0.s8 %v1668
    %v1670 = vlaneseq
    %v1671 = vshrl.u32 %v1670, 7
    %v1672 = vsub.s32 %v1669, %v1671
    %v1673 = vrot.slane %v1658, %v1672
    %v1675 = vunpack.c.l.s4 1966171168
    %v1676 = vunpack.c.0.s8 %v1675
    %v1677 = vlaneseq
    %v1678 = vshrl.u32 %v1677, 7
    %v1679 = vsub.s32 %v1676, %v1678
    %v1680 = vrot.slane %v1665, %v1679
    %v1682 = vunpack.c.l.s4 1966171168
    %v1683 = vunpack.c.0.s8 %v1682
    %v1684 = vlaneseq
    %v1685 = vshrl.u32 %v1684, 7
    %v1686 = vsub.s32 %v1683, %v1685
    %v1687 = vrot.slane %v1666, %v1686
    %v1688 = vcombine.high %v1673, %v1673
    %v1689 = vcombine.high %v1687, %v1687
    %v1690 = vcombine.high %v1568, %v1568
    %v1692 = vunpack.c.l.s4 1966171168
    %v1693 = vunpack.c.0.s8 %v1692
    %v1694 = vlaneseq
    %v1695 = vshrl.u32 %v1694, 7
    %v1696 = vsub.s32 %v1693, %v1695
    %v1697 = vrot.slane %v1568, %v1696
    %v1699 = vunpack.c.l.s4 1966171168
    %v1700 = vunpack.c.0.s8 %v1699
    %v1701 = vlaneseq
    %v1702 = vshrl.u32 %v1701, 7
    %v1703 = vsub.s32 %v1700, %v1702
    %v1704 = vrot.slane %v1690, %v1703
    %v1705 = vcombine.high %v1697, %v1697
    %v1707 = vunpack.c.l.s4 1966171168
    %v1708 = vunpack.c.0.s8 %v1707
    %v1709 = vlaneseq
    %v1710 = vshrl.u32 %v1709, 7
    %v1711 = vsub.s32 %v1708, %v1710
    %v1712 = vrot.slane %v1697, %v1711
    %v1714 = vunpack.c.l.s4 1966171168
    %v1715 = vunpack.c.0.s8 %v1714
    %v1716 = vlaneseq
    %v1717 = vshrl.u32 %v1716, 7
    %v1718 = vsub.s32 %v1715, %v1717
    %v1719 = vrot.slane %v1704, %v1718
    %v1721 = vunpack.c.l.s4 1966171168
    %v1722 = vunpack.c.0.s8 %v1721
    %v1723 = vlaneseq
    %v1724 = vshrl.u32 %v1723, 7
    %v1725 = vsub.s32 %v1722, %v1724
    %v1726 = vrot.slane %v1705, %v1725
    %v1727 = vcombine.high %v1712, %v1712
    %v1728 = vcombine.high %v1726, %v1726
    %v1749 = vrcp.pop %v1595
    %v1750 = vmul.f32 %v1189, %v1749
    %v1751 = vrcp.pop %v1609
    %v1752 = vmul.f32 %v1203, %v1751
    %v1753 = vrcp.pop %v1610
    %v1754 = vmul.f32 %v1211, %v1753
    %v1755 = vrcp.pop %v1611
    %v1756 = vmul.f32 %v1213, %v1755
    %v1757 = vrcp.pop %v1602
    %v1758 = vmul.f32 %v1196, %v1757
    %v1759 = vrcp.pop %v1634
    %v1760 = vmul.f32 %v1210, %v1759
    %v1761 = vrcp.pop %v1648
    %v1762 = vmul.f32 %v1212, %v1761
    %v1763 = vrcp.pop %v1649
    %v1764 = vmul.f32 %v1214, %v1763
    %v1765 = vrcp.pop %v1650
    %v1766 = vmul.f32 %v1238, %v1765
    %v1767 = vrcp.pop %v1641
    %v1768 = vmul.f32 %v1252, %v1767
    %v1769 = vrcp.pop %v1673
    %v1770 = vmul.f32 %v1260, %v1769
    %v1771 = vrcp.pop %v1687
    %v1772 = vmul.f32 %v1262, %v1771
    %v1773 = vrcp.pop %v1688
    %v1774 = vmul.f32 %v1245, %v1773
    %v1775 = vrcp.pop %v1689
    %v1776 = vmul.f32 %v1259, %v1775
    %v1777 = vrcp.pop %v1680
    %v1778 = vmul.f32 %v1261, %v1777
    %v1779 = vrcp.pop %v1712
    %v1780 = vmul.f32 %v1263, %v1779
    %v1781 = vrcp.pop %v1726
    %v1782 = vmul.f32 %v1278, %v1781
    %v1783 = vrcp.pop %v1727
    %v1784 = vmul.f32 %v1285, %v1783
    %v1785 = vrcp.pop %v1728
    %v1786 = vmul.f32 %v1286, %v1785
    %v1787 = vrcp.pop %v1719
    %v1788 = vmul.f32 %v1287, %v1787
    %v1809 = vcombine.low %v1750, %v1752
    %v1810 = vcombine.low %v1754, %v1756
    %v1812 = vunpack.c.l.s4 1966171168
    %v1813 = vunpack.c.0.s8 %v1812
    %v1814 = vlaneseq
    %v1815 = vshrl.u32 %v1814, 7
    %v1816 = vsub.s32 %v1813, %v1815
    %v1817 = vrot.slane %v1809, %v1816
    %v1819 = vunpack.c.l.s4 1966171168
    %v1820 = vunpack.c.0.s8 %v1819
    %v1821 = vlaneseq
    %v1822 = vshrl.u32 %v1821, 7
    %v1823 = vsub.s32 %v1820, %v1822
    %v1824 = vrot.slane %v1810, %v1823
    %v1826 = vunpack.c.l.s4 1966171168
    %v1827 = vunpack.c.0.s8 %v1826
    %v1828 = vlaneseq
    %v1829 = vshrl.u32 %v1828, 7
    %v1830 = vsub.s32 %v1827, %v1829
    %v1831 = vrot.slane %v1758, %v1830
    %v1832 = vcombine.low %v1817, %v1824
    %v1834 = vunpack.c.l.s4 1966171168
    %v1835 = vunpack.c.0.s8 %v1834
    %v1836 = vlaneseq
    %v1837 = vshrl.u32 %v1836, 7
    %v1838 = vsub.s32 %v1835, %v1837
    %v1839 = vrot.slane %v1832, %v1838
    %v1841 = vunpack.c.l.s4 1966171168
    %v1842 = vunpack.c.0.s8 %v1841
    %v1843 = vlaneseq
    %v1844 = vshrl.u32 %v1843, 7
    %v1845 = vsub.s32 %v1842, %v1844
    %v1846 = vrot.slane %v1831, %v1845
    %v1847 = vcombine.low %v1839, %v1846
    %v1848 = vcombine.low %v1760, %v1762
    %v1849 = vcombine.low %v1764, %v1766
    %v1851 = vunpack.c.l.s4 1966171168
    %v1852 = vunpack.c.0.s8 %v1851
    %v1853 = vlaneseq
    %v1854 = vshrl.u32 %v1853, 7
    %v1855 = vsub.s32 %v1852, %v1854
    %v1856 = vrot.slane %v1848, %v1855
    %v1858 = vunpack.c.l.s4 1966171168
    %v1859 = vunpack.c.0.s8 %v1858
    %v1860 = vlaneseq
    %v1861 = vshrl.u32 %v1860, 7
    %v1862 = vsub.s32 %v1859, %v1861
    %v1863 = vrot.slane %v1849, %v1862
    %v1865 = vunpack.c.l.s4 1966171168
    %v1866 = vunpack.c.0.s8 %v1865
    %v1867 = vlaneseq
    %v1868 = vshrl.u32 %v1867, 7
    %v1869 = vsub.s32 %v1866, %v1868
    %v1870 = vrot.slane %v1768, %v1869
    %v1871 = vcombine.low %v1856, %v1863
    %v1873 = vunpack.c.l.s4 1966171168
    %v1874 = vunpack.c.0.s8 %v1873
    %v1875 = vlaneseq
    %v1876 = vshrl.u32 %v1875, 7
    %v1877 = vsub.s32 %v1874, %v1876
    %v1878 = vrot.slane %v1871, %v1877
    %v1880 = vunpack.c.l.s4 1966171168
    %v1881 = vunpack.c.0.s8 %v1880
    %v1882 = vlaneseq
    %v1883 = vshrl.u32 %v1882, 7
    %v1884 = vsub.s32 %v1881, %v1883
    %v1885 = vrot.slane %v1870, %v1884
    %v1886 = vcombine.low %v1878, %v1885
    %v1887 = vcombine.low %v1770, %v1772
    %v1888 = vcombine.low %v1774, %v1776
    %v1890 = vunpack.c.l.s4 1966171168
    %v1891 = vunpack.c.0.s8 %v1890
    %v1892 = vlaneseq
    %v1893 = vshrl.u32 %v1892, 7
    %v1894 = vsub.s32 %v1891, %v1893
    %v1895 = vrot.slane %v1887, %v1894
    %v1897 = vunpack.c.l.s4 1966171168
    %v1898 = vunpack.c.0.s8 %v1897
    %v1899 = vlaneseq
    %v1900 = vshrl.u32 %v1899, 7
    %v1901 = vsub.s32 %v1898, %v1900
    %v1902 = vrot.slane %v1888, %v1901
    %v1904 = vunpack.c.l.s4 1966171168
    %v1905 = vunpack.c.0.s8 %v1904
    %v1906 = vlaneseq
    %v1907 = vshrl.u32 %v1906, 7
    %v1908 = vsub.s32 %v1905, %v1907
    %v1909 = vrot.slane %v1778, %v1908
    %v1910 = vcombine.low %v1895, %v1902
    %v1912 = vunpack.c.l.s4 1966171168
    %v1913 = vunpack.c.0.s8 %v1912
    %v1914 = vlaneseq
    %v1915 = vshrl.u32 %v1914, 7
    %v1916 = vsub.s32 %v1913, %v1915
    %v1917 = vrot.slane %v1910, %v1916
    %v1919 = vunpack.c.l.s4 1966171168
    %v1920 = vunpack.c.0.s8 %v1919
    %v1921 = vlaneseq
    %v1922 = vshrl.u32 %v1921, 7
    %v1923 = vsub.s32 %v1920, %v1922
    %v1924 = vrot.slane %v1909, %v1923
    %v1925 = vcombine.low %v1917, %v1924
    %v1926 = vcombine.low %v1780, %v1782
    %v1927 = vcombine.low %v1784, %v1786
    %v1929 = vunpack.c.l.s4 1966171168
    %v1930 = vunpack.c.0.s8 %v1929
    %v1931 = vlaneseq
    %v1932 = vshrl.u32 %v1931, 7
    %v1933 = vsub.s32 %v1930, %v1932
    %v1934 = vrot.slane %v1926, %v1933
    %v1936 = vunpack.c.l.s4 1966171168
    %v1937 = vunpack.c.0.s8 %v1936
    %v1938 = vlaneseq
    %v1939 = vshrl.u32 %v1938, 7
    %v1940 = vsub.s32 %v1937, %v1939
    %v1941 = vrot.slane %v1927, %v1940
    %v1943 = vunpack.c.l.s4 1966171168
    %v1944 = vunpack.c.0.s8 %v1943
    %v1945 = vlaneseq
    %v1946 = vshrl.u32 %v1945, 7
    %v1947 = vsub.s32 %v1944, %v1946
    %v1948 = vrot.slane %v1788, %v1947
    %v1949 = vcombine.low %v1934, %v1941
    %v1951 = vunpack.c.l.s4 1966171168
    %v1952 = vunpack.c.0.s8 %v1951
    %v1953 = vlaneseq
    %v1954 = vshrl.u32 %v1953, 7
    %v1955 = vsub.s32 %v1952, %v1954
    %v1956 = vrot.slane %v1949, %v1955
    %v1958 = vunpack.c.l.s4 1966171168
    %v1959 = vunpack.c.0.s8 %v1958
    %v1960 = vlaneseq
    %v1961 = vshrl.u32 %v1960, 7
    %v1962 = vsub.s32 %v1959, %v1961
    %v1963 = vrot.slane %v1948, %v1962
    %v1964 = vcombine.low %v1956, %v1963
    %1969 = vst.msk [vmem:[#allocation3] sm:$0x1f] %vm1508, %v1847
    %1970 = vst.msk [vmem:[#allocation3 + $0x8] sm:$0x1f] %vm1508, %v1886
    %1971 = vst.msk [vmem:[#allocation3 + $0x10] sm:$0x1f] %vm1508, %v1925
    %1972 = vst.msk [vmem:[#allocation3 + $0x18] sm:$0x1f] %vm1508, %v1964
    %v1973 = vcombine.low %v1750, %v1760
    %v1974 = vcombine.low %v1770, %v1780
    %v1976 = vunpack.c.l.s4 1966171168
    %v1977 = vunpack.c.0.s8 %v1976
    %v1978 = vlaneseq
    %v1979 = vshrl.u32 %v1978, 7
    %v1980 = vsub.s32 %v1977, %v1979
    %v1981 = vrot.slane %v1973, %v1980
    %v1983 = vunpack.c.l.s4 1966171168
    %v1984 = vunpack.c.0.s8 %v1983
    %v1985 = vlaneseq
    %v1986 = vshrl.u32 %v1985, 7
    %v1987 = vsub.s32 %v1984, %v1986
    %v1988 = vrot.slane %v1974, %v1987
    %v1989 = vcombine.low %v1981, %v1988
    %v1991 = vunpack.c.l.s4 1966171168
    %v1992 = vunpack.c.0.s8 %v1991
    %v1993 = vlaneseq
    %v1994 = vshrl.u32 %v1993, 7
    %v1995 = vsub.s32 %v1992, %v1994
    %v1996 = vrot.slane %v1989, %v1995
    %vm1998 = vcmask 257024
    %1999 = vst.msk [vmem:[%s13] sm:$0xf] %vm1998, %v1996
    %v2000 = vld [vmem:[%s5] sm:$0xff]
    %v2001 = vld [vmem:[%s5 + $0x8] sm:$0xff]
    %v2002 = vld [vmem:[%s5 + $0x10] sm:$0xff]
    %v2003 = vld [vmem:[%s5 + $0x18] sm:$0xff]
    %v2004 = vld [vmem:[%s6] sm:$0x1]
    %v2006 = vlaneseq
    %v2007 = vshrl.u32 %v2006, 7
    %v2008 = vsub.s32 0, %v2007
    %v2009 = vrot.slane %v2004, %v2008
    %v2010 = vcombine.high %v2009, %v2009
    %v2012 = vunpack.c.l.s4 1966171168
    %v2013 = vunpack.c.0.s8 %v2012
    %v2014 = vlaneseq
    %v2015 = vshrl.u32 %v2014, 7
    %v2016 = vsub.s32 %v2013, %v2015
    %v2017 = vrot.slane %v2009, %v2016
    %v2019 = vunpack.c.l.s4 1966171168
    %v2020 = vunpack.c.0.s8 %v2019
    %v2021 = vlaneseq
    %v2022 = vshrl.u32 %v2021, 7
    %v2023 = vsub.s32 %v2020, %v2022
    %v2024 = vrot.slane %v2010, %v2023
    %v2025 = vcombine.high %v2017, %v2017
    %v2027 = vunpack.c.l.s4 1966171168
    %v2028 = vunpack.c.0.s8 %v2027
    %v2029 = vlaneseq
    %v2030 = vshrl.u32 %v2029, 7
    %v2031 = vsub.s32 %v2028, %v2030
    %v2032 = vrot.slane %v2017, %v2031
    %v2034 = vunpack.c.l.s4 1966171168
    %v2035 = vunpack.c.0.s8 %v2034
    %v2036 = vlaneseq
    %v2037 = vshrl.u32 %v2036, 7
    %v2038 = vsub.s32 %v2035, %v2037
    %v2039 = vrot.slane %v2024, %v2038
    %v2041 = vunpack.c.l.s4 1966171168
    %v2042 = vunpack.c.0.s8 %v2041
    %v2043 = vlaneseq
    %v2044 = vshrl.u32 %v2043, 7
    %v2045 = vsub.s32 %v2042, %v2044
    %v2046 = vrot.slane %v2025, %v2045
    %v2047 = vcombine.high %v2032, %v2032
    %v2048 = vcombine.high %v2046, %v2046
    %v2049 = vcombine.low %v1758, %v1760
    %v2050 = vcombine.low %v1762, %v1764
    %v2052 = vunpack.c.l.s4 1966171168
    %v2053 = vunpack.c.0.s8 %v2052
    %v2054 = vlaneseq
    %v2055 = vshrl.u32 %v2054, 7
    %v2056 = vsub.s32 %v2053, %v2055
    %v2057 = vrot.slane %v2049, %v2056
    %v2059 = vunpack.c.l.s4 1966171168
    %v2060 = vunpack.c.0.s8 %v2059
    %v2061 = vlaneseq
    %v2062 = vshrl.u32 %v2061, 7
    %v2063 = vsub.s32 %v2060, %v2062
    %v2064 = vrot.slane %v2050, %v2063
    %v2065 = vcombine.low %v2057, %v2064
    %v2067 = vunpack.c.l.s4 1966171168
    %v2068 = vunpack.c.0.s8 %v2067
    %v2069 = vlaneseq
    %v2070 = vshrl.u32 %v2069, 7
    %v2071 = vsub.s32 %v2068, %v2070
    %v2072 = vrot.slane %v2065, %v2071
    %v2073 = vcombine.low %v1839, %v2072
    %v2074 = vcombine.low %v1766, %v1768
    %v2075 = vcombine.low %v1778, %v1780
    %v2077 = vunpack.c.l.s4 1966171168
    %v2078 = vunpack.c.0.s8 %v2077
    %v2079 = vlaneseq
    %v2080 = vshrl.u32 %v2079, 7
    %v2081 = vsub.s32 %v2078, %v2080
    %v2082 = vrot.slane %v2074, %v2081
    %v2084 = vunpack.c.l.s4 1966171168
    %v2085 = vunpack.c.0.s8 %v2084
    %v2086 = vlaneseq
    %v2087 = vshrl.u32 %v2086, 7
    %v2088 = vsub.s32 %v2085, %v2087
    %v2089 = vrot.slane %v2075, %v2088
    %v2090 = vcombine.low %v2082, %v1895
    %v2091 = vcombine.low %v1902, %v2089
    %v2093 = vunpack.c.l.s4 1966171168
    %v2094 = vunpack.c.0.s8 %v2093
    %v2095 = vlaneseq
    %v2096 = vshrl.u32 %v2095, 7
    %v2097 = vsub.s32 %v2094, %v2096
    %v2098 = vrot.slane %v2090, %v2097
    %v2100 = vunpack.c.l.s4 1966171168
    %v2101 = vunpack.c.0.s8 %v2100
    %v2102 = vlaneseq
    %v2103 = vshrl.u32 %v2102, 7
    %v2104 = vsub.s32 %v2101, %v2103
    %v2105 = vrot.slane %v2091, %v2104
    %v2106 = vcombine.low %v2098, %v2105
    %v2107 = vcombine.low %v1782, %v1784
    %v2108 = vcombine.low %v1786, %v1788
    %v2110 = vunpack.c.l.s4 1966171168
    %v2111 = vunpack.c.0.s8 %v2110
    %v2112 = vlaneseq
    %v2113 = vshrl.u32 %v2112, 7
    %v2114 = vsub.s32 %v2111, %v2113
    %v2115 = vrot.slane %v2107, %v2114
    %v2117 = vunpack.c.l.s4 1966171168
    %v2118 = vunpack.c.0.s8 %v2117
    %v2119 = vlaneseq
    %v2120 = vshrl.u32 %v2119, 7
    %v2121 = vsub.s32 %v2118, %v2120
    %v2122 = vrot.slane %v2108, %v2121
    %v2123 = vcombine.low %v2115, %v2122
    %v2125 = vunpack.c.l.s4 1966171168
    %v2126 = vunpack.c.0.s8 %v2125
    %v2127 = vlaneseq
    %v2128 = vshrl.u32 %v2127, 7
    %v2129 = vsub.s32 %v2126, %v2128
    %v2130 = vrot.slane %v2123, %v2129
    %v2131 = vcombine.low %v2032, %v2046
    %v2132 = vcombine.low %v2047, %v2048
    %v2133 = vcombine.low %v2039, %v2032
    %v2134 = vcombine.low %v2046, %v2047
    %v2136 = vunpack.c.l.s4 1966171168
    %v2137 = vunpack.c.0.s8 %v2136
    %v2138 = vlaneseq
    %v2139 = vshrl.u32 %v2138, 7
    %v2140 = vsub.s32 %v2137, %v2139
    %v2141 = vrot.slane %v2131, %v2140
    %v2143 = vunpack.c.l.s4 1966171168
    %v2144 = vunpack.c.0.s8 %v2143
    %v2145 = vlaneseq
    %v2146 = vshrl.u32 %v2145, 7
    %v2147 = vsub.s32 %v2144, %v2146
    %v2148 = vrot.slane %v2132, %v2147
    %v2150 = vunpack.c.l.s4 1966171168
    %v2151 = vunpack.c.0.s8 %v2150
    %v2152 = vlaneseq
    %v2153 = vshrl.u32 %v2152, 7
    %v2154 = vsub.s32 %v2151, %v2153
    %v2155 = vrot.slane %v2133, %v2154
    %v2157 = vunpack.c.l.s4 1966171168
    %v2158 = vunpack.c.0.s8 %v2157
    %v2159 = vlaneseq
    %v2160 = vshrl.u32 %v2159, 7
    %v2161 = vsub.s32 %v2158, %v2160
    %v2162 = vrot.slane %v2134, %v2161
    %v2163 = vcombine.low %v2141, %v2148
    %v2164 = vcombine.low %v2155, %v2162
    %v2166 = vunpack.c.l.s4 1966171168
    %v2167 = vunpack.c.0.s8 %v2166
    %v2168 = vlaneseq
    %v2169 = vshrl.u32 %v2168, 7
    %v2170 = vsub.s32 %v2167, %v2169
    %v2171 = vrot.slane %v2163, %v2170
    %v2173 = vunpack.c.l.s4 1966171168
    %v2174 = vunpack.c.0.s8 %v2173
    %v2175 = vlaneseq
    %v2176 = vshrl.u32 %v2175, 7
    %v2177 = vsub.s32 %v2174, %v2176
    %v2178 = vrot.slane %v2164, %v2177
    %v2179 = vcombine.low %v2171, %v2178
    %v2180 = vcombine.low %v2048, %v2039
    %v2182 = vunpack.c.l.s4 1966171168
    %v2183 = vunpack.c.0.s8 %v2182
    %v2184 = vlaneseq
    %v2185 = vshrl.u32 %v2184, 7
    %v2186 = vsub.s32 %v2183, %v2185
    %v2187 = vrot.slane %v2180, %v2186
    %v2188 = vcombine.low %v2187, %v2141
    %v2189 = vcombine.low %v2148, %v2155
    %v2191 = vunpack.c.l.s4 1966171168
    %v2192 = vunpack.c.0.s8 %v2191
    %v2193 = vlaneseq
    %v2194 = vshrl.u32 %v2193, 7
    %v2195 = vsub.s32 %v2192, %v2194
    %v2196 = vrot.slane %v2188, %v2195
    %v2198 = vunpack.c.l.s4 1966171168
    %v2199 = vunpack.c.0.s8 %v2198
    %v2200 = vlaneseq
    %v2201 = vshrl.u32 %v2200, 7
    %v2202 = vsub.s32 %v2199, %v2201
    %v2203 = vrot.slane %v2189, %v2202
    %v2204 = vcombine.low %v2196, %v2203
    %v2205 = vcombine.low %v2162, %v2187
    %v2207 = vunpack.c.l.s4 1966171168
    %v2208 = vunpack.c.0.s8 %v2207
    %v2209 = vlaneseq
    %v2210 = vshrl.u32 %v2209, 7
    %v2211 = vsub.s32 %v2208, %v2210
    %v2212 = vrot.slane %v2205, %v2211
    %v2216 = vsel %vm1076, %v2073, 0
    %v2218 = vsel %vm1076, %v2106, 0
    %v2220 = vsel %vm1076, %v2130, 0
    %2222 = vmatprep.subr.mxu0 0.0
    %2223 = vmatpush1.msra.mxu0 %v2000
    %2224 = vmatprep.subr.mxu0 0.0
    %2225 = vmatpush1.msra.mxu0 %v2001
    %2226 = vmatprep.subr.mxu0 0.0
    %2227 = vmatpush1.msra.mxu0 %v2002
    %2228 = vmatprep.subr.mxu0 0.0
    %2229 = vmatpush1.msra.mxu0 %v2003
    %2230 = vmatprep.subr.mxu0 0.0
    %2231 = vmatpush1.msra.mxu0 0.0
    %2232 = vmatprep.subr.mxu0 0.0
    %2233 = vmatpush1.msra.mxu0 0.0
    %2234 = vmatprep.subr.mxu0 0.0
    %2235 = vmatpush1.msra.mxu0 0.0
    %2236 = vmatprep.subr.mxu0 0.0
    %2237 = vmatpush1.msra.mxu0 0.0
    %2238 = vmatprep.subr.mxu0 0.0
    %2239 = vmatpush1.msra.mxu0 0.0
    %2240 = vmatprep.subr.mxu0 0.0
    %2241 = vmatpush1.msra.mxu0 0.0
    %2242 = vmatprep.subr.mxu0 0.0
    %2243 = vmatpush1.msra.mxu0 0.0
    %2244 = vmatprep.subr.mxu0 0.0
    %2245 = vmatpush1.msra.mxu0 0.0
    %2246 = vmatprep.subr.mxu0 0.0
    %2247 = vmatpush1.msra.mxu0 0.0
    %2248 = vmatprep.subr.mxu0 0.0
    %2249 = vmatpush1.msra.mxu0 0.0
    %2250 = vmatprep.subr.mxu0 0.0
    %2251 = vmatpush1.msra.mxu0 0.0
    %2252 = vmatprep.subr.mxu0 0.0
    %2253 = vmatpush1.msra.mxu0 0.0
    %2254 = vmatprep.subr.mxu0 0.0
    %2255 = vmatpush1.msra.mxu0 0.0
    %2256 = vmatprep.subr.mxu0 0.0
    %2257 = vmatpush1.msra.mxu0 0.0
    %2258 = vmatprep.subr.mxu0 0.0
    %2259 = vmatpush1.msra.mxu0 0.0
    %2260 = vmatprep.subr.mxu0 0.0
    %2261 = vmatpush1.msra.mxu0 0.0
    %2262 = vmatprep.subr.mxu0 0.0
    %2263 = vmatpush1.msra.mxu0 0.0
    %2264 = vmatprep.subr.mxu0 0.0
    %2265 = vmatpush1.msra.mxu0 0.0
    %2266 = vmatprep.subr.mxu0 0.0
    %2267 = vmatpush1.msra.mxu0 0.0
    %2268 = vmatprep.subr.mxu0 0.0
    %2269 = vmatpush1.msra.mxu0 0.0
    %2270 = vmatprep.subr.mxu0 0.0
    %2271 = vmatpush1.msra.mxu0 0.0
    %2272 = vmatprep.subr.mxu0 0.0
    %2273 = vmatpush1.msra.mxu0 0.0
    %2274 = vmatprep.subr.mxu0 0.0
    %2275 = vmatpush1.msra.mxu0 0.0
    %2276 = vmatprep.subr.mxu0 0.0
    %2277 = vmatpush1.msra.mxu0 0.0
    %2278 = vmatprep.subr.mxu0 0.0
    %2279 = vmatpush1.msra.mxu0 0.0
    %2280 = vmatprep.subr.mxu0 0.0
    %2281 = vmatpush1.msra.mxu0 0.0
    %2282 = vmatprep.subr.mxu0 0.0
    %2283 = vmatpush1.msra.mxu0 0.0
    %2284 = vmatprep.subr.mxu0 0.0
    %2285 = vmatpush1.msra.mxu0 0.0
    %2286 = vmatprep.mubr.f32.mxu0 0.0
    %2287 = vmatmul.mubr.f32.gmra.mrb[0].mxu0 %v2216
    %v2288 = vpop.f32.mrb[0].mxu0
    %v2289 = vadd.f32 %v2179, %v2288
    %v2290 = vpop.f32.mrb[0].mxu0
    %2291 = vmatprep.mubr.f32.mxu0 0.0
    %2292 = vmatmul.mubr.f32.gmra.mrb[0].mxu0 %v2218
    %v2293 = vpop.f32.mrb[0].mxu0
    %v2294 = vadd.f32 %v2204, %v2293
    %v2295 = vpop.f32.mrb[0].mxu0
    %2296 = vmatprep.mubr.f32.mxu0 0.0
    %2297 = vmatmul.mubr.f32.gmra.mrb[0].mxu0 %v2220
    %v2298 = vpop.f32.mrb[0].mxu0
    %v2299 = vadd.f32 %v2212, %v2298
    %v2300 = vpop.f32.mrb[0].mxu0
    %2301 = vdwg.mxu0
    %v2305 = vcombine.high %v2289, %v2289
    %v2307 = vunpack.c.l.s4 1966171168
    %v2308 = vunpack.c.0.s8 %v2307
    %v2309 = vlaneseq
    %v2310 = vshrl.u32 %v2309, 7
    %v2311 = vsub.s32 %v2308, %v2310
    %v2312 = vrot.slane %v2289, %v2311
    %v2314 = vunpack.c.l.s4 1966171168
    %v2315 = vunpack.c.0.s8 %v2314
    %v2316 = vlaneseq
    %v2317 = vshrl.u32 %v2316, 7
    %v2318 = vsub.s32 %v2315, %v2317
    %v2319 = vrot.slane %v2305, %v2318
    %v2320 = vcombine.high %v2312, %v2312
    %v2321 = vcombine.high %v2319, %v2319
    %v2323 = vunpack.c.l.s4 1966171168
    %v2324 = vunpack.c.0.s8 %v2323
    %v2325 = vlaneseq
    %v2326 = vshrl.u32 %v2325, 7
    %v2327 = vsub.s32 %v2324, %v2326
    %v2328 = vrot.slane %v2312, %v2327
    %v2330 = vunpack.c.l.s4 1966171168
    %v2331 = vunpack.c.0.s8 %v2330
    %v2332 = vlaneseq
    %v2333 = vshrl.u32 %v2332, 7
    %v2334 = vsub.s32 %v2331, %v2333
    %v2335 = vrot.slane %v2319, %v2334
    %v2337 = vunpack.c.l.s4 1966171168
    %v2338 = vunpack.c.0.s8 %v2337
    %v2339 = vlaneseq
    %v2340 = vshrl.u32 %v2339, 7
    %v2341 = vsub.s32 %v2338, %v2340
    %v2342 = vrot.slane %v2320, %v2341
    %v2344 = vunpack.c.l.s4 1966171168
    %v2345 = vunpack.c.0.s8 %v2344
    %v2346 = vlaneseq
    %v2347 = vshrl.u32 %v2346, 7
    %v2348 = vsub.s32 %v2345, %v2347
    %v2349 = vrot.slane %v2321, %v2348
    %v2350 = vcombine.high %v2328, %v2328
    %v2351 = vcombine.high %v2335, %v2335
    %v2352 = vcombine.high %v2342, %v2342
    %v2353 = vcombine.high %v2349, %v2349
    %v2354 = vcombine.high %v2294, %v2294
    %v2356 = vunpack.c.l.s4 1966171168
    %v2357 = vunpack.c.0.s8 %v2356
    %v2358 = vlaneseq
    %v2359 = vshrl.u32 %v2358, 7
    %v2360 = vsub.s32 %v2357, %v2359
    %v2361 = vrot.slane %v2294, %v2360
    %v2363 = vunpack.c.l.s4 1966171168
    %v2364 = vunpack.c.0.s8 %v2363
    %v2365 = vlaneseq
    %v2366 = vshrl.u32 %v2365, 7
    %v2367 = vsub.s32 %v2364, %v2366
    %v2368 = vrot.slane %v2354, %v2367
    %v2369 = vcombine.high %v2361, %v2361
    %v2370 = vcombine.high %v2368, %v2368
    %v2372 = vunpack.c.l.s4 1966171168
    %v2373 = vunpack.c.0.s8 %v2372
    %v2374 = vlaneseq
    %v2375 = vshrl.u32 %v2374, 7
    %v2376 = vsub.s32 %v2373, %v2375
    %v2377 = vrot.slane %v2361, %v2376
    %v2379 = vunpack.c.l.s4 1966171168
    %v2380 = vunpack.c.0.s8 %v2379
    %v2381 = vlaneseq
    %v2382 = vshrl.u32 %v2381, 7
    %v2383 = vsub.s32 %v2380, %v2382
    %v2384 = vrot.slane %v2368, %v2383
    %v2386 = vunpack.c.l.s4 1966171168
    %v2387 = vunpack.c.0.s8 %v2386
    %v2388 = vlaneseq
    %v2389 = vshrl.u32 %v2388, 7
    %v2390 = vsub.s32 %v2387, %v2389
    %v2391 = vrot.slane %v2369, %v2390
    %v2393 = vunpack.c.l.s4 1966171168
    %v2394 = vunpack.c.0.s8 %v2393
    %v2395 = vlaneseq
    %v2396 = vshrl.u32 %v2395, 7
    %v2397 = vsub.s32 %v2394, %v2396
    %v2398 = vrot.slane %v2370, %v2397
    %v2399 = vcombine.high %v2377, %v2377
    %v2400 = vcombine.high %v2384, %v2384
    %v2401 = vcombine.high %v2391, %v2391
    %v2402 = vcombine.high %v2398, %v2398
    %v2404 = vunpack.c.l.s4 1966171168
    %v2405 = vunpack.c.0.s8 %v2404
    %v2406 = vlaneseq
    %v2407 = vshrl.u32 %v2406, 7
    %v2408 = vsub.s32 %v2405, %v2407
    %v2409 = vrot.slane %v2299, %v2408
    %v2410 = vcombine.high %v2409, %v2409
    %v2412 = vunpack.c.l.s4 1966171168
    %v2413 = vunpack.c.0.s8 %v2412
    %v2414 = vlaneseq
    %v2415 = vshrl.u32 %v2414, 7
    %v2416 = vsub.s32 %v2413, %v2415
    %v2417 = vrot.slane %v2409, %v2416
    %v2419 = vunpack.c.l.s4 1966171168
    %v2420 = vunpack.c.0.s8 %v2419
    %v2421 = vlaneseq
    %v2422 = vshrl.u32 %v2421, 7
    %v2423 = vsub.s32 %v2420, %v2422
    %v2424 = vrot.slane %v2410, %v2423
    %v2425 = vcombine.high %v2417, %v2417
    %v2426 = vcombine.high %v2424, %v2424
    %v2447 = vmul.f32 %v2328, 0.5
    %v2448 = vmul.f32 %v2342, 0.5
    %v2449 = vmul.f32 %v2350, 0.5
    %v2450 = vmul.f32 %v2352, 0.5
    %v2451 = vmul.f32 %v2335, 0.5
    %v2452 = vmul.f32 %v2349, 0.5
    %v2453 = vmul.f32 %v2351, 0.5
    %v2454 = vmul.f32 %v2353, 0.5
    %v2455 = vmul.f32 %v2377, 0.5
    %v2456 = vmul.f32 %v2391, 0.5
    %v2457 = vmul.f32 %v2399, 0.5
    %v2458 = vmul.f32 %v2401, 0.5
    %v2459 = vmul.f32 %v2384, 0.5
    %v2460 = vmul.f32 %v2398, 0.5
    %v2461 = vmul.f32 %v2400, 0.5
    %v2462 = vmul.f32 %v2402, 0.5
    %v2463 = vmul.f32 %v2417, 0.5
    %v2464 = vmul.f32 %v2424, 0.5
    %v2465 = vmul.f32 %v2425, 0.5
    %v2466 = vmul.f32 %v2426, 0.5
    %v2467 = vmul.f32 %v2328, 0.70710677
    %v2468 = vmul.f32 %v2342, 0.70710677
    %v2469 = vmul.f32 %v2350, 0.70710677
    %v2470 = vmul.f32 %v2352, 0.70710677
    %v2471 = vmul.f32 %v2335, 0.70710677
    %v2472 = vmul.f32 %v2349, 0.70710677
    %v2473 = vmul.f32 %v2351, 0.70710677
    %v2474 = vmul.f32 %v2353, 0.70710677
    %v2475 = vmul.f32 %v2377, 0.70710677
    %v2476 = vmul.f32 %v2391, 0.70710677
    %v2477 = vmul.f32 %v2399, 0.70710677
    %v2478 = vmul.f32 %v2401, 0.70710677
    %v2479 = vmul.f32 %v2384, 0.70710677
    %v2480 = vmul.f32 %v2398, 0.70710677
    %v2481 = vmul.f32 %v2400, 0.70710677
    %v2482 = vmul.f32 %v2402, 0.70710677
    %v2483 = vmul.f32 %v2417, 0.70710677
    %v2484 = vmul.f32 %v2424, 0.70710677
    %v2485 = vmul.f32 %v2425, 0.70710677
    %v2486 = vmul.f32 %v2426, 0.70710677
    %v2487 = verf.f32.pop %v2467
    %v2488 = verf.f32.pop %v2468
    %v2489 = verf.f32.pop %v2469
    %v2490 = verf.f32.pop %v2470
    %v2491 = verf.f32.pop %v2471
    %v2492 = verf.f32.pop %v2472
    %v2493 = verf.f32.pop %v2473
    %v2494 = verf.f32.pop %v2474
    %v2495 = verf.f32.pop %v2475
    %v2496 = verf.f32.pop %v2476
    %v2497 = verf.f32.pop %v2477
    %v2498 = verf.f32.pop %v2478
    %v2499 = verf.f32.pop %v2479
    %v2500 = verf.f32.pop %v2480
    %v2501 = verf.f32.pop %v2481
    %v2502 = verf.f32.pop %v2482
    %v2503 = verf.f32.pop %v2483
    %v2504 = verf.f32.pop %v2484
    %v2505 = verf.f32.pop %v2485
    %v2506 = verf.f32.pop %v2486
    %v2507 = vadd.f32 %v2487, 1.0
    %v2508 = vadd.f32 %v2488, 1.0
    %v2509 = vadd.f32 %v2489, 1.0
    %v2510 = vadd.f32 %v2490, 1.0
    %v2511 = vadd.f32 %v2491, 1.0
    %v2512 = vadd.f32 %v2492, 1.0
    %v2513 = vadd.f32 %v2493, 1.0
    %v2514 = vadd.f32 %v2494, 1.0
    %v2515 = vadd.f32 %v2495, 1.0
    %v2516 = vadd.f32 %v2496, 1.0
    %v2517 = vadd.f32 %v2497, 1.0
    %v2518 = vadd.f32 %v2498, 1.0
    %v2519 = vadd.f32 %v2499, 1.0
    %v2520 = vadd.f32 %v2500, 1.0
    %v2521 = vadd.f32 %v2501, 1.0
    %v2522 = vadd.f32 %v2502, 1.0
    %v2523 = vadd.f32 %v2503, 1.0
    %v2524 = vadd.f32 %v2504, 1.0
    %v2525 = vadd.f32 %v2505, 1.0
    %v2526 = vadd.f32 %v2506, 1.0
    %v2527 = vmul.f32 %v2447, %v2507
    %v2528 = vmul.f32 %v2448, %v2508
    %v2529 = vmul.f32 %v2449, %v2509
    %v2530 = vmul.f32 %v2450, %v2510
    %v2531 = vmul.f32 %v2451, %v2511
    %v2532 = vmul.f32 %v2452, %v2512
    %v2533 = vmul.f32 %v2453, %v2513
    %v2534 = vmul.f32 %v2454, %v2514
    %v2535 = vmul.f32 %v2455, %v2515
    %v2536 = vmul.f32 %v2456, %v2516
    %v2537 = vmul.f32 %v2457, %v2517
    %v2538 = vmul.f32 %v2458, %v2518
    %v2539 = vmul.f32 %v2459, %v2519
    %v2540 = vmul.f32 %v2460, %v2520
    %v2541 = vmul.f32 %v2461, %v2521
    %v2542 = vmul.f32 %v2462, %v2522
    %v2543 = vmul.f32 %v2463, %v2523
    %v2544 = vmul.f32 %v2464, %v2524
    %v2545 = vmul.f32 %v2465, %v2525
    %v2546 = vmul.f32 %v2466, %v2526
    %v2547 = vld [vmem:[%s7] sm:$0xff]
    %v2548 = vld [vmem:[%s7 + $0x8] sm:$0xff]
    %v2549 = vld [vmem:[%s7 + $0x10] sm:$0xff]
    %v2550 = vld [vmem:[%s7 + $0x18] sm:$0xff]
    %v2551 = vld [vmem:[#allocation2] sm:$0x1]
    %v2553 = vlaneseq
    %v2554 = vshrl.u32 %v2553, 7
    %v2555 = vsub.s32 0, %v2554
    %v2556 = vrot.slane %v2551, %v2555
    %v2557 = vcombine.high %v2556, %v2556
    %v2559 = vunpack.c.l.s4 1966171168
    %v2560 = vunpack.c.0.s8 %v2559
    %v2561 = vlaneseq
    %v2562 = vshrl.u32 %v2561, 7
    %v2563 = vsub.s32 %v2560, %v2562
    %v2564 = vrot.slane %v2556, %v2563
    %v2566 = vunpack.c.l.s4 1966171168
    %v2567 = vunpack.c.0.s8 %v2566
    %v2568 = vlaneseq
    %v2569 = vshrl.u32 %v2568, 7
    %v2570 = vsub.s32 %v2567, %v2569
    %v2571 = vrot.slane %v2557, %v2570
    %v2572 = vcombine.high %v2564, %v2564
    %v2574 = vunpack.c.l.s4 1966171168
    %v2575 = vunpack.c.0.s8 %v2574
    %v2576 = vlaneseq
    %v2577 = vshrl.u32 %v2576, 7
    %v2578 = vsub.s32 %v2575, %v2577
    %v2579 = vrot.slane %v2564, %v2578
    %v2581 = vunpack.c.l.s4 1966171168
    %v2582 = vunpack.c.0.s8 %v2581
    %v2583 = vlaneseq
    %v2584 = vshrl.u32 %v2583, 7
    %v2585 = vsub.s32 %v2582, %v2584
    %v2586 = vrot.slane %v2571, %v2585
    %v2588 = vunpack.c.l.s4 1966171168
    %v2589 = vunpack.c.0.s8 %v2588
    %v2590 = vlaneseq
    %v2591 = vshrl.u32 %v2590, 7
    %v2592 = vsub.s32 %v2589, %v2591
    %v2593 = vrot.slane %v2572, %v2592
    %v2594 = vcombine.high %v2579, %v2579
    %v2595 = vcombine.high %v2593, %v2593
    %v2616 = vcombine.low %v2527, %v2528
    %v2617 = vcombine.low %v2529, %v2530
    %v2618 = vcombine.low %v2531, %v2532
    %v2619 = vcombine.low %v2533, %v2534
    %v2621 = vunpack.c.l.s4 1966171168
    %v2622 = vunpack.c.0.s8 %v2621
    %v2623 = vlaneseq
    %v2624 = vshrl.u32 %v2623, 7
    %v2625 = vsub.s32 %v2622, %v2624
    %v2626 = vrot.slane %v2616, %v2625
    %v2628 = vunpack.c.l.s4 1966171168
    %v2629 = vunpack.c.0.s8 %v2628
    %v2630 = vlaneseq
    %v2631 = vshrl.u32 %v2630, 7
    %v2632 = vsub.s32 %v2629, %v2631
    %v2633 = vrot.slane %v2617, %v2632
    %v2635 = vunpack.c.l.s4 1966171168
    %v2636 = vunpack.c.0.s8 %v2635
    %v2637 = vlaneseq
    %v2638 = vshrl.u32 %v2637, 7
    %v2639 = vsub.s32 %v2636, %v2638
    %v2640 = vrot.slane %v2618, %v2639
    %v2642 = vunpack.c.l.s4 1966171168
    %v2643 = vunpack.c.0.s8 %v2642
    %v2644 = vlaneseq
    %v2645 = vshrl.u32 %v2644, 7
    %v2646 = vsub.s32 %v2643, %v2645
    %v2647 = vrot.slane %v2619, %v2646
    %v2648 = vcombine.low %v2626, %v2633
    %v2649 = vcombine.low %v2640, %v2647
    %v2651 = vunpack.c.l.s4 1966171168
    %v2652 = vunpack.c.0.s8 %v2651
    %v2653 = vlaneseq
    %v2654 = vshrl.u32 %v2653, 7
    %v2655 = vsub.s32 %v2652, %v2654
    %v2656 = vrot.slane %v2648, %v2655
    %v2658 = vunpack.c.l.s4 1966171168
    %v2659 = vunpack.c.0.s8 %v2658
    %v2660 = vlaneseq
    %v2661 = vshrl.u32 %v2660, 7
    %v2662 = vsub.s32 %v2659, %v2661
    %v2663 = vrot.slane %v2649, %v2662
    %v2664 = vcombine.low %v2656, %v2663
    %v2665 = vcombine.low %v2535, %v2536
    %v2666 = vcombine.low %v2537, %v2538
    %v2667 = vcombine.low %v2539, %v2540
    %v2668 = vcombine.low %v2541, %v2542
    %v2670 = vunpack.c.l.s4 1966171168
    %v2671 = vunpack.c.0.s8 %v2670
    %v2672 = vlaneseq
    %v2673 = vshrl.u32 %v2672, 7
    %v2674 = vsub.s32 %v2671, %v2673
    %v2675 = vrot.slane %v2665, %v2674
    %v2677 = vunpack.c.l.s4 1966171168
    %v2678 = vunpack.c.0.s8 %v2677
    %v2679 = vlaneseq
    %v2680 = vshrl.u32 %v2679, 7
    %v2681 = vsub.s32 %v2678, %v2680
    %v2682 = vrot.slane %v2666, %v2681
    %v2684 = vunpack.c.l.s4 1966171168
    %v2685 = vunpack.c.0.s8 %v2684
    %v2686 = vlaneseq
    %v2687 = vshrl.u32 %v2686, 7
    %v2688 = vsub.s32 %v2685, %v2687
    %v2689 = vrot.slane %v2667, %v2688
    %v2691 = vunpack.c.l.s4 1966171168
    %v2692 = vunpack.c.0.s8 %v2691
    %v2693 = vlaneseq
    %v2694 = vshrl.u32 %v2693, 7
    %v2695 = vsub.s32 %v2692, %v2694
    %v2696 = vrot.slane %v2668, %v2695
    %v2697 = vcombine.low %v2675, %v2682
    %v2698 = vcombine.low %v2689, %v2696
    %v2700 = vunpack.c.l.s4 1966171168
    %v2701 = vunpack.c.0.s8 %v2700
    %v2702 = vlaneseq
    %v2703 = vshrl.u32 %v2702, 7
    %v2704 = vsub.s32 %v2701, %v2703
    %v2705 = vrot.slane %v2697, %v2704
    %v2707 = vunpack.c.l.s4 1966171168
    %v2708 = vunpack.c.0.s8 %v2707
    %v2709 = vlaneseq
    %v2710 = vshrl.u32 %v2709, 7
    %v2711 = vsub.s32 %v2708, %v2710
    %v2712 = vrot.slane %v2698, %v2711
    %v2713 = vcombine.low %v2705, %v2712
    %v2714 = vcombine.low %v2543, %v2544
    %v2715 = vcombine.low %v2545, %v2546
    %v2717 = vunpack.c.l.s4 1966171168
    %v2718 = vunpack.c.0.s8 %v2717
    %v2719 = vlaneseq
    %v2720 = vshrl.u32 %v2719, 7
    %v2721 = vsub.s32 %v2718, %v2720
    %v2722 = vrot.slane %v2714, %v2721
    %v2724 = vunpack.c.l.s4 1966171168
    %v2725 = vunpack.c.0.s8 %v2724
    %v2726 = vlaneseq
    %v2727 = vshrl.u32 %v2726, 7
    %v2728 = vsub.s32 %v2725, %v2727
    %v2729 = vrot.slane %v2715, %v2728
    %v2730 = vcombine.low %v2722, %v2729
    %v2732 = vunpack.c.l.s4 1966171168
    %v2733 = vunpack.c.0.s8 %v2732
    %v2734 = vlaneseq
    %v2735 = vshrl.u32 %v2734, 7
    %v2736 = vsub.s32 %v2733, %v2735
    %v2737 = vrot.slane %v2730, %v2736
    %v2738 = vcombine.low %v2579, %v2593
    %v2739 = vcombine.low %v2594, %v2595
    %v2740 = vcombine.low %v2586, %v2579
    %v2741 = vcombine.low %v2593, %v2594
    %v2743 = vunpack.c.l.s4 1966171168
    %v2744 = vunpack.c.0.s8 %v2743
    %v2745 = vlaneseq
    %v2746 = vshrl.u32 %v2745, 7
    %v2747 = vsub.s32 %v2744, %v2746
    %v2748 = vrot.slane %v2738, %v2747
    %v2750 = vunpack.c.l.s4 1966171168
    %v2751 = vunpack.c.0.s8 %v2750
    %v2752 = vlaneseq
    %v2753 = vshrl.u32 %v2752, 7
    %v2754 = vsub.s32 %v2751, %v2753
    %v2755 = vrot.slane %v2739, %v2754
    %v2757 = vunpack.c.l.s4 1966171168
    %v2758 = vunpack.c.0.s8 %v2757
    %v2759 = vlaneseq
    %v2760 = vshrl.u32 %v2759, 7
    %v2761 = vsub.s32 %v2758, %v2760
    %v2762 = vrot.slane %v2740, %v2761
    %v2764 = vunpack.c.l.s4 1966171168
    %v2765 = vunpack.c.0.s8 %v2764
    %v2766 = vlaneseq
    %v2767 = vshrl.u32 %v2766, 7
    %v2768 = vsub.s32 %v2765, %v2767
    %v2769 = vrot.slane %v2741, %v2768
    %v2770 = vcombine.low %v2748, %v2755
    %v2771 = vcombine.low %v2762, %v2769
    %v2773 = vunpack.c.l.s4 1966171168
    %v2774 = vunpack.c.0.s8 %v2773
    %v2775 = vlaneseq
    %v2776 = vshrl.u32 %v2775, 7
    %v2777 = vsub.s32 %v2774, %v2776
    %v2778 = vrot.slane %v2770, %v2777
    %v2780 = vunpack.c.l.s4 1966171168
    %v2781 = vunpack.c.0.s8 %v2780
    %v2782 = vlaneseq
    %v2783 = vshrl.u32 %v2782, 7
    %v2784 = vsub.s32 %v2781, %v2783
    %v2785 = vrot.slane %v2771, %v2784
    %v2786 = vcombine.low %v2778, %v2785
    %v2787 = vcombine.low %v2595, %v2586
    %v2789 = vunpack.c.l.s4 1966171168
    %v2790 = vunpack.c.0.s8 %v2789
    %v2791 = vlaneseq
    %v2792 = vshrl.u32 %v2791, 7
    %v2793 = vsub.s32 %v2790, %v2792
    %v2794 = vrot.slane %v2787, %v2793
    %v2795 = vcombine.low %v2794, %v2748
    %v2796 = vcombine.low %v2755, %v2762
    %v2798 = vunpack.c.l.s4 1966171168
    %v2799 = vunpack.c.0.s8 %v2798
    %v2800 = vlaneseq
    %v2801 = vshrl.u32 %v2800, 7
    %v2802 = vsub.s32 %v2799, %v2801
    %v2803 = vrot.slane %v2795, %v2802
    %v2805 = vunpack.c.l.s4 1966171168
    %v2806 = vunpack.c.0.s8 %v2805
    %v2807 = vlaneseq
    %v2808 = vshrl.u32 %v2807, 7
    %v2809 = vsub.s32 %v2806, %v2808
    %v2810 = vrot.slane %v2796, %v2809
    %v2811 = vcombine.low %v2803, %v2810
    %v2812 = vcombine.low %v2769, %v2794
    %v2814 = vunpack.c.l.s4 1966171168
    %v2815 = vunpack.c.0.s8 %v2814
    %v2816 = vlaneseq
    %v2817 = vshrl.u32 %v2816, 7
    %v2818 = vsub.s32 %v2815, %v2817
    %v2819 = vrot.slane %v2812, %v2818
    %v2823 = vsel %vm1076, %v2664, 0
    %v2825 = vsel %vm1076, %v2713, 0
    %v2827 = vsel %vm1076, %v2737, 0
    %2829 = vmatprep.subr.mxu0 0.0
    %2830 = vmatpush1.msra.mxu0 %v2547
    %2831 = vmatprep.subr.mxu0 0.0
    %2832 = vmatpush1.msra.mxu0 %v2548
    %2833 = vmatprep.subr.mxu0 0.0
    %2834 = vmatpush1.msra.mxu0 %v2549
    %2835 = vmatprep.subr.mxu0 0.0
    %2836 = vmatpush1.msra.mxu0 %v2550
    %2837 = vmatprep.subr.mxu0 0.0
    %2838 = vmatpush1.msra.mxu0 0.0
    %2839 = vmatprep.subr.mxu0 0.0
    %2840 = vmatpush1.msra.mxu0 0.0
    %2841 = vmatprep.subr.mxu0 0.0
    %2842 = vmatpush1.msra.mxu0 0.0
    %2843 = vmatprep.subr.mxu0 0.0
    %2844 = vmatpush1.msra.mxu0 0.0
    %2845 = vmatprep.subr.mxu0 0.0
    %2846 = vmatpush1.msra.mxu0 0.0
    %2847 = vmatprep.subr.mxu0 0.0
    %2848 = vmatpush1.msra.mxu0 0.0
    %2849 = vmatprep.subr.mxu0 0.0
    %2850 = vmatpush1.msra.mxu0 0.0
    %2851 = vmatprep.subr.mxu0 0.0
    %2852 = vmatpush1.msra.mxu0 0.0
    %2853 = vmatprep.subr.mxu0 0.0
    %2854 = vmatpush1.msra.mxu0 0.0
    %2855 = vmatprep.subr.mxu0 0.0
    %2856 = vmatpush1.msra.mxu0 0.0
    %2857 = vmatprep.subr.mxu0 0.0
    %2858 = vmatpush1.msra.mxu0 0.0
    %2859 = vmatprep.subr.mxu0 0.0
    %2860 = vmatpush1.msra.mxu0 0.0
    %2861 = vmatprep.subr.mxu0 0.0
    %2862 = vmatpush1.msra.mxu0 0.0
    %2863 = vmatprep.subr.mxu0 0.0
    %2864 = vmatpush1.msra.mxu0 0.0
    %2865 = vmatprep.subr.mxu0 0.0
    %2866 = vmatpush1.msra.mxu0 0.0
    %2867 = vmatprep.subr.mxu0 0.0
    %2868 = vmatpush1.msra.mxu0 0.0
    %2869 = vmatprep.subr.mxu0 0.0
    %2870 = vmatpush1.msra.mxu0 0.0
    %2871 = vmatprep.subr.mxu0 0.0
    %2872 = vmatpush1.msra.mxu0 0.0
    %2873 = vmatprep.subr.mxu0 0.0
    %2874 = vmatpush1.msra.mxu0 0.0
    %2875 = vmatprep.subr.mxu0 0.0
    %2876 = vmatpush1.msra.mxu0 0.0
    %2877 = vmatprep.subr.mxu0 0.0
    %2878 = vmatpush1.msra.mxu0 0.0
    %2879 = vmatprep.subr.mxu0 0.0
    %2880 = vmatpush1.msra.mxu0 0.0
    %2881 = vmatprep.subr.mxu0 0.0
    %2882 = vmatpush1.msra.mxu0 0.0
    %2883 = vmatprep.subr.mxu0 0.0
    %2884 = vmatpush1.msra.mxu0 0.0
    %2885 = vmatprep.subr.mxu0 0.0
    %2886 = vmatpush1.msra.mxu0 0.0
    %2887 = vmatprep.subr.mxu0 0.0
    %2888 = vmatpush1.msra.mxu0 0.0
    %2889 = vmatprep.subr.mxu0 0.0
    %2890 = vmatpush1.msra.mxu0 0.0
    %2891 = vmatprep.subr.mxu0 0.0
    %2892 = vmatpush1.msra.mxu0 0.0
    %2893 = vmatprep.mubr.f32.mxu0 0.0
    %2894 = vmatmul.mubr.f32.gmra.mrb[0].mxu0 %v2823
    %v2895 = vpop.f32.mrb[0].mxu0
    %v2896 = vadd.f32 %v2786, %v2895
    %v2897 = vpop.f32.mrb[0].mxu0
    %2898 = vmatprep.mubr.f32.mxu0 0.0
    %2899 = vmatmul.mubr.f32.gmra.mrb[0].mxu0 %v2825
    %v2900 = vpop.f32.mrb[0].mxu0
    %v2901 = vadd.f32 %v2811, %v2900
    %v2902 = vpop.f32.mrb[0].mxu0
    %2903 = vmatprep.mubr.f32.mxu0 0.0
    %2904 = vmatmul.mubr.f32.gmra.mrb[0].mxu0 %v2827
    %v2905 = vpop.f32.mrb[0].mxu0
    %v2906 = vadd.f32 %v2819, %v2905
    %v2907 = vpop.f32.mrb[0].mxu0
    %2908 = vdwg.mxu0
    %v2912 = vcombine.high %v2896, %v2896
    %v2914 = vunpack.c.l.s4 1966171168
    %v2915 = vunpack.c.0.s8 %v2914
    %v2916 = vlaneseq
    %v2917 = vshrl.u32 %v2916, 7
    %v2918 = vsub.s32 %v2915, %v2917
    %v2919 = vrot.slane %v2896, %v2918
    %v2921 = vunpack.c.l.s4 1966171168
    %v2922 = vunpack.c.0.s8 %v2921
    %v2923 = vlaneseq
    %v2924 = vshrl.u32 %v2923, 7
    %v2925 = vsub.s32 %v2922, %v2924
    %v2926 = vrot.slane %v2912, %v2925
    %v2927 = vcombine.high %v2919, %v2919
    %v2928 = vcombine.high %v2926, %v2926
    %v2930 = vunpack.c.l.s4 1966171168
    %v2931 = vunpack.c.0.s8 %v2930
    %v2932 = vlaneseq
    %v2933 = vshrl.u32 %v2932, 7
    %v2934 = vsub.s32 %v2931, %v2933
    %v2935 = vrot.slane %v2919, %v2934
    %v2937 = vunpack.c.l.s4 1966171168
    %v2938 = vunpack.c.0.s8 %v2937
    %v2939 = vlaneseq
    %v2940 = vshrl.u32 %v2939, 7
    %v2941 = vsub.s32 %v2938, %v2940
    %v2942 = vrot.slane %v2926, %v2941
    %v2944 = vunpack.c.l.s4 1966171168
    %v2945 = vunpack.c.0.s8 %v2944
    %v2946 = vlaneseq
    %v2947 = vshrl.u32 %v2946, 7
    %v2948 = vsub.s32 %v2945, %v2947
    %v2949 = vrot.slane %v2927, %v2948
    %v2951 = vunpack.c.l.s4 1966171168
    %v2952 = vunpack.c.0.s8 %v2951
    %v2953 = vlaneseq
    %v2954 = vshrl.u32 %v2953, 7
    %v2955 = vsub.s32 %v2952, %v2954
    %v2956 = vrot.slane %v2928, %v2955
    %v2957 = vcombine.high %v2935, %v2935
    %v2958 = vcombine.high %v2942, %v2942
    %v2959 = vcombine.high %v2949, %v2949
    %v2960 = vcombine.high %v2956, %v2956
    %v2961 = vcombine.high %v2901, %v2901
    %v2963 = vunpack.c.l.s4 1966171168
    %v2964 = vunpack.c.0.s8 %v2963
    %v2965 = vlaneseq
    %v2966 = vshrl.u32 %v2965, 7
    %v2967 = vsub.s32 %v2964, %v2966
    %v2968 = vrot.slane %v2901, %v2967
    %v2970 = vunpack.c.l.s4 1966171168
    %v2971 = vunpack.c.0.s8 %v2970
    %v2972 = vlaneseq
    %v2973 = vshrl.u32 %v2972, 7
    %v2974 = vsub.s32 %v2971, %v2973
    %v2975 = vrot.slane %v2961, %v2974
    %v2976 = vcombine.high %v2968, %v2968
    %v2977 = vcombine.high %v2975, %v2975
    %v2979 = vunpack.c.l.s4 1966171168
    %v2980 = vunpack.c.0.s8 %v2979
    %v2981 = vlaneseq
    %v2982 = vshrl.u32 %v2981, 7
    %v2983 = vsub.s32 %v2980, %v2982
    %v2984 = vrot.slane %v2968, %v2983
    %v2986 = vunpack.c.l.s4 1966171168
    %v2987 = vunpack.c.0.s8 %v2986
    %v2988 = vlaneseq
    %v2989 = vshrl.u32 %v2988, 7
    %v2990 = vsub.s32 %v2987, %v2989
    %v2991 = vrot.slane %v2975, %v2990
    %v2993 = vunpack.c.l.s4 1966171168
    %v2994 = vunpack.c.0.s8 %v2993
    %v2995 = vlaneseq
    %v2996 = vshrl.u32 %v2995, 7
    %v2997 = vsub.s32 %v2994, %v2996
    %v2998 = vrot.slane %v2976, %v2997
    %v3000 = vunpack.c.l.s4 1966171168
    %v3001 = vunpack.c.0.s8 %v3000
    %v3002 = vlaneseq
    %v3003 = vshrl.u32 %v3002, 7
    %v3004 = vsub.s32 %v3001, %v3003
    %v3005 = vrot.slane %v2977, %v3004
    %v3006 = vcombine.high %v2984, %v2984
    %v3007 = vcombine.high %v2991, %v2991
    %v3008 = vcombine.high %v2998, %v2998
    %v3009 = vcombine.high %v3005, %v3005
    %v3011 = vunpack.c.l.s4 1966171168
    %v3012 = vunpack.c.0.s8 %v3011
    %v3013 = vlaneseq
    %v3014 = vshrl.u32 %v3013, 7
    %v3015 = vsub.s32 %v3012, %v3014
    %v3016 = vrot.slane %v2906, %v3015
    %v3017 = vcombine.high %v3016, %v3016
    %v3019 = vunpack.c.l.s4 1966171168
    %v3020 = vunpack.c.0.s8 %v3019
    %v3021 = vlaneseq
    %v3022 = vshrl.u32 %v3021, 7
    %v3023 = vsub.s32 %v3020, %v3022
    %v3024 = vrot.slane %v3016, %v3023
    %v3026 = vunpack.c.l.s4 1966171168
    %v3027 = vunpack.c.0.s8 %v3026
    %v3028 = vlaneseq
    %v3029 = vshrl.u32 %v3028, 7
    %v3030 = vsub.s32 %v3027, %v3029
    %v3031 = vrot.slane %v3017, %v3030
    %v3032 = vcombine.high %v3024, %v3024
    %v3033 = vcombine.high %v3031, %v3031
    %v3054 = vlaneseq
    %v3055 = vshrl.u32 %v3054, 7
    %vm3056 = vcmp.ge.s32.totalorder %v3055, 1
    %v3057 = vlaneseq
    %vm3058 = vcmp.ge.s32.totalorder %v3057, 0
    %vm3059 = vcmp.lt.s32.totalorder %v3057, 1
    %vm3060 = vmand %vm3058, %vm3059
    %v3061 = vsel %vm3060, %v2935, -inf
    %v3062 = vsel %vm3060, %v2956, -inf
    %v3063 = vmax.f32 %v3061, %v3062
    %v3064 = vsel %vm3060, %v3006, -inf
    %v3065 = vmax.f32 %v3063, %v3064
    %v3066 = vsel %vm3060, %v3009, -inf
    %v3067 = vmax.f32 %v3065, %v3066
    %v3068 = vsel %vm3060, %v2949, -inf
    %v3069 = vsel %vm3060, %v2958, -inf
    %v3070 = vmax.f32 %v3068, %v3069
    %v3071 = vsel %vm3060, %v3008, -inf
    %v3072 = vmax.f32 %v3070, %v3071
    %v3073 = vsel %vm3060, %v3024, -inf
    %v3074 = vmax.f32 %v3072, %v3073
    %v3075 = vsel %vm3060, %v2957, -inf
    %v3076 = vsel %vm3060, %v2960, -inf
    %v3077 = vmax.f32 %v3075, %v3076
    %v3078 = vsel %vm3060, %v2991, -inf
    %v3079 = vmax.f32 %v3077, %v3078
    %v3080 = vsel %vm3060, %v3031, -inf
    %v3081 = vmax.f32 %v3079, %v3080
    %v3082 = vsel %vm3060, %v2959, -inf
    %v3083 = vsel %vm3060, %v2984, -inf
    %v3084 = vmax.f32 %v3082, %v3083
    %v3085 = vsel %vm3060, %v3005, -inf
    %v3086 = vmax.f32 %v3084, %v3085
    %v3087 = vsel %vm3060, %v3032, -inf
    %v3088 = vmax.f32 %v3086, %v3087
    %v3089 = vsel %vm3060, %v2942, -inf
    %v3090 = vsel %vm3060, %v2998, -inf
    %v3091 = vmax.f32 %v3089, %v3090
    %v3092 = vsel %vm3060, %v3007, -inf
    %v3093 = vmax.f32 %v3091, %v3092
    %v3094 = vsel %vm3060, %v3033, -inf
    %v3095 = vmax.f32 %v3093, %v3094
    %v3096 = vsub.f32 %v2935, %v3067
    %v3097 = vsub.f32 %v2949, %v3074
    %v3098 = vsub.f32 %v2957, %v3081
    %v3099 = vsub.f32 %v2959, %v3088
    %v3100 = vsub.f32 %v2942, %v3095
    %v3101 = vsub.f32 %v2956, %v3067
    %v3102 = vsub.f32 %v2958, %v3074
    %v3103 = vsub.f32 %v2960, %v3081
    %v3104 = vsub.f32 %v2984, %v3088
    %v3105 = vsub.f32 %v2998, %v3095
    %v3106 = vsub.f32 %v3006, %v3067
    %v3107 = vsub.f32 %v3008, %v3074
    %v3108 = vsub.f32 %v2991, %v3081
    %v3109 = vsub.f32 %v3005, %v3088
    %v3110 = vsub.f32 %v3007, %v3095
    %v3111 = vsub.f32 %v3009, %v3067
    %v3112 = vsub.f32 %v3024, %v3074
    %v3113 = vsub.f32 %v3031, %v3081
    %v3114 = vsub.f32 %v3032, %v3088
    %v3115 = vsub.f32 %v3033, %v3095
    %v3116 = vmul.f32 %v3096, 1.442695
    %v3117 = vpow.pop %v3116
    %v3118 = vmul.f32 %v3097, 1.442695
    %v3119 = vpow.pop %v3118
    %v3120 = vmul.f32 %v3098, 1.442695
    %v3121 = vpow.pop %v3120
    %v3122 = vmul.f32 %v3099, 1.442695
    %v3123 = vpow.pop %v3122
    %v3124 = vmul.f32 %v3100, 1.442695
    %v3125 = vpow.pop %v3124
    %v3126 = vmul.f32 %v3101, 1.442695
    %v3127 = vpow.pop %v3126
    %v3128 = vmul.f32 %v3102, 1.442695
    %v3129 = vpow.pop %v3128
    %v3130 = vmul.f32 %v3103, 1.442695
    %v3131 = vpow.pop %v3130
    %v3132 = vmul.f32 %v3104, 1.442695
    %v3133 = vpow.pop %v3132
    %v3134 = vmul.f32 %v3105, 1.442695
    %v3135 = vpow.pop %v3134
    %v3136 = vmul.f32 %v3106, 1.442695
    %v3137 = vpow.pop %v3136
    %v3138 = vmul.f32 %v3107, 1.442695
    %v3139 = vpow.pop %v3138
    %v3140 = vmul.f32 %v3108, 1.442695
    %v3141 = vpow.pop %v3140
    %v3142 = vmul.f32 %v3109, 1.442695
    %v3143 = vpow.pop %v3142
    %v3144 = vmul.f32 %v3110, 1.442695
    %v3145 = vpow.pop %v3144
    %v3146 = vmul.f32 %v3111, 1.442695
    %v3147 = vpow.pop %v3146
    %v3148 = vmul.f32 %v3112, 1.442695
    %v3149 = vpow.pop %v3148
    %v3150 = vmul.f32 %v3113, 1.442695
    %v3151 = vpow.pop %v3150
    %v3152 = vmul.f32 %v3114, 1.442695
    %v3153 = vpow.pop %v3152
    %v3154 = vmul.f32 %v3115, 1.442695
    %v3155 = vpow.pop %v3154
    %v3176 = vcombine.low %v3117, %v3119
    %v3177 = vcombine.low %v3121, %v3123
    %v3179 = vunpack.c.l.s4 1966171168
    %v3180 = vunpack.c.0.s8 %v3179
    %v3181 = vlaneseq
    %v3182 = vshrl.u32 %v3181, 7
    %v3183 = vsub.s32 %v3180, %v3182
    %v3184 = vrot.slane %v3176, %v3183
    %v3186 = vunpack.c.l.s4 1966171168
    %v3187 = vunpack.c.0.s8 %v3186
    %v3188 = vlaneseq
    %v3189 = vshrl.u32 %v3188, 7
    %v3190 = vsub.s32 %v3187, %v3189
    %v3191 = vrot.slane %v3177, %v3190
    %v3193 = vunpack.c.l.s4 1966171168
    %v3194 = vunpack.c.0.s8 %v3193
    %v3195 = vlaneseq
    %v3196 = vshrl.u32 %v3195, 7
    %v3197 = vsub.s32 %v3194, %v3196
    %v3198 = vrot.slane %v3125, %v3197
    %v3199 = vcombine.low %v3184, %v3191
    %v3201 = vunpack.c.l.s4 1966171168
    %v3202 = vunpack.c.0.s8 %v3201
    %v3203 = vlaneseq
    %v3204 = vshrl.u32 %v3203, 7
    %v3205 = vsub.s32 %v3202, %v3204
    %v3206 = vrot.slane %v3199, %v3205
    %v3208 = vunpack.c.l.s4 1966171168
    %v3209 = vunpack.c.0.s8 %v3208
    %v3210 = vlaneseq
    %v3211 = vshrl.u32 %v3210, 7
    %v3212 = vsub.s32 %v3209, %v3211
    %v3213 = vrot.slane %v3198, %v3212
    %v3214 = vcombine.low %v3206, %v3213
    %v3215 = vcombine.low %v3127, %v3129
    %v3216 = vcombine.low %v3131, %v3133
    %v3218 = vunpack.c.l.s4 1966171168
    %v3219 = vunpack.c.0.s8 %v3218
    %v3220 = vlaneseq
    %v3221 = vshrl.u32 %v3220, 7
    %v3222 = vsub.s32 %v3219, %v3221
    %v3223 = vrot.slane %v3215, %v3222
    %v3225 = vunpack.c.l.s4 1966171168
    %v3226 = vunpack.c.0.s8 %v3225
    %v3227 = vlaneseq
    %v3228 = vshrl.u32 %v3227, 7
    %v3229 = vsub.s32 %v3226, %v3228
    %v3230 = vrot.slane %v3216, %v3229
    %v3232 = vunpack.c.l.s4 1966171168
    %v3233 = vunpack.c.0.s8 %v3232
    %v3234 = vlaneseq
    %v3235 = vshrl.u32 %v3234, 7
    %v3236 = vsub.s32 %v3233, %v3235
    %v3237 = vrot.slane %v3135, %v3236
    %v3238 = vcombine.low %v3223, %v3230
    %v3240 = vunpack.c.l.s4 1966171168
    %v3241 = vunpack.c.0.s8 %v3240
    %v3242 = vlaneseq
    %v3243 = vshrl.u32 %v3242, 7
    %v3244 = vsub.s32 %v3241, %v3243
    %v3245 = vrot.slane %v3238, %v3244
    %v3247 = vunpack.c.l.s4 1966171168
    %v3248 = vunpack.c.0.s8 %v3247
    %v3249 = vlaneseq
    %v3250 = vshrl.u32 %v3249, 7
    %v3251 = vsub.s32 %v3248, %v3250
    %v3252 = vrot.slane %v3237, %v3251
    %v3253 = vcombine.low %v3245, %v3252
    %v3254 = vcombine.low %v3137, %v3139
    %v3255 = vcombine.low %v3141, %v3143
    %v3257 = vunpack.c.l.s4 1966171168
    %v3258 = vunpack.c.0.s8 %v3257
    %v3259 = vlaneseq
    %v3260 = vshrl.u32 %v3259, 7
    %v3261 = vsub.s32 %v3258, %v3260
    %v3262 = vrot.slane %v3254, %v3261
    %v3264 = vunpack.c.l.s4 1966171168
    %v3265 = vunpack.c.0.s8 %v3264
    %v3266 = vlaneseq
    %v3267 = vshrl.u32 %v3266, 7
    %v3268 = vsub.s32 %v3265, %v3267
    %v3269 = vrot.slane %v3255, %v3268
    %v3271 = vunpack.c.l.s4 1966171168
    %v3272 = vunpack.c.0.s8 %v3271
    %v3273 = vlaneseq
    %v3274 = vshrl.u32 %v3273, 7
    %v3275 = vsub.s32 %v3272, %v3274
    %v3276 = vrot.slane %v3145, %v3275
    %v3277 = vcombine.low %v3262, %v3269
    %v3279 = vunpack.c.l.s4 1966171168
    %v3280 = vunpack.c.0.s8 %v3279
    %v3281 = vlaneseq
    %v3282 = vshrl.u32 %v3281, 7
    %v3283 = vsub.s32 %v3280, %v3282
    %v3284 = vrot.slane %v3277, %v3283
    %v3286 = vunpack.c.l.s4 1966171168
    %v3287 = vunpack.c.0.s8 %v3286
    %v3288 = vlaneseq
    %v3289 = vshrl.u32 %v3288, 7
    %v3290 = vsub.s32 %v3287, %v3289
    %v3291 = vrot.slane %v3276, %v3290
    %v3292 = vcombine.low %v3284, %v3291
    %v3293 = vcombine.low %v3147, %v3149
    %v3294 = vcombine.low %v3151, %v3153
    %v3296 = vunpack.c.l.s4 1966171168
    %v3297 = vunpack.c.0.s8 %v3296
    %v3298 = vlaneseq
    %v3299 = vshrl.u32 %v3298, 7
    %v3300 = vsub.s32 %v3297, %v3299
    %v3301 = vrot.slane %v3293, %v3300
    %v3303 = vunpack.c.l.s4 1966171168
    %v3304 = vunpack.c.0.s8 %v3303
    %v3305 = vlaneseq
    %v3306 = vshrl.u32 %v3305, 7
    %v3307 = vsub.s32 %v3304, %v3306
    %v3308 = vrot.slane %v3294, %v3307
    %v3310 = vunpack.c.l.s4 1966171168
    %v3311 = vunpack.c.0.s8 %v3310
    %v3312 = vlaneseq
    %v3313 = vshrl.u32 %v3312, 7
    %v3314 = vsub.s32 %v3311, %v3313
    %v3315 = vrot.slane %v3155, %v3314
    %v3316 = vcombine.low %v3301, %v3308
    %v3318 = vunpack.c.l.s4 1966171168
    %v3319 = vunpack.c.0.s8 %v3318
    %v3320 = vlaneseq
    %v3321 = vshrl.u32 %v3320, 7
    %v3322 = vsub.s32 %v3319, %v3321
    %v3323 = vrot.slane %v3316, %v3322
    %v3325 = vunpack.c.l.s4 1966171168
    %v3326 = vunpack.c.0.s8 %v3325
    %v3327 = vlaneseq
    %v3328 = vshrl.u32 %v3327, 7
    %v3329 = vsub.s32 %v3326, %v3328
    %v3330 = vrot.slane %v3315, %v3329
    %v3331 = vcombine.low %v3323, %v3330
    %vm3336 = vcmask 4096
    %v3337 = vsel %vm3336, %v3214, 0.0
    %v3338 = vsel %vm3336, %v3253, 0.0
    %v3339 = vadd.f32 %v3337, %v3338
    %v3340 = vsel %vm3336, %v3292, 0.0
    %v3341 = vadd.f32 %v3339, %v3340
    %v3342 = vsel %vm3336, %v3331, 0.0
    %v3343 = vadd.f32 %v3341, %v3342
    %v3345 = vcombine.high %v3343, %v3343
    %v3347 = vunpack.c.l.s4 1966171168
    %v3348 = vunpack.c.0.s8 %v3347
    %v3349 = vlaneseq
    %v3350 = vshrl.u32 %v3349, 7
    %v3351 = vsub.s32 %v3348, %v3350
    %v3352 = vrot.slane %v3343, %v3351
    %v3354 = vunpack.c.l.s4 1966171168
    %v3355 = vunpack.c.0.s8 %v3354
    %v3356 = vlaneseq
    %v3357 = vshrl.u32 %v3356, 7
    %v3358 = vsub.s32 %v3355, %v3357
    %v3359 = vrot.slane %v3345, %v3358
    %v3360 = vcombine.high %v3352, %v3352
    %v3362 = vunpack.c.l.s4 1966171168
    %v3363 = vunpack.c.0.s8 %v3362
    %v3364 = vlaneseq
    %v3365 = vshrl.u32 %v3364, 7
    %v3366 = vsub.s32 %v3363, %v3365
    %v3367 = vrot.slane %v3352, %v3366
    %v3369 = vunpack.c.l.s4 1966171168
    %v3370 = vunpack.c.0.s8 %v3369
    %v3371 = vlaneseq
    %v3372 = vshrl.u32 %v3371, 7
    %v3373 = vsub.s32 %v3370, %v3372
    %v3374 = vrot.slane %v3359, %v3373
    %v3376 = vunpack.c.l.s4 1966171168
    %v3377 = vunpack.c.0.s8 %v3376
    %v3378 = vlaneseq
    %v3379 = vshrl.u32 %v3378, 7
    %v3380 = vsub.s32 %v3377, %v3379
    %v3381 = vrot.slane %v3360, %v3380
    %v3382 = vcombine.high %v3367, %v3367
    %v3383 = vcombine.high %v3381, %v3381
    %v3389 = vrcp.pop %v3367
    %v3390 = vmul.f32 %v3117, %v3389
    %v3391 = vrcp.pop %v3381
    %v3392 = vmul.f32 %v3119, %v3391
    %v3393 = vrcp.pop %v3382
    %v3394 = vmul.f32 %v3121, %v3393
    %v3395 = vrcp.pop %v3383
    %v3396 = vmul.f32 %v3123, %v3395
    %v3397 = vrcp.pop %v3374
    %v3398 = vmul.f32 %v3125, %v3397
    %v3399 = vmul.f32 %v3127, %v3389
    %v3400 = vmul.f32 %v3129, %v3391
    %v3401 = vmul.f32 %v3131, %v3393
    %v3402 = vmul.f32 %v3133, %v3395
    %v3403 = vmul.f32 %v3135, %v3397
    %v3404 = vmul.f32 %v3137, %v3389
    %v3405 = vmul.f32 %v3139, %v3391
    %v3406 = vmul.f32 %v3141, %v3393
    %v3407 = vmul.f32 %v3143, %v3395
    %v3408 = vmul.f32 %v3145, %v3397
    %v3409 = vmul.f32 %v3147, %v3389
    %v3410 = vmul.f32 %v3149, %v3391
    %v3411 = vmul.f32 %v3151, %v3393
    %v3412 = vmul.f32 %v3153, %v3395
    %v3413 = vmul.f32 %v3155, %v3397
    %v3414 = vsel %vm3056, 1, 0
    %vm3415 = vcmp.eq.s32.totalorder %v3414, 1
    %v3436 = vcombine.low %v3390, %v3392
    %v3437 = vcombine.low %v3394, %v3396
    %v3439 = vunpack.c.l.s4 1966171168
    %v3440 = vunpack.c.0.s8 %v3439
    %v3441 = vlaneseq
    %v3442 = vshrl.u32 %v3441, 7
    %v3443 = vsub.s32 %v3440, %v3442
    %v3444 = vrot.slane %v3436, %v3443
    %v3446 = vunpack.c.l.s4 1966171168
    %v3447 = vunpack.c.0.s8 %v3446
    %v3448 = vlaneseq
    %v3449 = vshrl.u32 %v3448, 7
    %v3450 = vsub.s32 %v3447, %v3449
    %v3451 = vrot.slane %v3437, %v3450
    %v3453 = vunpack.c.l.s4 1966171168
    %v3454 = vunpack.c.0.s8 %v3453
    %v3455 = vlaneseq
    %v3456 = vshrl.u32 %v3455, 7
    %v3457 = vsub.s32 %v3454, %v3456
    %v3458 = vrot.slane %v3398, %v3457
    %v3459 = vcombine.low %v3444, %v3451
    %v3461 = vunpack.c.l.s4 1966171168
    %v3462 = vunpack.c.0.s8 %v3461
    %v3463 = vlaneseq
    %v3464 = vshrl.u32 %v3463, 7
    %v3465 = vsub.s32 %v3462, %v3464
    %v3466 = vrot.slane %v3459, %v3465
    %v3468 = vunpack.c.l.s4 1966171168
    %v3469 = vunpack.c.0.s8 %v3468
    %v3470 = vlaneseq
    %v3471 = vshrl.u32 %v3470, 7
    %v3472 = vsub.s32 %v3469, %v3471
    %v3473 = vrot.slane %v3458, %v3472
    %v3474 = vcombine.low %v3466, %v3473
    %v3475 = vcombine.low %v3399, %v3400
    %v3476 = vcombine.low %v3401, %v3402
    %v3478 = vunpack.c.l.s4 1966171168
    %v3479 = vunpack.c.0.s8 %v3478
    %v3480 = vlaneseq
    %v3481 = vshrl.u32 %v3480, 7
    %v3482 = vsub.s32 %v3479, %v3481
    %v3483 = vrot.slane %v3475, %v3482
    %v3485 = vunpack.c.l.s4 1966171168
    %v3486 = vunpack.c.0.s8 %v3485
    %v3487 = vlaneseq
    %v3488 = vshrl.u32 %v3487, 7
    %v3489 = vsub.s32 %v3486, %v3488
    %v3490 = vrot.slane %v3476, %v3489
    %v3492 = vunpack.c.l.s4 1966171168
    %v3493 = vunpack.c.0.s8 %v3492
    %v3494 = vlaneseq
    %v3495 = vshrl.u32 %v3494, 7
    %v3496 = vsub.s32 %v3493, %v3495
    %v3497 = vrot.slane %v3403, %v3496
    %v3498 = vcombine.low %v3483, %v3490
    %v3500 = vunpack.c.l.s4 1966171168
    %v3501 = vunpack.c.0.s8 %v3500
    %v3502 = vlaneseq
    %v3503 = vshrl.u32 %v3502, 7
    %v3504 = vsub.s32 %v3501, %v3503
    %v3505 = vrot.slane %v3498, %v3504
    %v3507 = vunpack.c.l.s4 1966171168
    %v3508 = vunpack.c.0.s8 %v3507
    %v3509 = vlaneseq
    %v3510 = vshrl.u32 %v3509, 7
    %v3511 = vsub.s32 %v3508, %v3510
    %v3512 = vrot.slane %v3497, %v3511
    %v3513 = vcombine.low %v3505, %v3512
    %v3514 = vcombine.low %v3404, %v3405
    %v3515 = vcombine.low %v3406, %v3407
    %v3517 = vunpack.c.l.s4 1966171168
    %v3518 = vunpack.c.0.s8 %v3517
    %v3519 = vlaneseq
    %v3520 = vshrl.u32 %v3519, 7
    %v3521 = vsub.s32 %v3518, %v3520
    %v3522 = vrot.slane %v3514, %v3521
    %v3524 = vunpack.c.l.s4 1966171168
    %v3525 = vunpack.c.0.s8 %v3524
    %v3526 = vlaneseq
    %v3527 = vshrl.u32 %v3526, 7
    %v3528 = vsub.s32 %v3525, %v3527
    %v3529 = vrot.slane %v3515, %v3528
    %v3531 = vunpack.c.l.s4 1966171168
    %v3532 = vunpack.c.0.s8 %v3531
    %v3533 = vlaneseq
    %v3534 = vshrl.u32 %v3533, 7
    %v3535 = vsub.s32 %v3532, %v3534
    %v3536 = vrot.slane %v3408, %v3535
    %v3537 = vcombine.low %v3522, %v3529
    %v3539 = vunpack.c.l.s4 1966171168
    %v3540 = vunpack.c.0.s8 %v3539
    %v3541 = vlaneseq
    %v3542 = vshrl.u32 %v3541, 7
    %v3543 = vsub.s32 %v3540, %v3542
    %v3544 = vrot.slane %v3537, %v3543
    %v3546 = vunpack.c.l.s4 1966171168
    %v3547 = vunpack.c.0.s8 %v3546
    %v3548 = vlaneseq
    %v3549 = vshrl.u32 %v3548, 7
    %v3550 = vsub.s32 %v3547, %v3549
    %v3551 = vrot.slane %v3536, %v3550
    %v3552 = vcombine.low %v3544, %v3551
    %v3553 = vcombine.low %v3409, %v3410
    %v3554 = vcombine.low %v3411, %v3412
    %v3556 = vunpack.c.l.s4 1966171168
    %v3557 = vunpack.c.0.s8 %v3556
    %v3558 = vlaneseq
    %v3559 = vshrl.u32 %v3558, 7
    %v3560 = vsub.s32 %v3557, %v3559
    %v3561 = vrot.slane %v3553, %v3560
    %v3563 = vunpack.c.l.s4 1966171168
    %v3564 = vunpack.c.0.s8 %v3563
    %v3565 = vlaneseq
    %v3566 = vshrl.u32 %v3565, 7
    %v3567 = vsub.s32 %v3564, %v3566
    %v3568 = vrot.slane %v3554, %v3567
    %v3570 = vunpack.c.l.s4 1966171168
    %v3571 = vunpack.c.0.s8 %v3570
    %v3572 = vlaneseq
    %v3573 = vshrl.u32 %v3572, 7
    %v3574 = vsub.s32 %v3571, %v3573
    %v3575 = vrot.slane %v3413, %v3574
    %v3576 = vcombine.low %v3561, %v3568
    %v3578 = vunpack.c.l.s4 1966171168
    %v3579 = vunpack.c.0.s8 %v3578
    %v3580 = vlaneseq
    %v3581 = vshrl.u32 %v3580, 7
    %v3582 = vsub.s32 %v3579, %v3581
    %v3583 = vrot.slane %v3576, %v3582
    %v3585 = vunpack.c.l.s4 1966171168
    %v3586 = vunpack.c.0.s8 %v3585
    %v3587 = vlaneseq
    %v3588 = vshrl.u32 %v3587, 7
    %v3589 = vsub.s32 %v3586, %v3588
    %v3590 = vrot.slane %v3575, %v3589
    %v3591 = vcombine.low %v3583, %v3590
    %v3596 = vsel %vm3415, %v3474, 0.0
    %v3597 = vsel %vm3415, %v3513, 0.0
    %v3598 = vsel %vm3415, %v3552, 0.0
    %v3599 = vsel %vm3415, %v3591, 0.0
    %v3600 = vld [vmem:[%s9] sm:$0xff]
    %v3601 = vld [vmem:[%s9 + $0x8] sm:$0xff]
    %v3602 = vld [vmem:[%s9 + $0x10] sm:$0xff]
    %v3603 = vld [vmem:[%s9 + $0x18] sm:$0xff]
    %v3604 = vld [vmem:[%s10] sm:$0x1]
    %v3606 = vlaneseq
    %v3607 = vshrl.u32 %v3606, 7
    %v3608 = vsub.s32 0, %v3607
    %v3609 = vrot.slane %v3604, %v3608
    %v3610 = vcombine.high %v3609, %v3609
    %v3612 = vunpack.c.l.s4 1966171168
    %v3613 = vunpack.c.0.s8 %v3612
    %v3614 = vlaneseq
    %v3615 = vshrl.u32 %v3614, 7
    %v3616 = vsub.s32 %v3613, %v3615
    %v3617 = vrot.slane %v3609, %v3616
    %v3619 = vunpack.c.l.s4 1966171168
    %v3620 = vunpack.c.0.s8 %v3619
    %v3621 = vlaneseq
    %v3622 = vshrl.u32 %v3621, 7
    %v3623 = vsub.s32 %v3620, %v3622
    %v3624 = vrot.slane %v3610, %v3623
    %v3625 = vcombine.high %v3617, %v3617
    %v3627 = vunpack.c.l.s4 1966171168
    %v3628 = vunpack.c.0.s8 %v3627
    %v3629 = vlaneseq
    %v3630 = vshrl.u32 %v3629, 7
    %v3631 = vsub.s32 %v3628, %v3630
    %v3632 = vrot.slane %v3617, %v3631
    %v3634 = vunpack.c.l.s4 1966171168
    %v3635 = vunpack.c.0.s8 %v3634
    %v3636 = vlaneseq
    %v3637 = vshrl.u32 %v3636, 7
    %v3638 = vsub.s32 %v3635, %v3637
    %v3639 = vrot.slane %v3624, %v3638
    %v3641 = vunpack.c.l.s4 1966171168
    %v3642 = vunpack.c.0.s8 %v3641
    %v3643 = vlaneseq
    %v3644 = vshrl.u32 %v3643, 7
    %v3645 = vsub.s32 %v3642, %v3644
    %v3646 = vrot.slane %v3625, %v3645
    %v3647 = vcombine.high %v3632, %v3632
    %v3648 = vcombine.high %v3646, %v3646
    %v3649 = vcombine.low %v3632, %v3646
    %v3650 = vcombine.low %v3647, %v3648
    %v3651 = vcombine.low %v3639, %v3632
    %v3652 = vcombine.low %v3646, %v3647
    %v3654 = vunpack.c.l.s4 1966171168
    %v3655 = vunpack.c.0.s8 %v3654
    %v3656 = vlaneseq
    %v3657 = vshrl.u32 %v3656, 7
    %v3658 = vsub.s32 %v3655, %v3657
    %v3659 = vrot.slane %v3649, %v3658
    %v3661 = vunpack.c.l.s4 1966171168
    %v3662 = vunpack.c.0.s8 %v3661
    %v3663 = vlaneseq
    %v3664 = vshrl.u32 %v3663, 7
    %v3665 = vsub.s32 %v3662, %v3664
    %v3666 = vrot.slane %v3650, %v3665
    %v3668 = vunpack.c.l.s4 1966171168
    %v3669 = vunpack.c.0.s8 %v3668
    %v3670 = vlaneseq
    %v3671 = vshrl.u32 %v3670, 7
    %v3672 = vsub.s32 %v3669, %v3671
    %v3673 = vrot.slane %v3651, %v3672
    %v3675 = vunpack.c.l.s4 1966171168
    %v3676 = vunpack.c.0.s8 %v3675
    %v3677 = vlaneseq
    %v3678 = vshrl.u32 %v3677, 7
    %v3679 = vsub.s32 %v3676, %v3678
    %v3680 = vrot.slane %v3652, %v3679
    %v3681 = vcombine.low %v3659, %v3666
    %v3682 = vcombine.low %v3673, %v3680
    %v3684 = vunpack.c.l.s4 1966171168
    %v3685 = vunpack.c.0.s8 %v3684
    %v3686 = vlaneseq
    %v3687 = vshrl.u32 %v3686, 7
    %v3688 = vsub.s32 %v3685, %v3687
    %v3689 = vrot.slane %v3681, %v3688
    %v3691 = vunpack.c.l.s4 1966171168
    %v3692 = vunpack.c.0.s8 %v3691
    %v3693 = vlaneseq
    %v3694 = vshrl.u32 %v3693, 7
    %v3695 = vsub.s32 %v3692, %v3694
    %v3696 = vrot.slane %v3682, %v3695
    %v3697 = vcombine.low %v3689, %v3696
    %v3698 = vcombine.low %v3648, %v3639
    %v3700 = vunpack.c.l.s4 1966171168
    %v3701 = vunpack.c.0.s8 %v3700
    %v3702 = vlaneseq
    %v3703 = vshrl.u32 %v3702, 7
    %v3704 = vsub.s32 %v3701, %v3703
    %v3705 = vrot.slane %v3698, %v3704
    %v3706 = vcombine.low %v3705, %v3659
    %v3707 = vcombine.low %v3666, %v3673
    %v3709 = vunpack.c.l.s4 1966171168
    %v3710 = vunpack.c.0.s8 %v3709
    %v3711 = vlaneseq
    %v3712 = vshrl.u32 %v3711, 7
    %v3713 = vsub.s32 %v3710, %v3712
    %v3714 = vrot.slane %v3706, %v3713
    %v3716 = vunpack.c.l.s4 1966171168
    %v3717 = vunpack.c.0.s8 %v3716
    %v3718 = vlaneseq
    %v3719 = vshrl.u32 %v3718, 7
    %v3720 = vsub.s32 %v3717, %v3719
    %v3721 = vrot.slane %v3707, %v3720
    %v3722 = vcombine.low %v3714, %v3721
    %v3723 = vcombine.low %v3680, %v3705
    %v3725 = vunpack.c.l.s4 1966171168
    %v3726 = vunpack.c.0.s8 %v3725
    %v3727 = vlaneseq
    %v3728 = vshrl.u32 %v3727, 7
    %v3729 = vsub.s32 %v3726, %v3728
    %v3730 = vrot.slane %v3723, %v3729
    %3734 = vmatprep.subr.mxu0 0.0
    %3735 = vmatpush1.msra.mxu0 %v3600
    %3736 = vmatprep.subr.mxu0 0.0
    %3737 = vmatpush1.msra.mxu0 %v3601
    %3738 = vmatprep.subr.mxu0 0.0
    %3739 = vmatpush1.msra.mxu0 %v3602
    %3740 = vmatprep.subr.mxu0 0.0
    %3741 = vmatpush1.msra.mxu0 %v3603
    %3742 = vmatprep.subr.mxu0 0.0
    %3743 = vmatpush1.msra.mxu0 0.0
    %3744 = vmatprep.subr.mxu0 0.0
    %3745 = vmatpush1.msra.mxu0 0.0
    %3746 = vmatprep.subr.mxu0 0.0
    %3747 = vmatpush1.msra.mxu0 0.0
    %3748 = vmatprep.subr.mxu0 0.0
    %3749 = vmatpush1.msra.mxu0 0.0
    %3750 = vmatprep.subr.mxu0 0.0
    %3751 = vmatpush1.msra.mxu0 0.0
    %3752 = vmatprep.subr.mxu0 0.0
    %3753 = vmatpush1.msra.mxu0 0.0
    %3754 = vmatprep.subr.mxu0 0.0
    %3755 = vmatpush1.msra.mxu0 0.0
    %3756 = vmatprep.subr.mxu0 0.0
    %3757 = vmatpush1.msra.mxu0 0.0
    %3758 = vmatprep.subr.mxu0 0.0
    %3759 = vmatpush1.msra.mxu0 0.0
    %3760 = vmatprep.subr.mxu0 0.0
    %3761 = vmatpush1.msra.mxu0 0.0
    %3762 = vmatprep.subr.mxu0 0.0
    %3763 = vmatpush1.msra.mxu0 0.0
    %3764 = vmatprep.subr.mxu0 0.0
    %3765 = vmatpush1.msra.mxu0 0.0
    %3766 = vmatprep.subr.mxu0 0.0
    %3767 = vmatpush1.msra.mxu0 0.0
    %3768 = vmatprep.subr.mxu0 0.0
    %3769 = vmatpush1.msra.mxu0 0.0
    %3770 = vmatprep.subr.mxu0 0.0
    %3771 = vmatpush1.msra.mxu0 0.0
    %3772 = vmatprep.subr.mxu0 0.0
    %3773 = vmatpush1.msra.mxu0 0.0
    %3774 = vmatprep.subr.mxu0 0.0
    %3775 = vmatpush1.msra.mxu0 0.0
    %3776 = vmatprep.subr.mxu0 0.0
    %3777 = vmatpush1.msra.mxu0 0.0
    %3778 = vmatprep.subr.mxu0 0.0
    %3779 = vmatpush1.msra.mxu0 0.0
    %3780 = vmatprep.subr.mxu0 0.0
    %3781 = vmatpush1.msra.mxu0 0.0
    %3782 = vmatprep.subr.mxu0 0.0
    %3783 = vmatpush1.msra.mxu0 0.0
    %3784 = vmatprep.subr.mxu0 0.0
    %3785 = vmatpush1.msra.mxu0 0.0
    %3786 = vmatprep.subr.mxu0 0.0
    %3787 = vmatpush1.msra.mxu0 0.0
    %3788 = vmatprep.subr.mxu0 0.0
    %3789 = vmatpush1.msra.mxu0 0.0
    %3790 = vmatprep.subr.mxu0 0.0
    %3791 = vmatpush1.msra.mxu0 0.0
    %3792 = vmatprep.subr.mxu0 0.0
    %3793 = vmatpush1.msra.mxu0 0.0
    %3794 = vmatprep.subr.mxu0 0.0
    %3795 = vmatpush1.msra.mxu0 0.0
    %3796 = vmatprep.subr.mxu0 0.0
    %3797 = vmatpush1.msra.mxu0 0.0
    %3798 = vmatprep.mubr.f32.mxu0 0.0
    %3799 = vmatmul.mubr.f32.gmra.mrb[0].mxu0 %v2216
    %v3800 = vpop.f32.mrb[0].mxu0
    %v3801 = vadd.f32 %v3697, %v3800
    %v3802 = vpop.f32.mrb[0].mxu0
    %3803 = vmatprep.mubr.f32.mxu0 0.0
    %3804 = vmatmul.mubr.f32.gmra.mrb[0].mxu0 %v2218
    %v3805 = vpop.f32.mrb[0].mxu0
    %v3806 = vadd.f32 %v3722, %v3805
    %v3807 = vpop.f32.mrb[0].mxu0
    %3808 = vmatprep.mubr.f32.mxu0 0.0
    %3809 = vmatmul.mubr.f32.gmra.mrb[0].mxu0 %v2220
    %v3810 = vpop.f32.mrb[0].mxu0
    %v3811 = vadd.f32 %v3730, %v3810
    %v3812 = vpop.f32.mrb[0].mxu0
    %3813 = vdwg.mxu0
    %v3817 = vcombine.high %v3801, %v3801
    %v3819 = vunpack.c.l.s4 1966171168
    %v3820 = vunpack.c.0.s8 %v3819
    %v3821 = vlaneseq
    %v3822 = vshrl.u32 %v3821, 7
    %v3823 = vsub.s32 %v3820, %v3822
    %v3824 = vrot.slane %v3801, %v3823
    %v3826 = vunpack.c.l.s4 1966171168
    %v3827 = vunpack.c.0.s8 %v3826
    %v3828 = vlaneseq
    %v3829 = vshrl.u32 %v3828, 7
    %v3830 = vsub.s32 %v3827, %v3829
    %v3831 = vrot.slane %v3817, %v3830
    %v3832 = vcombine.high %v3824, %v3824
    %v3833 = vcombine.high %v3831, %v3831
    %v3835 = vunpack.c.l.s4 1966171168
    %v3836 = vunpack.c.0.s8 %v3835
    %v3837 = vlaneseq
    %v3838 = vshrl.u32 %v3837, 7
    %v3839 = vsub.s32 %v3836, %v3838
    %v3840 = vrot.slane %v3824, %v3839
    %v3842 = vunpack.c.l.s4 1966171168
    %v3843 = vunpack.c.0.s8 %v3842
    %v3844 = vlaneseq
    %v3845 = vshrl.u32 %v3844, 7
    %v3846 = vsub.s32 %v3843, %v3845
    %v3847 = vrot.slane %v3831, %v3846
    %v3849 = vunpack.c.l.s4 1966171168
    %v3850 = vunpack.c.0.s8 %v3849
    %v3851 = vlaneseq
    %v3852 = vshrl.u32 %v3851, 7
    %v3853 = vsub.s32 %v3850, %v3852
    %v3854 = vrot.slane %v3832, %v3853
    %v3856 = vunpack.c.l.s4 1966171168
    %v3857 = vunpack.c.0.s8 %v3856
    %v3858 = vlaneseq
    %v3859 = vshrl.u32 %v3858, 7
    %v3860 = vsub.s32 %v3857, %v3859
    %v3861 = vrot.slane %v3833, %v3860
    %v3862 = vcombine.high %v3840, %v3840
    %v3863 = vcombine.high %v3847, %v3847
    %v3864 = vcombine.high %v3854, %v3854
    %v3865 = vcombine.high %v3861, %v3861
    %v3866 = vcombine.high %v3806, %v3806
    %v3868 = vunpack.c.l.s4 1966171168
    %v3869 = vunpack.c.0.s8 %v3868
    %v3870 = vlaneseq
    %v3871 = vshrl.u32 %v3870, 7
    %v3872 = vsub.s32 %v3869, %v3871
    %v3873 = vrot.slane %v3806, %v3872
    %v3875 = vunpack.c.l.s4 1966171168
    %v3876 = vunpack.c.0.s8 %v3875
    %v3877 = vlaneseq
    %v3878 = vshrl.u32 %v3877, 7
    %v3879 = vsub.s32 %v3876, %v3878
    %v3880 = vrot.slane %v3866, %v3879
    %v3881 = vcombine.high %v3873, %v3873
    %v3882 = vcombine.high %v3880, %v3880
    %v3884 = vunpack.c.l.s4 1966171168
    %v3885 = vunpack.c.0.s8 %v3884
    %v3886 = vlaneseq
    %v3887 = vshrl.u32 %v3886, 7
    %v3888 = vsub.s32 %v3885, %v3887
    %v3889 = vrot.slane %v3873, %v3888
    %v3891 = vunpack.c.l.s4 1966171168
    %v3892 = vunpack.c.0.s8 %v3891
    %v3893 = vlaneseq
    %v3894 = vshrl.u32 %v3893, 7
    %v3895 = vsub.s32 %v3892, %v3894
    %v3896 = vrot.slane %v3880, %v3895
    %v3898 = vunpack.c.l.s4 1966171168
    %v3899 = vunpack.c.0.s8 %v3898
    %v3900 = vlaneseq
    %v3901 = vshrl.u32 %v3900, 7
    %v3902 = vsub.s32 %v3899, %v3901
    %v3903 = vrot.slane %v3881, %v3902
    %v3905 = vunpack.c.l.s4 1966171168
    %v3906 = vunpack.c.0.s8 %v3905
    %v3907 = vlaneseq
    %v3908 = vshrl.u32 %v3907, 7
    %v3909 = vsub.s32 %v3906, %v3908
    %v3910 = vrot.slane %v3882, %v3909
    %v3911 = vcombine.high %v3889, %v3889
    %v3912 = vcombine.high %v3896, %v3896
    %v3913 = vcombine.high %v3903, %v3903
    %v3914 = vcombine.high %v3910, %v3910
    %v3916 = vunpack.c.l.s4 1966171168
    %v3917 = vunpack.c.0.s8 %v3916
    %v3918 = vlaneseq
    %v3919 = vshrl.u32 %v3918, 7
    %v3920 = vsub.s32 %v3917, %v3919
    %v3921 = vrot.slane %v3811, %v3920
    %v3922 = vcombine.high %v3921, %v3921
    %v3924 = vunpack.c.l.s4 1966171168
    %v3925 = vunpack.c.0.s8 %v3924
    %v3926 = vlaneseq
    %v3927 = vshrl.u32 %v3926, 7
    %v3928 = vsub.s32 %v3925, %v3927
    %v3929 = vrot.slane %v3921, %v3928
    %v3931 = vunpack.c.l.s4 1966171168
    %v3932 = vunpack.c.0.s8 %v3931
    %v3933 = vlaneseq
    %v3934 = vshrl.u32 %v3933, 7
    %v3935 = vsub.s32 %v3932, %v3934
    %v3936 = vrot.slane %v3922, %v3935
    %v3937 = vcombine.high %v3929, %v3929
    %v3938 = vcombine.high %v3936, %v3936
    %3940 = vset.pattern.permute.xlu0 0
    %3941 = vperm.xlu0 %3940, %v3596
    %v3942 = vpop.permute.xlu0 %3941
    %3945 = vset.pattern.permute.xlu0 0
    %3946 = vperm.xlu0 %3945, %v3597
    %v3947 = vpop.permute.xlu0 %3946
    %3950 = vset.pattern.permute.xlu0 0
    %3951 = vperm.xlu0 %3950, %v3598
    %v3952 = vpop.permute.xlu0 %3951
    %3955 = vset.pattern.permute.xlu0 0
    %3956 = vperm.xlu0 %3955, %v3599
    %v3957 = vpop.permute.xlu0 %3956
    %v3959 = vcombine.low %v3840, %v3854
    %v3960 = vcombine.low %v3862, %v3864
    %v3962 = vunpack.c.l.s4 1966171168
    %v3963 = vunpack.c.0.s8 %v3962
    %v3964 = vlaneseq
    %v3965 = vshrl.u32 %v3964, 7
    %v3966 = vsub.s32 %v3963, %v3965
    %v3967 = vrot.slane %v3959, %v3966
    %v3969 = vunpack.c.l.s4 1966171168
    %v3970 = vunpack.c.0.s8 %v3969
    %v3971 = vlaneseq
    %v3972 = vshrl.u32 %v3971, 7
    %v3973 = vsub.s32 %v3970, %v3972
    %v3974 = vrot.slane %v3960, %v3973
    %v3976 = vunpack.c.l.s4 1966171168
    %v3977 = vunpack.c.0.s8 %v3976
    %v3978 = vlaneseq
    %v3979 = vshrl.u32 %v3978, 7
    %v3980 = vsub.s32 %v3977, %v3979
    %v3981 = vrot.slane %v3847, %v3980
    %v3982 = vcombine.low %v3967, %v3974
    %v3984 = vunpack.c.l.s4 1966171168
    %v3985 = vunpack.c.0.s8 %v3984
    %v3986 = vlaneseq
    %v3987 = vshrl.u32 %v3986, 7
    %v3988 = vsub.s32 %v3985, %v3987
    %v3989 = vrot.slane %v3982, %v3988
    %v3991 = vunpack.c.l.s4 1966171168
    %v3992 = vunpack.c.0.s8 %v3991
    %v3993 = vlaneseq
    %v3994 = vshrl.u32 %v3993, 7
    %v3995 = vsub.s32 %v3992, %v3994
    %v3996 = vrot.slane %v3981, %v3995
    %v3997 = vcombine.low %v3989, %v3996
    %v3998 = vcombine.low %v3861, %v3863
    %v3999 = vcombine.low %v3865, %v3889
    %v4001 = vunpack.c.l.s4 1966171168
    %v4002 = vunpack.c.0.s8 %v4001
    %v4003 = vlaneseq
    %v4004 = vshrl.u32 %v4003, 7
    %v4005 = vsub.s32 %v4002, %v4004
    %v4006 = vrot.slane %v3998, %v4005
    %v4008 = vunpack.c.l.s4 1966171168
    %v4009 = vunpack.c.0.s8 %v4008
    %v4010 = vlaneseq
    %v4011 = vshrl.u32 %v4010, 7
    %v4012 = vsub.s32 %v4009, %v4011
    %v4013 = vrot.slane %v3999, %v4012
    %v4015 = vunpack.c.l.s4 1966171168
    %v4016 = vunpack.c.0.s8 %v4015
    %v4017 = vlaneseq
    %v4018 = vshrl.u32 %v4017, 7
    %v4019 = vsub.s32 %v4016, %v4018
    %v4020 = vrot.slane %v3903, %v4019
    %v4021 = vcombine.low %v4006, %v4013
    %v4023 = vunpack.c.l.s4 1966171168
    %v4024 = vunpack.c.0.s8 %v4023
    %v4025 = vlaneseq
    %v4026 = vshrl.u32 %v4025, 7
    %v4027 = vsub.s32 %v4024, %v4026
    %v4028 = vrot.slane %v4021, %v4027
    %v4030 = vunpack.c.l.s4 1966171168
    %v4031 = vunpack.c.0.s8 %v4030
    %v4032 = vlaneseq
    %v4033 = vshrl.u32 %v4032, 7
    %v4034 = vsub.s32 %v4031, %v4033
    %v4035 = vrot.slane %v4020, %v4034
    %v4036 = vcombine.low %v4028, %v4035
    %v4037 = vcombine.low %v3911, %v3913
    %v4038 = vcombine.low %v3896, %v3910
    %v4040 = vunpack.c.l.s4 1966171168
    %v4041 = vunpack.c.0.s8 %v4040
    %v4042 = vlaneseq
    %v4043 = vshrl.u32 %v4042, 7
    %v4044 = vsub.s32 %v4041, %v4043
    %v4045 = vrot.slane %v4037, %v4044
    %v4047 = vunpack.c.l.s4 1966171168
    %v4048 = vunpack.c.0.s8 %v4047
    %v4049 = vlaneseq
    %v4050 = vshrl.u32 %v4049, 7
    %v4051 = vsub.s32 %v4048, %v4050
    %v4052 = vrot.slane %v4038, %v4051
    %v4054 = vunpack.c.l.s4 1966171168
    %v4055 = vunpack.c.0.s8 %v4054
    %v4056 = vlaneseq
    %v4057 = vshrl.u32 %v4056, 7
    %v4058 = vsub.s32 %v4055, %v4057
    %v4059 = vrot.slane %v3912, %v4058
    %v4060 = vcombine.low %v4045, %v4052
    %v4062 = vunpack.c.l.s4 1966171168
    %v4063 = vunpack.c.0.s8 %v4062
    %v4064 = vlaneseq
    %v4065 = vshrl.u32 %v4064, 7
    %v4066 = vsub.s32 %v4063, %v4065
    %v4067 = vrot.slane %v4060, %v4066
    %v4069 = vunpack.c.l.s4 1966171168
    %v4070 = vunpack.c.0.s8 %v4069
    %v4071 = vlaneseq
    %v4072 = vshrl.u32 %v4071, 7
    %v4073 = vsub.s32 %v4070, %v4072
    %v4074 = vrot.slane %v4059, %v4073
    %v4075 = vcombine.low %v4067, %v4074
    %v4076 = vcombine.low %v3914, %v3929
    %v4077 = vcombine.low %v3936, %v3937
    %v4079 = vunpack.c.l.s4 1966171168
    %v4080 = vunpack.c.0.s8 %v4079
    %v4081 = vlaneseq
    %v4082 = vshrl.u32 %v4081, 7
    %v4083 = vsub.s32 %v4080, %v4082
    %v4084 = vrot.slane %v4076, %v4083
    %v4086 = vunpack.c.l.s4 1966171168
    %v4087 = vunpack.c.0.s8 %v4086
    %v4088 = vlaneseq
    %v4089 = vshrl.u32 %v4088, 7
    %v4090 = vsub.s32 %v4087, %v4089
    %v4091 = vrot.slane %v4077, %v4090
    %v4093 = vunpack.c.l.s4 1966171168
    %v4094 = vunpack.c.0.s8 %v4093
    %v4095 = vlaneseq
    %v4096 = vshrl.u32 %v4095, 7
    %v4097 = vsub.s32 %v4094, %v4096
    %v4098 = vrot.slane %v3938, %v4097
    %v4099 = vcombine.low %v4084, %v4091
    %v4101 = vunpack.c.l.s4 1966171168
    %v4102 = vunpack.c.0.s8 %v4101
    %v4103 = vlaneseq
    %v4104 = vshrl.u32 %v4103, 7
    %v4105 = vsub.s32 %v4102, %v4104
    %v4106 = vrot.slane %v4099, %v4105
    %v4108 = vunpack.c.l.s4 1966171168
    %v4109 = vunpack.c.0.s8 %v4108
    %v4110 = vlaneseq
    %v4111 = vshrl.u32 %v4110, 7
    %v4112 = vsub.s32 %v4109, %v4111
    %v4113 = vrot.slane %v4098, %v4112
    %v4114 = vcombine.low %v4106, %v4113
    %v4119 = vmul.f32 %v3942, %v3997
    %v4120 = vmul.f32 %v3947, %v4036
    %v4121 = vmul.f32 %v3952, %v4075
    %v4122 = vmul.f32 %v3957, %v4114
    %v4123 = vsel %vm1508, %v4119, 0.0
    %v4124 = vrot.slane %v4123, 4
    %v4125 = vadd.f32 %v4123, %v4124
    %v4126 = vrot.slane %v4125, 2
    %v4127 = vadd.f32 %v4125, %v4126
    %v4128 = vrot.slane %v4127, 1
    %v4129 = vadd.f32 %v4127, %v4128
    %v4130 = vsel %vm1508, %v4120, 0.0
    %v4131 = vrot.slane %v4130, 4
    %v4132 = vadd.f32 %v4130, %v4131
    %v4133 = vrot.slane %v4132, 2
    %v4134 = vadd.f32 %v4132, %v4133
    %v4135 = vrot.slane %v4134, 1
    %v4136 = vadd.f32 %v4134, %v4135
    %v4137 = vsel %vm1508, %v4121, 0.0
    %v4138 = vrot.slane %v4137, 4
    %v4139 = vadd.f32 %v4137, %v4138
    %v4140 = vrot.slane %v4139, 2
    %v4141 = vadd.f32 %v4139, %v4140
    %v4142 = vrot.slane %v4141, 1
    %v4143 = vadd.f32 %v4141, %v4142
    %v4144 = vsel %vm1508, %v4122, 0.0
    %v4145 = vrot.slane %v4144, 4
    %v4146 = vadd.f32 %v4144, %v4145
    %v4147 = vrot.slane %v4146, 2
    %v4148 = vadd.f32 %v4146, %v4147
    %v4149 = vrot.slane %v4148, 1
    %v4150 = vadd.f32 %v4148, %v4149
    %v4151 = vadd.f32 %v4129, %v1750
    %v4152 = vadd.f32 %v4136, %v1760
    %v4153 = vadd.f32 %v4143, %v1770
    %v4154 = vadd.f32 %v4150, %v1780
    %v4159 = vrot.slane %v4152, 7
    %vm4160 = vcmask 1041409
    %v4161 = vsel %vm4160, %v4159, %v4151
    %v4162 = vrot.slane %v4153, 6
    %vm4163 = vcmask 1042434
    %v4164 = vsel %vm4163, %v4162, %v4161
    %v4165 = vrot.slane %v4154, 5
    %vm4166 = vcmask 1043459
    %v4167 = vsel %vm4166, %v4165, %v4164
    %4169 = vst.msk [vmem:[%s12] sm:$0xf] %vm1998, %v4167
    // Predicated region
    $region46: #{classifier_forward.3} parent=1 // pred_check
      _
    $region47: #{classifier_forward.3} parent=1 // pred_check_branch
      %4171 = sbr.rel (0) target = $region49
    $region48: #{classifier_forward.3} parent=1 // pred_region
      %s4173 = ssub.s32 512, 512
      %4174 = vsyncadd [#allocation4], %s4173
      %s4175 = sshll.u32 [#allocation3], 4
      %s4176 = int_to_ptr.vmem [resolvable:$true] %s4175
      %4181 = dma.vmem_to_hbm [thread:$0]  %s4176, 512, %s11, [#allocation4], 128, 128, 8
    $region49: #{classifier_forward.3} parent=1 // pred_fallthru
      _
    // Predicated region
    $region50: #{classifier_forward.3} parent=1 // pred_check
      _
    $region51: #{classifier_forward.3} parent=1 // pred_check_branch
      %4183 = sbr.rel (0) target = $region53
    $region52: #{classifier_forward.3} parent=1 // pred_region
      _
    $region53: #{classifier_forward.3} parent=1 // pred_fallthru
      _
    // Predicated region
    $region54: #{classifier_forward.3} parent=1 // pred_check
      _
    $region55: #{classifier_forward.3} parent=1 // pred_check_branch
      %4185 = sbr.rel (0) target = $region57
    $region56: #{classifier_forward.3} parent=1 // pred_region
      _
    $region57: #{classifier_forward.3} parent=1 // pred_fallthru
      _
    // Predicated region
    $region58: #{classifier_forward.3} parent=1 // pred_check
      _
    $region59: #{classifier_forward.3} parent=1 // pred_check_branch
      %4187 = sbr.rel (0) target = $region61
    $region60: #{classifier_forward.3} parent=1 // pred_region
      %4188 = dma.done [#allocation4], 512
    $region61: #{classifier_forward.3} parent=1 // pred_fallthru
      _
    // Predicated region
    $region62: #{classifier_forward.3} parent=1 // pred_check
      _
    $region63: #{classifier_forward.3} parent=1 // pred_check_branch
      %4190 = sbr.rel (0) target = $region65
    $region64: #{classifier_forward.3} parent=1 // pred_region
      _
    $region65: #{classifier_forward.3} parent=1 // pred_fallthru
      _
    // Predicated region
    $region66: #{classifier_forward.3} parent=1 // pred_check
      _
    $region67: #{classifier_forward.3} parent=1 // pred_check_branch
      %4192 = sbr.rel (0) target = $region69
    $region68: #{classifier_forward.3} parent=1 // pred_region
      _
    $region69: #{classifier_forward.3} parent=1 // pred_fallthru
      _
    %4193 = vsyncpa [#allocation4], 1

// kernel: classifier_forward.5
$region0: #{classifier_forward.5}
  #allocation0 [shape = 'u32[]', space=smem, size = 0x4, offset = 0x4, fixed_abs, tag = 'smem constant byte address 0x4 - core index']
  #allocation1 [shape = 'u32[144,128]{1,0:T(1,128)}', space=vmem, size = 0x12000, scoped, tag = 'internal scratch']
  #allocation2 [shape = 'f32[1,1]{1,0:T(1,128)S(1)}', space=vmem, size = 0x200, scoped, tag = 'scoped memory for classifier_forward.5']
  #allocation3 [shape = 'f32[1,1]{1,0:T(1,128)S(1)}', space=vmem, size = 0x200, scoped, tag = 'scoped memory for classifier_forward.5']
  %s0 = inlined_call_operand.smem [shape: u32[33], index: -1, kind: input, shape index: {}]
  %s1 = sld [smem:[%s0]]
  %s2 = scalar_lea.smem %s0, 1
  %s3 = sld [smem:[%s2]]
  %s4 = scalar_lea.smem %s0, 2
  %s5 = sld [smem:[%s4]]
  %s6 = scalar_lea.smem %s0, 3
  %s7 = sld [smem:[%s6]]
  %s8 = scalar_lea.smem %s0, 4
  %s9 = sld [smem:[%s8]]
  %s10 = scalar_lea.smem %s0, 5
  %s11 = sld [smem:[%s10]]
  %s12 = scalar_lea.smem %s0, 6
  %s13 = sld [smem:[%s12]]
  %s14 = scalar_lea.smem %s0, 7
  %s15 = sld [smem:[%s14]]
  %s16 = scalar_lea.smem %s0, 8
  %s17 = sld [smem:[%s16]]
  %s18 = scalar_lea.smem %s0, 9
  %s19 = sld [smem:[%s18]]
  %s20 = scalar_lea.smem %s0, 10
  %s21 = sld [smem:[%s20]]
  %s22 = scalar_lea.smem %s0, 11
  %s23 = sld [smem:[%s22]]
  %s24 = scalar_lea.smem %s0, 12
  %s25 = sld [smem:[%s24]]
  %s26 = scalar_lea.smem %s0, 13
  %s27 = sld [smem:[%s26]]
  %s28 = scalar_lea.smem %s0, 14
  %s29 = sld [smem:[%s28]]
  %s30 = scalar_lea.smem %s0, 15
  %s31 = sld [smem:[%s30]]
  %s32 = scalar_lea.smem %s0, 16
  %s33 = sld [smem:[%s32]]
  %s34 = scalar_lea.smem %s0, 17
  %s35 = sld [smem:[%s34]]
  %s36 = scalar_lea.smem %s0, 18
  %s37 = sld [smem:[%s36]]
  %s38 = scalar_lea.smem %s0, 19
  %s39 = sld [smem:[%s38]]
  %s40 = scalar_lea.smem %s0, 20
  %s41 = sld [smem:[%s40]]
  %s42 = scalar_lea.smem %s0, 21
  %s43 = sld [smem:[%s42]]
  %s44 = scalar_lea.smem %s0, 22
  %s45 = sld [smem:[%s44]]
  %s46 = scalar_lea.smem %s0, 23
  %s47 = sld [smem:[%s46]]
  %s48 = scalar_lea.smem %s0, 24
  %s49 = sld [smem:[%s48]]
  %s50 = scalar_lea.smem %s0, 25
  %s51 = sld [smem:[%s50]]
  %s52 = scalar_lea.smem %s0, 26
  %s53 = sld [smem:[%s52]]
  %s54 = scalar_lea.smem %s0, 27
  %s55 = sld [smem:[%s54]]
  %s56 = scalar_lea.smem %s0, 28
  %s57 = sld [smem:[%s56]]
  %s58 = scalar_lea.smem %s0, 29
  %s59 = sld [smem:[%s58]]
  %s60 = scalar_lea.smem %s0, 30
  %s61 = sld [smem:[%s60]]
  %s62 = scalar_lea.smem %s0, 31
  %s63 = sld [smem:[%s62]]
  %s64 = scalar_lea.smem %s0, 32
  %s65 = sld [smem:[%s64]]
  %s66 = sld [smem:[#allocation0]]
  $region138: #{classifier_forward.5} parent=0
    _
  %s68 = ssub.s32 1, %s66
  %s69 = scalar_select 0, %s68, %s66
  %v70 = vstv %s59
  %71 = vst [vmem:[#allocation2] sm:$0x1] %v70
  %v72 = vstv %s63
  %73 = vst [vmem:[#allocation3] sm:$0x1] %v72
  $region1: #{classifier_forward.5} parent=0
    #allocation4 [shape = 'u8[512]{0}', space=vmem, size = 0x400, scoped, tag = 'output window, operand 0, single buffered']
    #allocation5 [shape = 's32[1]{0}', space=sflag, size = 0x4, scoped, tag = 'scoped memory for classifier_forward.5']
    %74 = vsyncpa [#allocation5], 0
    // Predicated region
    $region2: #{classifier_forward.5} parent=1 // pred_check
      _
    $region3: #{classifier_forward.5} parent=1 // pred_check_branch
      %76 = sbr.rel (0) target = $region5
    $region4: #{classifier_forward.5} parent=1 // pred_region
      _
    $region5: #{classifier_forward.5} parent=1 // pred_fallthru
      _
    // Predicated region
    $region6: #{classifier_forward.5} parent=1 // pred_check
      _
    $region7: #{classifier_forward.5} parent=1 // pred_check_branch
      %78 = sbr.rel (0) target = $region9
    $region8: #{classifier_forward.5} parent=1 // pred_region
      _
    $region9: #{classifier_forward.5} parent=1 // pred_fallthru
      _
    // Predicated region
    $region10: #{classifier_forward.5} parent=1 // pred_check
      _
    $region11: #{classifier_forward.5} parent=1 // pred_check_branch
      %80 = sbr.rel (0) target = $region13
    $region12: #{classifier_forward.5} parent=1 // pred_region
      _
    $region13: #{classifier_forward.5} parent=1 // pred_fallthru
      _
    // Predicated region
    $region14: #{classifier_forward.5} parent=1 // pred_check
      _
    $region15: #{classifier_forward.5} parent=1 // pred_check_branch
      %82 = sbr.rel (0) target = $region17
    $region16: #{classifier_forward.5} parent=1 // pred_region
      _
    $region17: #{classifier_forward.5} parent=1 // pred_fallthru
      _
    // Predicated region
    $region18: #{classifier_forward.5} parent=1 // pred_check
      _
    $region19: #{classifier_forward.5} parent=1 // pred_check_branch
      %84 = sbr.rel (0) target = $region21
    $region20: #{classifier_forward.5} parent=1 // pred_region
      _
    $region21: #{classifier_forward.5} parent=1 // pred_fallthru
      _
    // Predicated region
    $region22: #{classifier_forward.5} parent=1 // pred_check
      _
    $region23: #{classifier_forward.5} parent=1 // pred_check_branch
      %86 = sbr.rel (0) target = $region25
    $region24: #{classifier_forward.5} parent=1 // pred_region
      _
    $region25: #{classifier_forward.5} parent=1 // pred_fallthru
      _
    // Predicated region
    $region26: #{classifier_forward.5} parent=1 // pred_check
      _
    $region27: #{classifier_forward.5} parent=1 // pred_check_branch
      %88 = sbr.rel (0) target = $region29
    $region28: #{classifier_forward.5} parent=1 // pred_region
      _
    $region29: #{classifier_forward.5} parent=1 // pred_fallthru
      _
    // Predicated region
    $region30: #{classifier_forward.5} parent=1 // pred_check
      _
    $region31: #{classifier_forward.5} parent=1 // pred_check_branch
      %90 = sbr.rel (0) target = $region33
    $region32: #{classifier_forward.5} parent=1 // pred_region
      _
    $region33: #{classifier_forward.5} parent=1 // pred_fallthru
      _
    // Predicated region
    $region34: #{classifier_forward.5} parent=1 // pred_check
      _
    $region35: #{classifier_forward.5} parent=1 // pred_check_branch
      %92 = sbr.rel (0) target = $region37
    $region36: #{classifier_forward.5} parent=1 // pred_region
      _
    $region37: #{classifier_forward.5} parent=1 // pred_fallthru
      _
    // Predicated region
    $region38: #{classifier_forward.5} parent=1 // pred_check
      _
    $region39: #{classifier_forward.5} parent=1 // pred_check_branch
      %94 = sbr.rel (0) target = $region41
    $region40: #{classifier_forward.5} parent=1 // pred_region
      _
    $region41: #{classifier_forward.5} parent=1 // pred_fallthru
      _
    // Predicated region
    $region42: #{classifier_forward.5} parent=1 // pred_check
      _
    $region43: #{classifier_forward.5} parent=1 // pred_check_branch
      %96 = sbr.rel (0) target = $region45
    $region44: #{classifier_forward.5} parent=1 // pred_region
      _
    $region45: #{classifier_forward.5} parent=1 // pred_fallthru
      _
    // Predicated region
    $region46: #{classifier_forward.5} parent=1 // pred_check
      _
    $region47: #{classifier_forward.5} parent=1 // pred_check_branch
      %98 = sbr.rel (0) target = $region49
    $region48: #{classifier_forward.5} parent=1 // pred_region
      _
    $region49: #{classifier_forward.5} parent=1 // pred_fallthru
      _
    // Predicated region
    $region50: #{classifier_forward.5} parent=1 // pred_check
      _
    $region51: #{classifier_forward.5} parent=1 // pred_check_branch
      %100 = sbr.rel (0) target = $region53
    $region52: #{classifier_forward.5} parent=1 // pred_region
      _
    $region53: #{classifier_forward.5} parent=1 // pred_fallthru
      _
    // Predicated region
    $region54: #{classifier_forward.5} parent=1 // pred_check
      _
    $region55: #{classifier_forward.5} parent=1 // pred_check_branch
      %102 = sbr.rel (0) target = $region57
    $region56: #{classifier_forward.5} parent=1 // pred_region
      _
    $region57: #{classifier_forward.5} parent=1 // pred_fallthru
      _
    // Predicated region
    $region58: #{classifier_forward.5} parent=1 // pred_check
      _
    $region59: #{classifier_forward.5} parent=1 // pred_check_branch
      %104 = sbr.rel (0) target = $region61
    $region60: #{classifier_forward.5} parent=1 // pred_region
      _
    $region61: #{classifier_forward.5} parent=1 // pred_fallthru
      _
    // Predicated region
    $region62: #{classifier_forward.5} parent=1 // pred_check
      _
    $region63: #{classifier_forward.5} parent=1 // pred_check_branch
      %106 = sbr.rel (0) target = $region65
    $region64: #{classifier_forward.5} parent=1 // pred_region
      _
    $region65: #{classifier_forward.5} parent=1 // pred_fallthru
      _
    // Predicated region
    $region66: #{classifier_forward.5} parent=1 // pred_check
      _
    $region67: #{classifier_forward.5} parent=1 // pred_check_branch
      %108 = sbr.rel (0) target = $region69
    $region68: #{classifier_forward.5} parent=1 // pred_region
      _
    $region69: #{classifier_forward.5} parent=1 // pred_fallthru
      _
    // Predicated region
    $region70: #{classifier_forward.5} parent=1 // pred_check
      _
    $region71: #{classifier_forward.5} parent=1 // pred_check_branch
      %110 = sbr.rel (0) target = $region73
    $region72: #{classifier_forward.5} parent=1 // pred_region
      _
    $region73: #{classifier_forward.5} parent=1 // pred_fallthru
      _
    // Predicated region
    $region74: #{classifier_forward.5} parent=1 // pred_check
      _
    $region75: #{classifier_forward.5} parent=1 // pred_check_branch
      %112 = sbr.rel (0) target = $region77
    $region76: #{classifier_forward.5} parent=1 // pred_region
      _
    $region77: #{classifier_forward.5} parent=1 // pred_fallthru
      _
    // Predicated region
    $region78: #{classifier_forward.5} parent=1 // pred_check
      _
    $region79: #{classifier_forward.5} parent=1 // pred_check_branch
      %114 = sbr.rel (0) target = $region81
    $region80: #{classifier_forward.5} parent=1 // pred_region
      _
    $region81: #{classifier_forward.5} parent=1 // pred_fallthru
      _
    // Predicated region
    $region82: #{classifier_forward.5} parent=1 // pred_check
      _
    $region83: #{classifier_forward.5} parent=1 // pred_check_branch
      %116 = sbr.rel (0) target = $region85
    $region84: #{classifier_forward.5} parent=1 // pred_region
      _
    $region85: #{classifier_forward.5} parent=1 // pred_fallthru
      _
    // Predicated region
    $region86: #{classifier_forward.5} parent=1 // pred_check
      _
    $region87: #{classifier_forward.5} parent=1 // pred_check_branch
      %118 = sbr.rel (0) target = $region89
    $region88: #{classifier_forward.5} parent=1 // pred_region
      _
    $region89: #{classifier_forward.5} parent=1 // pred_fallthru
      _
    // Predicated region
    $region90: #{classifier_forward.5} parent=1 // pred_check
      _
    $region91: #{classifier_forward.5} parent=1 // pred_check_branch
      %120 = sbr.rel (0) target = $region93
    $region92: #{classifier_forward.5} parent=1 // pred_region
      _
    $region93: #{classifier_forward.5} parent=1 // pred_fallthru
      _
    // Predicated region
    $region94: #{classifier_forward.5} parent=1 // pred_check
      _
    $region95: #{classifier_forward.5} parent=1 // pred_check_branch
      %122 = sbr.rel (0) target = $region97
    $region96: #{classifier_forward.5} parent=1 // pred_region
      _
    $region97: #{classifier_forward.5} parent=1 // pred_fallthru
      _
    // Predicated region
    $region98: #{classifier_forward.5} parent=1 // pred_check
      _
    $region99: #{classifier_forward.5} parent=1 // pred_check_branch
      %124 = sbr.rel (0) target = $region101
    $region100: #{classifier_forward.5} parent=1 // pred_region
      _
    $region101: #{classifier_forward.5} parent=1 // pred_fallthru
      _
    // Predicated region
    $region102: #{classifier_forward.5} parent=1 // pred_check
      _
    $region103: #{classifier_forward.5} parent=1 // pred_check_branch
      %126 = sbr.rel (0) target = $region105
    $region104: #{classifier_forward.5} parent=1 // pred_region
      _
    $region105: #{classifier_forward.5} parent=1 // pred_fallthru
      _
    // Predicated region
    $region106: #{classifier_forward.5} parent=1 // pred_check
      _
    $region107: #{classifier_forward.5} parent=1 // pred_check_branch
      %128 = sbr.rel (0) target = $region109
    $region108: #{classifier_forward.5} parent=1 // pred_region
      _
    $region109: #{classifier_forward.5} parent=1 // pred_fallthru
      _
    // Predicated region
    $region110: #{classifier_forward.5} parent=1 // pred_check
      _
    $region111: #{classifier_forward.5} parent=1 // pred_check_branch
      %130 = sbr.rel (0) target = $region113
    $region112: #{classifier_forward.5} parent=1 // pred_region
      _
    $region113: #{classifier_forward.5} parent=1 // pred_fallthru
      _
    // Predicated region
    $region114: #{classifier_forward.5} parent=1 // pred_check
      _
    $region115: #{classifier_forward.5} parent=1 // pred_check_branch
      %132 = sbr.rel (0) target = $region117
    $region116: #{classifier_forward.5} parent=1 // pred_region
      _
    $region117: #{classifier_forward.5} parent=1 // pred_fallthru
      _
    // Predicated region
    $region118: #{classifier_forward.5} parent=1 // pred_check
      _
    $region119: #{classifier_forward.5} parent=1 // pred_check_branch
      %134 = sbr.rel (0) target = $region121
    $region120: #{classifier_forward.5} parent=1 // pred_region
      _
    $region121: #{classifier_forward.5} parent=1 // pred_fallthru
      _
    // Predicated region
    $region122: #{classifier_forward.5} parent=1 // pred_check
      _
    $region123: #{classifier_forward.5} parent=1 // pred_check_branch
      %136 = sbr.rel (0) target = $region125
    $region124: #{classifier_forward.5} parent=1 // pred_region
      _
    $region125: #{classifier_forward.5} parent=1 // pred_fallthru
      _
    // Predicated region
    $region126: #{classifier_forward.5} parent=1 // pred_check
      _
    $region127: #{classifier_forward.5} parent=1 // pred_check_branch
      %138 = sbr.rel (0) target = $region129
    $region128: #{classifier_forward.5} parent=1 // pred_region
      _
    $region129: #{classifier_forward.5} parent=1 // pred_fallthru
      _
    %v139 = vld [vmem:[%s1] sm:$0x1]
    %v140 = vld [vmem:[%s1 + $0x1] sm:$0x1]
    %v141 = vld [vmem:[%s1 + $0x2] sm:$0x1]
    %v142 = vld [vmem:[%s1 + $0x3] sm:$0x1]
    %v143 = vld [vmem:[%s1 + $0x4] sm:$0x1]
    %v144 = vld [vmem:[%s1 + $0x5] sm:$0x1]
    %v145 = vld [vmem:[%s1 + $0x6] sm:$0x1]
    %v146 = vld [vmem:[%s1 + $0x7] sm:$0x1]
    %v147 = vld [vmem:[%s1 + $0x8] sm:$0x1]
    %v148 = vld [vmem:[%s1 + $0x9] sm:$0x1]
    %v149 = vld [vmem:[%s1 + $0xa] sm:$0x1]
    %v150 = vld [vmem:[%s1 + $0xb] sm:$0x1]
    %v151 = vld [vmem:[%s1 + $0xc] sm:$0x1]
    %v152 = vld [vmem:[%s1 + $0xd] sm:$0x1]
    %v153 = vld [vmem:[%s1 + $0xe] sm:$0x1]
    %v154 = vld [vmem:[%s1 + $0xf] sm:$0x1]
    %v155 = vld [vmem:[%s3] sm:$0xff]
    %v156 = vld [vmem:[%s3 + $0x8] sm:$0xff]
    %v157 = vld [vmem:[%s3 + $0x10] sm:$0xff]
    %v158 = vld [vmem:[%s3 + $0x18] sm:$0xff]
    %v159 = vld [vmem:[%s3 + $0x20] sm:$0xff]
    %v160 = vld [vmem:[%s3 + $0x28] sm:$0xff]
    %v161 = vld [vmem:[%s3 + $0x30] sm:$0xff]
    %v162 = vld [vmem:[%s3 + $0x38] sm:$0xff]
    %v163 = vld [vmem:[%s3 + $0x40] sm:$0xff]
    %v164 = vld [vmem:[%s3 + $0x48] sm:$0xff]
    %v165 = vld [vmem:[%s3 + $0x50] sm:$0xff]
    %v166 = vld [vmem:[%s3 + $0x58] sm:$0xff]
    %v167 = vld [vmem:[%s3 + $0x60] sm:$0xff]
    %v168 = vld [vmem:[%s3 + $0x68] sm:$0xff]
    %v169 = vld [vmem:[%s3 + $0x70] sm:$0xff]
    %v170 = vld [vmem:[%s3 + $0x78] sm:$0xff]
    %v171 = vld [vmem:[%s5] sm:$0xff]
    %v172 = vld [vmem:[%s5 + $0x8] sm:$0xff]
    %v173 = vld [vmem:[%s5 + $0x10] sm:$0xff]
    %v174 = vld [vmem:[%s5 + $0x18] sm:$0xff]
    %v175 = vld [vmem:[%s5 + $0x20] sm:$0xff]
    %v176 = vld [vmem:[%s5 + $0x28] sm:$0xff]
    %v177 = vld [vmem:[%s5 + $0x30] sm:$0xff]
    %v178 = vld [vmem:[%s5 + $0x38] sm:$0xff]
    %v179 = vld [vmem:[%s5 + $0x40] sm:$0xff]
    %v180 = vld [vmem:[%s5 + $0x48] sm:$0xff]
    %v181 = vld [vmem:[%s5 + $0x50] sm:$0xff]
    %v182 = vld [vmem:[%s5 + $0x58] sm:$0xff]
    %v183 = vld [vmem:[%s5 + $0x60] sm:$0xff]
    %v184 = vld [vmem:[%s5 + $0x68] sm:$0xff]
    %v185 = vld [vmem:[%s5 + $0x70] sm:$0xff]
    %v186 = vld [vmem:[%s5 + $0x78] sm:$0xff]
    %v187 = vld [vmem:[%s25] sm:$0xff]
    %v188 = vld [vmem:[%s25 + $0x8] sm:$0xff]
    %v189 = vld [vmem:[%s25 + $0x10] sm:$0xff]
    %v190 = vld [vmem:[%s25 + $0x18] sm:$0xff]
    %v191 = vld [vmem:[%s27] sm:$0x1]
    %v208 = vcombine.low %v139, %v140
    %v209 = vcombine.low %v141, %v142
    %v210 = vcombine.low %v143, %v144
    %v211 = vcombine.low %v145, %v146
    %v213 = vunpack.c.l.s4 1966171168
    %v214 = vunpack.c.0.s8 %v213
    %v215 = vlaneseq
    %v216 = vshrl.u32 %v215, 7
    %v217 = vsub.s32 %v214, %v216
    %v218 = vrot.slane %v208, %v217
    %v220 = vunpack.c.l.s4 1966171168
    %v221 = vunpack.c.0.s8 %v220
    %v222 = vlaneseq
    %v223 = vshrl.u32 %v222, 7
    %v224 = vsub.s32 %v221, %v223
    %v225 = vrot.slane %v209, %v224
    %v227 = vunpack.c.l.s4 1966171168
    %v228 = vunpack.c.0.s8 %v227
    %v229 = vlaneseq
    %v230 = vshrl.u32 %v229, 7
    %v231 = vsub.s32 %v228, %v230
    %v232 = vrot.slane %v210, %v231
    %v234 = vunpack.c.l.s4 1966171168
    %v235 = vunpack.c.0.s8 %v234
    %v236 = vlaneseq
    %v237 = vshrl.u32 %v236, 7
    %v238 = vsub.s32 %v235, %v237
    %v239 = vrot.slane %v211, %v238
    %v240 = vcombine.low %v218, %v225
    %v241 = vcombine.low %v232, %v239
    %v243 = vunpack.c.l.s4 1966171168
    %v244 = vunpack.c.0.s8 %v243
    %v245 = vlaneseq
    %v246 = vshrl.u32 %v245, 7
    %v247 = vsub.s32 %v244, %v246
    %v248 = vrot.slane %v240, %v247
    %v250 = vunpack.c.l.s4 1966171168
    %v251 = vunpack.c.0.s8 %v250
    %v252 = vlaneseq
    %v253 = vshrl.u32 %v252, 7
    %v254 = vsub.s32 %v251, %v253
    %v255 = vrot.slane %v241, %v254
    %v256 = vcombine.low %v248, %v255
    %v257 = vcombine.low %v147, %v148
    %v258 = vcombine.low %v149, %v150
    %v259 = vcombine.low %v151, %v152
    %v260 = vcombine.low %v153, %v154
    %v262 = vunpack.c.l.s4 1966171168
    %v263 = vunpack.c.0.s8 %v262
    %v264 = vlaneseq
    %v265 = vshrl.u32 %v264, 7
    %v266 = vsub.s32 %v263, %v265
    %v267 = vrot.slane %v257, %v266
    %v269 = vunpack.c.l.s4 1966171168
    %v270 = vunpack.c.0.s8 %v269
    %v271 = vlaneseq
    %v272 = vshrl.u32 %v271, 7
    %v273 = vsub.s32 %v270, %v272
    %v274 = vrot.slane %v258, %v273
    %v276 = vunpack.c.l.s4 1966171168
    %v277 = vunpack.c.0.s8 %v276
    %v278 = vlaneseq
    %v279 = vshrl.u32 %v278, 7
    %v280 = vsub.s32 %v277, %v279
    %v281 = vrot.slane %v259, %v280
    %v283 = vunpack.c.l.s4 1966171168
    %v284 = vunpack.c.0.s8 %v283
    %v285 = vlaneseq
    %v286 = vshrl.u32 %v285, 7
    %v287 = vsub.s32 %v284, %v286
    %v288 = vrot.slane %v260, %v287
    %v289 = vcombine.low %v267, %v274
    %v290 = vcombine.low %v281, %v288
    %v292 = vunpack.c.l.s4 1966171168
    %v293 = vunpack.c.0.s8 %v292
    %v294 = vlaneseq
    %v295 = vshrl.u32 %v294, 7
    %v296 = vsub.s32 %v293, %v295
    %v297 = vrot.slane %v289, %v296
    %v299 = vunpack.c.l.s4 1966171168
    %v300 = vunpack.c.0.s8 %v299
    %v301 = vlaneseq
    %v302 = vshrl.u32 %v301, 7
    %v303 = vsub.s32 %v300, %v302
    %v304 = vrot.slane %v290, %v303
    %v305 = vcombine.low %v297, %v304
    %v307 = vcombine.low %v191, %v191
    %v309 = vunpack.c.l.s4 1966171168
    %v310 = vunpack.c.0.s8 %v309
    %v311 = vlaneseq
    %v312 = vshrl.u32 %v311, 7
    %v313 = vsub.s32 %v310, %v312
    %v314 = vrot.slane %v307, %v313
    %v315 = vcombine.low %v314, %v314
    %v317 = vunpack.c.l.s4 1966171168
    %v318 = vunpack.c.0.s8 %v317
    %v319 = vlaneseq
    %v320 = vshrl.u32 %v319, 7
    %v321 = vsub.s32 %v318, %v320
    %v322 = vrot.slane %v315, %v321
    %v323 = vcombine.low %v322, %v322
    %vm325 = vcmask 261120
    %v326 = vsel %vm325, %v256, 0
    %v328 = vsel %vm325, %v305, 0
    %330 = vmatprep.subr.mxu0 0.0
    %331 = vmatpush1.msra.mxu0 %v187
    %332 = vmatprep.subr.mxu0 0.0
    %333 = vmatpush1.msra.mxu0 %v188
    %334 = vmatprep.subr.mxu0 0.0
    %335 = vmatpush1.msra.mxu0 %v189
    %336 = vmatprep.subr.mxu0 0.0
    %337 = vmatpush1.msra.mxu0 %v190
    %338 = vmatprep.subr.mxu0 0.0
    %339 = vmatpush1.msra.mxu0 0.0
    %340 = vmatprep.subr.mxu0 0.0
    %341 = vmatpush1.msra.mxu0 0.0
    %342 = vmatprep.subr.mxu0 0.0
    %343 = vmatpush1.msra.mxu0 0.0
    %344 = vmatprep.subr.mxu0 0.0
    %345 = vmatpush1.msra.mxu0 0.0
    %346 = vmatprep.subr.mxu0 0.0
    %347 = vmatpush1.msra.mxu0 0.0
    %348 = vmatprep.subr.mxu0 0.0
    %349 = vmatpush1.msra.mxu0 0.0
    %350 = vmatprep.subr.mxu0 0.0
    %351 = vmatpush1.msra.mxu0 0.0
    %352 = vmatprep.subr.mxu0 0.0
    %353 = vmatpush1.msra.mxu0 0.0
    %354 = vmatprep.subr.mxu0 0.0
    %355 = vmatpush1.msra.mxu0 0.0
    %356 = vmatprep.subr.mxu0 0.0
    %357 = vmatpush1.msra.mxu0 0.0
    %358 = vmatprep.subr.mxu0 0.0
    %359 = vmatpush1.msra.mxu0 0.0
    %360 = vmatprep.subr.mxu0 0.0
    %361 = vmatpush1.msra.mxu0 0.0
    %362 = vmatprep.subr.mxu0 0.0
    %363 = vmatpush1.msra.mxu0 0.0
    %364 = vmatprep.subr.mxu0 0.0
    %365 = vmatpush1.msra.mxu0 0.0
    %366 = vmatprep.subr.mxu0 0.0
    %367 = vmatpush1.msra.mxu0 0.0
    %368 = vmatprep.subr.mxu0 0.0
    %369 = vmatpush1.msra.mxu0 0.0
    %370 = vmatprep.subr.mxu0 0.0
    %371 = vmatpush1.msra.mxu0 0.0
    %372 = vmatprep.subr.mxu0 0.0
    %373 = vmatpush1.msra.mxu0 0.0
    %374 = vmatprep.subr.mxu0 0.0
    %375 = vmatpush1.msra.mxu0 0.0
    %376 = vmatprep.subr.mxu0 0.0
    %377 = vmatpush1.msra.mxu0 0.0
    %378 = vmatprep.subr.mxu0 0.0
    %379 = vmatpush1.msra.mxu0 0.0
    %380 = vmatprep.subr.mxu0 0.0
    %381 = vmatpush1.msra.mxu0 0.0
    %382 = vmatprep.subr.mxu0 0.0
    %383 = vmatpush1.msra.mxu0 0.0
    %384 = vmatprep.subr.mxu0 0.0
    %385 = vmatpush1.msra.mxu0 0.0
    %386 = vmatprep.subr.mxu0 0.0
    %387 = vmatpush1.msra.mxu0 0.0
    %388 = vmatprep.subr.mxu0 0.0
    %389 = vmatpush1.msra.mxu0 0.0
    %390 = vmatprep.subr.mxu0 0.0
    %391 = vmatpush1.msra.mxu0 0.0
    %392 = vmatprep.subr.mxu0 0.0
    %393 = vmatpush1.msra.mxu0 0.0
    %394 = vmatprep.mubr.f32.mxu0 0.0
    %395 = vmatmul.mubr.f32.gmra.mrb[0].mxu0 %v326
    %v396 = vpop.f32.mrb[0].mxu0
    %v397 = vadd.f32 %v323, %v396
    %v398 = vpop.f32.mrb[0].mxu0
    %399 = vmatprep.mubr.f32.mxu0 0.0
    %400 = vmatmul.mubr.f32.gmra.mrb[0].mxu0 %v328
    %v401 = vpop.f32.mrb[0].mxu0
    %v402 = vadd.f32 %v323, %v401
    %v403 = vpop.f32.mrb[0].mxu0
    %404 = vdwg.mxu0
    %v407 = vcombine.high %v397, %v397
    %v409 = vunpack.c.l.s4 1966171168
    %v410 = vunpack.c.0.s8 %v409
    %v411 = vlaneseq
    %v412 = vshrl.u32 %v411, 7
    %v413 = vsub.s32 %v410, %v412
    %v414 = vrot.slane %v397, %v413
    %v416 = vunpack.c.l.s4 1966171168
    %v417 = vunpack.c.0.s8 %v416
    %v418 = vlaneseq
    %v419 = vshrl.u32 %v418, 7
    %v420 = vsub.s32 %v417, %v419
    %v421 = vrot.slane %v407, %v420
    %v422 = vcombine.high %v414, %v414
    %v423 = vcombine.high %v421, %v421
    %v425 = vunpack.c.l.s4 1966171168
    %v426 = vunpack.c.0.s8 %v425
    %v427 = vlaneseq
    %v428 = vshrl.u32 %v427, 7
    %v429 = vsub.s32 %v426, %v428
    %v430 = vrot.slane %v414, %v429
    %v432 = vunpack.c.l.s4 1966171168
    %v433 = vunpack.c.0.s8 %v432
    %v434 = vlaneseq
    %v435 = vshrl.u32 %v434, 7
    %v436 = vsub.s32 %v433, %v435
    %v437 = vrot.slane %v421, %v436
    %v439 = vunpack.c.l.s4 1966171168
    %v440 = vunpack.c.0.s8 %v439
    %v441 = vlaneseq
    %v442 = vshrl.u32 %v441, 7
    %v443 = vsub.s32 %v440, %v442
    %v444 = vrot.slane %v422, %v443
    %v446 = vunpack.c.l.s4 1966171168
    %v447 = vunpack.c.0.s8 %v446
    %v448 = vlaneseq
    %v449 = vshrl.u32 %v448, 7
    %v450 = vsub.s32 %v447, %v449
    %v451 = vrot.slane %v423, %v450
    %v452 = vcombine.high %v430, %v430
    %v453 = vcombine.high %v437, %v437
    %v454 = vcombine.high %v444, %v444
    %v455 = vcombine.high %v451, %v451
    %v456 = vcombine.high %v402, %v402
    %v458 = vunpack.c.l.s4 1966171168
    %v459 = vunpack.c.0.s8 %v458
    %v460 = vlaneseq
    %v461 = vshrl.u32 %v460, 7
    %v462 = vsub.s32 %v459, %v461
    %v463 = vrot.slane %v402, %v462
    %v465 = vunpack.c.l.s4 1966171168
    %v466 = vunpack.c.0.s8 %v465
    %v467 = vlaneseq
    %v468 = vshrl.u32 %v467, 7
    %v469 = vsub.s32 %v466, %v468
    %v470 = vrot.slane %v456, %v469
    %v471 = vcombine.high %v463, %v463
    %v472 = vcombine.high %v470, %v470
    %v474 = vunpack.c.l.s4 1966171168
    %v475 = vunpack.c.0.s8 %v474
    %v476 = vlaneseq
    %v477 = vshrl.u32 %v476, 7
    %v478 = vsub.s32 %v475, %v477
    %v479 = vrot.slane %v463, %v478
    %v481 = vunpack.c.l.s4 1966171168
    %v482 = vunpack.c.0.s8 %v481
    %v483 = vlaneseq
    %v484 = vshrl.u32 %v483, 7
    %v485 = vsub.s32 %v482, %v484
    %v486 = vrot.slane %v470, %v485
    %v488 = vunpack.c.l.s4 1966171168
    %v489 = vunpack.c.0.s8 %v488
    %v490 = vlaneseq
    %v491 = vshrl.u32 %v490, 7
    %v492 = vsub.s32 %v489, %v491
    %v493 = vrot.slane %v471, %v492
    %v495 = vunpack.c.l.s4 1966171168
    %v496 = vunpack.c.0.s8 %v495
    %v497 = vlaneseq
    %v498 = vshrl.u32 %v497, 7
    %v499 = vsub.s32 %v496, %v498
    %v500 = vrot.slane %v472, %v499
    %v501 = vcombine.high %v479, %v479
    %v502 = vcombine.high %v486, %v486
    %v503 = vcombine.high %v493, %v493
    %v504 = vcombine.high %v500, %v500
    %v505 = vld [vmem:[%s29] sm:$0xff]
    %v506 = vld [vmem:[%s29 + $0x8] sm:$0xff]
    %v507 = vld [vmem:[%s29 + $0x10] sm:$0xff]
    %v508 = vld [vmem:[%s29 + $0x18] sm:$0xff]
    %v509 = vld [vmem:[%s31] sm:$0x1]
    %v511 = vlaneseq
    %v512 = vshrl.u32 %v511, 7
    %v513 = vsub.s32 0, %v512
    %v514 = vrot.slane %v509, %v513
    %v517 = vsel %vm325, %v155, 0
    %v520 = vsel %vm325, %v156, 0
    %v523 = vsel %vm325, %v157, 0
    %v526 = vsel %vm325, %v158, 0
    %v529 = vsel %vm325, %v159, 0
    %v532 = vsel %vm325, %v160, 0
    %v535 = vsel %vm325, %v161, 0
    %v538 = vsel %vm325, %v162, 0
    %v541 = vsel %vm325, %v163, 0
    %v544 = vsel %vm325, %v164, 0
    %v547 = vsel %vm325, %v165, 0
    %v550 = vsel %vm325, %v166, 0
    %v553 = vsel %vm325, %v167, 0
    %v556 = vsel %vm325, %v168, 0
    %v559 = vsel %vm325, %v169, 0
    %v562 = vsel %vm325, %v170, 0
    %564 = vmatprep.subr.mxu0 0.0
    %565 = vmatpush1.msra.mxu0 %v505
    %566 = vmatprep.subr.mxu0 0.0
    %567 = vmatpush1.msra.mxu0 %v506
    %568 = vmatprep.subr.mxu0 0.0
    %569 = vmatpush1.msra.mxu0 %v507
    %570 = vmatprep.subr.mxu0 0.0
    %571 = vmatpush1.msra.mxu0 %v508
    %572 = vmatprep.subr.mxu0 0.0
    %573 = vmatpush1.msra.mxu0 0.0
    %574 = vmatprep.subr.mxu0 0.0
    %575 = vmatpush1.msra.mxu0 0.0
    %576 = vmatprep.subr.mxu0 0.0
    %577 = vmatpush1.msra.mxu0 0.0
    %578 = vmatprep.subr.mxu0 0.0
    %579 = vmatpush1.msra.mxu0 0.0
    %580 = vmatprep.subr.mxu0 0.0
    %581 = vmatpush1.msra.mxu0 0.0
    %582 = vmatprep.subr.mxu0 0.0
    %583 = vmatpush1.msra.mxu0 0.0
    %584 = vmatprep.subr.mxu0 0.0
    %585 = vmatpush1.msra.mxu0 0.0
    %586 = vmatprep.subr.mxu0 0.0
    %587 = vmatpush1.msra.mxu0 0.0
    %588 = vmatprep.subr.mxu0 0.0
    %589 = vmatpush1.msra.mxu0 0.0
    %590 = vmatprep.subr.mxu0 0.0
    %591 = vmatpush1.msra.mxu0 0.0
    %592 = vmatprep.subr.mxu0 0.0
    %593 = vmatpush1.msra.mxu0 0.0
    %594 = vmatprep.subr.mxu0 0.0
    %595 = vmatpush1.msra.mxu0 0.0
    %596 = vmatprep.subr.mxu0 0.0
    %597 = vmatpush1.msra.mxu0 0.0
    %598 = vmatprep.subr.mxu0 0.0
    %599 = vmatpush1.msra.mxu0 0.0
    %600 = vmatprep.subr.mxu0 0.0
    %601 = vmatpush1.msra.mxu0 0.0
    %602 = vmatprep.subr.mxu0 0.0
    %603 = vmatpush1.msra.mxu0 0.0
    %604 = vmatprep.subr.mxu0 0.0
    %605 = vmatpush1.msra.mxu0 0.0
    %606 = vmatprep.subr.mxu0 0.0
    %607 = vmatpush1.msra.mxu0 0.0
    %608 = vmatprep.subr.mxu0 0.0
    %609 = vmatpush1.msra.mxu0 0.0
    %610 = vmatprep.subr.mxu0 0.0
    %611 = vmatpush1.msra.mxu0 0.0
    %612 = vmatprep.subr.mxu0 0.0
    %613 = vmatpush1.msra.mxu0 0.0
    %614 = vmatprep.subr.mxu0 0.0
    %615 = vmatpush1.msra.mxu0 0.0
    %616 = vmatprep.subr.mxu0 0.0
    %617 = vmatpush1.msra.mxu0 0.0
    %618 = vmatprep.subr.mxu0 0.0
    %619 = vmatpush1.msra.mxu0 0.0
    %620 = vmatprep.subr.mxu0 0.0
    %621 = vmatpush1.msra.mxu0 0.0
    %622 = vmatprep.subr.mxu0 0.0
    %623 = vmatpush1.msra.mxu0 0.0
    %624 = vmatprep.subr.mxu0 0.0
    %625 = vmatpush1.msra.mxu0 0.0
    %626 = vmatprep.subr.mxu0 0.0
    %627 = vmatpush1.msra.mxu0 0.0
    %628 = vmatprep.mubr.f32.mxu0 0.0
    %629 = vmatmul.mubr.f32.gmra.mrb[0].mxu0 %v517
    %v630 = vpop.f32.mrb[0].mxu0
    %v631 = vadd.f32 %v514, %v630
    %v632 = vpop.f32.mrb[0].mxu0
    %633 = vmatprep.mubr.f32.mxu0 0.0
    %634 = vmatmul.mubr.f32.gmra.mrb[0].mxu0 %v520
    %v635 = vpop.f32.mrb[0].mxu0
    %v636 = vadd.f32 %v514, %v635
    %v637 = vpop.f32.mrb[0].mxu0
    %638 = vmatprep.mubr.f32.mxu0 0.0
    %639 = vmatmul.mubr.f32.gmra.mrb[0].mxu0 %v523
    %v640 = vpop.f32.mrb[0].mxu0
    %v641 = vadd.f32 %v514, %v640
    %v642 = vpop.f32.mrb[0].mxu0
    %643 = vmatprep.mubr.f32.mxu0 0.0
    %644 = vmatmul.mubr.f32.gmra.mrb[0].mxu0 %v526
    %v645 = vpop.f32.mrb[0].mxu0
    %v646 = vadd.f32 %v514, %v645
    %v647 = vpop.f32.mrb[0].mxu0
    %648 = vmatprep.mubr.f32.mxu0 0.0
    %649 = vmatmul.mubr.f32.gmra.mrb[0].mxu0 %v529
    %v650 = vpop.f32.mrb[0].mxu0
    %v651 = vadd.f32 %v514, %v650
    %v652 = vpop.f32.mrb[0].mxu0
    %653 = vmatprep.mubr.f32.mxu0 0.0
    %654 = vmatmul.mubr.f32.gmra.mrb[0].mxu0 %v532
    %v655 = vpop.f32.mrb[0].mxu0
    %v656 = vadd.f32 %v514, %v655
    %v657 = vpop.f32.mrb[0].mxu0
    %658 = vmatprep.mubr.f32.mxu0 0.0
    %659 = vmatmul.mubr.f32.gmra.mrb[0].mxu0 %v535
    %v660 = vpop.f32.mrb[0].mxu0
    %v661 = vadd.f32 %v514, %v660
    %v662 = vpop.f32.mrb[0].mxu0
    %663 = vmatprep.mubr.f32.mxu0 0.0
    %664 = vmatmul.mubr.f32.gmra.mrb[0].mxu0 %v538
    %v665 = vpop.f32.mrb[0].mxu0
    %v666 = vadd.f32 %v514, %v665
    %v667 = vpop.f32.mrb[0].mxu0
    %668 = vmatprep.mubr.f32.mxu0 0.0
    %669 = vmatmul.mubr.f32.gmra.mrb[0].mxu0 %v541
    %v670 = vpop.f32.mrb[0].mxu0
    %v671 = vadd.f32 %v514, %v670
    %v672 = vpop.f32.mrb[0].mxu0
    %673 = vmatprep.mubr.f32.mxu0 0.0
    %674 = vmatmul.mubr.f32.gmra.mrb[0].mxu0 %v544
    %v675 = vpop.f32.mrb[0].mxu0
    %v676 = vadd.f32 %v514, %v675
    %v677 = vpop.f32.mrb[0].mxu0
    %678 = vmatprep.mubr.f32.mxu0 0.0
    %679 = vmatmul.mubr.f32.gmra.mrb[0].mxu0 %v547
    %v680 = vpop.f32.mrb[0].mxu0
    %v681 = vadd.f32 %v514, %v680
    %v682 = vpop.f32.mrb[0].mxu0
    %683 = vmatprep.mubr.f32.mxu0 0.0
    %684 = vmatmul.mubr.f32.gmra.mrb[0].mxu0 %v550
    %v685 = vpop.f32.mrb[0].mxu0
    %v686 = vadd.f32 %v514, %v685
    %v687 = vpop.f32.mrb[0].mxu0
    %688 = vmatprep.mubr.f32.mxu0 0.0
    %689 = vmatmul.mubr.f32.gmra.mrb[0].mxu0 %v553
    %v690 = vpop.f32.mrb[0].mxu0
    %v691 = vadd.f32 %v514, %v690
    %v692 = vpop.f32.mrb[0].mxu0
    %693 = vmatprep.mubr.f32.mxu0 0.0
    %694 = vmatmul.mubr.f32.gmra.mrb[0].mxu0 %v556
    %v695 = vpop.f32.mrb[0].mxu0
    %v696 = vadd.f32 %v514, %v695
    %v697 = vpop.f32.mrb[0].mxu0
    %698 = vmatprep.mubr.f32.mxu0 0.0
    %699 = vmatmul.mubr.f32.gmra.mrb[0].mxu0 %v559
    %v700 = vpop.f32.mrb[0].mxu0
    %v701 = vadd.f32 %v514, %v700
    %v702 = vpop.f32.mrb[0].mxu0
    %703 = vmatprep.mubr.f32.mxu0 0.0
    %704 = vmatmul.mubr.f32.gmra.mrb[0].mxu0 %v562
    %v705 = vpop.f32.mrb[0].mxu0
    %v706 = vadd.f32 %v514, %v705
    %v707 = vpop.f32.mrb[0].mxu0
    %708 = vdwg.mxu0
    %v709 = vld [vmem:[%s33] sm:$0xff]
    %v710 = vld [vmem:[%s33 + $0x8] sm:$0xff]
    %v711 = vld [vmem:[%s33 + $0x10] sm:$0xff]
    %v712 = vld [vmem:[%s33 + $0x18] sm:$0xff]
    %v713 = vld [vmem:[%s35] sm:$0x1]
    %v715 = vlaneseq
    %v716 = vshrl.u32 %v715, 7
    %v717 = vsub.s32 0, %v716
    %v718 = vrot.slane %v713, %v717
    %720 = vmatprep.subr.mxu0 0.0
    %721 = vmatpush1.msra.mxu0 %v709
    %722 = vmatprep.subr.mxu0 0.0
    %723 = vmatpush1.msra.mxu0 %v710
    %724 = vmatprep.subr.mxu0 0.0
    %725 = vmatpush1.msra.mxu0 %v711
    %726 = vmatprep.subr.mxu0 0.0
    %727 = vmatpush1.msra.mxu0 %v712
    %728 = vmatprep.subr.mxu0 0.0
    %729 = vmatpush1.msra.mxu0 0.0
    %730 = vmatprep.subr.mxu0 0.0
    %731 = vmatpush1.msra.mxu0 0.0
    %732 = vmatprep.subr.mxu0 0.0
    %733 = vmatpush1.msra.mxu0 0.0
    %734 = vmatprep.subr.mxu0 0.0
    %735 = vmatpush1.msra.mxu0 0.0
    %736 = vmatprep.subr.mxu0 0.0
    %737 = vmatpush1.msra.mxu0 0.0
    %738 = vmatprep.subr.mxu0 0.0
    %739 = vmatpush1.msra.mxu0 0.0
    %740 = vmatprep.subr.mxu0 0.0
    %741 = vmatpush1.msra.mxu0 0.0
    %742 = vmatprep.subr.mxu0 0.0
    %743 = vmatpush1.msra.mxu0 0.0
    %744 = vmatprep.subr.mxu0 0.0
    %745 = vmatpush1.msra.mxu0 0.0
    %746 = vmatprep.subr.mxu0 0.0
    %747 = vmatpush1.msra.mxu0 0.0
    %748 = vmatprep.subr.mxu0 0.0
    %749 = vmatpush1.msra.mxu0 0.0
    %750 = vmatprep.subr.mxu0 0.0
    %751 = vmatpush1.msra.mxu0 0.0
    %752 = vmatprep.subr.mxu0 0.0
    %753 = vmatpush1.msra.mxu0 0.0
    %754 = vmatprep.subr.mxu0 0.0
    %755 = vmatpush1.msra.mxu0 0.0
    %756 = vmatprep.subr.mxu0 0.0
    %757 = vmatpush1.msra.mxu0 0.0
    %758 = vmatprep.subr.mxu0 0.0
    %759 = vmatpush1.msra.mxu0 0.0
    %760 = vmatprep.subr.mxu0 0.0
    %761 = vmatpush1.msra.mxu0 0.0
    %762 = vmatprep.subr.mxu0 0.0
    %763 = vmatpush1.msra.mxu0 0.0
    %764 = vmatprep.subr.mxu0 0.0
    %765 = vmatpush1.msra.mxu0 0.0
    %766 = vmatprep.subr.mxu0 0.0
    %767 = vmatpush1.msra.mxu0 0.0
    %768 = vmatprep.subr.mxu0 0.0
    %769 = vmatpush1.msra.mxu0 0.0
    %770 = vmatprep.subr.mxu0 0.0
    %771 = vmatpush1.msra.mxu0 0.0
    %772 = vmatprep.subr.mxu0 0.0
    %773 = vmatpush1.msra.mxu0 0.0
    %774 = vmatprep.subr.mxu0 0.0
    %775 = vmatpush1.msra.mxu0 0.0
    %776 = vmatprep.subr.mxu0 0.0
    %777 = vmatpush1.msra.mxu0 0.0
    %778 = vmatprep.subr.mxu0 0.0
    %779 = vmatpush1.msra.mxu0 0.0
    %780 = vmatprep.subr.mxu0 0.0
    %781 = vmatpush1.msra.mxu0 0.0
    %782 = vmatprep.subr.mxu0 0.0
    %783 = vmatpush1.msra.mxu0 0.0
    %784 = vmatprep.mubr.f32.mxu0 0.0
    %785 = vmatmul.mubr.f32.gmra.mrb[0].mxu0 %v517
    %v786 = vpop.f32.mrb[0].mxu0
    %v787 = vadd.f32 %v718, %v786
    %v788 = vpop.f32.mrb[0].mxu0
    %789 = vmatprep.mubr.f32.mxu0 0.0
    %790 = vmatmul.mubr.f32.gmra.mrb[0].mxu0 %v520
    %v791 = vpop.f32.mrb[0].mxu0
    %v792 = vadd.f32 %v718, %v791
    %v793 = vpop.f32.mrb[0].mxu0
    %794 = vmatprep.mubr.f32.mxu0 0.0
    %795 = vmatmul.mubr.f32.gmra.mrb[0].mxu0 %v523
    %v796 = vpop.f32.mrb[0].mxu0
    %v797 = vadd.f32 %v718, %v796
    %v798 = vpop.f32.mrb[0].mxu0
    %799 = vmatprep.mubr.f32.mxu0 0.0
    %800 = vmatmul.mubr.f32.gmra.mrb[0].mxu0 %v526
    %v801 = vpop.f32.mrb[0].mxu0
    %v802 = vadd.f32 %v718, %v801
    %v803 = vpop.f32.mrb[0].mxu0
    %804 = vmatprep.mubr.f32.mxu0 0.0
    %805 = vmatmul.mubr.f32.gmra.mrb[0].mxu0 %v529
    %v806 = vpop.f32.mrb[0].mxu0
    %v807 = vadd.f32 %v718, %v806
    %v808 = vpop.f32.mrb[0].mxu0
    %809 = vmatprep.mubr.f32.mxu0 0.0
    %810 = vmatmul.mubr.f32.gmra.mrb[0].mxu0 %v532
    %v811 = vpop.f32.mrb[0].mxu0
    %v812 = vadd.f32 %v718, %v811
    %v813 = vpop.f32.mrb[0].mxu0
    %814 = vmatprep.mubr.f32.mxu0 0.0
    %815 = vmatmul.mubr.f32.gmra.mrb[0].mxu0 %v535
    %v816 = vpop.f32.mrb[0].mxu0
    %v817 = vadd.f32 %v718, %v816
    %v818 = vpop.f32.mrb[0].mxu0
    %819 = vmatprep.mubr.f32.mxu0 0.0
    %820 = vmatmul.mubr.f32.gmra.mrb[0].mxu0 %v538
    %v821 = vpop.f32.mrb[0].mxu0
    %v822 = vadd.f32 %v718, %v821
    %v823 = vpop.f32.mrb[0].mxu0
    %824 = vmatprep.mubr.f32.mxu0 0.0
    %825 = vmatmul.mubr.f32.gmra.mrb[0].mxu0 %v541
    %v826 = vpop.f32.mrb[0].mxu0
    %v827 = vadd.f32 %v718, %v826
    %v828 = vpop.f32.mrb[0].mxu0
    %829 = vmatprep.mubr.f32.mxu0 0.0
    %830 = vmatmul.mubr.f32.gmra.mrb[0].mxu0 %v544
    %v831 = vpop.f32.mrb[0].mxu0
    %v832 = vadd.f32 %v718, %v831
    %v833 = vpop.f32.mrb[0].mxu0
    %834 = vmatprep.mubr.f32.mxu0 0.0
    %835 = vmatmul.mubr.f32.gmra.mrb[0].mxu0 %v547
    %v836 = vpop.f32.mrb[0].mxu0
    %v837 = vadd.f32 %v718, %v836
    %v838 = vpop.f32.mrb[0].mxu0
    %839 = vmatprep.mubr.f32.mxu0 0.0
    %840 = vmatmul.mubr.f32.gmra.mrb[0].mxu0 %v550
    %v841 = vpop.f32.mrb[0].mxu0
    %v842 = vadd.f32 %v718, %v841
    %v843 = vpop.f32.mrb[0].mxu0
    %844 = vmatprep.mubr.f32.mxu0 0.0
    %845 = vmatmul.mubr.f32.gmra.mrb[0].mxu0 %v553
    %v846 = vpop.f32.mrb[0].mxu0
    %v847 = vadd.f32 %v718, %v846
    %v848 = vpop.f32.mrb[0].mxu0
    %849 = vmatprep.mubr.f32.mxu0 0.0
    %850 = vmatmul.mubr.f32.gmra.mrb[0].mxu0 %v556
    %v851 = vpop.f32.mrb[0].mxu0
    %v852 = vadd.f32 %v718, %v851
    %v853 = vpop.f32.mrb[0].mxu0
    %854 = vmatprep.mubr.f32.mxu0 0.0
    %855 = vmatmul.mubr.f32.gmra.mrb[0].mxu0 %v559
    %v856 = vpop.f32.mrb[0].mxu0
    %v857 = vadd.f32 %v718, %v856
    %v858 = vpop.f32.mrb[0].mxu0
    %859 = vmatprep.mubr.f32.mxu0 0.0
    %860 = vmatmul.mubr.f32.gmra.mrb[0].mxu0 %v562
    %v861 = vpop.f32.mrb[0].mxu0
    %v862 = vadd.f32 %v718, %v861
    %v863 = vpop.f32.mrb[0].mxu0
    %864 = vdwg.mxu0
    %v865 = vlaneseq
    %v866 = vshrl.u32 %v865, 7
    %v867 = vsub.s32 0, %v866
    %v868 = vrot.slane %v430, %v867
    %v869 = vlaneseq
    %v870 = vshrl.u32 %v869, 7
    %v871 = vsub.s32 0, %v870
    %v872 = vrot.slane %v444, %v871
    %v873 = vlaneseq
    %v874 = vshrl.u32 %v873, 7
    %v875 = vsub.s32 0, %v874
    %v876 = vrot.slane %v452, %v875
    %v877 = vlaneseq
    %v878 = vshrl.u32 %v877, 7
    %v879 = vsub.s32 0, %v878
    %v880 = vrot.slane %v454, %v879
    %v881 = vlaneseq
    %v882 = vshrl.u32 %v881, 7
    %v883 = vsub.s32 0, %v882
    %v884 = vrot.slane %v437, %v883
    %v885 = vlaneseq
    %v886 = vshrl.u32 %v885, 7
    %v887 = vsub.s32 0, %v886
    %v888 = vrot.slane %v451, %v887
    %v889 = vlaneseq
    %v890 = vshrl.u32 %v889, 7
    %v891 = vsub.s32 0, %v890
    %v892 = vrot.slane %v453, %v891
    %v893 = vlaneseq
    %v894 = vshrl.u32 %v893, 7
    %v895 = vsub.s32 0, %v894
    %v896 = vrot.slane %v455, %v895
    %v897 = vlaneseq
    %v898 = vshrl.u32 %v897, 7
    %v899 = vsub.s32 0, %v898
    %v900 = vrot.slane %v479, %v899
    %v901 = vlaneseq
    %v902 = vshrl.u32 %v901, 7
    %v903 = vsub.s32 0, %v902
    %v904 = vrot.slane %v493, %v903
    %v905 = vlaneseq
    %v906 = vshrl.u32 %v905, 7
    %v907 = vsub.s32 0, %v906
    %v908 = vrot.slane %v501, %v907
    %v909 = vlaneseq
    %v910 = vshrl.u32 %v909, 7
    %v911 = vsub.s32 0, %v910
    %v912 = vrot.slane %v503, %v911
    %v913 = vlaneseq
    %v914 = vshrl.u32 %v913, 7
    %v915 = vsub.s32 0, %v914
    %v916 = vrot.slane %v486, %v915
    %v917 = vlaneseq
    %v918 = vshrl.u32 %v917, 7
    %v919 = vsub.s32 0, %v918
    %v920 = vrot.slane %v500, %v919
    %v921 = vlaneseq
    %v922 = vshrl.u32 %v921, 7
    %v923 = vsub.s32 0, %v922
    %v924 = vrot.slane %v502, %v923
    %v925 = vlaneseq
    %v926 = vshrl.u32 %v925, 7
    %v927 = vsub.s32 0, %v926
    %v928 = vrot.slane %v504, %v927
    %v945 = vmul.f32 %v868, %v631
    %v946 = vmul.f32 %v872, %v636
    %v947 = vmul.f32 %v876, %v641
    %v948 = vmul.f32 %v880, %v646
    %v949 = vmul.f32 %v884, %v651
    %v950 = vmul.f32 %v888, %v656
    %v951 = vmul.f32 %v892, %v661
    %v952 = vmul.f32 %v896, %v666
    %v953 = vmul.f32 %v900, %v671
    %v954 = vmul.f32 %v904, %v676
    %v955 = vmul.f32 %v908, %v681
    %v956 = vmul.f32 %v912, %v686
    %v957 = vmul.f32 %v916, %v691
    %v958 = vmul.f32 %v920, %v696
    %v959 = vmul.f32 %v924, %v701
    %v960 = vmul.f32 %v928, %v706
    %v961 = vld [vmem:[%s21] sm:$0xff]
    %v962 = vld [vmem:[%s21 + $0x8] sm:$0xff]
    %v963 = vld [vmem:[%s21 + $0x10] sm:$0xff]
    %v964 = vld [vmem:[%s21 + $0x18] sm:$0xff]
    %v966 = vsel %vm325, %v945, 0
    %v969 = vsel %vm325, %v946, 0
    %v972 = vsel %vm325, %v947, 0
    %v975 = vsel %vm325, %v948, 0
    %v978 = vsel %vm325, %v949, 0
    %v981 = vsel %vm325, %v950, 0
    %v984 = vsel %vm325, %v951, 0
    %v987 = vsel %vm325, %v952, 0
    %v990 = vsel %vm325, %v953, 0
    %v993 = vsel %vm325, %v954, 0
    %v996 = vsel %vm325, %v955, 0
    %v999 = vsel %vm325, %v956, 0
    %v1002 = vsel %vm325, %v957, 0
    %v1005 = vsel %vm325, %v958, 0
    %v1008 = vsel %vm325, %v959, 0
    %v1011 = vsel %vm325, %v960, 0
    %1013 = vmatprep.subr.mxu0 0.0
    %1014 = vmatpush1.msra.mxu0 %v961
    %1015 = vmatprep.subr.mxu0 0.0
    %1016 = vmatpush1.msra.mxu0 %v962
    %1017 = vmatprep.subr.mxu0 0.0
    %1018 = vmatpush1.msra.mxu0 %v963
    %1019 = vmatprep.subr.mxu0 0.0
    %1020 = vmatpush1.msra.mxu0 %v964
    %1021 = vmatprep.subr.mxu0 0.0
    %1022 = vmatpush1.msra.mxu0 0.0
    %1023 = vmatprep.subr.mxu0 0.0
    %1024 = vmatpush1.msra.mxu0 0.0
    %1025 = vmatprep.subr.mxu0 0.0
    %1026 = vmatpush1.msra.mxu0 0.0
    %1027 = vmatprep.subr.mxu0 0.0
    %1028 = vmatpush1.msra.mxu0 0.0
    %1029 = vmatprep.subr.mxu0 0.0
    %1030 = vmatpush1.msra.mxu0 0.0
    %1031 = vmatprep.subr.mxu0 0.0
    %1032 = vmatpush1.msra.mxu0 0.0
    %1033 = vmatprep.subr.mxu0 0.0
    %1034 = vmatpush1.msra.mxu0 0.0
    %1035 = vmatprep.subr.mxu0 0.0
    %1036 = vmatpush1.msra.mxu0 0.0
    %1037 = vmatprep.subr.mxu0 0.0
    %1038 = vmatpush1.msra.mxu0 0.0
    %1039 = vmatprep.subr.mxu0 0.0
    %1040 = vmatpush1.msra.mxu0 0.0
    %1041 = vmatprep.subr.mxu0 0.0
    %1042 = vmatpush1.msra.mxu0 0.0
    %1043 = vmatprep.subr.mxu0 0.0
    %1044 = vmatpush1.msra.mxu0 0.0
    %1045 = vmatprep.subr.mxu0 0.0
    %1046 = vmatpush1.msra.mxu0 0.0
    %1047 = vmatprep.subr.mxu0 0.0
    %1048 = vmatpush1.msra.mxu0 0.0
    %1049 = vmatprep.subr.mxu0 0.0
    %1050 = vmatpush1.msra.mxu0 0.0
    %1051 = vmatprep.subr.mxu0 0.0
    %1052 = vmatpush1.msra.mxu0 0.0
    %1053 = vmatprep.subr.mxu0 0.0
    %1054 = vmatpush1.msra.mxu0 0.0
    %1055 = vmatprep.subr.mxu0 0.0
    %1056 = vmatpush1.msra.mxu0 0.0
    %1057 = vmatprep.subr.mxu0 0.0
    %1058 = vmatpush1.msra.mxu0 0.0
    %1059 = vmatprep.subr.mxu0 0.0
    %1060 = vmatpush1.msra.mxu0 0.0
    %1061 = vmatprep.subr.mxu0 0.0
    %1062 = vmatpush1.msra.mxu0 0.0
    %1063 = vmatprep.subr.mxu0 0.0
    %1064 = vmatpush1.msra.mxu0 0.0
    %1065 = vmatprep.subr.mxu0 0.0
    %1066 = vmatpush1.msra.mxu0 0.0
    %1067 = vmatprep.subr.mxu0 0.0
    %1068 = vmatpush1.msra.mxu0 0.0
    %1069 = vmatprep.subr.mxu0 0.0
    %1070 = vmatpush1.msra.mxu0 0.0
    %1071 = vmatprep.subr.mxu0 0.0
    %1072 = vmatpush1.msra.mxu0 0.0
    %1073 = vmatprep.subr.mxu0 0.0
    %1074 = vmatpush1.msra.mxu0 0.0
    %1075 = vmatprep.subr.mxu0 0.0
    %1076 = vmatpush1.msra.mxu0 0.0
    %1077 = vmatprep.mubr.f32.mxu0 0.0
    %1078 = vmatmul.mubr.f32.gmra.mrb[0].mxu0 %v966
    %v1079 = vpop.f32.mrb[0].mxu0
    %v1080 = vadd.f32 0.0, %v1079
    %v1081 = vpop.f32.mrb[0].mxu0
    %1082 = vmatprep.mubr.f32.mxu0 0.0
    %1083 = vmatmul.mubr.f32.gmra.mrb[0].mxu0 %v969
    %v1084 = vpop.f32.mrb[0].mxu0
    %v1085 = vadd.f32 0.0, %v1084
    %v1086 = vpop.f32.mrb[0].mxu0
    %1087 = vmatprep.mubr.f32.mxu0 0.0
    %1088 = vmatmul.mubr.f32.gmra.mrb[0].mxu0 %v972
    %v1089 = vpop.f32.mrb[0].mxu0
    %v1090 = vadd.f32 0.0, %v1089
    %v1091 = vpop.f32.mrb[0].mxu0
    %1092 = vmatprep.mubr.f32.mxu0 0.0
    %1093 = vmatmul.mubr.f32.gmra.mrb[0].mxu0 %v975
    %v1094 = vpop.f32.mrb[0].mxu0
    %v1095 = vadd.f32 0.0, %v1094
    %v1096 = vpop.f32.mrb[0].mxu0
    %1097 = vmatprep.mubr.f32.mxu0 0.0
    %1098 = vmatmul.mubr.f32.gmra.mrb[0].mxu0 %v978
    %v1099 = vpop.f32.mrb[0].mxu0
    %v1100 = vadd.f32 0.0, %v1099
    %v1101 = vpop.f32.mrb[0].mxu0
    %1102 = vmatprep.mubr.f32.mxu0 0.0
    %1103 = vmatmul.mubr.f32.gmra.mrb[0].mxu0 %v981
    %v1104 = vpop.f32.mrb[0].mxu0
    %v1105 = vadd.f32 0.0, %v1104
    %v1106 = vpop.f32.mrb[0].mxu0
    %1107 = vmatprep.mubr.f32.mxu0 0.0
    %1108 = vmatmul.mubr.f32.gmra.mrb[0].mxu0 %v984
    %v1109 = vpop.f32.mrb[0].mxu0
    %v1110 = vadd.f32 0.0, %v1109
    %v1111 = vpop.f32.mrb[0].mxu0
    %1112 = vmatprep.mubr.f32.mxu0 0.0
    %1113 = vmatmul.mubr.f32.gmra.mrb[0].mxu0 %v987
    %v1114 = vpop.f32.mrb[0].mxu0
    %v1115 = vadd.f32 0.0, %v1114
    %v1116 = vpop.f32.mrb[0].mxu0
    %1117 = vmatprep.mubr.f32.mxu0 0.0
    %1118 = vmatmul.mubr.f32.gmra.mrb[0].mxu0 %v990
    %v1119 = vpop.f32.mrb[0].mxu0
    %v1120 = vadd.f32 0.0, %v1119
    %v1121 = vpop.f32.mrb[0].mxu0
    %1122 = vmatprep.mubr.f32.mxu0 0.0
    %1123 = vmatmul.mubr.f32.gmra.mrb[0].mxu0 %v993
    %v1124 = vpop.f32.mrb[0].mxu0
    %v1125 = vadd.f32 0.0, %v1124
    %v1126 = vpop.f32.mrb[0].mxu0
    %1127 = vmatprep.mubr.f32.mxu0 0.0
    %1128 = vmatmul.mubr.f32.gmra.mrb[0].mxu0 %v996
    %v1129 = vpop.f32.mrb[0].mxu0
    %v1130 = vadd.f32 0.0, %v1129
    %v1131 = vpop.f32.mrb[0].mxu0
    %1132 = vmatprep.mubr.f32.mxu0 0.0
    %1133 = vmatmul.mubr.f32.gmra.mrb[0].mxu0 %v999
    %v1134 = vpop.f32.mrb[0].mxu0
    %v1135 = vadd.f32 0.0, %v1134
    %v1136 = vpop.f32.mrb[0].mxu0
    %1137 = vmatprep.mubr.f32.mxu0 0.0
    %1138 = vmatmul.mubr.f32.gmra.mrb[0].mxu0 %v1002
    %v1139 = vpop.f32.mrb[0].mxu0
    %v1140 = vadd.f32 0.0, %v1139
    %v1141 = vpop.f32.mrb[0].mxu0
    %1142 = vmatprep.mubr.f32.mxu0 0.0
    %1143 = vmatmul.mubr.f32.gmra.mrb[0].mxu0 %v1005
    %v1144 = vpop.f32.mrb[0].mxu0
    %v1145 = vadd.f32 0.0, %v1144
    %v1146 = vpop.f32.mrb[0].mxu0
    %1147 = vmatprep.mubr.f32.mxu0 0.0
    %1148 = vmatmul.mubr.f32.gmra.mrb[0].mxu0 %v1008
    %v1149 = vpop.f32.mrb[0].mxu0
    %v1150 = vadd.f32 0.0, %v1149
    %v1151 = vpop.f32.mrb[0].mxu0
    %1152 = vmatprep.mubr.f32.mxu0 0.0
    %1153 = vmatmul.mubr.f32.gmra.mrb[0].mxu0 %v1011
    %v1154 = vpop.f32.mrb[0].mxu0
    %v1155 = vadd.f32 0.0, %v1154
    %v1156 = vpop.f32.mrb[0].mxu0
    %1157 = vdwg.mxu0
    %v1158 = vmul.f32 %v1080, 0.35355338
    %v1159 = vmul.f32 %v1085, 0.35355338
    %v1160 = vmul.f32 %v1090, 0.35355338
    %v1161 = vmul.f32 %v1095, 0.35355338
    %v1162 = vmul.f32 %v1100, 0.35355338
    %v1163 = vmul.f32 %v1105, 0.35355338
    %v1164 = vmul.f32 %v1110, 0.35355338
    %v1165 = vmul.f32 %v1115, 0.35355338
    %v1166 = vmul.f32 %v1120, 0.35355338
    %v1167 = vmul.f32 %v1125, 0.35355338
    %v1168 = vmul.f32 %v1130, 0.35355338
    %v1169 = vmul.f32 %v1135, 0.35355338
    %v1170 = vmul.f32 %v1140, 0.35355338
    %v1171 = vmul.f32 %v1145, 0.35355338
    %v1172 = vmul.f32 %v1150, 0.35355338
    %v1173 = vmul.f32 %v1155, 0.35355338
    %1175 = vset.pattern.permute.xlu0 0
    %1176 = vperm.xlu0 %1175, %v171
    %v1177 = vpop.permute.xlu0 %1176
    %1180 = vset.pattern.permute.xlu0 0
    %1181 = vperm.xlu0 %1180, %v172
    %v1182 = vpop.permute.xlu0 %1181
    %1185 = vset.pattern.permute.xlu0 0
    %1186 = vperm.xlu0 %1185, %v173
    %v1187 = vpop.permute.xlu0 %1186
    %1190 = vset.pattern.permute.xlu0 0
    %1191 = vperm.xlu0 %1190, %v174
    %v1192 = vpop.permute.xlu0 %1191
    %1195 = vset.pattern.permute.xlu0 0
    %1196 = vperm.xlu0 %1195, %v175
    %v1197 = vpop.permute.xlu0 %1196
    %1200 = vset.pattern.permute.xlu0 0
    %1201 = vperm.xlu0 %1200, %v176
    %v1202 = vpop.permute.xlu0 %1201
    %1205 = vset.pattern.permute.xlu0 0
    %1206 = vperm.xlu0 %1205, %v177
    %v1207 = vpop.permute.xlu0 %1206
    %1210 = vset.pattern.permute.xlu0 0
    %1211 = vperm.xlu0 %1210, %v178
    %v1212 = vpop.permute.xlu0 %1211
    %1215 = vset.pattern.permute.xlu0 0
    %1216 = vperm.xlu0 %1215, %v179
    %v1217 = vpop.permute.xlu0 %1216
    %1220 = vset.pattern.permute.xlu0 0
    %1221 = vperm.xlu0 %1220, %v180
    %v1222 = vpop.permute.xlu0 %1221
    %1225 = vset.pattern.permute.xlu0 0
    %1226 = vperm.xlu0 %1225, %v181
    %v1227 = vpop.permute.xlu0 %1226
    %1230 = vset.pattern.permute.xlu0 0
    %1231 = vperm.xlu0 %1230, %v182
    %v1232 = vpop.permute.xlu0 %1231
    %1235 = vset.pattern.permute.xlu0 0
    %1236 = vperm.xlu0 %1235, %v183
    %v1237 = vpop.permute.xlu0 %1236
    %1240 = vset.pattern.permute.xlu0 0
    %1241 = vperm.xlu0 %1240, %v184
    %v1242 = vpop.permute.xlu0 %1241
    %1245 = vset.pattern.permute.xlu0 0
    %1246 = vperm.xlu0 %1245, %v185
    %v1247 = vpop.permute.xlu0 %1246
    %1250 = vset.pattern.permute.xlu0 0
    %1251 = vperm.xlu0 %1250, %v186
    %v1252 = vpop.permute.xlu0 %1251
    %v1254 = vadd.f32 %v1158, %v1177
    %v1255 = vadd.f32 %v1159, %v1182
    %v1256 = vadd.f32 %v1160, %v1187
    %v1257 = vadd.f32 %v1161, %v1192
    %v1258 = vadd.f32 %v1162, %v1197
    %v1259 = vadd.f32 %v1163, %v1202
    %v1260 = vadd.f32 %v1164, %v1207
    %v1261 = vadd.f32 %v1165, %v1212
    %v1262 = vadd.f32 %v1166, %v1217
    %v1263 = vadd.f32 %v1167, %v1222
    %v1264 = vadd.f32 %v1168, %v1227
    %v1265 = vadd.f32 %v1169, %v1232
    %v1266 = vadd.f32 %v1170, %v1237
    %v1267 = vadd.f32 %v1171, %v1242
    %v1268 = vadd.f32 %v1172, %v1247
    %v1269 = vadd.f32 %v1173, %v1252
    %vm1270 = vcmask 31744
    %v1271 = vsel %vm1270, %v1254, -inf
    %v1272 = vrot.slane %v1271, 4
    %v1273 = vmax.f32 %v1271, %v1272
    %v1274 = vrot.slane %v1273, 2
    %v1275 = vmax.f32 %v1273, %v1274
    %v1276 = vrot.slane %v1275, 1
    %v1277 = vmax.f32 %v1275, %v1276
    %v1278 = vsel %vm1270, %v1255, -inf
    %v1279 = vrot.slane %v1278, 4
    %v1280 = vmax.f32 %v1278, %v1279
    %v1281 = vrot.slane %v1280, 2
    %v1282 = vmax.f32 %v1280, %v1281
    %v1283 = vrot.slane %v1282, 1
    %v1284 = vmax.f32 %v1282, %v1283
    %v1285 = vsel %vm1270, %v1256, -inf
    %v1286 = vrot.slane %v1285, 4
    %v1287 = vmax.f32 %v1285, %v1286
    %v1288 = vrot.slane %v1287, 2
    %v1289 = vmax.f32 %v1287, %v1288
    %v1290 = vrot.slane %v1289, 1
    %v1291 = vmax.f32 %v1289, %v1290
    %v1292 = vsel %vm1270, %v1257, -inf
    %v1293 = vrot.slane %v1292, 4
    %v1294 = vmax.f32 %v1292, %v1293
    %v1295 = vrot.slane %v1294, 2
    %v1296 = vmax.f32 %v1294, %v1295
    %v1297 = vrot.slane %v1296, 1
    %v1298 = vmax.f32 %v1296, %v1297
    %v1299 = vsel %vm1270, %v1258, -inf
    %v1300 = vrot.slane %v1299, 4
    %v1301 = vmax.f32 %v1299, %v1300
    %v1302 = vrot.slane %v1301, 2
    %v1303 = vmax.f32 %v1301, %v1302
    %v1304 = vrot.slane %v1303, 1
    %v1305 = vmax.f32 %v1303, %v1304
    %v1306 = vsel %vm1270, %v1259, -inf
    %v1307 = vrot.slane %v1306, 4
    %v1308 = vmax.f32 %v1306, %v1307
    %v1309 = vrot.slane %v1308, 2
    %v1310 = vmax.f32 %v1308, %v1309
    %v1311 = vrot.slane %v1310, 1
    %v1312 = vmax.f32 %v1310, %v1311
    %v1313 = vsel %vm1270, %v1260, -inf
    %v1314 = vrot.slane %v1313, 4
    %v1315 = vmax.f32 %v1313, %v1314
    %v1316 = vrot.slane %v1315, 2
    %v1317 = vmax.f32 %v1315, %v1316
    %v1318 = vrot.slane %v1317, 1
    %v1319 = vmax.f32 %v1317, %v1318
    %v1320 = vsel %vm1270, %v1261, -inf
    %v1321 = vrot.slane %v1320, 4
    %v1322 = vmax.f32 %v1320, %v1321
    %v1323 = vrot.slane %v1322, 2
    %v1324 = vmax.f32 %v1322, %v1323
    %v1325 = vrot.slane %v1324, 1
    %v1326 = vmax.f32 %v1324, %v1325
    %v1327 = vsel %vm1270, %v1262, -inf
    %v1328 = vrot.slane %v1327, 4
    %v1329 = vmax.f32 %v1327, %v1328
    %v1330 = vrot.slane %v1329, 2
    %v1331 = vmax.f32 %v1329, %v1330
    %v1332 = vrot.slane %v1331, 1
    %v1333 = vmax.f32 %v1331, %v1332
    %v1334 = vsel %vm1270, %v1263, -inf
    %v1335 = vrot.slane %v1334, 4
    %v1336 = vmax.f32 %v1334, %v1335
    %v1337 = vrot.slane %v1336, 2
    %v1338 = vmax.f32 %v1336, %v1337
    %v1339 = vrot.slane %v1338, 1
    %v1340 = vmax.f32 %v1338, %v1339
    %v1341 = vsel %vm1270, %v1264, -inf
    %v1342 = vrot.slane %v1341, 4
    %v1343 = vmax.f32 %v1341, %v1342
    %v1344 = vrot.slane %v1343, 2
    %v1345 = vmax.f32 %v1343, %v1344
    %v1346 = vrot.slane %v1345, 1
    %v1347 = vmax.f32 %v1345, %v1346
    %v1348 = vsel %vm1270, %v1265, -inf
    %v1349 = vrot.slane %v1348, 4
    %v1350 = vmax.f32 %v1348, %v1349
    %v1351 = vrot.slane %v1350, 2
    %v1352 = vmax.f32 %v1350, %v1351
    %v1353 = vrot.slane %v1352, 1
    %v1354 = vmax.f32 %v1352, %v1353
    %v1355 = vsel %vm1270, %v1266, -inf
    %v1356 = vrot.slane %v1355, 4
    %v1357 = vmax.f32 %v1355, %v1356
    %v1358 = vrot.slane %v1357, 2
    %v1359 = vmax.f32 %v1357, %v1358
    %v1360 = vrot.slane %v1359, 1
    %v1361 = vmax.f32 %v1359, %v1360
    %v1362 = vsel %vm1270, %v1267, -inf
    %v1363 = vrot.slane %v1362, 4
    %v1364 = vmax.f32 %v1362, %v1363
    %v1365 = vrot.slane %v1364, 2
    %v1366 = vmax.f32 %v1364, %v1365
    %v1367 = vrot.slane %v1366, 1
    %v1368 = vmax.f32 %v1366, %v1367
    %v1369 = vsel %vm1270, %v1268, -inf
    %v1370 = vrot.slane %v1369, 4
    %v1371 = vmax.f32 %v1369, %v1370
    %v1372 = vrot.slane %v1371, 2
    %v1373 = vmax.f32 %v1371, %v1372
    %v1374 = vrot.slane %v1373, 1
    %v1375 = vmax.f32 %v1373, %v1374
    %v1376 = vsel %vm1270, %v1269, -inf
    %v1377 = vrot.slane %v1376, 4
    %v1378 = vmax.f32 %v1376, %v1377
    %v1379 = vrot.slane %v1378, 2
    %v1380 = vmax.f32 %v1378, %v1379
    %v1381 = vrot.slane %v1380, 1
    %v1382 = vmax.f32 %v1380, %v1381
    %v1383 = vsub.f32 %v1254, %v1277
    %v1384 = vsub.f32 %v1255, %v1284
    %v1385 = vsub.f32 %v1256, %v1291
    %v1386 = vsub.f32 %v1257, %v1298
    %v1387 = vsub.f32 %v1258, %v1305
    %v1388 = vsub.f32 %v1259, %v1312
    %v1389 = vsub.f32 %v1260, %v1319
    %v1390 = vsub.f32 %v1261, %v1326
    %v1391 = vsub.f32 %v1262, %v1333
    %v1392 = vsub.f32 %v1263, %v1340
    %v1393 = vsub.f32 %v1264, %v1347
    %v1394 = vsub.f32 %v1265, %v1354
    %v1395 = vsub.f32 %v1266, %v1361
    %v1396 = vsub.f32 %v1267, %v1368
    %v1397 = vsub.f32 %v1268, %v1375
    %v1398 = vsub.f32 %v1269, %v1382
    %v1399 = vmul.f32 %v1383, 1.442695
    %v1400 = vpow.pop %v1399
    %v1401 = vmul.f32 %v1384, 1.442695
    %v1402 = vpow.pop %v1401
    %v1403 = vmul.f32 %v1385, 1.442695
    %v1404 = vpow.pop %v1403
    %v1405 = vmul.f32 %v1386, 1.442695
    %v1406 = vpow.pop %v1405
    %v1407 = vmul.f32 %v1387, 1.442695
    %v1408 = vpow.pop %v1407
    %v1409 = vmul.f32 %v1388, 1.442695
    %v1410 = vpow.pop %v1409
    %v1411 = vmul.f32 %v1389, 1.442695
    %v1412 = vpow.pop %v1411
    %v1413 = vmul.f32 %v1390, 1.442695
    %v1414 = vpow.pop %v1413
    %v1415 = vmul.f32 %v1391, 1.442695
    %v1416 = vpow.pop %v1415
    %v1417 = vmul.f32 %v1392, 1.442695
    %v1418 = vpow.pop %v1417
    %v1419 = vmul.f32 %v1393, 1.442695
    %v1420 = vpow.pop %v1419
    %v1421 = vmul.f32 %v1394, 1.442695
    %v1422 = vpow.pop %v1421
    %v1423 = vmul.f32 %v1395, 1.442695
    %v1424 = vpow.pop %v1423
    %v1425 = vmul.f32 %v1396, 1.442695
    %v1426 = vpow.pop %v1425
    %v1427 = vmul.f32 %v1397, 1.442695
    %v1428 = vpow.pop %v1427
    %v1429 = vmul.f32 %v1398, 1.442695
    %v1430 = vpow.pop %v1429
    %v1431 = vsel %vm1270, %v1400, 0.0
    %v1432 = vrot.slane %v1431, 4
    %v1433 = vadd.f32 %v1431, %v1432
    %v1434 = vrot.slane %v1433, 2
    %v1435 = vadd.f32 %v1433, %v1434
    %v1436 = vrot.slane %v1435, 1
    %v1437 = vadd.f32 %v1435, %v1436
    %v1438 = vsel %vm1270, %v1402, 0.0
    %v1439 = vrot.slane %v1438, 4
    %v1440 = vadd.f32 %v1438, %v1439
    %v1441 = vrot.slane %v1440, 2
    %v1442 = vadd.f32 %v1440, %v1441
    %v1443 = vrot.slane %v1442, 1
    %v1444 = vadd.f32 %v1442, %v1443
    %v1445 = vsel %vm1270, %v1404, 0.0
    %v1446 = vrot.slane %v1445, 4
    %v1447 = vadd.f32 %v1445, %v1446
    %v1448 = vrot.slane %v1447, 2
    %v1449 = vadd.f32 %v1447, %v1448
    %v1450 = vrot.slane %v1449, 1
    %v1451 = vadd.f32 %v1449, %v1450
    %v1452 = vsel %vm1270, %v1406, 0.0
    %v1453 = vrot.slane %v1452, 4
    %v1454 = vadd.f32 %v1452, %v1453
    %v1455 = vrot.slane %v1454, 2
    %v1456 = vadd.f32 %v1454, %v1455
    %v1457 = vrot.slane %v1456, 1
    %v1458 = vadd.f32 %v1456, %v1457
    %v1459 = vsel %vm1270, %v1408, 0.0
    %v1460 = vrot.slane %v1459, 4
    %v1461 = vadd.f32 %v1459, %v1460
    %v1462 = vrot.slane %v1461, 2
    %v1463 = vadd.f32 %v1461, %v1462
    %v1464 = vrot.slane %v1463, 1
    %v1465 = vadd.f32 %v1463, %v1464
    %v1466 = vsel %vm1270, %v1410, 0.0
    %v1467 = vrot.slane %v1466, 4
    %v1468 = vadd.f32 %v1466, %v1467
    %v1469 = vrot.slane %v1468, 2
    %v1470 = vadd.f32 %v1468, %v1469
    %v1471 = vrot.slane %v1470, 1
    %v1472 = vadd.f32 %v1470, %v1471
    %v1473 = vsel %vm1270, %v1412, 0.0
    %v1474 = vrot.slane %v1473, 4
    %v1475 = vadd.f32 %v1473, %v1474
    %v1476 = vrot.slane %v1475, 2
    %v1477 = vadd.f32 %v1475, %v1476
    %v1478 = vrot.slane %v1477, 1
    %v1479 = vadd.f32 %v1477, %v1478
    %v1480 = vsel %vm1270, %v1414, 0.0
    %v1481 = vrot.slane %v1480, 4
    %v1482 = vadd.f32 %v1480, %v1481
    %v1483 = vrot.slane %v1482, 2
    %v1484 = vadd.f32 %v1482, %v1483
    %v1485 = vrot.slane %v1484, 1
    %v1486 = vadd.f32 %v1484, %v1485
    %v1487 = vsel %vm1270, %v1416, 0.0
    %v1488 = vrot.slane %v1487, 4
    %v1489 = vadd.f32 %v1487, %v1488
    %v1490 = vrot.slane %v1489, 2
    %v1491 = vadd.f32 %v1489, %v1490
    %v1492 = vrot.slane %v1491, 1
    %v1493 = vadd.f32 %v1491, %v1492
    %v1494 = vsel %vm1270, %v1418, 0.0
    %v1495 = vrot.slane %v1494, 4
    %v1496 = vadd.f32 %v1494, %v1495
    %v1497 = vrot.slane %v1496, 2
    %v1498 = vadd.f32 %v1496, %v1497
    %v1499 = vrot.slane %v1498, 1
    %v1500 = vadd.f32 %v1498, %v1499
    %v1501 = vsel %vm1270, %v1420, 0.0
    %v1502 = vrot.slane %v1501, 4
    %v1503 = vadd.f32 %v1501, %v1502
    %v1504 = vrot.slane %v1503, 2
    %v1505 = vadd.f32 %v1503, %v1504
    %v1506 = vrot.slane %v1505, 1
    %v1507 = vadd.f32 %v1505, %v1506
    %v1508 = vsel %vm1270, %v1422, 0.0
    %v1509 = vrot.slane %v1508, 4
    %v1510 = vadd.f32 %v1508, %v1509
    %v1511 = vrot.slane %v1510, 2
    %v1512 = vadd.f32 %v1510, %v1511
    %v1513 = vrot.slane %v1512, 1
    %v1514 = vadd.f32 %v1512, %v1513
    %v1515 = vsel %vm1270, %v1424, 0.0
    %v1516 = vrot.slane %v1515, 4
    %v1517 = vadd.f32 %v1515, %v1516
    %v1518 = vrot.slane %v1517, 2
    %v1519 = vadd.f32 %v1517, %v1518
    %v1520 = vrot.slane %v1519, 1
    %v1521 = vadd.f32 %v1519, %v1520
    %v1522 = vsel %vm1270, %v1426, 0.0
    %v1523 = vrot.slane %v1522, 4
    %v1524 = vadd.f32 %v1522, %v1523
    %v1525 = vrot.slane %v1524, 2
    %v1526 = vadd.f32 %v1524, %v1525
    %v1527 = vrot.slane %v1526, 1
    %v1528 = vadd.f32 %v1526, %v1527
    %v1529 = vsel %vm1270, %v1428, 0.0
    %v1530 = vrot.slane %v1529, 4
    %v1531 = vadd.f32 %v1529, %v1530
    %v1532 = vrot.slane %v1531, 2
    %v1533 = vadd.f32 %v1531, %v1532
    %v1534 = vrot.slane %v1533, 1
    %v1535 = vadd.f32 %v1533, %v1534
    %v1536 = vsel %vm1270, %v1430, 0.0
    %v1537 = vrot.slane %v1536, 4
    %v1538 = vadd.f32 %v1536, %v1537
    %v1539 = vrot.slane %v1538, 2
    %v1540 = vadd.f32 %v1538, %v1539
    %v1541 = vrot.slane %v1540, 1
    %v1542 = vadd.f32 %v1540, %v1541
    %v1543 = vrcp.pop %v1437
    %v1544 = vmul.f32 %v1400, %v1543
    %v1545 = vrcp.pop %v1444
    %v1546 = vmul.f32 %v1402, %v1545
    %v1547 = vrcp.pop %v1451
    %v1548 = vmul.f32 %v1404, %v1547
    %v1549 = vrcp.pop %v1458
    %v1550 = vmul.f32 %v1406, %v1549
    %v1551 = vrcp.pop %v1465
    %v1552 = vmul.f32 %v1408, %v1551
    %v1553 = vrcp.pop %v1472
    %v1554 = vmul.f32 %v1410, %v1553
    %v1555 = vrcp.pop %v1479
    %v1556 = vmul.f32 %v1412, %v1555
    %v1557 = vrcp.pop %v1486
    %v1558 = vmul.f32 %v1414, %v1557
    %v1559 = vrcp.pop %v1493
    %v1560 = vmul.f32 %v1416, %v1559
    %v1561 = vrcp.pop %v1500
    %v1562 = vmul.f32 %v1418, %v1561
    %v1563 = vrcp.pop %v1507
    %v1564 = vmul.f32 %v1420, %v1563
    %v1565 = vrcp.pop %v1514
    %v1566 = vmul.f32 %v1422, %v1565
    %v1567 = vrcp.pop %v1521
    %v1568 = vmul.f32 %v1424, %v1567
    %v1569 = vrcp.pop %v1528
    %v1570 = vmul.f32 %v1426, %v1569
    %v1571 = vrcp.pop %v1535
    %v1572 = vmul.f32 %v1428, %v1571
    %v1573 = vrcp.pop %v1542
    %v1574 = vmul.f32 %v1430, %v1573
    %v1575 = vld [vmem:[%s23] sm:$0xf]
    %v1577 = vsel %vm1270, %v1544, 0
    %v1580 = vsel %vm1270, %v1546, 0
    %v1583 = vsel %vm1270, %v1548, 0
    %v1586 = vsel %vm1270, %v1550, 0
    %v1589 = vsel %vm1270, %v1552, 0
    %v1592 = vsel %vm1270, %v1554, 0
    %v1595 = vsel %vm1270, %v1556, 0
    %v1598 = vsel %vm1270, %v1558, 0
    %v1601 = vsel %vm1270, %v1560, 0
    %v1604 = vsel %vm1270, %v1562, 0
    %v1607 = vsel %vm1270, %v1564, 0
    %v1610 = vsel %vm1270, %v1566, 0
    %v1613 = vsel %vm1270, %v1568, 0
    %v1616 = vsel %vm1270, %v1570, 0
    %v1619 = vsel %vm1270, %v1572, 0
    %v1622 = vsel %vm1270, %v1574, 0
    %vm1624 = vcmask 1043456
    %v1626 = vsel %vm1624, %v1575, 0
    %1628 = vmatprep.subr.mxu0 0.0
    %1629 = vmatpush1.msra.mxu0 %v1626
    %1630 = vmatprep.subr.mxu0 0.0
    %1631 = vmatpush1.msra.mxu0 0.0
    %1632 = vmatprep.subr.mxu0 0.0
    %1633 = vmatpush1.msra.mxu0 0.0
    %1634 = vmatprep.subr.mxu0 0.0
    %1635 = vmatpush1.msra.mxu0 0.0
    %1636 = vmatprep.subr.mxu0 0.0
    %1637 = vmatpush1.msra.mxu0 0.0
    %1638 = vmatprep.subr.mxu0 0.0
    %1639 = vmatpush1.msra.mxu0 0.0
    %1640 = vmatprep.subr.mxu0 0.0
    %1641 = vmatpush1.msra.mxu0 0.0
    %1642 = vmatprep.subr.mxu0 0.0
    %1643 = vmatpush1.msra.mxu0 0.0
    %1644 = vmatprep.subr.mxu0 0.0
    %1645 = vmatpush1.msra.mxu0 0.0
    %1646 = vmatprep.subr.mxu0 0.0
    %1647 = vmatpush1.msra.mxu0 0.0
    %1648 = vmatprep.subr.mxu0 0.0
    %1649 = vmatpush1.msra.mxu0 0.0
    %1650 = vmatprep.subr.mxu0 0.0
    %1651 = vmatpush1.msra.mxu0 0.0
    %1652 = vmatprep.subr.mxu0 0.0
    %1653 = vmatpush1.msra.mxu0 0.0
    %1654 = vmatprep.subr.mxu0 0.0
    %1655 = vmatpush1.msra.mxu0 0.0
    %1656 = vmatprep.subr.mxu0 0.0
    %1657 = vmatpush1.msra.mxu0 0.0
    %1658 = vmatprep.subr.mxu0 0.0
    %1659 = vmatpush1.msra.mxu0 0.0
    %1660 = vmatprep.subr.mxu0 0.0
    %1661 = vmatpush1.msra.mxu0 0.0
    %1662 = vmatprep.subr.mxu0 0.0
    %1663 = vmatpush1.msra.mxu0 0.0
    %1664 = vmatprep.subr.mxu0 0.0
    %1665 = vmatpush1.msra.mxu0 0.0
    %1666 = vmatprep.subr.mxu0 0.0
    %1667 = vmatpush1.msra.mxu0 0.0
    %1668 = vmatprep.subr.mxu0 0.0
    %1669 = vmatpush1.msra.mxu0 0.0
    %1670 = vmatprep.subr.mxu0 0.0
    %1671 = vmatpush1.msra.mxu0 0.0
    %1672 = vmatprep.subr.mxu0 0.0
    %1673 = vmatpush1.msra.mxu0 0.0
    %1674 = vmatprep.subr.mxu0 0.0
    %1675 = vmatpush1.msra.mxu0 0.0
    %1676 = vmatprep.subr.mxu0 0.0
    %1677 = vmatpush1.msra.mxu0 0.0
    %1678 = vmatprep.subr.mxu0 0.0
    %1679 = vmatpush1.msra.mxu0 0.0
    %1680 = vmatprep.subr.mxu0 0.0
    %1681 = vmatpush1.msra.mxu0 0.0
    %1682 = vmatprep.subr.mxu0 0.0
    %1683 = vmatpush1.msra.mxu0 0.0
    %1684 = vmatprep.subr.mxu0 0.0
    %1685 = vmatpush1.msra.mxu0 0.0
    %1686 = vmatprep.subr.mxu0 0.0
    %1687 = vmatpush1.msra.mxu0 0.0
    %1688 = vmatprep.subr.mxu0 0.0
    %1689 = vmatpush1.msra.mxu0 0.0
    %1690 = vmatprep.subr.mxu0 0.0
    %1691 = vmatpush1.msra.mxu0 0.0
    %1692 = vmatprep.mubr.f32.mxu0 0.0
    %1693 = vmatmul.mubr.f32.gmra.mrb[0].mxu0 %v1577
    %v1694 = vpop.f32.mrb[0].mxu0
    %v1695 = vadd.f32 0.0, %v1694
    %v1696 = vpop.f32.mrb[0].mxu0
    %1697 = vmatprep.mubr.f32.mxu0 0.0
    %1698 = vmatmul.mubr.f32.gmra.mrb[0].mxu0 %v1580
    %v1699 = vpop.f32.mrb[0].mxu0
    %v1700 = vadd.f32 0.0, %v1699
    %v1701 = vpop.f32.mrb[0].mxu0
    %1702 = vmatprep.mubr.f32.mxu0 0.0
    %1703 = vmatmul.mubr.f32.gmra.mrb[0].mxu0 %v1583
    %v1704 = vpop.f32.mrb[0].mxu0
    %v1705 = vadd.f32 0.0, %v1704
    %v1706 = vpop.f32.mrb[0].mxu0
    %1707 = vmatprep.mubr.f32.mxu0 0.0
    %1708 = vmatmul.mubr.f32.gmra.mrb[0].mxu0 %v1586
    %v1709 = vpop.f32.mrb[0].mxu0
    %v1710 = vadd.f32 0.0, %v1709
    %v1711 = vpop.f32.mrb[0].mxu0
    %1712 = vmatprep.mubr.f32.mxu0 0.0
    %1713 = vmatmul.mubr.f32.gmra.mrb[0].mxu0 %v1589
    %v1714 = vpop.f32.mrb[0].mxu0
    %v1715 = vadd.f32 0.0, %v1714
    %v1716 = vpop.f32.mrb[0].mxu0
    %1717 = vmatprep.mubr.f32.mxu0 0.0
    %1718 = vmatmul.mubr.f32.gmra.mrb[0].mxu0 %v1592
    %v1719 = vpop.f32.mrb[0].mxu0
    %v1720 = vadd.f32 0.0, %v1719
    %v1721 = vpop.f32.mrb[0].mxu0
    %1722 = vmatprep.mubr.f32.mxu0 0.0
    %1723 = vmatmul.mubr.f32.gmra.mrb[0].mxu0 %v1595
    %v1724 = vpop.f32.mrb[0].mxu0
    %v1725 = vadd.f32 0.0, %v1724
    %v1726 = vpop.f32.mrb[0].mxu0
    %1727 = vmatprep.mubr.f32.mxu0 0.0
    %1728 = vmatmul.mubr.f32.gmra.mrb[0].mxu0 %v1598
    %v1729 = vpop.f32.mrb[0].mxu0
    %v1730 = vadd.f32 0.0, %v1729
    %v1731 = vpop.f32.mrb[0].mxu0
    %1732 = vmatprep.mubr.f32.mxu0 0.0
    %1733 = vmatmul.mubr.f32.gmra.mrb[0].mxu0 %v1601
    %v1734 = vpop.f32.mrb[0].mxu0
    %v1735 = vadd.f32 0.0, %v1734
    %v1736 = vpop.f32.mrb[0].mxu0
    %1737 = vmatprep.mubr.f32.mxu0 0.0
    %1738 = vmatmul.mubr.f32.gmra.mrb[0].mxu0 %v1604
    %v1739 = vpop.f32.mrb[0].mxu0
    %v1740 = vadd.f32 0.0, %v1739
    %v1741 = vpop.f32.mrb[0].mxu0
    %1742 = vmatprep.mubr.f32.mxu0 0.0
    %1743 = vmatmul.mubr.f32.gmra.mrb[0].mxu0 %v1607
    %v1744 = vpop.f32.mrb[0].mxu0
    %v1745 = vadd.f32 0.0, %v1744
    %v1746 = vpop.f32.mrb[0].mxu0
    %1747 = vmatprep.mubr.f32.mxu0 0.0
    %1748 = vmatmul.mubr.f32.gmra.mrb[0].mxu0 %v1610
    %v1749 = vpop.f32.mrb[0].mxu0
    %v1750 = vadd.f32 0.0, %v1749
    %v1751 = vpop.f32.mrb[0].mxu0
    %1752 = vmatprep.mubr.f32.mxu0 0.0
    %1753 = vmatmul.mubr.f32.gmra.mrb[0].mxu0 %v1613
    %v1754 = vpop.f32.mrb[0].mxu0
    %v1755 = vadd.f32 0.0, %v1754
    %v1756 = vpop.f32.mrb[0].mxu0
    %1757 = vmatprep.mubr.f32.mxu0 0.0
    %1758 = vmatmul.mubr.f32.gmra.mrb[0].mxu0 %v1616
    %v1759 = vpop.f32.mrb[0].mxu0
    %v1760 = vadd.f32 0.0, %v1759
    %v1761 = vpop.f32.mrb[0].mxu0
    %1762 = vmatprep.mubr.f32.mxu0 0.0
    %1763 = vmatmul.mubr.f32.gmra.mrb[0].mxu0 %v1619
    %v1764 = vpop.f32.mrb[0].mxu0
    %v1765 = vadd.f32 0.0, %v1764
    %v1766 = vpop.f32.mrb[0].mxu0
    %1767 = vmatprep.mubr.f32.mxu0 0.0
    %1768 = vmatmul.mubr.f32.gmra.mrb[0].mxu0 %v1622
    %v1769 = vpop.f32.mrb[0].mxu0
    %v1770 = vadd.f32 0.0, %v1769
    %v1771 = vpop.f32.mrb[0].mxu0
    %1772 = vdwg.mxu0
    %v1773 = vmul.f32 %v1695, %v787
    %v1774 = vmul.f32 %v1700, %v792
    %v1775 = vmul.f32 %v1705, %v797
    %v1776 = vmul.f32 %v1710, %v802
    %v1777 = vmul.f32 %v1715, %v807
    %v1778 = vmul.f32 %v1720, %v812
    %v1779 = vmul.f32 %v1725, %v817
    %v1780 = vmul.f32 %v1730, %v822
    %v1781 = vmul.f32 %v1735, %v827
    %v1782 = vmul.f32 %v1740, %v832
    %v1783 = vmul.f32 %v1745, %v837
    %v1784 = vmul.f32 %v1750, %v842
    %v1785 = vmul.f32 %v1755, %v847
    %v1786 = vmul.f32 %v1760, %v852
    %v1787 = vmul.f32 %v1765, %v857
    %v1788 = vmul.f32 %v1770, %v862
    %v1789 = vsel %vm325, %v1773, 0.0
    %v1790 = vrot.slane %v1789, 4
    %v1791 = vadd.f32 %v1789, %v1790
    %v1792 = vrot.slane %v1791, 2
    %v1793 = vadd.f32 %v1791, %v1792
    %v1794 = vrot.slane %v1793, 1
    %v1795 = vadd.f32 %v1793, %v1794
    %v1796 = vsel %vm325, %v1774, 0.0
    %v1797 = vrot.slane %v1796, 4
    %v1798 = vadd.f32 %v1796, %v1797
    %v1799 = vrot.slane %v1798, 2
    %v1800 = vadd.f32 %v1798, %v1799
    %v1801 = vrot.slane %v1800, 1
    %v1802 = vadd.f32 %v1800, %v1801
    %v1803 = vsel %vm325, %v1775, 0.0
    %v1804 = vrot.slane %v1803, 4
    %v1805 = vadd.f32 %v1803, %v1804
    %v1806 = vrot.slane %v1805, 2
    %v1807 = vadd.f32 %v1805, %v1806
    %v1808 = vrot.slane %v1807, 1
    %v1809 = vadd.f32 %v1807, %v1808
    %v1810 = vsel %vm325, %v1776, 0.0
    %v1811 = vrot.slane %v1810, 4
    %v1812 = vadd.f32 %v1810, %v1811
    %v1813 = vrot.slane %v1812, 2
    %v1814 = vadd.f32 %v1812, %v1813
    %v1815 = vrot.slane %v1814, 1
    %v1816 = vadd.f32 %v1814, %v1815
    %v1817 = vsel %vm325, %v1777, 0.0
    %v1818 = vrot.slane %v1817, 4
    %v1819 = vadd.f32 %v1817, %v1818
    %v1820 = vrot.slane %v1819, 2
    %v1821 = vadd.f32 %v1819, %v1820
    %v1822 = vrot.slane %v1821, 1
    %v1823 = vadd.f32 %v1821, %v1822
    %v1824 = vsel %vm325, %v1778, 0.0
    %v1825 = vrot.slane %v1824, 4
    %v1826 = vadd.f32 %v1824, %v1825
    %v1827 = vrot.slane %v1826, 2
    %v1828 = vadd.f32 %v1826, %v1827
    %v1829 = vrot.slane %v1828, 1
    %v1830 = vadd.f32 %v1828, %v1829
    %v1831 = vsel %vm325, %v1779, 0.0
    %v1832 = vrot.slane %v1831, 4
    %v1833 = vadd.f32 %v1831, %v1832
    %v1834 = vrot.slane %v1833, 2
    %v1835 = vadd.f32 %v1833, %v1834
    %v1836 = vrot.slane %v1835, 1
    %v1837 = vadd.f32 %v1835, %v1836
    %v1838 = vsel %vm325, %v1780, 0.0
    %v1839 = vrot.slane %v1838, 4
    %v1840 = vadd.f32 %v1838, %v1839
    %v1841 = vrot.slane %v1840, 2
    %v1842 = vadd.f32 %v1840, %v1841
    %v1843 = vrot.slane %v1842, 1
    %v1844 = vadd.f32 %v1842, %v1843
    %v1845 = vsel %vm325, %v1781, 0.0
    %v1846 = vrot.slane %v1845, 4
    %v1847 = vadd.f32 %v1845, %v1846
    %v1848 = vrot.slane %v1847, 2
    %v1849 = vadd.f32 %v1847, %v1848
    %v1850 = vrot.slane %v1849, 1
    %v1851 = vadd.f32 %v1849, %v1850
    %v1852 = vsel %vm325, %v1782, 0.0
    %v1853 = vrot.slane %v1852, 4
    %v1854 = vadd.f32 %v1852, %v1853
    %v1855 = vrot.slane %v1854, 2
    %v1856 = vadd.f32 %v1854, %v1855
    %v1857 = vrot.slane %v1856, 1
    %v1858 = vadd.f32 %v1856, %v1857
    %v1859 = vsel %vm325, %v1783, 0.0
    %v1860 = vrot.slane %v1859, 4
    %v1861 = vadd.f32 %v1859, %v1860
    %v1862 = vrot.slane %v1861, 2
    %v1863 = vadd.f32 %v1861, %v1862
    %v1864 = vrot.slane %v1863, 1
    %v1865 = vadd.f32 %v1863, %v1864
    %v1866 = vsel %vm325, %v1784, 0.0
    %v1867 = vrot.slane %v1866, 4
    %v1868 = vadd.f32 %v1866, %v1867
    %v1869 = vrot.slane %v1868, 2
    %v1870 = vadd.f32 %v1868, %v1869
    %v1871 = vrot.slane %v1870, 1
    %v1872 = vadd.f32 %v1870, %v1871
    %v1873 = vsel %vm325, %v1785, 0.0
    %v1874 = vrot.slane %v1873, 4
    %v1875 = vadd.f32 %v1873, %v1874
    %v1876 = vrot.slane %v1875, 2
    %v1877 = vadd.f32 %v1875, %v1876
    %v1878 = vrot.slane %v1877, 1
    %v1879 = vadd.f32 %v1877, %v1878
    %v1880 = vsel %vm325, %v1786, 0.0
    %v1881 = vrot.slane %v1880, 4
    %v1882 = vadd.f32 %v1880, %v1881
    %v1883 = vrot.slane %v1882, 2
    %v1884 = vadd.f32 %v1882, %v1883
    %v1885 = vrot.slane %v1884, 1
    %v1886 = vadd.f32 %v1884, %v1885
    %v1887 = vsel %vm325, %v1787, 0.0
    %v1888 = vrot.slane %v1887, 4
    %v1889 = vadd.f32 %v1887, %v1888
    %v1890 = vrot.slane %v1889, 2
    %v1891 = vadd.f32 %v1889, %v1890
    %v1892 = vrot.slane %v1891, 1
    %v1893 = vadd.f32 %v1891, %v1892
    %v1894 = vsel %vm325, %v1788, 0.0
    %v1895 = vrot.slane %v1894, 4
    %v1896 = vadd.f32 %v1894, %v1895
    %v1897 = vrot.slane %v1896, 2
    %v1898 = vadd.f32 %v1896, %v1897
    %v1899 = vrot.slane %v1898, 1
    %v1900 = vadd.f32 %v1898, %v1899
    %v1901 = vld [vmem:[%s37] sm:$0xff]
    %v1902 = vld [vmem:[%s37 + $0x8] sm:$0xff]
    %v1903 = vld [vmem:[%s37 + $0x10] sm:$0xff]
    %v1904 = vld [vmem:[%s37 + $0x18] sm:$0xff]
    %v1905 = vld [vmem:[%s39] sm:$0x1]
    %vm1922 = vcmask 1041409
    %v1923 = vsel %vm1922, %v1802, %v1795
    %vm1924 = vcmask 1042434
    %v1925 = vsel %vm1924, %v1809, %v1923
    %vm1926 = vcmask 1043459
    %v1927 = vsel %vm1926, %v1816, %v1925
    %vm1928 = vcmask 1044484
    %v1929 = vsel %vm1928, %v1823, %v1927
    %vm1930 = vcmask 1045509
    %v1931 = vsel %vm1930, %v1830, %v1929
    %vm1932 = vcmask 1046534
    %v1933 = vsel %vm1932, %v1837, %v1931
    %vm1934 = vcmask 1047559
    %v1935 = vsel %vm1934, %v1844, %v1933
    %v1936 = vsel %vm1922, %v1858, %v1851
    %v1937 = vsel %vm1924, %v1865, %v1936
    %v1938 = vsel %vm1926, %v1872, %v1937
    %v1939 = vsel %vm1928, %v1879, %v1938
    %v1940 = vsel %vm1930, %v1886, %v1939
    %v1941 = vsel %vm1932, %v1893, %v1940
    %v1942 = vsel %vm1934, %v1900, %v1941
    %v1944 = vcombine.low %v1905, %v1905
    %v1946 = vunpack.c.l.s4 1966171168
    %v1947 = vunpack.c.0.s8 %v1946
    %v1948 = vlaneseq
    %v1949 = vshrl.u32 %v1948, 7
    %v1950 = vsub.s32 %v1947, %v1949
    %v1951 = vrot.slane %v1944, %v1950
    %v1952 = vcombine.low %v1951, %v1951
    %v1954 = vunpack.c.l.s4 1966171168
    %v1955 = vunpack.c.0.s8 %v1954
    %v1956 = vlaneseq
    %v1957 = vshrl.u32 %v1956, 7
    %v1958 = vsub.s32 %v1955, %v1957
    %v1959 = vrot.slane %v1952, %v1958
    %v1960 = vcombine.low %v1959, %v1959
    %v1962 = vsel %vm325, %v1935, 0
    %v1964 = vsel %vm325, %v1942, 0
    %1966 = vmatprep.subr.mxu0 0.0
    %1967 = vmatpush1.msra.mxu0 %v1901
    %1968 = vmatprep.subr.mxu0 0.0
    %1969 = vmatpush1.msra.mxu0 %v1902
    %1970 = vmatprep.subr.mxu0 0.0
    %1971 = vmatpush1.msra.mxu0 %v1903
    %1972 = vmatprep.subr.mxu0 0.0
    %1973 = vmatpush1.msra.mxu0 %v1904
    %1974 = vmatprep.subr.mxu0 0.0
    %1975 = vmatpush1.msra.mxu0 0.0
    %1976 = vmatprep.subr.mxu0 0.0
    %1977 = vmatpush1.msra.mxu0 0.0
    %1978 = vmatprep.subr.mxu0 0.0
    %1979 = vmatpush1.msra.mxu0 0.0
    %1980 = vmatprep.subr.mxu0 0.0
    %1981 = vmatpush1.msra.mxu0 0.0
    %1982 = vmatprep.subr.mxu0 0.0
    %1983 = vmatpush1.msra.mxu0 0.0
    %1984 = vmatprep.subr.mxu0 0.0
    %1985 = vmatpush1.msra.mxu0 0.0
    %1986 = vmatprep.subr.mxu0 0.0
    %1987 = vmatpush1.msra.mxu0 0.0
    %1988 = vmatprep.subr.mxu0 0.0
    %1989 = vmatpush1.msra.mxu0 0.0
    %1990 = vmatprep.subr.mxu0 0.0
    %1991 = vmatpush1.msra.mxu0 0.0
    %1992 = vmatprep.subr.mxu0 0.0
    %1993 = vmatpush1.msra.mxu0 0.0
    %1994 = vmatprep.subr.mxu0 0.0
    %1995 = vmatpush1.msra.mxu0 0.0
    %1996 = vmatprep.subr.mxu0 0.0
    %1997 = vmatpush1.msra.mxu0 0.0
    %1998 = vmatprep.subr.mxu0 0.0
    %1999 = vmatpush1.msra.mxu0 0.0
    %2000 = vmatprep.subr.mxu0 0.0
    %2001 = vmatpush1.msra.mxu0 0.0
    %2002 = vmatprep.subr.mxu0 0.0
    %2003 = vmatpush1.msra.mxu0 0.0
    %2004 = vmatprep.subr.mxu0 0.0
    %2005 = vmatpush1.msra.mxu0 0.0
    %2006 = vmatprep.subr.mxu0 0.0
    %2007 = vmatpush1.msra.mxu0 0.0
    %2008 = vmatprep.subr.mxu0 0.0
    %2009 = vmatpush1.msra.mxu0 0.0
    %2010 = vmatprep.subr.mxu0 0.0
    %2011 = vmatpush1.msra.mxu0 0.0
    %2012 = vmatprep.subr.mxu0 0.0
    %2013 = vmatpush1.msra.mxu0 0.0
    %2014 = vmatprep.subr.mxu0 0.0
    %2015 = vmatpush1.msra.mxu0 0.0
    %2016 = vmatprep.subr.mxu0 0.0
    %2017 = vmatpush1.msra.mxu0 0.0
    %2018 = vmatprep.subr.mxu0 0.0
    %2019 = vmatpush1.msra.mxu0 0.0
    %2020 = vmatprep.subr.mxu0 0.0
    %2021 = vmatpush1.msra.mxu0 0.0
    %2022 = vmatprep.subr.mxu0 0.0
    %2023 = vmatpush1.msra.mxu0 0.0
    %2024 = vmatprep.subr.mxu0 0.0
    %2025 = vmatpush1.msra.mxu0 0.0
    %2026 = vmatprep.subr.mxu0 0.0
    %2027 = vmatpush1.msra.mxu0 0.0
    %2028 = vmatprep.subr.mxu0 0.0
    %2029 = vmatpush1.msra.mxu0 0.0
    %2030 = vmatprep.mubr.f32.mxu0 0.0
    %2031 = vmatmul.mubr.f32.gmra.mrb[0].mxu0 %v1962
    %v2032 = vpop.f32.mrb[0].mxu0
    %v2033 = vadd.f32 %v1960, %v2032
    %v2034 = vpop.f32.mrb[0].mxu0
    %2035 = vmatprep.mubr.f32.mxu0 0.0
    %2036 = vmatmul.mubr.f32.gmra.mrb[0].mxu0 %v1964
    %v2037 = vpop.f32.mrb[0].mxu0
    %v2038 = vadd.f32 %v1960, %v2037
    %v2039 = vpop.f32.mrb[0].mxu0
    %2040 = vdwg.mxu0
    %v2043 = vcombine.high %v2033, %v2033
    %v2045 = vunpack.c.l.s4 1966171168
    %v2046 = vunpack.c.0.s8 %v2045
    %v2047 = vlaneseq
    %v2048 = vshrl.u32 %v2047, 7
    %v2049 = vsub.s32 %v2046, %v2048
    %v2050 = vrot.slane %v2033, %v2049
    %v2052 = vunpack.c.l.s4 1966171168
    %v2053 = vunpack.c.0.s8 %v2052
    %v2054 = vlaneseq
    %v2055 = vshrl.u32 %v2054, 7
    %v2056 = vsub.s32 %v2053, %v2055
    %v2057 = vrot.slane %v2043, %v2056
    %v2058 = vcombine.high %v2050, %v2050
    %v2059 = vcombine.high %v2057, %v2057
    %v2061 = vunpack.c.l.s4 1966171168
    %v2062 = vunpack.c.0.s8 %v2061
    %v2063 = vlaneseq
    %v2064 = vshrl.u32 %v2063, 7
    %v2065 = vsub.s32 %v2062, %v2064
    %v2066 = vrot.slane %v2050, %v2065
    %v2068 = vunpack.c.l.s4 1966171168
    %v2069 = vunpack.c.0.s8 %v2068
    %v2070 = vlaneseq
    %v2071 = vshrl.u32 %v2070, 7
    %v2072 = vsub.s32 %v2069, %v2071
    %v2073 = vrot.slane %v2057, %v2072
    %v2075 = vunpack.c.l.s4 1966171168
    %v2076 = vunpack.c.0.s8 %v2075
    %v2077 = vlaneseq
    %v2078 = vshrl.u32 %v2077, 7
    %v2079 = vsub.s32 %v2076, %v2078
    %v2080 = vrot.slane %v2058, %v2079
    %v2082 = vunpack.c.l.s4 1966171168
    %v2083 = vunpack.c.0.s8 %v2082
    %v2084 = vlaneseq
    %v2085 = vshrl.u32 %v2084, 7
    %v2086 = vsub.s32 %v2083, %v2085
    %v2087 = vrot.slane %v2059, %v2086
    %v2088 = vcombine.high %v2066, %v2066
    %v2089 = vcombine.high %v2073, %v2073
    %v2090 = vcombine.high %v2080, %v2080
    %v2091 = vcombine.high %v2087, %v2087
    %v2092 = vcombine.high %v2038, %v2038
    %v2094 = vunpack.c.l.s4 1966171168
    %v2095 = vunpack.c.0.s8 %v2094
    %v2096 = vlaneseq
    %v2097 = vshrl.u32 %v2096, 7
    %v2098 = vsub.s32 %v2095, %v2097
    %v2099 = vrot.slane %v2038, %v2098
    %v2101 = vunpack.c.l.s4 1966171168
    %v2102 = vunpack.c.0.s8 %v2101
    %v2103 = vlaneseq
    %v2104 = vshrl.u32 %v2103, 7
    %v2105 = vsub.s32 %v2102, %v2104
    %v2106 = vrot.slane %v2092, %v2105
    %v2107 = vcombine.high %v2099, %v2099
    %v2108 = vcombine.high %v2106, %v2106
    %v2110 = vunpack.c.l.s4 1966171168
    %v2111 = vunpack.c.0.s8 %v2110
    %v2112 = vlaneseq
    %v2113 = vshrl.u32 %v2112, 7
    %v2114 = vsub.s32 %v2111, %v2113
    %v2115 = vrot.slane %v2099, %v2114
    %v2117 = vunpack.c.l.s4 1966171168
    %v2118 = vunpack.c.0.s8 %v2117
    %v2119 = vlaneseq
    %v2120 = vshrl.u32 %v2119, 7
    %v2121 = vsub.s32 %v2118, %v2120
    %v2122 = vrot.slane %v2106, %v2121
    %v2124 = vunpack.c.l.s4 1966171168
    %v2125 = vunpack.c.0.s8 %v2124
    %v2126 = vlaneseq
    %v2127 = vshrl.u32 %v2126, 7
    %v2128 = vsub.s32 %v2125, %v2127
    %v2129 = vrot.slane %v2107, %v2128
    %v2131 = vunpack.c.l.s4 1966171168
    %v2132 = vunpack.c.0.s8 %v2131
    %v2133 = vlaneseq
    %v2134 = vshrl.u32 %v2133, 7
    %v2135 = vsub.s32 %v2132, %v2134
    %v2136 = vrot.slane %v2108, %v2135
    %v2137 = vcombine.high %v2115, %v2115
    %v2138 = vcombine.high %v2122, %v2122
    %v2139 = vcombine.high %v2129, %v2129
    %v2140 = vcombine.high %v2136, %v2136
    %v2157 = vadd.f32 %v139, %v2066
    %v2158 = vadd.f32 %v140, %v2080
    %v2159 = vadd.f32 %v141, %v2088
    %v2160 = vadd.f32 %v142, %v2090
    %v2161 = vadd.f32 %v143, %v2073
    %v2162 = vadd.f32 %v144, %v2087
    %v2163 = vadd.f32 %v145, %v2089
    %v2164 = vadd.f32 %v146, %v2091
    %v2165 = vadd.f32 %v147, %v2115
    %v2166 = vadd.f32 %v148, %v2129
    %v2167 = vadd.f32 %v149, %v2137
    %v2168 = vadd.f32 %v150, %v2139
    %v2169 = vadd.f32 %v151, %v2122
    %v2170 = vadd.f32 %v152, %v2136
    %v2171 = vadd.f32 %v153, %v2138
    %v2172 = vadd.f32 %v154, %v2140
    %v2173 = vld [vmem:[%s41] sm:$0x1]
    %v2174 = vld [vmem:[%s43] sm:$0x1]
    %vm2175 = vcmask 253952
    %v2176 = vsel %vm2175, %v2157, 0.0
    %2177 = vadd.xlane.f32.xlu0 %v2176
    %v2178 = vpop.xlane.xlu0 %2177
    %v2179 = vsel %vm2175, %v2158, 0.0
    %2180 = vadd.xlane.f32.xlu0 %v2179
    %v2181 = vpop.xlane.xlu0 %2180
    %v2182 = vsel %vm2175, %v2159, 0.0
    %2183 = vadd.xlane.f32.xlu0 %v2182
    %v2184 = vpop.xlane.xlu0 %2183
    %v2185 = vsel %vm2175, %v2160, 0.0
    %2186 = vadd.xlane.f32.xlu0 %v2185
    %v2187 = vpop.xlane.xlu0 %2186
    %v2188 = vsel %vm2175, %v2161, 0.0
    %2189 = vadd.xlane.f32.xlu0 %v2188
    %v2190 = vpop.xlane.xlu0 %2189
    %v2191 = vsel %vm2175, %v2162, 0.0
    %2192 = vadd.xlane.f32.xlu0 %v2191
    %v2193 = vpop.xlane.xlu0 %2192
    %v2194 = vsel %vm2175, %v2163, 0.0
    %2195 = vadd.xlane.f32.xlu0 %v2194
    %v2196 = vpop.xlane.xlu0 %2195
    %v2197 = vsel %vm2175, %v2164, 0.0
    %2198 = vadd.xlane.f32.xlu0 %v2197
    %v2199 = vpop.xlane.xlu0 %2198
    %v2200 = vsel %vm2175, %v2165, 0.0
    %2201 = vadd.xlane.f32.xlu0 %v2200
    %v2202 = vpop.xlane.xlu0 %2201
    %v2203 = vsel %vm2175, %v2166, 0.0
    %2204 = vadd.xlane.f32.xlu0 %v2203
    %v2205 = vpop.xlane.xlu0 %2204
    %v2206 = vsel %vm2175, %v2167, 0.0
    %2207 = vadd.xlane.f32.xlu0 %v2206
    %v2208 = vpop.xlane.xlu0 %2207
    %v2209 = vsel %vm2175, %v2168, 0.0
    %2210 = vadd.xlane.f32.xlu0 %v2209
    %v2211 = vpop.xlane.xlu0 %2210
    %v2212 = vsel %vm2175, %v2169, 0.0
    %2213 = vadd.xlane.f32.xlu0 %v2212
    %v2214 = vpop.xlane.xlu0 %2213
    %v2215 = vsel %vm2175, %v2170, 0.0
    %2216 = vadd.xlane.f32.xlu0 %v2215
    %v2217 = vpop.xlane.xlu0 %2216
    %v2218 = vsel %vm2175, %v2171, 0.0
    %2219 = vadd.xlane.f32.xlu0 %v2218
    %v2220 = vpop.xlane.xlu0 %2219
    %v2221 = vsel %vm2175, %v2172, 0.0
    %2222 = vadd.xlane.f32.xlu0 %v2221
    %v2223 = vpop.xlane.xlu0 %2222
    %v2224 = vrcp.pop 32.0
    %v2225 = vmul.f32 %v2178, %v2224
    %v2226 = vmul.f32 %v2181, %v2224
    %v2227 = vmul.f32 %v2184, %v2224
    %v2228 = vmul.f32 %v2187, %v2224
    %v2229 = vmul.f32 %v2190, %v2224
    %v2230 = vmul.f32 %v2193, %v2224
    %v2231 = vmul.f32 %v2196, %v2224
    %v2232 = vmul.f32 %v2199, %v2224
    %v2233 = vmul.f32 %v2202, %v2224
    %v2234 = vmul.f32 %v2205, %v2224
    %v2235 = vmul.f32 %v2208, %v2224
    %v2236 = vmul.f32 %v2211, %v2224
    %v2237 = vmul.f32 %v2214, %v2224
    %v2238 = vmul.f32 %v2217, %v2224
    %v2239 = vmul.f32 %v2220, %v2224
    %v2240 = vmul.f32 %v2223, %v2224
    %v2241 = vsub.f32 %v2157, %v2225
    %v2242 = vsub.f32 %v2158, %v2226
    %v2243 = vsub.f32 %v2159, %v2227
    %v2244 = vsub.f32 %v2160, %v2228
    %v2245 = vsub.f32 %v2161, %v2229
    %v2246 = vsub.f32 %v2162, %v2230
    %v2247 = vsub.f32 %v2163, %v2231
    %v2248 = vsub.f32 %v2164, %v2232
    %v2249 = vsub.f32 %v2165, %v2233
    %v2250 = vsub.f32 %v2166, %v2234
    %v2251 = vsub.f32 %v2167, %v2235
    %v2252 = vsub.f32 %v2168, %v2236
    %v2253 = vsub.f32 %v2169, %v2237
    %v2254 = vsub.f32 %v2170, %v2238
    %v2255 = vsub.f32 %v2171, %v2239
    %v2256 = vsub.f32 %v2172, %v2240
    %v2257 = vmul.f32 %v2241, %v2241
    %v2258 = vmul.f32 %v2242, %v2242
    %v2259 = vmul.f32 %v2243, %v2243
    %v2260 = vmul.f32 %v2244, %v2244
    %v2261 = vmul.f32 %v2245, %v2245
    %v2262 = vmul.f32 %v2246, %v2246
    %v2263 = vmul.f32 %v2247, %v2247
    %v2264 = vmul.f32 %v2248, %v2248
    %v2265 = vmul.f32 %v2249, %v2249
    %v2266 = vmul.f32 %v2250, %v2250
    %v2267 = vmul.f32 %v2251, %v2251
    %v2268 = vmul.f32 %v2252, %v2252
    %v2269 = vmul.f32 %v2253, %v2253
    %v2270 = vmul.f32 %v2254, %v2254
    %v2271 = vmul.f32 %v2255, %v2255
    %v2272 = vmul.f32 %v2256, %v2256
    %v2273 = vsel %vm2175, %v2257, 0.0
    %2274 = vadd.xlane.f32.xlu0 %v2273
    %v2275 = vpop.xlane.xlu0 %2274
    %v2276 = vsel %vm2175, %v2258, 0.0
    %2277 = vadd.xlane.f32.xlu0 %v2276
    %v2278 = vpop.xlane.xlu0 %2277
    %v2279 = vsel %vm2175, %v2259, 0.0
    %2280 = vadd.xlane.f32.xlu0 %v2279
    %v2281 = vpop.xlane.xlu0 %2280
    %v2282 = vsel %vm2175, %v2260, 0.0
    %2283 = vadd.xlane.f32.xlu0 %v2282
    %v2284 = vpop.xlane.xlu0 %2283
    %v2285 = vsel %vm2175, %v2261, 0.0
    %2286 = vadd.xlane.f32.xlu0 %v2285
    %v2287 = vpop.xlane.xlu0 %2286
    %v2288 = vsel %vm2175, %v2262, 0.0
    %2289 = vadd.xlane.f32.xlu0 %v2288
    %v2290 = vpop.xlane.xlu0 %2289
    %v2291 = vsel %vm2175, %v2263, 0.0
    %2292 = vadd.xlane.f32.xlu0 %v2291
    %v2293 = vpop.xlane.xlu0 %2292
    %v2294 = vsel %vm2175, %v2264, 0.0
    %2295 = vadd.xlane.f32.xlu0 %v2294
    %v2296 = vpop.xlane.xlu0 %2295
    %v2297 = vsel %vm2175, %v2265, 0.0
    %2298 = vadd.xlane.f32.xlu0 %v2297
    %v2299 = vpop.xlane.xlu0 %2298
    %v2300 = vsel %vm2175, %v2266, 0.0
    %2301 = vadd.xlane.f32.xlu0 %v2300
    %v2302 = vpop.xlane.xlu0 %2301
    %v2303 = vsel %vm2175, %v2267, 0.0
    %2304 = vadd.xlane.f32.xlu0 %v2303
    %v2305 = vpop.xlane.xlu0 %2304
    %v2306 = vsel %vm2175, %v2268, 0.0
    %2307 = vadd.xlane.f32.xlu0 %v2306
    %v2308 = vpop.xlane.xlu0 %2307
    %v2309 = vsel %vm2175, %v2269, 0.0
    %2310 = vadd.xlane.f32.xlu0 %v2309
    %v2311 = vpop.xlane.xlu0 %2310
    %v2312 = vsel %vm2175, %v2270, 0.0
    %2313 = vadd.xlane.f32.xlu0 %v2312
    %v2314 = vpop.xlane.xlu0 %2313
    %v2315 = vsel %vm2175, %v2271, 0.0
    %2316 = vadd.xlane.f32.xlu0 %v2315
    %v2317 = vpop.xlane.xlu0 %2316
    %v2318 = vsel %vm2175, %v2272, 0.0
    %2319 = vadd.xlane.f32.xlu0 %v2318
    %v2320 = vpop.xlane.xlu0 %2319
    %v2321 = vmul.f32 %v2275, %v2224
    %v2322 = vmul.f32 %v2278, %v2224
    %v2323 = vmul.f32 %v2281, %v2224
    %v2324 = vmul.f32 %v2284, %v2224
    %v2325 = vmul.f32 %v2287, %v2224
    %v2326 = vmul.f32 %v2290, %v2224
    %v2327 = vmul.f32 %v2293, %v2224
    %v2328 = vmul.f32 %v2296, %v2224
    %v2329 = vmul.f32 %v2299, %v2224
    %v2330 = vmul.f32 %v2302, %v2224
    %v2331 = vmul.f32 %v2305, %v2224
    %v2332 = vmul.f32 %v2308, %v2224
    %v2333 = vmul.f32 %v2311, %v2224
    %v2334 = vmul.f32 %v2314, %v2224
    %v2335 = vmul.f32 %v2317, %v2224
    %v2336 = vmul.f32 %v2320, %v2224
    %v2337 = vadd.f32 %v2321, 1e-05
    %v2338 = vadd.f32 %v2322, 1e-05
    %v2339 = vadd.f32 %v2323, 1e-05
    %v2340 = vadd.f32 %v2324, 1e-05
    %v2341 = vadd.f32 %v2325, 1e-05
    %v2342 = vadd.f32 %v2326, 1e-05
    %v2343 = vadd.f32 %v2327, 1e-05
    %v2344 = vadd.f32 %v2328, 1e-05
    %v2345 = vadd.f32 %v2329, 1e-05
    %v2346 = vadd.f32 %v2330, 1e-05
    %v2347 = vadd.f32 %v2331, 1e-05
    %v2348 = vadd.f32 %v2332, 1e-05
    %v2349 = vadd.f32 %v2333, 1e-05
    %v2350 = vadd.f32 %v2334, 1e-05
    %v2351 = vadd.f32 %v2335, 1e-05
    %v2352 = vadd.f32 %v2336, 1e-05
    %v2353 = vrsqrt.pop %v2337
    %v2354 = vrsqrt.pop %v2338
    %v2355 = vrsqrt.pop %v2339
    %v2356 = vrsqrt.pop %v2340
    %v2357 = vrsqrt.pop %v2341
    %v2358 = vrsqrt.pop %v2342
    %v2359 = vrsqrt.pop %v2343
    %v2360 = vrsqrt.pop %v2344
    %v2361 = vrsqrt.pop %v2345
    %v2362 = vrsqrt.pop %v2346
    %v2363 = vrsqrt.pop %v2347
    %v2364 = vrsqrt.pop %v2348
    %v2365 = vrsqrt.pop %v2349
    %v2366 = vrsqrt.pop %v2350
    %v2367 = vrsqrt.pop %v2351
    %v2368 = vrsqrt.pop %v2352
    %v2369 = vmul.f32 %v2241, %v2353
    %v2370 = vmul.f32 %v2242, %v2354
    %v2371 = vmul.f32 %v2243, %v2355
    %v2372 = vmul.f32 %v2244, %v2356
    %v2373 = vmul.f32 %v2245, %v2357
    %v2374 = vmul.f32 %v2246, %v2358
    %v2375 = vmul.f32 %v2247, %v2359
    %v2376 = vmul.f32 %v2248, %v2360
    %v2377 = vmul.f32 %v2249, %v2361
    %v2378 = vmul.f32 %v2250, %v2362
    %v2379 = vmul.f32 %v2251, %v2363
    %v2380 = vmul.f32 %v2252, %v2364
    %v2381 = vmul.f32 %v2253, %v2365
    %v2382 = vmul.f32 %v2254, %v2366
    %v2383 = vmul.f32 %v2255, %v2367
    %v2384 = vmul.f32 %v2256, %v2368
    %v2385 = vmul.f32 %v2369, %v2173
    %v2386 = vmul.f32 %v2370, %v2173
    %v2387 = vmul.f32 %v2371, %v2173
    %v2388 = vmul.f32 %v2372, %v2173
    %v2389 = vmul.f32 %v2373, %v2173
    %v2390 = vmul.f32 %v2374, %v2173
    %v2391 = vmul.f32 %v2375, %v2173
    %v2392 = vmul.f32 %v2376, %v2173
    %v2393 = vmul.f32 %v2377, %v2173
    %v2394 = vmul.f32 %v2378, %v2173
    %v2395 = vmul.f32 %v2379, %v2173
    %v2396 = vmul.f32 %v2380, %v2173
    %v2397 = vmul.f32 %v2381, %v2173
    %v2398 = vmul.f32 %v2382, %v2173
    %v2399 = vmul.f32 %v2383, %v2173
    %v2400 = vmul.f32 %v2384, %v2173
    %v2401 = vadd.f32 %v2385, %v2174
    %v2402 = vadd.f32 %v2386, %v2174
    %v2403 = vadd.f32 %v2387, %v2174
    %v2404 = vadd.f32 %v2388, %v2174
    %v2405 = vadd.f32 %v2389, %v2174
    %v2406 = vadd.f32 %v2390, %v2174
    %v2407 = vadd.f32 %v2391, %v2174
    %v2408 = vadd.f32 %v2392, %v2174
    %v2409 = vadd.f32 %v2393, %v2174
    %v2410 = vadd.f32 %v2394, %v2174
    %v2411 = vadd.f32 %v2395, %v2174
    %v2412 = vadd.f32 %v2396, %v2174
    %v2413 = vadd.f32 %v2397, %v2174
    %v2414 = vadd.f32 %v2398, %v2174
    %v2415 = vadd.f32 %v2399, %v2174
    %v2416 = vadd.f32 %v2400, %v2174
    %v2417 = vld [vmem:[%s45] sm:$0xff]
    %v2418 = vld [vmem:[%s45 + $0x8] sm:$0xff]
    %v2419 = vld [vmem:[%s45 + $0x10] sm:$0xff]
    %v2420 = vld [vmem:[%s45 + $0x18] sm:$0xff]
    %v2421 = vld [vmem:[%s45 + $0x20] sm:$0xff]
    %v2422 = vld [vmem:[%s45 + $0x28] sm:$0xff]
    %v2423 = vld [vmem:[%s45 + $0x30] sm:$0xff]
    %v2424 = vld [vmem:[%s45 + $0x38] sm:$0xff]
    %v2425 = vld [vmem:[%s45 + $0x40] sm:$0xff]
    %v2426 = vld [vmem:[%s45 + $0x48] sm:$0xff]
    %v2427 = vld [vmem:[%s45 + $0x50] sm:$0xff]
    %v2428 = vld [vmem:[%s45 + $0x58] sm:$0xff]
    %v2429 = vld [vmem:[%s45 + $0x60] sm:$0xff]
    %v2430 = vld [vmem:[%s45 + $0x68] sm:$0xff]
    %v2431 = vld [vmem:[%s45 + $0x70] sm:$0xff]
    %v2432 = vld [vmem:[%s45 + $0x78] sm:$0xff]
    %v2433 = vld [vmem:[%s45 + $0x80] sm:$0xff]
    %v2434 = vld [vmem:[%s45 + $0x88] sm:$0xff]
    %v2435 = vld [vmem:[%s45 + $0x90] sm:$0xff]
    %v2436 = vld [vmem:[%s45 + $0x98] sm:$0xff]
    %v2437 = vld [vmem:[%s45 + $0xa0] sm:$0xff]
    %v2438 = vld [vmem:[%s45 + $0xa8] sm:$0xff]
    %v2439 = vld [vmem:[%s45 + $0xb0] sm:$0xff]
    %v2440 = vld [vmem:[%s45 + $0xb8] sm:$0xff]
    %v2441 = vld [vmem:[%s45 + $0xc0] sm:$0xff]
    %v2442 = vld [vmem:[%s45 + $0xc8] sm:$0xff]
    %v2443 = vld [vmem:[%s45 + $0xd0] sm:$0xff]
    %v2444 = vld [vmem:[%s45 + $0xd8] sm:$0xff]
    %v2445 = vld [vmem:[%s45 + $0xe0] sm:$0xff]
    %v2446 = vld [vmem:[%s45 + $0xe8] sm:$0xff]
    %v2447 = vld [vmem:[%s45 + $0xf0] sm:$0xff]
    %v2448 = vld [vmem:[%s45 + $0xf8] sm:$0xff]
    %v2449 = vld [vmem:[%s47] sm:$0xff]
    %v2466 = vcombine.low %v2401, %v2402
    %v2467 = vcombine.low %v2403, %v2404
    %v2468 = vcombine.low %v2405, %v2406
    %v2469 = vcombine.low %v2407, %v2408
    %v2471 = vunpack.c.l.s4 1966171168
    %v2472 = vunpack.c.0.s8 %v2471
    %v2473 = vlaneseq
    %v2474 = vshrl.u32 %v2473, 7
    %v2475 = vsub.s32 %v2472, %v2474
    %v2476 = vrot.slane %v2466, %v2475
    %v2478 = vunpack.c.l.s4 1966171168
    %v2479 = vunpack.c.0.s8 %v2478
    %v2480 = vlaneseq
    %v2481 = vshrl.u32 %v2480, 7
    %v2482 = vsub.s32 %v2479, %v2481
    %v2483 = vrot.slane %v2467, %v2482
    %v2485 = vunpack.c.l.s4 1966171168
    %v2486 = vunpack.c.0.s8 %v2485
    %v2487 = vlaneseq
    %v2488 = vshrl.u32 %v2487, 7
    %v2489 = vsub.s32 %v2486, %v2488
    %v2490 = vrot.slane %v2468, %v2489
    %v2492 = vunpack.c.l.s4 1966171168
    %v2493 = vunpack.c.0.s8 %v2492
    %v2494 = vlaneseq
    %v2495 = vshrl.u32 %v2494, 7
    %v2496 = vsub.s32 %v2493, %v2495
    %v2497 = vrot.slane %v2469, %v2496
    %v2498 = vcombine.low %v2476, %v2483
    %v2499 = vcombine.low %v2490, %v2497
    %v2501 = vunpack.c.l.s4 1966171168
    %v2502 = vunpack.c.0.s8 %v2501
    %v2503 = vlaneseq
    %v2504 = vshrl.u32 %v2503, 7
    %v2505 = vsub.s32 %v2502, %v2504
    %v2506 = vrot.slane %v2498, %v2505
    %v2508 = vunpack.c.l.s4 1966171168
    %v2509 = vunpack.c.0.s8 %v2508
    %v2510 = vlaneseq
    %v2511 = vshrl.u32 %v2510, 7
    %v2512 = vsub.s32 %v2509, %v2511
    %v2513 = vrot.slane %v2499, %v2512
    %v2514 = vcombine.low %v2506, %v2513
    %v2515 = vcombine.low %v2409, %v2410
    %v2516 = vcombine.low %v2411, %v2412
    %v2517 = vcombine.low %v2413, %v2414
    %v2518 = vcombine.low %v2415, %v2416
    %v2520 = vunpack.c.l.s4 1966171168
    %v2521 = vunpack.c.0.s8 %v2520
    %v2522 = vlaneseq
    %v2523 = vshrl.u32 %v2522, 7
    %v2524 = vsub.s32 %v2521, %v2523
    %v2525 = vrot.slane %v2515, %v2524
    %v2527 = vunpack.c.l.s4 1966171168
    %v2528 = vunpack.c.0.s8 %v2527
    %v2529 = vlaneseq
    %v2530 = vshrl.u32 %v2529, 7
    %v2531 = vsub.s32 %v2528, %v2530
    %v2532 = vrot.slane %v2516, %v2531
    %v2534 = vunpack.c.l.s4 1966171168
    %v2535 = vunpack.c.0.s8 %v2534
    %v2536 = vlaneseq
    %v2537 = vshrl.u32 %v2536, 7
    %v2538 = vsub.s32 %v2535, %v2537
    %v2539 = vrot.slane %v2517, %v2538
    %v2541 = vunpack.c.l.s4 1966171168
    %v2542 = vunpack.c.0.s8 %v2541
    %v2543 = vlaneseq
    %v2544 = vshrl.u32 %v2543, 7
    %v2545 = vsub.s32 %v2542, %v2544
    %v2546 = vrot.slane %v2518, %v2545
    %v2547 = vcombine.low %v2525, %v2532
    %v2548 = vcombine.low %v2539, %v2546
    %v2550 = vunpack.c.l.s4 1966171168
    %v2551 = vunpack.c.0.s8 %v2550
    %v2552 = vlaneseq
    %v2553 = vshrl.u32 %v2552, 7
    %v2554 = vsub.s32 %v2551, %v2553
    %v2555 = vrot.slane %v2547, %v2554
    %v2557 = vunpack.c.l.s4 1966171168
    %v2558 = vunpack.c.0.s8 %v2557
    %v2559 = vlaneseq
    %v2560 = vshrl.u32 %v2559, 7
    %v2561 = vsub.s32 %v2558, %v2560
    %v2562 = vrot.slane %v2548, %v2561
    %v2563 = vcombine.low %v2555, %v2562
    %v2565 = vcombine.low %v2449, %v2449
    %v2566 = vcombine.high %v2449, %v2449
    %v2568 = vunpack.c.l.s4 1966171168
    %v2569 = vunpack.c.0.s8 %v2568
    %v2570 = vlaneseq
    %v2571 = vshrl.u32 %v2570, 7
    %v2572 = vsub.s32 %v2569, %v2571
    %v2573 = vrot.slane %v2565, %v2572
    %v2575 = vunpack.c.l.s4 1966171168
    %v2576 = vunpack.c.0.s8 %v2575
    %v2577 = vlaneseq
    %v2578 = vshrl.u32 %v2577, 7
    %v2579 = vsub.s32 %v2576, %v2578
    %v2580 = vrot.slane %v2566, %v2579
    %v2581 = vcombine.low %v2573, %v2573
    %v2582 = vcombine.high %v2573, %v2573
    %v2583 = vcombine.low %v2580, %v2580
    %v2584 = vcombine.high %v2580, %v2580
    %v2586 = vunpack.c.l.s4 1966171168
    %v2587 = vunpack.c.0.s8 %v2586
    %v2588 = vlaneseq
    %v2589 = vshrl.u32 %v2588, 7
    %v2590 = vsub.s32 %v2587, %v2589
    %v2591 = vrot.slane %v2581, %v2590
    %v2593 = vunpack.c.l.s4 1966171168
    %v2594 = vunpack.c.0.s8 %v2593
    %v2595 = vlaneseq
    %v2596 = vshrl.u32 %v2595, 7
    %v2597 = vsub.s32 %v2594, %v2596
    %v2598 = vrot.slane %v2583, %v2597
    %v2600 = vunpack.c.l.s4 1966171168
    %v2601 = vunpack.c.0.s8 %v2600
    %v2602 = vlaneseq
    %v2603 = vshrl.u32 %v2602, 7
    %v2604 = vsub.s32 %v2601, %v2603
    %v2605 = vrot.slane %v2582, %v2604
    %v2607 = vunpack.c.l.s4 1966171168
    %v2608 = vunpack.c.0.s8 %v2607
    %v2609 = vlaneseq
    %v2610 = vshrl.u32 %v2609, 7
    %v2611 = vsub.s32 %v2608, %v2610
    %v2612 = vrot.slane %v2584, %v2611
    %v2613 = vcombine.low %v2591, %v2591
    %v2614 = vcombine.high %v2591, %v2591
    %v2615 = vcombine.low %v2598, %v2598
    %v2616 = vcombine.high %v2598, %v2598
    %v2617 = vcombine.low %v2605, %v2605
    %v2618 = vcombine.high %v2605, %v2605
    %v2619 = vcombine.low %v2612, %v2612
    %v2620 = vcombine.high %v2612, %v2612
    %v2629 = vsel %vm325, %v2514, 0
    %v2631 = vsel %vm325, %v2563, 0
    %2633 = vmatprep.subr.mxu0 %v2418
    %2634 = vmatpush1.msra.mxu0 %v2417
    %2635 = vmatprep.subr.mxu0 %v2426
    %2636 = vmatpush1.msra.mxu0 %v2425
    %2637 = vmatprep.subr.mxu0 %v2434
    %2638 = vmatpush1.msra.mxu0 %v2433
    %2639 = vmatprep.subr.mxu0 %v2442
    %2640 = vmatpush1.msra.mxu0 %v2441
    %2641 = vmatprep.subr.mxu0 0.0
    %2642 = vmatpush1.msra.mxu0 0.0
    %2643 = vmatprep.subr.mxu0 0.0
    %2644 = vmatpush1.msra.mxu0 0.0
    %2645 = vmatprep.subr.mxu0 0.0
    %2646 = vmatpush1.msra.mxu0 0.0
    %2647 = vmatprep.subr.mxu0 0.0
    %2648 = vmatpush1.msra.mxu0 0.0
    %2649 = vmatprep.subr.mxu0 0.0
    %2650 = vmatpush1.msra.mxu0 0.0
    %2651 = vmatprep.subr.mxu0 0.0
    %2652 = vmatpush1.msra.mxu0 0.0
    %2653 = vmatprep.subr.mxu0 0.0
    %2654 = vmatpush1.msra.mxu0 0.0
    %2655 = vmatprep.subr.mxu0 0.0
    %2656 = vmatpush1.msra.mxu0 0.0
    %2657 = vmatprep.subr.mxu0 0.0
    %2658 = vmatpush1.msra.mxu0 0.0
    %2659 = vmatprep.subr.mxu0 0.0
    %2660 = vmatpush1.msra.mxu0 0.0
    %2661 = vmatprep.subr.mxu0 0.0
    %2662 = vmatpush1.msra.mxu0 0.0
    %2663 = vmatprep.subr.mxu0 0.0
    %2664 = vmatpush1.msra.mxu0 0.0
    %2665 = vmatprep.subr.mxu0 0.0
    %2666 = vmatpush1.msra.mxu0 0.0
    %2667 = vmatprep.subr.mxu0 0.0
    %2668 = vmatpush1.msra.mxu0 0.0
    %2669 = vmatprep.subr.mxu0 0.0
    %2670 = vmatpush1.msra.mxu0 0.0
    %2671 = vmatprep.subr.mxu0 0.0
    %2672 = vmatpush1.msra.mxu0 0.0
    %2673 = vmatprep.subr.mxu0 0.0
    %2674 = vmatpush1.msra.mxu0 0.0
    %2675 = vmatprep.subr.mxu0 0.0
    %2676 = vmatpush1.msra.mxu0 0.0
    %2677 = vmatprep.subr.mxu0 0.0
    %2678 = vmatpush1.msra.mxu0 0.0
    %2679 = vmatprep.subr.mxu0 0.0
    %2680 = vmatpush1.msra.mxu0 0.0
    %2681 = vmatprep.subr.mxu0 0.0
    %2682 = vmatpush1.msra.mxu0 0.0
    %2683 = vmatprep.subr.mxu0 0.0
    %2684 = vmatpush1.msra.mxu0 0.0
    %2685 = vmatprep.subr.mxu0 0.0
    %2686 = vmatpush1.msra.mxu0 0.0
    %2687 = vmatprep.subr.mxu0 0.0
    %2688 = vmatpush1.msra.mxu0 0.0
    %2689 = vmatprep.subr.mxu0 0.0
    %2690 = vmatpush1.msra.mxu0 0.0
    %2691 = vmatprep.subr.mxu0 0.0
    %2692 = vmatpush1.msra.mxu0 0.0
    %2693 = vmatprep.subr.mxu0 0.0
    %2694 = vmatpush1.msra.mxu0 0.0
    %2695 = vmatprep.subr.mxu0 0.0
    %2696 = vmatpush1.msra.mxu0 0.0
    %2697 = vmatprep.mubr.f32.mxu0 0.0
    %2698 = vmatmul.mubr.f32.gmra.mrb[0].mxu0 %v2629
    %v2699 = vpop.f32.mrb[0].mxu0
    %v2700 = vadd.f32 %v2613, %v2699
    %v2701 = vpop.f32.mrb[0].mxu0
    %v2702 = vadd.f32 %v2617, %v2701
    %2703 = vmatprep.mubr.f32.mxu0 0.0
    %2704 = vmatmul.mubr.f32.gmra.mrb[0].mxu0 %v2631
    %v2705 = vpop.f32.mrb[0].mxu0
    %v2706 = vadd.f32 %v2613, %v2705
    %v2707 = vpop.f32.mrb[0].mxu0
    %v2708 = vadd.f32 %v2617, %v2707
    %2709 = vdwg.mxu0
    %2710 = vmatprep.subr.mxu0 %v2420
    %2711 = vmatpush1.msra.mxu0 %v2419
    %2712 = vmatprep.subr.mxu0 %v2428
    %2713 = vmatpush1.msra.mxu0 %v2427
    %2714 = vmatprep.subr.mxu0 %v2436
    %2715 = vmatpush1.msra.mxu0 %v2435
    %2716 = vmatprep.subr.mxu0 %v2444
    %2717 = vmatpush1.msra.mxu0 %v2443
    %2718 = vmatprep.subr.mxu0 0.0
    %2719 = vmatpush1.msra.mxu0 0.0
    %2720 = vmatprep.subr.mxu0 0.0
    %2721 = vmatpush1.msra.mxu0 0.0
    %2722 = vmatprep.subr.mxu0 0.0
    %2723 = vmatpush1.msra.mxu0 0.0
    %2724 = vmatprep.subr.mxu0 0.0
    %2725 = vmatpush1.msra.mxu0 0.0
    %2726 = vmatprep.subr.mxu0 0.0
    %2727 = vmatpush1.msra.mxu0 0.0
    %2728 = vmatprep.subr.mxu0 0.0
    %2729 = vmatpush1.msra.mxu0 0.0
    %2730 = vmatprep.subr.mxu0 0.0
    %2731 = vmatpush1.msra.mxu0 0.0
    %2732 = vmatprep.subr.mxu0 0.0
    %2733 = vmatpush1.msra.mxu0 0.0
    %2734 = vmatprep.subr.mxu0 0.0
    %2735 = vmatpush1.msra.mxu0 0.0
    %2736 = vmatprep.subr.mxu0 0.0
    %2737 = vmatpush1.msra.mxu0 0.0
    %2738 = vmatprep.subr.mxu0 0.0
    %2739 = vmatpush1.msra.mxu0 0.0
    %2740 = vmatprep.subr.mxu0 0.0
    %2741 = vmatpush1.msra.mxu0 0.0
    %2742 = vmatprep.subr.mxu0 0.0
    %2743 = vmatpush1.msra.mxu0 0.0
    %2744 = vmatprep.subr.mxu0 0.0
    %2745 = vmatpush1.msra.mxu0 0.0
    %2746 = vmatprep.subr.mxu0 0.0
    %2747 = vmatpush1.msra.mxu0 0.0
    %2748 = vmatprep.subr.mxu0 0.0
    %2749 = vmatpush1.msra.mxu0 0.0
    %2750 = vmatprep.subr.mxu0 0.0
    %2751 = vmatpush1.msra.mxu0 0.0
    %2752 = vmatprep.subr.mxu0 0.0
    %2753 = vmatpush1.msra.mxu0 0.0
    %2754 = vmatprep.subr.mxu0 0.0
    %2755 = vmatpush1.msra.mxu0 0.0
    %2756 = vmatprep.subr.mxu0 0.0
    %2757 = vmatpush1.msra.mxu0 0.0
    %2758 = vmatprep.subr.mxu0 0.0
    %2759 = vmatpush1.msra.mxu0 0.0
    %2760 = vmatprep.subr.mxu0 0.0
    %2761 = vmatpush1.msra.mxu0 0.0
    %2762 = vmatprep.subr.mxu0 0.0
    %2763 = vmatpush1.msra.mxu0 0.0
    %2764 = vmatprep.subr.mxu0 0.0
    %2765 = vmatpush1.msra.mxu0 0.0
    %2766 = vmatprep.subr.mxu0 0.0
    %2767 = vmatpush1.msra.mxu0 0.0
    %2768 = vmatprep.subr.mxu0 0.0
    %2769 = vmatpush1.msra.mxu0 0.0
    %2770 = vmatprep.subr.mxu0 0.0
    %2771 = vmatpush1.msra.mxu0 0.0
    %2772 = vmatprep.subr.mxu0 0.0
    %2773 = vmatpush1.msra.mxu0 0.0
    %2774 = vmatprep.mubr.f32.mxu0 0.0
    %2775 = vmatmul.mubr.f32.gmra.mrb[0].mxu0 %v2629
    %v2776 = vpop.f32.mrb[0].mxu0
    %v2777 = vadd.f32 %v2614, %v2776
    %v2778 = vpop.f32.mrb[0].mxu0
    %v2779 = vadd.f32 %v2618, %v2778
    %2780 = vmatprep.mubr.f32.mxu0 0.0
    %2781 = vmatmul.mubr.f32.gmra.mrb[0].mxu0 %v2631
    %v2782 = vpop.f32.mrb[0].mxu0
    %v2783 = vadd.f32 %v2614, %v2782
    %v2784 = vpop.f32.mrb[0].mxu0
    %v2785 = vadd.f32 %v2618, %v2784
    %2786 = vdwg.mxu0
    %2787 = vmatprep.subr.mxu0 %v2422
    %2788 = vmatpush1.msra.mxu0 %v2421
    %2789 = vmatprep.subr.mxu0 %v2430
    %2790 = vmatpush1.msra.mxu0 %v2429
    %2791 = vmatprep.subr.mxu0 %v2438
    %2792 = vmatpush1.msra.mxu0 %v2437
    %2793 = vmatprep.subr.mxu0 %v2446
    %2794 = vmatpush1.msra.mxu0 %v2445
    %2795 = vmatprep.subr.mxu0 0.0
    %2796 = vmatpush1.msra.mxu0 0.0
    %2797 = vmatprep.subr.mxu0 0.0
    %2798 = vmatpush1.msra.mxu0 0.0
    %2799 = vmatprep.subr.mxu0 0.0
    %2800 = vmatpush1.msra.mxu0 0.0
    %2801 = vmatprep.subr.mxu0 0.0
    %2802 = vmatpush1.msra.mxu0 0.0
    %2803 = vmatprep.subr.mxu0 0.0
    %2804 = vmatpush1.msra.mxu0 0.0
    %2805 = vmatprep.subr.mxu0 0.0
    %2806 = vmatpush1.msra.mxu0 0.0
    %2807 = vmatprep.subr.mxu0 0.0
    %2808 = vmatpush1.msra.mxu0 0.0
    %2809 = vmatprep.subr.mxu0 0.0
    %2810 = vmatpush1.msra.mxu0 0.0
    %2811 = vmatprep.subr.mxu0 0.0
    %2812 = vmatpush1.msra.mxu0 0.0
    %2813 = vmatprep.subr.mxu0 0.0
    %2814 = vmatpush1.msra.mxu0 0.0
    %2815 = vmatprep.subr.mxu0 0.0
    %2816 = vmatpush1.msra.mxu0 0.0
    %2817 = vmatprep.subr.mxu0 0.0
    %2818 = vmatpush1.msra.mxu0 0.0
    %2819 = vmatprep.subr.mxu0 0.0
    %2820 = vmatpush1.msra.mxu0 0.0
    %2821 = vmatprep.subr.mxu0 0.0
    %2822 = vmatpush1.msra.mxu0 0.0
    %2823 = vmatprep.subr.mxu0 0.0
    %2824 = vmatpush1.msra.mxu0 0.0
    %2825 = vmatprep.subr.mxu0 0.0
    %2826 = vmatpush1.msra.mxu0 0.0
    %2827 = vmatprep.subr.mxu0 0.0
    %2828 = vmatpush1.msra.mxu0 0.0
    %2829 = vmatprep.subr.mxu0 0.0
    %2830 = vmatpush1.msra.mxu0 0.0
    %2831 = vmatprep.subr.mxu0 0.0
    %2832 = vmatpush1.msra.mxu0 0.0
    %2833 = vmatprep.subr.mxu0 0.0
    %2834 = vmatpush1.msra.mxu0 0.0
    %2835 = vmatprep.subr.mxu0 0.0
    %2836 = vmatpush1.msra.mxu0 0.0
    %2837 = vmatprep.subr.mxu0 0.0
    %2838 = vmatpush1.msra.mxu0 0.0
    %2839 = vmatprep.subr.mxu0 0.0
    %2840 = vmatpush1.msra.mxu0 0.0
    %2841 = vmatprep.subr.mxu0 0.0
    %2842 = vmatpush1.msra.mxu0 0.0
    %2843 = vmatprep.subr.mxu0 0.0
    %2844 = vmatpush1.msra.mxu0 0.0
    %2845 = vmatprep.subr.mxu0 0.0
    %2846 = vmatpush1.msra.mxu0 0.0
    %2847 = vmatprep.subr.mxu0 0.0
    %2848 = vmatpush1.msra.mxu0 0.0
    %2849 = vmatprep.subr.mxu0 0.0
    %2850 = vmatpush1.msra.mxu0 0.0
    %2851 = vmatprep.mubr.f32.mxu0 0.0
    %2852 = vmatmul.mubr.f32.gmra.mrb[0].mxu0 %v2629
    %v2853 = vpop.f32.mrb[0].mxu0
    %v2854 = vadd.f32 %v2615, %v2853
    %v2855 = vpop.f32.mrb[0].mxu0
    %v2856 = vadd.f32 %v2619, %v2855
    %2857 = vmatprep.mubr.f32.mxu0 0.0
    %2858 = vmatmul.mubr.f32.gmra.mrb[0].mxu0 %v2631
    %v2859 = vpop.f32.mrb[0].mxu0
    %v2860 = vadd.f32 %v2615, %v2859
    %v2861 = vpop.f32.mrb[0].mxu0
    %v2862 = vadd.f32 %v2619, %v2861
    %2863 = vdwg.mxu0
    %2864 = vmatprep.subr.mxu0 %v2424
    %2865 = vmatpush1.msra.mxu0 %v2423
    %2866 = vmatprep.subr.mxu0 %v2432
    %2867 = vmatpush1.msra.mxu0 %v2431
    %2868 = vmatprep.subr.mxu0 %v2440
    %2869 = vmatpush1.msra.mxu0 %v2439
    %2870 = vmatprep.subr.mxu0 %v2448
    %2871 = vmatpush1.msra.mxu0 %v2447
    %2872 = vmatprep.subr.mxu0 0.0
    %2873 = vmatpush1.msra.mxu0 0.0
    %2874 = vmatprep.subr.mxu0 0.0
    %2875 = vmatpush1.msra.mxu0 0.0
    %2876 = vmatprep.subr.mxu0 0.0
    %2877 = vmatpush1.msra.mxu0 0.0
    %2878 = vmatprep.subr.mxu0 0.0
    %2879 = vmatpush1.msra.mxu0 0.0
    %2880 = vmatprep.subr.mxu0 0.0
    %2881 = vmatpush1.msra.mxu0 0.0
    %2882 = vmatprep.subr.mxu0 0.0
    %2883 = vmatpush1.msra.mxu0 0.0
    %2884 = vmatprep.subr.mxu0 0.0
    %2885 = vmatpush1.msra.mxu0 0.0
    %2886 = vmatprep.subr.mxu0 0.0
    %2887 = vmatpush1.msra.mxu0 0.0
    %2888 = vmatprep.subr.mxu0 0.0
    %2889 = vmatpush1.msra.mxu0 0.0
    %2890 = vmatprep.subr.mxu0 0.0
    %2891 = vmatpush1.msra.mxu0 0.0
    %2892 = vmatprep.subr.mxu0 0.0
    %2893 = vmatpush1.msra.mxu0 0.0
    %2894 = vmatprep.subr.mxu0 0.0
    %2895 = vmatpush1.msra.mxu0 0.0
    %2896 = vmatprep.subr.mxu0 0.0
    %2897 = vmatpush1.msra.mxu0 0.0
    %2898 = vmatprep.subr.mxu0 0.0
    %2899 = vmatpush1.msra.mxu0 0.0
    %2900 = vmatprep.subr.mxu0 0.0
    %2901 = vmatpush1.msra.mxu0 0.0
    %2902 = vmatprep.subr.mxu0 0.0
    %2903 = vmatpush1.msra.mxu0 0.0
    %2904 = vmatprep.subr.mxu0 0.0
    %2905 = vmatpush1.msra.mxu0 0.0
    %2906 = vmatprep.subr.mxu0 0.0
    %2907 = vmatpush1.msra.mxu0 0.0
    %2908 = vmatprep.subr.mxu0 0.0
    %2909 = vmatpush1.msra.mxu0 0.0
    %2910 = vmatprep.subr.mxu0 0.0
    %2911 = vmatpush1.msra.mxu0 0.0
    %2912 = vmatprep.subr.mxu0 0.0
    %2913 = vmatpush1.msra.mxu0 0.0
    %2914 = vmatprep.subr.mxu0 0.0
    %2915 = vmatpush1.msra.mxu0 0.0
    %2916 = vmatprep.subr.mxu0 0.0
    %2917 = vmatpush1.msra.mxu0 0.0
    %2918 = vmatprep.subr.mxu0 0.0
    %2919 = vmatpush1.msra.mxu0 0.0
    %2920 = vmatprep.subr.mxu0 0.0
    %2921 = vmatpush1.msra.mxu0 0.0
    %2922 = vmatprep.subr.mxu0 0.0
    %2923 = vmatpush1.msra.mxu0 0.0
    %2924 = vmatprep.subr.mxu0 0.0
    %2925 = vmatpush1.msra.mxu0 0.0
    %2926 = vmatprep.subr.mxu0 0.0
    %2927 = vmatpush1.msra.mxu0 0.0
    %2928 = vmatprep.mubr.f32.mxu0 0.0
    %2929 = vmatmul.mubr.f32.gmra.mrb[0].mxu0 %v2629
    %v2930 = vpop.f32.mrb[0].mxu0
    %v2931 = vadd.f32 %v2616, %v2930
    %v2932 = vpop.f32.mrb[0].mxu0
    %v2933 = vadd.f32 %v2620, %v2932
    %2934 = vmatprep.mubr.f32.mxu0 0.0
    %2935 = vmatmul.mubr.f32.gmra.mrb[0].mxu0 %v2631
    %v2936 = vpop.f32.mrb[0].mxu0
    %v2937 = vadd.f32 %v2616, %v2936
    %v2938 = vpop.f32.mrb[0].mxu0
    %v2939 = vadd.f32 %v2620, %v2938
    %2940 = vdwg.mxu0
    %v2957 = vcombine.low %v2700, %v2702
    %v2958 = vcombine.high %v2700, %v2702
    %v2959 = vcombine.low %v2777, %v2779
    %v2960 = vcombine.high %v2777, %v2779
    %v2961 = vcombine.low %v2854, %v2856
    %v2962 = vcombine.high %v2854, %v2856
    %v2963 = vcombine.low %v2931, %v2933
    %v2964 = vcombine.high %v2931, %v2933
    %v2966 = vunpack.c.l.s4 1966171168
    %v2967 = vunpack.c.0.s8 %v2966
    %v2968 = vlaneseq
    %v2969 = vshrl.u32 %v2968, 7
    %v2970 = vsub.s32 %v2967, %v2969
    %v2971 = vrot.slane %v2957, %v2970
    %v2973 = vunpack.c.l.s4 1966171168
    %v2974 = vunpack.c.0.s8 %v2973
    %v2975 = vlaneseq
    %v2976 = vshrl.u32 %v2975, 7
    %v2977 = vsub.s32 %v2974, %v2976
    %v2978 = vrot.slane %v2958, %v2977
    %v2980 = vunpack.c.l.s4 1966171168
    %v2981 = vunpack.c.0.s8 %v2980
    %v2982 = vlaneseq
    %v2983 = vshrl.u32 %v2982, 7
    %v2984 = vsub.s32 %v2981, %v2983
    %v2985 = vrot.slane %v2959, %v2984
    %v2987 = vunpack.c.l.s4 1966171168
    %v2988 = vunpack.c.0.s8 %v2987
    %v2989 = vlaneseq
    %v2990 = vshrl.u32 %v2989, 7
    %v2991 = vsub.s32 %v2988, %v2990
    %v2992 = vrot.slane %v2960, %v2991
    %v2994 = vunpack.c.l.s4 1966171168
    %v2995 = vunpack.c.0.s8 %v2994
    %v2996 = vlaneseq
    %v2997 = vshrl.u32 %v2996, 7
    %v2998 = vsub.s32 %v2995, %v2997
    %v2999 = vrot.slane %v2961, %v2998
    %v3001 = vunpack.c.l.s4 1966171168
    %v3002 = vunpack.c.0.s8 %v3001
    %v3003 = vlaneseq
    %v3004 = vshrl.u32 %v3003, 7
    %v3005 = vsub.s32 %v3002, %v3004
    %v3006 = vrot.slane %v2962, %v3005
    %v3008 = vunpack.c.l.s4 1966171168
    %v3009 = vunpack.c.0.s8 %v3008
    %v3010 = vlaneseq
    %v3011 = vshrl.u32 %v3010, 7
    %v3012 = vsub.s32 %v3009, %v3011
    %v3013 = vrot.slane %v2963, %v3012
    %v3015 = vunpack.c.l.s4 1966171168
    %v3016 = vunpack.c.0.s8 %v3015
    %v3017 = vlaneseq
    %v3018 = vshrl.u32 %v3017, 7
    %v3019 = vsub.s32 %v3016, %v3018
    %v3020 = vrot.slane %v2964, %v3019
    %v3021 = vcombine.low %v2971, %v2985
    %v3022 = vcombine.high %v2971, %v2985
    %v3023 = vcombine.low %v2978, %v2992
    %v3024 = vcombine.high %v2978, %v2992
    %v3025 = vcombine.low %v2999, %v3013
    %v3026 = vcombine.high %v2999, %v3013
    %v3027 = vcombine.low %v3006, %v3020
    %v3028 = vcombine.high %v3006, %v3020
    %v3030 = vunpack.c.l.s4 1966171168
    %v3031 = vunpack.c.0.s8 %v3030
    %v3032 = vlaneseq
    %v3033 = vshrl.u32 %v3032, 7
    %v3034 = vsub.s32 %v3031, %v3033
    %v3035 = vrot.slane %v3021, %v3034
    %v3037 = vunpack.c.l.s4 1966171168
    %v3038 = vunpack.c.0.s8 %v3037
    %v3039 = vlaneseq
    %v3040 = vshrl.u32 %v3039, 7
    %v3041 = vsub.s32 %v3038, %v3040
    %v3042 = vrot.slane %v3023, %v3041
    %v3044 = vunpack.c.l.s4 1966171168
    %v3045 = vunpack.c.0.s8 %v3044
    %v3046 = vlaneseq
    %v3047 = vshrl.u32 %v3046, 7
    %v3048 = vsub.s32 %v3045, %v3047
    %v3049 = vrot.slane %v3022, %v3048
    %v3051 = vunpack.c.l.s4 1966171168
    %v3052 = vunpack.c.0.s8 %v3051
    %v3053 = vlaneseq
    %v3054 = vshrl.u32 %v3053, 7
    %v3055 = vsub.s32 %v3052, %v3054
    %v3056 = vrot.slane %v3024, %v3055
    %v3058 = vunpack.c.l.s4 1966171168
    %v3059 = vunpack.c.0.s8 %v3058
    %v3060 = vlaneseq
    %v3061 = vshrl.u32 %v3060, 7
    %v3062 = vsub.s32 %v3059, %v3061
    %v3063 = vrot.slane %v3025, %v3062
    %v3065 = vunpack.c.l.s4 1966171168
    %v3066 = vunpack.c.0.s8 %v3065
    %v3067 = vlaneseq
    %v3068 = vshrl.u32 %v3067, 7
    %v3069 = vsub.s32 %v3066, %v3068
    %v3070 = vrot.slane %v3027, %v3069
    %v3072 = vunpack.c.l.s4 1966171168
    %v3073 = vunpack.c.0.s8 %v3072
    %v3074 = vlaneseq
    %v3075 = vshrl.u32 %v3074, 7
    %v3076 = vsub.s32 %v3073, %v3075
    %v3077 = vrot.slane %v3026, %v3076
    %v3079 = vunpack.c.l.s4 1966171168
    %v3080 = vunpack.c.0.s8 %v3079
    %v3081 = vlaneseq
    %v3082 = vshrl.u32 %v3081, 7
    %v3083 = vsub.s32 %v3080, %v3082
    %v3084 = vrot.slane %v3028, %v3083
    %v3085 = vcombine.low %v3035, %v3063
    %v3086 = vcombine.high %v3035, %v3063
    %v3087 = vcombine.low %v3042, %v3070
    %v3088 = vcombine.high %v3042, %v3070
    %v3089 = vcombine.low %v3049, %v3077
    %v3090 = vcombine.high %v3049, %v3077
    %v3091 = vcombine.low %v3056, %v3084
    %v3092 = vcombine.high %v3056, %v3084
    %v3093 = vcombine.low %v2706, %v2708
    %v3094 = vcombine.high %v2706, %v2708
    %v3095 = vcombine.low %v2783, %v2785
    %v3096 = vcombine.high %v2783, %v2785
    %v3097 = vcombine.low %v2860, %v2862
    %v3098 = vcombine.high %v2860, %v2862
    %v3099 = vcombine.low %v2937, %v2939
    %v3100 = vcombine.high %v2937, %v2939
    %v3102 = vunpack.c.l.s4 1966171168
    %v3103 = vunpack.c.0.s8 %v3102
    %v3104 = vlaneseq
    %v3105 = vshrl.u32 %v3104, 7
    %v3106 = vsub.s32 %v3103, %v3105
    %v3107 = vrot.slane %v3093, %v3106
    %v3109 = vunpack.c.l.s4 1966171168
    %v3110 = vunpack.c.0.s8 %v3109
    %v3111 = vlaneseq
    %v3112 = vshrl.u32 %v3111, 7
    %v3113 = vsub.s32 %v3110, %v3112
    %v3114 = vrot.slane %v3094, %v3113
    %v3116 = vunpack.c.l.s4 1966171168
    %v3117 = vunpack.c.0.s8 %v3116
    %v3118 = vlaneseq
    %v3119 = vshrl.u32 %v3118, 7
    %v3120 = vsub.s32 %v3117, %v3119
    %v3121 = vrot.slane %v3095, %v3120
    %v3123 = vunpack.c.l.s4 1966171168
    %v3124 = vunpack.c.0.s8 %v3123
    %v3125 = vlaneseq
    %v3126 = vshrl.u32 %v3125, 7
    %v3127 = vsub.s32 %v3124, %v3126
    %v3128 = vrot.slane %v3096, %v3127
    %v3130 = vunpack.c.l.s4 1966171168
    %v3131 = vunpack.c.0.s8 %v3130
    %v3132 = vlaneseq
    %v3133 = vshrl.u32 %v3132, 7
    %v3134 = vsub.s32 %v3131, %v3133
    %v3135 = vrot.slane %v3097, %v3134
    %v3137 = vunpack.c.l.s4 1966171168
    %v3138 = vunpack.c.0.s8 %v3137
    %v3139 = vlaneseq
    %v3140 = vshrl.u32 %v3139, 7
    %v3141 = vsub.s32 %v3138, %v3140
    %v3142 = vrot.slane %v3098, %v3141
    %v3144 = vunpack.c.l.s4 1966171168
    %v3145 = vunpack.c.0.s8 %v3144
    %v3146 = vlaneseq
    %v3147 = vshrl.u32 %v3146, 7
    %v3148 = vsub.s32 %v3145, %v3147
    %v3149 = vrot.slane %v3099, %v3148
    %v3151 = vunpack.c.l.s4 1966171168
    %v3152 = vunpack.c.0.s8 %v3151
    %v3153 = vlaneseq
    %v3154 = vshrl.u32 %v3153, 7
    %v3155 = vsub.s32 %v3152, %v3154
    %v3156 = vrot.slane %v3100, %v3155
    %v3157 = vcombine.low %v3107, %v3121
    %v3158 = vcombine.high %v3107, %v3121
    %v3159 = vcombine.low %v3114, %v3128
    %v3160 = vcombine.high %v3114, %v3128
    %v3161 = vcombine.low %v3135, %v3149
    %v3162 = vcombine.high %v3135, %v3149
    %v3163 = vcombine.low %v3142, %v3156
    %v3164 = vcombine.high %v3142, %v3156
    %v3166 = vunpack.c.l.s4 1966171168
    %v3167 = vunpack.c.0.s8 %v3166
    %v3168 = vlaneseq
    %v3169 = vshrl.u32 %v3168, 7
    %v3170 = vsub.s32 %v3167, %v3169
    %v3171 = vrot.slane %v3157, %v3170
    %v3173 = vunpack.c.l.s4 1966171168
    %v3174 = vunpack.c.0.s8 %v3173
    %v3175 = vlaneseq
    %v3176 = vshrl.u32 %v3175, 7
    %v3177 = vsub.s32 %v3174, %v3176
    %v3178 = vrot.slane %v3159, %v3177
    %v3180 = vunpack.c.l.s4 1966171168
    %v3181 = vunpack.c.0.s8 %v3180
    %v3182 = vlaneseq
    %v3183 = vshrl.u32 %v3182, 7
    %v3184 = vsub.s32 %v3181, %v3183
    %v3185 = vrot.slane %v3158, %v3184
    %v3187 = vunpack.c.l.s4 1966171168
    %v3188 = vunpack.c.0.s8 %v3187
    %v3189 = vlaneseq
    %v3190 = vshrl.u32 %v3189, 7
    %v3191 = vsub.s32 %v3188, %v3190
    %v3192 = vrot.slane %v3160, %v3191
    %v3194 = vunpack.c.l.s4 1966171168
    %v3195 = vunpack.c.0.s8 %v3194
    %v3196 = vlaneseq
    %v3197 = vshrl.u32 %v3196, 7
    %v3198 = vsub.s32 %v3195, %v3197
    %v3199 = vrot.slane %v3161, %v3198
    %v3201 = vunpack.c.l.s4 1966171168
    %v3202 = vunpack.c.0.s8 %v3201
    %v3203 = vlaneseq
    %v3204 = vshrl.u32 %v3203, 7
    %v3205 = vsub.s32 %v3202, %v3204
    %v3206 = vrot.slane %v3163, %v3205
    %v3208 = vunpack.c.l.s4 1966171168
    %v3209 = vunpack.c.0.s8 %v3208
    %v3210 = vlaneseq
    %v3211 = vshrl.u32 %v3210, 7
    %v3212 = vsub.s32 %v3209, %v3211
    %v3213 = vrot.slane %v3162, %v3212
    %v3215 = vunpack.c.l.s4 1966171168
    %v3216 = vunpack.c.0.s8 %v3215
    %v3217 = vlaneseq
    %v3218 = vshrl.u32 %v3217, 7
    %v3219 = vsub.s32 %v3216, %v3218
    %v3220 = vrot.slane %v3164, %v3219
    %v3221 = vcombine.low %v3171, %v3199
    %v3222 = vcombine.high %v3171, %v3199
    %v3223 = vcombine.low %v3178, %v3206
    %v3224 = vcombine.high %v3178, %v3206
    %v3225 = vcombine.low %v3185, %v3213
    %v3226 = vcombine.high %v3185, %v3213
    %v3227 = vcombine.low %v3192, %v3220
    %v3228 = vcombine.high %v3192, %v3220
    %v3245 = vmul.f32 %v3085, 0.5
    %v3246 = vmul.f32 %v3089, 0.5
    %v3247 = vmul.f32 %v3086, 0.5
    %v3248 = vmul.f32 %v3090, 0.5
    %v3249 = vmul.f32 %v3087, 0.5
    %v3250 = vmul.f32 %v3091, 0.5
    %v3251 = vmul.f32 %v3088, 0.5
    %v3252 = vmul.f32 %v3092, 0.5
    %v3253 = vmul.f32 %v3221, 0.5
    %v3254 = vmul.f32 %v3225, 0.5
    %v3255 = vmul.f32 %v3222, 0.5
    %v3256 = vmul.f32 %v3226, 0.5
    %v3257 = vmul.f32 %v3223, 0.5
    %v3258 = vmul.f32 %v3227, 0.5
    %v3259 = vmul.f32 %v3224, 0.5
    %v3260 = vmul.f32 %v3228, 0.5
    %v3261 = vmul.f32 %v3085, 0.70710677
    %v3262 = vmul.f32 %v3089, 0.70710677
    %v3263 = vmul.f32 %v3086, 0.70710677
    %v3264 = vmul.f32 %v3090, 0.70710677
    %v3265 = vmul.f32 %v3087, 0.70710677
    %v3266 = vmul.f32 %v3091, 0.70710677
    %v3267 = vmul.f32 %v3088, 0.70710677
    %v3268 = vmul.f32 %v3092, 0.70710677
    %v3269 = vmul.f32 %v3221, 0.70710677
    %v3270 = vmul.f32 %v3225, 0.70710677
    %v3271 = vmul.f32 %v3222, 0.70710677
    %v3272 = vmul.f32 %v3226, 0.70710677
    %v3273 = vmul.f32 %v3223, 0.70710677
    %v3274 = vmul.f32 %v3227, 0.70710677
    %v3275 = vmul.f32 %v3224, 0.70710677
    %v3276 = vmul.f32 %v3228, 0.70710677
    %v3277 = verf.f32.pop %v3261
    %v3278 = verf.f32.pop %v3262
    %v3279 = verf.f32.pop %v3263
    %v3280 = verf.f32.pop %v3264
    %v3281 = verf.f32.pop %v3265
    %v3282 = verf.f32.pop %v3266
    %v3283 = verf.f32.pop %v3267
    %v3284 = verf.f32.pop %v3268
    %v3285 = verf.f32.pop %v3269
    %v3286 = verf.f32.pop %v3270
    %v3287 = verf.f32.pop %v3271
    %v3288 = verf.f32.pop %v3272
    %v3289 = verf.f32.pop %v3273
    %v3290 = verf.f32.pop %v3274
    %v3291 = verf.f32.pop %v3275
    %v3292 = verf.f32.pop %v3276
    %v3293 = vadd.f32 %v3277, 1.0
    %v3294 = vadd.f32 %v3278, 1.0
    %v3295 = vadd.f32 %v3279, 1.0
    %v3296 = vadd.f32 %v3280, 1.0
    %v3297 = vadd.f32 %v3281, 1.0
    %v3298 = vadd.f32 %v3282, 1.0
    %v3299 = vadd.f32 %v3283, 1.0
    %v3300 = vadd.f32 %v3284, 1.0
    %v3301 = vadd.f32 %v3285, 1.0
    %v3302 = vadd.f32 %v3286, 1.0
    %v3303 = vadd.f32 %v3287, 1.0
    %v3304 = vadd.f32 %v3288, 1.0
    %v3305 = vadd.f32 %v3289, 1.0
    %v3306 = vadd.f32 %v3290, 1.0
    %v3307 = vadd.f32 %v3291, 1.0
    %v3308 = vadd.f32 %v3292, 1.0
    %v3309 = vmul.f32 %v3245, %v3293
    %v3310 = vmul.f32 %v3246, %v3294
    %v3311 = vmul.f32 %v3247, %v3295
    %v3312 = vmul.f32 %v3248, %v3296
    %v3313 = vmul.f32 %v3249, %v3297
    %v3314 = vmul.f32 %v3250, %v3298
    %v3315 = vmul.f32 %v3251, %v3299
    %v3316 = vmul.f32 %v3252, %v3300
    %v3317 = vmul.f32 %v3253, %v3301
    %v3318 = vmul.f32 %v3254, %v3302
    %v3319 = vmul.f32 %v3255, %v3303
    %v3320 = vmul.f32 %v3256, %v3304
    %v3321 = vmul.f32 %v3257, %v3305
    %v3322 = vmul.f32 %v3258, %v3306
    %v3323 = vmul.f32 %v3259, %v3307
    %v3324 = vmul.f32 %v3260, %v3308
    %v3325 = vld [vmem:[%s49] sm:$0xff]
    %v3326 = vld [vmem:[%s49 + $0x8] sm:$0xff]
    %v3327 = vld [vmem:[%s49 + $0x10] sm:$0xff]
    %v3328 = vld [vmem:[%s49 + $0x18] sm:$0xff]
    %v3329 = vld [vmem:[%s49 + $0x20] sm:$0xff]
    %v3330 = vld [vmem:[%s49 + $0x28] sm:$0xff]
    %v3331 = vld [vmem:[%s49 + $0x30] sm:$0xff]
    %v3332 = vld [vmem:[%s49 + $0x38] sm:$0xff]
    %v3333 = vld [vmem:[%s49 + $0x40] sm:$0xff]
    %v3334 = vld [vmem:[%s49 + $0x48] sm:$0xff]
    %v3335 = vld [vmem:[%s49 + $0x50] sm:$0xff]
    %v3336 = vld [vmem:[%s49 + $0x58] sm:$0xff]
    %v3337 = vld [vmem:[%s49 + $0x60] sm:$0xff]
    %v3338 = vld [vmem:[%s49 + $0x68] sm:$0xff]
    %v3339 = vld [vmem:[%s49 + $0x70] sm:$0xff]
    %v3340 = vld [vmem:[%s49 + $0x78] sm:$0xff]
    %v3341 = vld [vmem:[%s49 + $0x80] sm:$0xff]
    %v3342 = vld [vmem:[%s49 + $0x88] sm:$0xff]
    %v3343 = vld [vmem:[%s49 + $0x90] sm:$0xff]
    %v3344 = vld [vmem:[%s49 + $0x98] sm:$0xff]
    %v3345 = vld [vmem:[%s49 + $0xa0] sm:$0xff]
    %v3346 = vld [vmem:[%s49 + $0xa8] sm:$0xff]
    %v3347 = vld [vmem:[%s49 + $0xb0] sm:$0xff]
    %v3348 = vld [vmem:[%s49 + $0xb8] sm:$0xff]
    %v3349 = vld [vmem:[%s49 + $0xc0] sm:$0xff]
    %v3350 = vld [vmem:[%s49 + $0xc8] sm:$0xff]
    %v3351 = vld [vmem:[%s49 + $0xd0] sm:$0xff]
    %v3352 = vld [vmem:[%s49 + $0xd8] sm:$0xff]
    %v3353 = vld [vmem:[%s49 + $0xe0] sm:$0xff]
    %v3354 = vld [vmem:[%s49 + $0xe8] sm:$0xff]
    %v3355 = vld [vmem:[%s49 + $0xf0] sm:$0xff]
    %v3356 = vld [vmem:[%s49 + $0xf8] sm:$0xff]
    %v3357 = vld [vmem:[%s49 + $0x100] sm:$0xff]
    %v3358 = vld [vmem:[%s49 + $0x108] sm:$0xff]
    %v3359 = vld [vmem:[%s49 + $0x110] sm:$0xff]
    %v3360 = vld [vmem:[%s49 + $0x118] sm:$0xff]
    %v3361 = vld [vmem:[%s49 + $0x120] sm:$0xff]
    %v3362 = vld [vmem:[%s49 + $0x128] sm:$0xff]
    %v3363 = vld [vmem:[%s49 + $0x130] sm:$0xff]
    %v3364 = vld [vmem:[%s49 + $0x138] sm:$0xff]
    %v3365 = vld [vmem:[%s49 + $0x140] sm:$0xff]
    %v3366 = vld [vmem:[%s49 + $0x148] sm:$0xff]
    %v3367 = vld [vmem:[%s49 + $0x150] sm:$0xff]
    %v3368 = vld [vmem:[%s49 + $0x158] sm:$0xff]
    %v3369 = vld [vmem:[%s49 + $0x160] sm:$0xff]
    %v3370 = vld [vmem:[%s49 + $0x168] sm:$0xff]
    %v3371 = vld [vmem:[%s49 + $0x170] sm:$0xff]
    %v3372 = vld [vmem:[%s49 + $0x178] sm:$0xff]
    %v3373 = vld [vmem:[%s49 + $0x180] sm:$0xff]
    %v3374 = vld [vmem:[%s49 + $0x188] sm:$0xff]
    %v3375 = vld [vmem:[%s49 + $0x190] sm:$0xff]
    %v3376 = vld [vmem:[%s49 + $0x198] sm:$0xff]
    %v3377 = vld [vmem:[%s49 + $0x1a0] sm:$0xff]
    %v3378 = vld [vmem:[%s49 + $0x1a8] sm:$0xff]
    %v3379 = vld [vmem:[%s49 + $0x1b0] sm:$0xff]
    %v3380 = vld [vmem:[%s49 + $0x1b8] sm:$0xff]
    %v3381 = vld [vmem:[%s49 + $0x1c0] sm:$0xff]
    %v3382 = vld [vmem:[%s49 + $0x1c8] sm:$0xff]
    %v3383 = vld [vmem:[%s49 + $0x1d0] sm:$0xff]
    %v3384 = vld [vmem:[%s49 + $0x1d8] sm:$0xff]
    %v3385 = vld [vmem:[%s49 + $0x1e0] sm:$0xff]
    %v3386 = vld [vmem:[%s49 + $0x1e8] sm:$0xff]
    %v3387 = vld [vmem:[%s49 + $0x1f0] sm:$0xff]
    %v3388 = vld [vmem:[%s49 + $0x1f8] sm:$0xff]
    %v3389 = vld [vmem:[%s49 + $0x200] sm:$0xff]
    %v3390 = vld [vmem:[%s49 + $0x208] sm:$0xff]
    %v3391 = vld [vmem:[%s49 + $0x210] sm:$0xff]
    %v3392 = vld [vmem:[%s49 + $0x218] sm:$0xff]
    %v3393 = vld [vmem:[%s49 + $0x220] sm:$0xff]
    %v3394 = vld [vmem:[%s49 + $0x228] sm:$0xff]
    %v3395 = vld [vmem:[%s49 + $0x230] sm:$0xff]
    %v3396 = vld [vmem:[%s49 + $0x238] sm:$0xff]
    %v3397 = vld [vmem:[%s49 + $0x240] sm:$0xff]
    %v3398 = vld [vmem:[%s49 + $0x248] sm:$0xff]
    %v3399 = vld [vmem:[%s49 + $0x250] sm:$0xff]
    %v3400 = vld [vmem:[%s49 + $0x258] sm:$0xff]
    %v3401 = vld [vmem:[%s49 + $0x260] sm:$0xff]
    %v3402 = vld [vmem:[%s49 + $0x268] sm:$0xff]
    %v3403 = vld [vmem:[%s49 + $0x270] sm:$0xff]
    %v3404 = vld [vmem:[%s49 + $0x278] sm:$0xff]
    %v3405 = vld [vmem:[%s49 + $0x280] sm:$0xff]
    %v3406 = vld [vmem:[%s49 + $0x288] sm:$0xff]
    %v3407 = vld [vmem:[%s49 + $0x290] sm:$0xff]
    %v3408 = vld [vmem:[%s49 + $0x298] sm:$0xff]
    %v3409 = vld [vmem:[%s49 + $0x2a0] sm:$0xff]
    %v3410 = vld [vmem:[%s49 + $0x2a8] sm:$0xff]
    %v3411 = vld [vmem:[%s49 + $0x2b0] sm:$0xff]
    %v3412 = vld [vmem:[%s49 + $0x2b8] sm:$0xff]
    %v3413 = vld [vmem:[%s49 + $0x2c0] sm:$0xff]
    %v3414 = vld [vmem:[%s49 + $0x2c8] sm:$0xff]
    %v3415 = vld [vmem:[%s49 + $0x2d0] sm:$0xff]
    %v3416 = vld [vmem:[%s49 + $0x2d8] sm:$0xff]
    %v3417 = vld [vmem:[%s49 + $0x2e0] sm:$0xff]
    %v3418 = vld [vmem:[%s49 + $0x2e8] sm:$0xff]
    %v3419 = vld [vmem:[%s49 + $0x2f0] sm:$0xff]
    %v3420 = vld [vmem:[%s49 + $0x2f8] sm:$0xff]
    %v3421 = vld [vmem:[%s49 + $0x300] sm:$0xff]
    %v3422 = vld [vmem:[%s49 + $0x308] sm:$0xff]
    %v3423 = vld [vmem:[%s49 + $0x310] sm:$0xff]
    %v3424 = vld [vmem:[%s49 + $0x318] sm:$0xff]
    %v3425 = vld [vmem:[%s49 + $0x320] sm:$0xff]
    %v3426 = vld [vmem:[%s49 + $0x328] sm:$0xff]
    %v3427 = vld [vmem:[%s49 + $0x330] sm:$0xff]
    %v3428 = vld [vmem:[%s49 + $0x338] sm:$0xff]
    %v3429 = vld [vmem:[%s49 + $0x340] sm:$0xff]
    %v3430 = vld [vmem:[%s49 + $0x348] sm:$0xff]
    %v3431 = vld [vmem:[%s49 + $0x350] sm:$0xff]
    %v3432 = vld [vmem:[%s49 + $0x358] sm:$0xff]
    %v3433 = vld [vmem:[%s49 + $0x360] sm:$0xff]
    %v3434 = vld [vmem:[%s49 + $0x368] sm:$0xff]
    %v3435 = vld [vmem:[%s49 + $0x370] sm:$0xff]
    %v3436 = vld [vmem:[%s49 + $0x378] sm:$0xff]
    %v3437 = vld [vmem:[%s49 + $0x380] sm:$0xff]
    %v3438 = vld [vmem:[%s49 + $0x388] sm:$0xff]
    %v3439 = vld [vmem:[%s49 + $0x390] sm:$0xff]
    %v3440 = vld [vmem:[%s49 + $0x398] sm:$0xff]
    %v3441 = vld [vmem:[%s49 + $0x3a0] sm:$0xff]
    %v3442 = vld [vmem:[%s49 + $0x3a8] sm:$0xff]
    %v3443 = vld [vmem:[%s49 + $0x3b0] sm:$0xff]
    %v3444 = vld [vmem:[%s49 + $0x3b8] sm:$0xff]
    %v3445 = vld [vmem:[%s49 + $0x3c0] sm:$0xff]
    %v3446 = vld [vmem:[%s49 + $0x3c8] sm:$0xff]
    %v3447 = vld [vmem:[%s49 + $0x3d0] sm:$0xff]
    %v3448 = vld [vmem:[%s49 + $0x3d8] sm:$0xff]
    %v3449 = vld [vmem:[%s49 + $0x3e0] sm:$0xff]
    %v3450 = vld [vmem:[%s49 + $0x3e8] sm:$0xff]
    %v3451 = vld [vmem:[%s49 + $0x3f0] sm:$0xff]
    %v3452 = vld [vmem:[%s49 + $0x3f8] sm:$0xff]
    %v3453 = vld [vmem:[%s51] sm:$0x1]
    %v3470 = vcombine.low %v3309, %v3310
    %v3471 = vcombine.high %v3309, %v3310
    %v3472 = vcombine.low %v3311, %v3312
    %v3473 = vcombine.high %v3311, %v3312
    %v3474 = vcombine.low %v3313, %v3314
    %v3475 = vcombine.high %v3313, %v3314
    %v3476 = vcombine.low %v3315, %v3316
    %v3477 = vcombine.high %v3315, %v3316
    %v3479 = vunpack.c.l.s4 1966171168
    %v3480 = vunpack.c.0.s8 %v3479
    %v3481 = vlaneseq
    %v3482 = vshrl.u32 %v3481, 7
    %v3483 = vsub.s32 %v3480, %v3482
    %v3484 = vrot.slane %v3470, %v3483
    %v3486 = vunpack.c.l.s4 1966171168
    %v3487 = vunpack.c.0.s8 %v3486
    %v3488 = vlaneseq
    %v3489 = vshrl.u32 %v3488, 7
    %v3490 = vsub.s32 %v3487, %v3489
    %v3491 = vrot.slane %v3471, %v3490
    %v3493 = vunpack.c.l.s4 1966171168
    %v3494 = vunpack.c.0.s8 %v3493
    %v3495 = vlaneseq
    %v3496 = vshrl.u32 %v3495, 7
    %v3497 = vsub.s32 %v3494, %v3496
    %v3498 = vrot.slane %v3472, %v3497
    %v3500 = vunpack.c.l.s4 1966171168
    %v3501 = vunpack.c.0.s8 %v3500
    %v3502 = vlaneseq
    %v3503 = vshrl.u32 %v3502, 7
    %v3504 = vsub.s32 %v3501, %v3503
    %v3505 = vrot.slane %v3473, %v3504
    %v3507 = vunpack.c.l.s4 1966171168
    %v3508 = vunpack.c.0.s8 %v3507
    %v3509 = vlaneseq
    %v3510 = vshrl.u32 %v3509, 7
    %v3511 = vsub.s32 %v3508, %v3510
    %v3512 = vrot.slane %v3474, %v3511
    %v3514 = vunpack.c.l.s4 1966171168
    %v3515 = vunpack.c.0.s8 %v3514
    %v3516 = vlaneseq
    %v3517 = vshrl.u32 %v3516, 7
    %v3518 = vsub.s32 %v3515, %v3517
    %v3519 = vrot.slane %v3475, %v3518
    %v3521 = vunpack.c.l.s4 1966171168
    %v3522 = vunpack.c.0.s8 %v3521
    %v3523 = vlaneseq
    %v3524 = vshrl.u32 %v3523, 7
    %v3525 = vsub.s32 %v3522, %v3524
    %v3526 = vrot.slane %v3476, %v3525
    %v3528 = vunpack.c.l.s4 1966171168
    %v3529 = vunpack.c.0.s8 %v3528
    %v3530 = vlaneseq
    %v3531 = vshrl.u32 %v3530, 7
    %v3532 = vsub.s32 %v3529, %v3531
    %v3533 = vrot.slane %v3477, %v3532
    %v3534 = vcombine.low %v3484, %v3498
    %v3535 = vcombine.high %v3484, %v3498
    %v3536 = vcombine.low %v3491, %v3505
    %v3537 = vcombine.high %v3491, %v3505
    %v3538 = vcombine.low %v3512, %v3526
    %v3539 = vcombine.high %v3512, %v3526
    %v3540 = vcombine.low %v3519, %v3533
    %v3541 = vcombine.high %v3519, %v3533
    %v3543 = vunpack.c.l.s4 1966171168
    %v3544 = vunpack.c.0.s8 %v3543
    %v3545 = vlaneseq
    %v3546 = vshrl.u32 %v3545, 7
    %v3547 = vsub.s32 %v3544, %v3546
    %v3548 = vrot.slane %v3534, %v3547
    %v3550 = vunpack.c.l.s4 1966171168
    %v3551 = vunpack.c.0.s8 %v3550
    %v3552 = vlaneseq
    %v3553 = vshrl.u32 %v3552, 7
    %v3554 = vsub.s32 %v3551, %v3553
    %v3555 = vrot.slane %v3536, %v3554
    %v3557 = vunpack.c.l.s4 1966171168
    %v3558 = vunpack.c.0.s8 %v3557
    %v3559 = vlaneseq
    %v3560 = vshrl.u32 %v3559, 7
    %v3561 = vsub.s32 %v3558, %v3560
    %v3562 = vrot.slane %v3535, %v3561
    %v3564 = vunpack.c.l.s4 1966171168
    %v3565 = vunpack.c.0.s8 %v3564
    %v3566 = vlaneseq
    %v3567 = vshrl.u32 %v3566, 7
    %v3568 = vsub.s32 %v3565, %v3567
    %v3569 = vrot.slane %v3537, %v3568
    %v3571 = vunpack.c.l.s4 1966171168
    %v3572 = vunpack.c.0.s8 %v3571
    %v3573 = vlaneseq
    %v3574 = vshrl.u32 %v3573, 7
    %v3575 = vsub.s32 %v3572, %v3574
    %v3576 = vrot.slane %v3538, %v3575
    %v3578 = vunpack.c.l.s4 1966171168
    %v3579 = vunpack.c.0.s8 %v3578
    %v3580 = vlaneseq
    %v3581 = vshrl.u32 %v3580, 7
    %v3582 = vsub.s32 %v3579, %v3581
    %v3583 = vrot.slane %v3540, %v3582
    %v3585 = vunpack.c.l.s4 1966171168
    %v3586 = vunpack.c.0.s8 %v3585
    %v3587 = vlaneseq
    %v3588 = vshrl.u32 %v3587, 7
    %v3589 = vsub.s32 %v3586, %v3588
    %v3590 = vrot.slane %v3539, %v3589
    %v3592 = vunpack.c.l.s4 1966171168
    %v3593 = vunpack.c.0.s8 %v3592
    %v3594 = vlaneseq
    %v3595 = vshrl.u32 %v3594, 7
    %v3596 = vsub.s32 %v3593, %v3595
    %v3597 = vrot.slane %v3541, %v3596
    %v3598 = vcombine.low %v3548, %v3576
    %v3599 = vcombine.high %v3548, %v3576
    %v3600 = vcombine.low %v3555, %v3583
    %v3601 = vcombine.high %v3555, %v3583
    %v3602 = vcombine.low %v3562, %v3590
    %v3603 = vcombine.high %v3562, %v3590
    %v3604 = vcombine.low %v3569, %v3597
    %v3605 = vcombine.high %v3569, %v3597
    %v3606 = vcombine.low %v3317, %v3318
    %v3607 = vcombine.high %v3317, %v3318
    %v3608 = vcombine.low %v3319, %v3320
    %v3609 = vcombine.high %v3319, %v3320
    %v3610 = vcombine.low %v3321, %v3322
    %v3611 = vcombine.high %v3321, %v3322
    %v3612 = vcombine.low %v3323, %v3324
    %v3613 = vcombine.high %v3323, %v3324
    %v3615 = vunpack.c.l.s4 1966171168
    %v3616 = vunpack.c.0.s8 %v3615
    %v3617 = vlaneseq
    %v3618 = vshrl.u32 %v3617, 7
    %v3619 = vsub.s32 %v3616, %v3618
    %v3620 = vrot.slane %v3606, %v3619
    %v3622 = vunpack.c.l.s4 1966171168
    %v3623 = vunpack.c.0.s8 %v3622
    %v3624 = vlaneseq
    %v3625 = vshrl.u32 %v3624, 7
    %v3626 = vsub.s32 %v3623, %v3625
    %v3627 = vrot.slane %v3607, %v3626
    %v3629 = vunpack.c.l.s4 1966171168
    %v3630 = vunpack.c.0.s8 %v3629
    %v3631 = vlaneseq
    %v3632 = vshrl.u32 %v3631, 7
    %v3633 = vsub.s32 %v3630, %v3632
    %v3634 = vrot.slane %v3608, %v3633
    %v3636 = vunpack.c.l.s4 1966171168
    %v3637 = vunpack.c.0.s8 %v3636
    %v3638 = vlaneseq
    %v3639 = vshrl.u32 %v3638, 7
    %v3640 = vsub.s32 %v3637, %v3639
    %v3641 = vrot.slane %v3609, %v3640
    %v3643 = vunpack.c.l.s4 1966171168
    %v3644 = vunpack.c.0.s8 %v3643
    %v3645 = vlaneseq
    %v3646 = vshrl.u32 %v3645, 7
    %v3647 = vsub.s32 %v3644, %v3646
    %v3648 = vrot.slane %v3610, %v3647
    %v3650 = vunpack.c.l.s4 1966171168
    %v3651 = vunpack.c.0.s8 %v3650
    %v3652 = vlaneseq
    %v3653 = vshrl.u32 %v3652, 7
    %v3654 = vsub.s32 %v3651, %v3653
    %v3655 = vrot.slane %v3611, %v3654
    %v3657 = vunpack.c.l.s4 1966171168
    %v3658 = vunpack.c.0.s8 %v3657
    %v3659 = vlaneseq
    %v3660 = vshrl.u32 %v3659, 7
    %v3661 = vsub.s32 %v3658, %v3660
    %v3662 = vrot.slane %v3612, %v3661
    %v3664 = vunpack.c.l.s4 1966171168
    %v3665 = vunpack.c.0.s8 %v3664
    %v3666 = vlaneseq
    %v3667 = vshrl.u32 %v3666, 7
    %v3668 = vsub.s32 %v3665, %v3667
    %v3669 = vrot.slane %v3613, %v3668
    %v3670 = vcombine.low %v3620, %v3634
    %v3671 = vcombine.high %v3620, %v3634
    %v3672 = vcombine.low %v3627, %v3641
    %v3673 = vcombine.high %v3627, %v3641
    %v3674 = vcombine.low %v3648, %v3662
    %v3675 = vcombine.high %v3648, %v3662
    %v3676 = vcombine.low %v3655, %v3669
    %v3677 = vcombine.high %v3655, %v3669
    %v3679 = vunpack.c.l.s4 1966171168
    %v3680 = vunpack.c.0.s8 %v3679
    %v3681 = vlaneseq
    %v3682 = vshrl.u32 %v3681, 7
    %v3683 = vsub.s32 %v3680, %v3682
    %v3684 = vrot.slane %v3670, %v3683
    %v3686 = vunpack.c.l.s4 1966171168
    %v3687 = vunpack.c.0.s8 %v3686
    %v3688 = vlaneseq
    %v3689 = vshrl.u32 %v3688, 7
    %v3690 = vsub.s32 %v3687, %v3689
    %v3691 = vrot.slane %v3672, %v3690
    %v3693 = vunpack.c.l.s4 1966171168
    %v3694 = vunpack.c.0.s8 %v3693
    %v3695 = vlaneseq
    %v3696 = vshrl.u32 %v3695, 7
    %v3697 = vsub.s32 %v3694, %v3696
    %v3698 = vrot.slane %v3671, %v3697
    %v3700 = vunpack.c.l.s4 1966171168
    %v3701 = vunpack.c.0.s8 %v3700
    %v3702 = vlaneseq
    %v3703 = vshrl.u32 %v3702, 7
    %v3704 = vsub.s32 %v3701, %v3703
    %v3705 = vrot.slane %v3673, %v3704
    %v3707 = vunpack.c.l.s4 1966171168
    %v3708 = vunpack.c.0.s8 %v3707
    %v3709 = vlaneseq
    %v3710 = vshrl.u32 %v3709, 7
    %v3711 = vsub.s32 %v3708, %v3710
    %v3712 = vrot.slane %v3674, %v3711
    %v3714 = vunpack.c.l.s4 1966171168
    %v3715 = vunpack.c.0.s8 %v3714
    %v3716 = vlaneseq
    %v3717 = vshrl.u32 %v3716, 7
    %v3718 = vsub.s32 %v3715, %v3717
    %v3719 = vrot.slane %v3676, %v3718
    %v3721 = vunpack.c.l.s4 1966171168
    %v3722 = vunpack.c.0.s8 %v3721
    %v3723 = vlaneseq
    %v3724 = vshrl.u32 %v3723, 7
    %v3725 = vsub.s32 %v3722, %v3724
    %v3726 = vrot.slane %v3675, %v3725
    %v3728 = vunpack.c.l.s4 1966171168
    %v3729 = vunpack.c.0.s8 %v3728
    %v3730 = vlaneseq
    %v3731 = vshrl.u32 %v3730, 7
    %v3732 = vsub.s32 %v3729, %v3731
    %v3733 = vrot.slane %v3677, %v3732
    %v3734 = vcombine.low %v3684, %v3712
    %v3735 = vcombine.high %v3684, %v3712
    %v3736 = vcombine.low %v3691, %v3719
    %v3737 = vcombine.high %v3691, %v3719
    %v3738 = vcombine.low %v3698, %v3726
    %v3739 = vcombine.high %v3698, %v3726
    %v3740 = vcombine.low %v3705, %v3733
    %v3741 = vcombine.high %v3705, %v3733
    %v3759 = vcombine.low %v3453, %v3453
    %v3761 = vunpack.c.l.s4 1966171168
    %v3762 = vunpack.c.0.s8 %v3761
    %v3763 = vlaneseq
    %v3764 = vshrl.u32 %v3763, 7
    %v3765 = vsub.s32 %v3762, %v3764
    %v3766 = vrot.slane %v3759, %v3765
    %v3767 = vcombine.low %v3766, %v3766
    %v3769 = vunpack.c.l.s4 1966171168
    %v3770 = vunpack.c.0.s8 %v3769
    %v3771 = vlaneseq
    %v3772 = vshrl.u32 %v3771, 7
    %v3773 = vsub.s32 %v3770, %v3772
    %v3774 = vrot.slane %v3767, %v3773
    %v3775 = vcombine.low %v3774, %v3774
    %3777 = vmatprep.subr.mxu0 0.0
    %3778 = vmatpush1.msra.mxu0 %v3325
    %3779 = vmatprep.subr.mxu0 0.0
    %3780 = vmatpush1.msra.mxu0 %v3326
    %3781 = vmatprep.subr.mxu0 0.0
    %3782 = vmatpush1.msra.mxu0 %v3327
    %3783 = vmatprep.subr.mxu0 0.0
    %3784 = vmatpush1.msra.mxu0 %v3328
    %3785 = vmatprep.subr.mxu0 0.0
    %3786 = vmatpush1.msra.mxu0 %v3329
    %3787 = vmatprep.subr.mxu0 0.0
    %3788 = vmatpush1.msra.mxu0 %v3330
    %3789 = vmatprep.subr.mxu0 0.0
    %3790 = vmatpush1.msra.mxu0 %v3331
    %3791 = vmatprep.subr.mxu0 0.0
    %3792 = vmatpush1.msra.mxu0 %v3332
    %3793 = vmatprep.subr.mxu0 0.0
    %3794 = vmatpush1.msra.mxu0 %v3333
    %3795 = vmatprep.subr.mxu0 0.0
    %3796 = vmatpush1.msra.mxu0 %v3334
    %3797 = vmatprep.subr.mxu0 0.0
    %3798 = vmatpush1.msra.mxu0 %v3335
    %3799 = vmatprep.subr.mxu0 0.0
    %3800 = vmatpush1.msra.mxu0 %v3336
    %3801 = vmatprep.subr.mxu0 0.0
    %3802 = vmatpush1.msra.mxu0 %v3337
    %3803 = vmatprep.subr.mxu0 0.0
    %3804 = vmatpush1.msra.mxu0 %v3338
    %3805 = vmatprep.subr.mxu0 0.0
    %3806 = vmatpush1.msra.mxu0 %v3339
    %3807 = vmatprep.subr.mxu0 0.0
    %3808 = vmatpush1.msra.mxu0 %v3340
    %3809 = vmatprep.subr.mxu0 0.0
    %3810 = vmatpush1.msra.mxu0 %v3341
    %3811 = vmatprep.subr.mxu0 0.0
    %3812 = vmatpush1.msra.mxu0 %v3342
    %3813 = vmatprep.subr.mxu0 0.0
    %3814 = vmatpush1.msra.mxu0 %v3343
    %3815 = vmatprep.subr.mxu0 0.0
    %3816 = vmatpush1.msra.mxu0 %v3344
    %3817 = vmatprep.subr.mxu0 0.0
    %3818 = vmatpush1.msra.mxu0 %v3345
    %3819 = vmatprep.subr.mxu0 0.0
    %3820 = vmatpush1.msra.mxu0 %v3346
    %3821 = vmatprep.subr.mxu0 0.0
    %3822 = vmatpush1.msra.mxu0 %v3347
    %3823 = vmatprep.subr.mxu0 0.0
    %3824 = vmatpush1.msra.mxu0 %v3348
    %3825 = vmatprep.subr.mxu0 0.0
    %3826 = vmatpush1.msra.mxu0 %v3349
    %3827 = vmatprep.subr.mxu0 0.0
    %3828 = vmatpush1.msra.mxu0 %v3350
    %3829 = vmatprep.subr.mxu0 0.0
    %3830 = vmatpush1.msra.mxu0 %v3351
    %3831 = vmatprep.subr.mxu0 0.0
    %3832 = vmatpush1.msra.mxu0 %v3352
    %3833 = vmatprep.subr.mxu0 0.0
    %3834 = vmatpush1.msra.mxu0 %v3353
    %3835 = vmatprep.subr.mxu0 0.0
    %3836 = vmatpush1.msra.mxu0 %v3354
    %3837 = vmatprep.subr.mxu0 0.0
    %3838 = vmatpush1.msra.mxu0 %v3355
    %3839 = vmatprep.subr.mxu0 0.0
    %3840 = vmatpush1.msra.mxu0 %v3356
    %3841 = vmatprep.mubr.f32.mxu0 %v3602
    %3842 = vmatmul.mubr.f32.gmra.mrb[0].mxu0 %v3598
    %v3843 = vpop.f32.mrb[0].mxu0
    %v3844 = vadd.f32 %v3775, %v3843
    %v3845 = vpop.f32.mrb[0].mxu0
    %3846 = vmatprep.mubr.f32.mxu0 %v3738
    %3847 = vmatmul.mubr.f32.gmra.mrb[0].mxu0 %v3734
    %v3848 = vpop.f32.mrb[0].mxu0
    %v3849 = vadd.f32 %v3775, %v3848
    %v3850 = vpop.f32.mrb[0].mxu0
    %3851 = vdwg.mxu0
    %3852 = vmatprep.subr.mxu0 0.0
    %3853 = vmatpush1.msra.mxu0 %v3357
    %3854 = vmatprep.subr.mxu0 0.0
    %3855 = vmatpush1.msra.mxu0 %v3358
    %3856 = vmatprep.subr.mxu0 0.0
    %3857 = vmatpush1.msra.mxu0 %v3359
    %3858 = vmatprep.subr.mxu0 0.0
    %3859 = vmatpush1.msra.mxu0 %v3360
    %3860 = vmatprep.subr.mxu0 0.0
    %3861 = vmatpush1.msra.mxu0 %v3361
    %3862 = vmatprep.subr.mxu0 0.0
    %3863 = vmatpush1.msra.mxu0 %v3362
    %3864 = vmatprep.subr.mxu0 0.0
    %3865 = vmatpush1.msra.mxu0 %v3363
    %3866 = vmatprep.subr.mxu0 0.0
    %3867 = vmatpush1.msra.mxu0 %v3364
    %3868 = vmatprep.subr.mxu0 0.0
    %3869 = vmatpush1.msra.mxu0 %v3365
    %3870 = vmatprep.subr.mxu0 0.0
    %3871 = vmatpush1.msra.mxu0 %v3366
    %3872 = vmatprep.subr.mxu0 0.0
    %3873 = vmatpush1.msra.mxu0 %v3367
    %3874 = vmatprep.subr.mxu0 0.0
    %3875 = vmatpush1.msra.mxu0 %v3368
    %3876 = vmatprep.subr.mxu0 0.0
    %3877 = vmatpush1.msra.mxu0 %v3369
    %3878 = vmatprep.subr.mxu0 0.0
    %3879 = vmatpush1.msra.mxu0 %v3370
    %3880 = vmatprep.subr.mxu0 0.0
    %3881 = vmatpush1.msra.mxu0 %v3371
    %3882 = vmatprep.subr.mxu0 0.0
    %3883 = vmatpush1.msra.mxu0 %v3372
    %3884 = vmatprep.subr.mxu0 0.0
    %3885 = vmatpush1.msra.mxu0 %v3373
    %3886 = vmatprep.subr.mxu0 0.0
    %3887 = vmatpush1.msra.mxu0 %v3374
    %3888 = vmatprep.subr.mxu0 0.0
    %3889 = vmatpush1.msra.mxu0 %v3375
    %3890 = vmatprep.subr.mxu0 0.0
    %3891 = vmatpush1.msra.mxu0 %v3376
    %3892 = vmatprep.subr.mxu0 0.0
    %3893 = vmatpush1.msra.mxu0 %v3377
    %3894 = vmatprep.subr.mxu0 0.0
    %3895 = vmatpush1.msra.mxu0 %v3378
    %3896 = vmatprep.subr.mxu0 0.0
    %3897 = vmatpush1.msra.mxu0 %v3379
    %3898 = vmatprep.subr.mxu0 0.0
    %3899 = vmatpush1.msra.mxu0 %v3380
    %3900 = vmatprep.subr.mxu0 0.0
    %3901 = vmatpush1.msra.mxu0 %v3381
    %3902 = vmatprep.subr.mxu0 0.0
    %3903 = vmatpush1.msra.mxu0 %v3382
    %3904 = vmatprep.subr.mxu0 0.0
    %3905 = vmatpush1.msra.mxu0 %v3383
    %3906 = vmatprep.subr.mxu0 0.0
    %3907 = vmatpush1.msra.mxu0 %v3384
    %3908 = vmatprep.subr.mxu0 0.0
    %3909 = vmatpush1.msra.mxu0 %v3385
    %3910 = vmatprep.subr.mxu0 0.0
    %3911 = vmatpush1.msra.mxu0 %v3386
    %3912 = vmatprep.subr.mxu0 0.0
    %3913 = vmatpush1.msra.mxu0 %v3387
    %3914 = vmatprep.subr.mxu0 0.0
    %3915 = vmatpush1.msra.mxu0 %v3388
    %3916 = vmatprep.mubr.f32.mxu0 %v3603
    %3917 = vmatmul.mubr.f32.gmra.mrb[0].mxu0 %v3599
    %v3918 = vpop.f32.mrb[0].mxu0
    %v3919 = vadd.f32 %v3844, %v3918
    %v3920 = vpop.f32.mrb[0].mxu0
    %3921 = vmatprep.mubr.f32.mxu0 %v3739
    %3922 = vmatmul.mubr.f32.gmra.mrb[0].mxu0 %v3735
    %v3923 = vpop.f32.mrb[0].mxu0
    %v3924 = vadd.f32 %v3849, %v3923
    %v3925 = vpop.f32.mrb[0].mxu0
    %3926 = vdwg.mxu0
    %3927 = vmatprep.subr.mxu0 0.0
    %3928 = vmatpush1.msra.mxu0 %v3389
    %3929 = vmatprep.subr.mxu0 0.0
    %3930 = vmatpush1.msra.mxu0 %v3390
    %3931 = vmatprep.subr.mxu0 0.0
    %3932 = vmatpush1.msra.mxu0 %v3391
    %3933 = vmatprep.subr.mxu0 0.0
    %3934 = vmatpush1.msra.mxu0 %v3392
    %3935 = vmatprep.subr.mxu0 0.0
    %3936 = vmatpush1.msra.mxu0 %v3393
    %3937 = vmatprep.subr.mxu0 0.0
    %3938 = vmatpush1.msra.mxu0 %v3394
    %3939 = vmatprep.subr.mxu0 0.0
    %3940 = vmatpush1.msra.mxu0 %v3395
    %3941 = vmatprep.subr.mxu0 0.0
    %3942 = vmatpush1.msra.mxu0 %v3396
    %3943 = vmatprep.subr.mxu0 0.0
    %3944 = vmatpush1.msra.mxu0 %v3397
    %3945 = vmatprep.subr.mxu0 0.0
    %3946 = vmatpush1.msra.mxu0 %v3398
    %3947 = vmatprep.subr.mxu0 0.0
    %3948 = vmatpush1.msra.mxu0 %v3399
    %3949 = vmatprep.subr.mxu0 0.0
    %3950 = vmatpush1.msra.mxu0 %v3400
    %3951 = vmatprep.subr.mxu0 0.0
    %3952 = vmatpush1.msra.mxu0 %v3401
    %3953 = vmatprep.subr.mxu0 0.0
    %3954 = vmatpush1.msra.mxu0 %v3402
    %3955 = vmatprep.subr.mxu0 0.0
    %3956 = vmatpush1.msra.mxu0 %v3403
    %3957 = vmatprep.subr.mxu0 0.0
    %3958 = vmatpush1.msra.mxu0 %v3404
    %3959 = vmatprep.subr.mxu0 0.0
    %3960 = vmatpush1.msra.mxu0 %v3405
    %3961 = vmatprep.subr.mxu0 0.0
    %3962 = vmatpush1.msra.mxu0 %v3406
    %3963 = vmatprep.subr.mxu0 0.0
    %3964 = vmatpush1.msra.mxu0 %v3407
    %3965 = vmatprep.subr.mxu0 0.0
    %3966 = vmatpush1.msra.mxu0 %v3408
    %3967 = vmatprep.subr.mxu0 0.0
    %3968 = vmatpush1.msra.mxu0 %v3409
    %3969 = vmatprep.subr.mxu0 0.0
    %3970 = vmatpush1.msra.mxu0 %v3410
    %3971 = vmatprep.subr.mxu0 0.0
    %3972 = vmatpush1.msra.mxu0 %v3411
    %3973 = vmatprep.subr.mxu0 0.0
    %3974 = vmatpush1.msra.mxu0 %v3412
    %3975 = vmatprep.subr.mxu0 0.0
    %3976 = vmatpush1.msra.mxu0 %v3413
    %3977 = vmatprep.subr.mxu0 0.0
    %3978 = vmatpush1.msra.mxu0 %v3414
    %3979 = vmatprep.subr.mxu0 0.0
    %3980 = vmatpush1.msra.mxu0 %v3415
    %3981 = vmatprep.subr.mxu0 0.0
    %3982 = vmatpush1.msra.mxu0 %v3416
    %3983 = vmatprep.subr.mxu0 0.0
    %3984 = vmatpush1.msra.mxu0 %v3417
    %3985 = vmatprep.subr.mxu0 0.0
    %3986 = vmatpush1.msra.mxu0 %v3418
    %3987 = vmatprep.subr.mxu0 0.0
    %3988 = vmatpush1.msra.mxu0 %v3419
    %3989 = vmatprep.subr.mxu0 0.0
    %3990 = vmatpush1.msra.mxu0 %v3420
    %3991 = vmatprep.mubr.f32.mxu0 %v3604
    %3992 = vmatmul.mubr.f32.gmra.mrb[0].mxu0 %v3600
    %v3993 = vpop.f32.mrb[0].mxu0
    %v3994 = vadd.f32 %v3919, %v3993
    %v3995 = vpop.f32.mrb[0].mxu0
    %3996 = vmatprep.mubr.f32.mxu0 %v3740
    %3997 = vmatmul.mubr.f32.gmra.mrb[0].mxu0 %v3736
    %v3998 = vpop.f32.mrb[0].mxu0
    %v3999 = vadd.f32 %v3924, %v3998
    %v4000 = vpop.f32.mrb[0].mxu0
    %4001 = vdwg.mxu0
    %4002 = vmatprep.subr.mxu0 0.0
    %4003 = vmatpush1.msra.mxu0 %v3421
    %4004 = vmatprep.subr.mxu0 0.0
    %4005 = vmatpush1.msra.mxu0 %v3422
    %4006 = vmatprep.subr.mxu0 0.0
    %4007 = vmatpush1.msra.mxu0 %v3423
    %4008 = vmatprep.subr.mxu0 0.0
    %4009 = vmatpush1.msra.mxu0 %v3424
    %4010 = vmatprep.subr.mxu0 0.0
    %4011 = vmatpush1.msra.mxu0 %v3425
    %4012 = vmatprep.subr.mxu0 0.0
    %4013 = vmatpush1.msra.mxu0 %v3426
    %4014 = vmatprep.subr.mxu0 0.0
    %4015 = vmatpush1.msra.mxu0 %v3427
    %4016 = vmatprep.subr.mxu0 0.0
    %4017 = vmatpush1.msra.mxu0 %v3428
    %4018 = vmatprep.subr.mxu0 0.0
    %4019 = vmatpush1.msra.mxu0 %v3429
    %4020 = vmatprep.subr.mxu0 0.0
    %4021 = vmatpush1.msra.mxu0 %v3430
    %4022 = vmatprep.subr.mxu0 0.0
    %4023 = vmatpush1.msra.mxu0 %v3431
    %4024 = vmatprep.subr.mxu0 0.0
    %4025 = vmatpush1.msra.mxu0 %v3432
    %4026 = vmatprep.subr.mxu0 0.0
    %4027 = vmatpush1.msra.mxu0 %v3433
    %4028 = vmatprep.subr.mxu0 0.0
    %4029 = vmatpush1.msra.mxu0 %v3434
    %4030 = vmatprep.subr.mxu0 0.0
    %4031 = vmatpush1.msra.mxu0 %v3435
    %4032 = vmatprep.subr.mxu0 0.0
    %4033 = vmatpush1.msra.mxu0 %v3436
    %4034 = vmatprep.subr.mxu0 0.0
    %4035 = vmatpush1.msra.mxu0 %v3437
    %4036 = vmatprep.subr.mxu0 0.0
    %4037 = vmatpush1.msra.mxu0 %v3438
    %4038 = vmatprep.subr.mxu0 0.0
    %4039 = vmatpush1.msra.mxu0 %v3439
    %4040 = vmatprep.subr.mxu0 0.0
    %4041 = vmatpush1.msra.mxu0 %v3440
    %4042 = vmatprep.subr.mxu0 0.0
    %4043 = vmatpush1.msra.mxu0 %v3441
    %4044 = vmatprep.subr.mxu0 0.0
    %4045 = vmatpush1.msra.mxu0 %v3442
    %4046 = vmatprep.subr.mxu0 0.0
    %4047 = vmatpush1.msra.mxu0 %v3443
    %4048 = vmatprep.subr.mxu0 0.0
    %4049 = vmatpush1.msra.mxu0 %v3444
    %4050 = vmatprep.subr.mxu0 0.0
    %4051 = vmatpush1.msra.mxu0 %v3445
    %4052 = vmatprep.subr.mxu0 0.0
    %4053 = vmatpush1.msra.mxu0 %v3446
    %4054 = vmatprep.subr.mxu0 0.0
    %4055 = vmatpush1.msra.mxu0 %v3447
    %4056 = vmatprep.subr.mxu0 0.0
    %4057 = vmatpush1.msra.mxu0 %v3448
    %4058 = vmatprep.subr.mxu0 0.0
    %4059 = vmatpush1.msra.mxu0 %v3449
    %4060 = vmatprep.subr.mxu0 0.0
    %4061 = vmatpush1.msra.mxu0 %v3450
    %4062 = vmatprep.subr.mxu0 0.0
    %4063 = vmatpush1.msra.mxu0 %v3451
    %4064 = vmatprep.subr.mxu0 0.0
    %4065 = vmatpush1.msra.mxu0 %v3452
    %4066 = vmatprep.mubr.f32.mxu0 %v3605
    %4067 = vmatmul.mubr.f32.gmra.mrb[0].mxu0 %v3601
    %v4068 = vpop.f32.mrb[0].mxu0
    %v4069 = vadd.f32 %v3994, %v4068
    %v4070 = vpop.f32.mrb[0].mxu0
    %4071 = vmatprep.mubr.f32.mxu0 %v3741
    %4072 = vmatmul.mubr.f32.gmra.mrb[0].mxu0 %v3737
    %v4073 = vpop.f32.mrb[0].mxu0
    %v4074 = vadd.f32 %v3999, %v4073
    %v4075 = vpop.f32.mrb[0].mxu0
    %4076 = vdwg.mxu0
    %v4079 = vcombine.high %v4069, %v4069
    %v4081 = vunpack.c.l.s4 1966171168
    %v4082 = vunpack.c.0.s8 %v4081
    %v4083 = vlaneseq
    %v4084 = vshrl.u32 %v4083, 7
    %v4085 = vsub.s32 %v4082, %v4084
    %v4086 = vrot.slane %v4069, %v4085
    %v4088 = vunpack.c.l.s4 1966171168
    %v4089 = vunpack.c.0.s8 %v4088
    %v4090 = vlaneseq
    %v4091 = vshrl.u32 %v4090, 7
    %v4092 = vsub.s32 %v4089, %v4091
    %v4093 = vrot.slane %v4079, %v4092
    %v4094 = vcombine.high %v4086, %v4086
    %v4095 = vcombine.high %v4093, %v4093
    %v4097 = vunpack.c.l.s4 1966171168
    %v4098 = vunpack.c.0.s8 %v4097
    %v4099 = vlaneseq
    %v4100 = vshrl.u32 %v4099, 7
    %v4101 = vsub.s32 %v4098, %v4100
    %v4102 = vrot.slane %v4086, %v4101
    %v4104 = vunpack.c.l.s4 1966171168
    %v4105 = vunpack.c.0.s8 %v4104
    %v4106 = vlaneseq
    %v4107 = vshrl.u32 %v4106, 7
    %v4108 = vsub.s32 %v4105, %v4107
    %v4109 = vrot.slane %v4093, %v4108
    %v4111 = vunpack.c.l.s4 1966171168
    %v4112 = vunpack.c.0.s8 %v4111
    %v4113 = vlaneseq
    %v4114 = vshrl.u32 %v4113, 7
    %v4115 = vsub.s32 %v4112, %v4114
    %v4116 = vrot.slane %v4094, %v4115
    %v4118 = vunpack.c.l.s4 1966171168
    %v4119 = vunpack.c.0.s8 %v4118
    %v4120 = vlaneseq
    %v4121 = vshrl.u32 %v4120, 7
    %v4122 = vsub.s32 %v4119, %v4121
    %v4123 = vrot.slane %v4095, %v4122
    %v4124 = vcombine.high %v4102, %v4102
    %v4125 = vcombine.high %v4109, %v4109
    %v4126 = vcombine.high %v4116, %v4116
    %v4127 = vcombine.high %v4123, %v4123
    %v4128 = vcombine.high %v4074, %v4074
    %v4130 = vunpack.c.l.s4 1966171168
    %v4131 = vunpack.c.0.s8 %v4130
    %v4132 = vlaneseq
    %v4133 = vshrl.u32 %v4132, 7
    %v4134 = vsub.s32 %v4131, %v4133
    %v4135 = vrot.slane %v4074, %v4134
    %v4137 = vunpack.c.l.s4 1966171168
    %v4138 = vunpack.c.0.s8 %v4137
    %v4139 = vlaneseq
    %v4140 = vshrl.u32 %v4139, 7
    %v4141 = vsub.s32 %v4138, %v4140
    %v4142 = vrot.slane %v4128, %v4141
    %v4143 = vcombine.high %v4135, %v4135
    %v4144 = vcombine.high %v4142, %v4142
    %v4146 = vunpack.c.l.s4 1966171168
    %v4147 = vunpack.c.0.s8 %v4146
    %v4148 = vlaneseq
    %v4149 = vshrl.u32 %v4148, 7
    %v4150 = vsub.s32 %v4147, %v4149
    %v4151 = vrot.slane %v4135, %v4150
    %v4153 = vunpack.c.l.s4 1966171168
    %v4154 = vunpack.c.0.s8 %v4153
    %v4155 = vlaneseq
    %v4156 = vshrl.u32 %v4155, 7
    %v4157 = vsub.s32 %v4154, %v4156
    %v4158 = vrot.slane %v4142, %v4157
    %v4160 = vunpack.c.l.s4 1966171168
    %v4161 = vunpack.c.0.s8 %v4160
    %v4162 = vlaneseq
    %v4163 = vshrl.u32 %v4162, 7
    %v4164 = vsub.s32 %v4161, %v4163
    %v4165 = vrot.slane %v4143, %v4164
    %v4167 = vunpack.c.l.s4 1966171168
    %v4168 = vunpack.c.0.s8 %v4167
    %v4169 = vlaneseq
    %v4170 = vshrl.u32 %v4169, 7
    %v4171 = vsub.s32 %v4168, %v4170
    %v4172 = vrot.slane %v4144, %v4171
    %v4173 = vcombine.high %v4151, %v4151
    %v4174 = vcombine.high %v4158, %v4158
    %v4175 = vcombine.high %v4165, %v4165
    %v4176 = vcombine.high %v4172, %v4172
    %v4193 = vadd.f32 %v2401, %v4102
    %v4194 = vadd.f32 %v2402, %v4116
    %v4195 = vadd.f32 %v2403, %v4124
    %v4196 = vadd.f32 %v2404, %v4126
    %v4197 = vadd.f32 %v2405, %v4109
    %v4198 = vadd.f32 %v2406, %v4123
    %v4199 = vadd.f32 %v2407, %v4125
    %v4200 = vadd.f32 %v2408, %v4127
    %v4201 = vadd.f32 %v2409, %v4151
    %v4202 = vadd.f32 %v2410, %v4165
    %v4203 = vadd.f32 %v2411, %v4173
    %v4204 = vadd.f32 %v2412, %v4175
    %v4205 = vadd.f32 %v2413, %v4158
    %v4206 = vadd.f32 %v2414, %v4172
    %v4207 = vadd.f32 %v2415, %v4174
    %v4208 = vadd.f32 %v2416, %v4176
    %v4209 = vld [vmem:[%s53] sm:$0x1]
    %v4210 = vld [vmem:[%s55] sm:$0x1]
    %v4211 = vsel %vm2175, %v4193, 0.0
    %4212 = vadd.xlane.f32.xlu0 %v4211
    %v4213 = vpop.xlane.xlu0 %4212
    %v4214 = vsel %vm2175, %v4194, 0.0
    %4215 = vadd.xlane.f32.xlu0 %v4214
    %v4216 = vpop.xlane.xlu0 %4215
    %v4217 = vsel %vm2175, %v4195, 0.0
    %4218 = vadd.xlane.f32.xlu0 %v4217
    %v4219 = vpop.xlane.xlu0 %4218
    %v4220 = vsel %vm2175, %v4196, 0.0
    %4221 = vadd.xlane.f32.xlu0 %v4220
    %v4222 = vpop.xlane.xlu0 %4221
    %v4223 = vsel %vm2175, %v4197, 0.0
    %4224 = vadd.xlane.f32.xlu0 %v4223
    %v4225 = vpop.xlane.xlu0 %4224
    %v4226 = vsel %vm2175, %v4198, 0.0
    %4227 = vadd.xlane.f32.xlu0 %v4226
    %v4228 = vpop.xlane.xlu0 %4227
    %v4229 = vsel %vm2175, %v4199, 0.0
    %4230 = vadd.xlane.f32.xlu0 %v4229
    %v4231 = vpop.xlane.xlu0 %4230
    %v4232 = vsel %vm2175, %v4200, 0.0
    %4233 = vadd.xlane.f32.xlu0 %v4232
    %v4234 = vpop.xlane.xlu0 %4233
    %v4235 = vsel %vm2175, %v4201, 0.0
    %4236 = vadd.xlane.f32.xlu0 %v4235
    %v4237 = vpop.xlane.xlu0 %4236
    %v4238 = vsel %vm2175, %v4202, 0.0
    %4239 = vadd.xlane.f32.xlu0 %v4238
    %v4240 = vpop.xlane.xlu0 %4239
    %v4241 = vsel %vm2175, %v4203, 0.0
    %4242 = vadd.xlane.f32.xlu0 %v4241
    %v4243 = vpop.xlane.xlu0 %4242
    %v4244 = vsel %vm2175, %v4204, 0.0
    %4245 = vadd.xlane.f32.xlu0 %v4244
    %v4246 = vpop.xlane.xlu0 %4245
    %v4247 = vsel %vm2175, %v4205, 0.0
    %4248 = vadd.xlane.f32.xlu0 %v4247
    %v4249 = vpop.xlane.xlu0 %4248
    %v4250 = vsel %vm2175, %v4206, 0.0
    %4251 = vadd.xlane.f32.xlu0 %v4250
    %v4252 = vpop.xlane.xlu0 %4251
    %v4253 = vsel %vm2175, %v4207, 0.0
    %4254 = vadd.xlane.f32.xlu0 %v4253
    %v4255 = vpop.xlane.xlu0 %4254
    %v4256 = vsel %vm2175, %v4208, 0.0
    %4257 = vadd.xlane.f32.xlu0 %v4256
    %v4258 = vpop.xlane.xlu0 %4257
    %v4259 = vmul.f32 %v4213, %v2224
    %v4260 = vmul.f32 %v4216, %v2224
    %v4261 = vmul.f32 %v4219, %v2224
    %v4262 = vmul.f32 %v4222, %v2224
    %v4263 = vmul.f32 %v4225, %v2224
    %v4264 = vmul.f32 %v4228, %v2224
    %v4265 = vmul.f32 %v4231, %v2224
    %v4266 = vmul.f32 %v4234, %v2224
    %v4267 = vmul.f32 %v4237, %v2224
    %v4268 = vmul.f32 %v4240, %v2224
    %v4269 = vmul.f32 %v4243, %v2224
    %v4270 = vmul.f32 %v4246, %v2224
    %v4271 = vmul.f32 %v4249, %v2224
    %v4272 = vmul.f32 %v4252, %v2224
    %v4273 = vmul.f32 %v4255, %v2224
    %v4274 = vmul.f32 %v4258, %v2224
    %v4275 = vsub.f32 %v4193, %v4259
    %v4276 = vsub.f32 %v4194, %v4260
    %v4277 = vsub.f32 %v4195, %v4261
    %v4278 = vsub.f32 %v4196, %v4262
    %v4279 = vsub.f32 %v4197, %v4263
    %v4280 = vsub.f32 %v4198, %v4264
    %v4281 = vsub.f32 %v4199, %v4265
    %v4282 = vsub.f32 %v4200, %v4266
    %v4283 = vsub.f32 %v4201, %v4267
    %v4284 = vsub.f32 %v4202, %v4268
    %v4285 = vsub.f32 %v4203, %v4269
    %v4286 = vsub.f32 %v4204, %v4270
    %v4287 = vsub.f32 %v4205, %v4271
    %v4288 = vsub.f32 %v4206, %v4272
    %v4289 = vsub.f32 %v4207, %v4273
    %v4290 = vsub.f32 %v4208, %v4274
    %v4291 = vmul.f32 %v4275, %v4275
    %v4292 = vmul.f32 %v4276, %v4276
    %v4293 = vmul.f32 %v4277, %v4277
    %v4294 = vmul.f32 %v4278, %v4278
    %v4295 = vmul.f32 %v4279, %v4279
    %v4296 = vmul.f32 %v4280, %v4280
    %v4297 = vmul.f32 %v4281, %v4281
    %v4298 = vmul.f32 %v4282, %v4282
    %v4299 = vmul.f32 %v4283, %v4283
    %v4300 = vmul.f32 %v4284, %v4284
    %v4301 = vmul.f32 %v4285, %v4285
    %v4302 = vmul.f32 %v4286, %v4286
    %v4303 = vmul.f32 %v4287, %v4287
    %v4304 = vmul.f32 %v4288, %v4288
    %v4305 = vmul.f32 %v4289, %v4289
    %v4306 = vmul.f32 %v4290, %v4290
    %v4307 = vsel %vm2175, %v4291, 0.0
    %4308 = vadd.xlane.f32.xlu0 %v4307
    %v4309 = vpop.xlane.xlu0 %4308
    %v4310 = vsel %vm2175, %v4292, 0.0
    %4311 = vadd.xlane.f32.xlu0 %v4310
    %v4312 = vpop.xlane.xlu0 %4311
    %v4313 = vsel %vm2175, %v4293, 0.0
    %4314 = vadd.xlane.f32.xlu0 %v4313
    %v4315 = vpop.xlane.xlu0 %4314
    %v4316 = vsel %vm2175, %v4294, 0.0
    %4317 = vadd.xlane.f32.xlu0 %v4316
    %v4318 = vpop.xlane.xlu0 %4317
    %v4319 = vsel %vm2175, %v4295, 0.0
    %4320 = vadd.xlane.f32.xlu0 %v4319
    %v4321 = vpop.xlane.xlu0 %4320
    %v4322 = vsel %vm2175, %v4296, 0.0
    %4323 = vadd.xlane.f32.xlu0 %v4322
    %v4324 = vpop.xlane.xlu0 %4323
    %v4325 = vsel %vm2175, %v4297, 0.0
    %4326 = vadd.xlane.f32.xlu0 %v4325
    %v4327 = vpop.xlane.xlu0 %4326
    %v4328 = vsel %vm2175, %v4298, 0.0
    %4329 = vadd.xlane.f32.xlu0 %v4328
    %v4330 = vpop.xlane.xlu0 %4329
    %v4331 = vsel %vm2175, %v4299, 0.0
    %4332 = vadd.xlane.f32.xlu0 %v4331
    %v4333 = vpop.xlane.xlu0 %4332
    %v4334 = vsel %vm2175, %v4300, 0.0
    %4335 = vadd.xlane.f32.xlu0 %v4334
    %v4336 = vpop.xlane.xlu0 %4335
    %v4337 = vsel %vm2175, %v4301, 0.0
    %4338 = vadd.xlane.f32.xlu0 %v4337
    %v4339 = vpop.xlane.xlu0 %4338
    %v4340 = vsel %vm2175, %v4302, 0.0
    %4341 = vadd.xlane.f32.xlu0 %v4340
    %v4342 = vpop.xlane.xlu0 %4341
    %v4343 = vsel %vm2175, %v4303, 0.0
    %4344 = vadd.xlane.f32.xlu0 %v4343
    %v4345 = vpop.xlane.xlu0 %4344
    %v4346 = vsel %vm2175, %v4304, 0.0
    %4347 = vadd.xlane.f32.xlu0 %v4346
    %v4348 = vpop.xlane.xlu0 %4347
    %v4349 = vsel %vm2175, %v4305, 0.0
    %4350 = vadd.xlane.f32.xlu0 %v4349
    %v4351 = vpop.xlane.xlu0 %4350
    %v4352 = vsel %vm2175, %v4306, 0.0
    %4353 = vadd.xlane.f32.xlu0 %v4352
    %v4354 = vpop.xlane.xlu0 %4353
    %v4355 = vmul.f32 %v4309, %v2224
    %v4356 = vmul.f32 %v4312, %v2224
    %v4357 = vmul.f32 %v4315, %v2224
    %v4358 = vmul.f32 %v4318, %v2224
    %v4359 = vmul.f32 %v4321, %v2224
    %v4360 = vmul.f32 %v4324, %v2224
    %v4361 = vmul.f32 %v4327, %v2224
    %v4362 = vmul.f32 %v4330, %v2224
    %v4363 = vmul.f32 %v4333, %v2224
    %v4364 = vmul.f32 %v4336, %v2224
    %v4365 = vmul.f32 %v4339, %v2224
    %v4366 = vmul.f32 %v4342, %v2224
    %v4367 = vmul.f32 %v4345, %v2224
    %v4368 = vmul.f32 %v4348, %v2224
    %v4369 = vmul.f32 %v4351, %v2224
    %v4370 = vmul.f32 %v4354, %v2224
    %v4371 = vadd.f32 %v4355, 1e-05
    %v4372 = vadd.f32 %v4356, 1e-05
    %v4373 = vadd.f32 %v4357, 1e-05
    %v4374 = vadd.f32 %v4358, 1e-05
    %v4375 = vadd.f32 %v4359, 1e-05
    %v4376 = vadd.f32 %v4360, 1e-05
    %v4377 = vadd.f32 %v4361, 1e-05
    %v4378 = vadd.f32 %v4362, 1e-05
    %v4379 = vadd.f32 %v4363, 1e-05
    %v4380 = vadd.f32 %v4364, 1e-05
    %v4381 = vadd.f32 %v4365, 1e-05
    %v4382 = vadd.f32 %v4366, 1e-05
    %v4383 = vadd.f32 %v4367, 1e-05
    %v4384 = vadd.f32 %v4368, 1e-05
    %v4385 = vadd.f32 %v4369, 1e-05
    %v4386 = vadd.f32 %v4370, 1e-05
    %v4387 = vrsqrt.pop %v4371
    %v4388 = vrsqrt.pop %v4372
    %v4389 = vrsqrt.pop %v4373
    %v4390 = vrsqrt.pop %v4374
    %v4391 = vrsqrt.pop %v4375
    %v4392 = vrsqrt.pop %v4376
    %v4393 = vrsqrt.pop %v4377
    %v4394 = vrsqrt.pop %v4378
    %v4395 = vrsqrt.pop %v4379
    %v4396 = vrsqrt.pop %v4380
    %v4397 = vrsqrt.pop %v4381
    %v4398 = vrsqrt.pop %v4382
    %v4399 = vrsqrt.pop %v4383
    %v4400 = vrsqrt.pop %v4384
    %v4401 = vrsqrt.pop %v4385
    %v4402 = vrsqrt.pop %v4386
    %v4403 = vmul.f32 %v4275, %v4387
    %v4404 = vmul.f32 %v4276, %v4388
    %v4405 = vmul.f32 %v4277, %v4389
    %v4406 = vmul.f32 %v4278, %v4390
    %v4407 = vmul.f32 %v4279, %v4391
    %v4408 = vmul.f32 %v4280, %v4392
    %v4409 = vmul.f32 %v4281, %v4393
    %v4410 = vmul.f32 %v4282, %v4394
    %v4411 = vmul.f32 %v4283, %v4395
    %v4412 = vmul.f32 %v4284, %v4396
    %v4413 = vmul.f32 %v4285, %v4397
    %v4414 = vmul.f32 %v4286, %v4398
    %v4415 = vmul.f32 %v4287, %v4399
    %v4416 = vmul.f32 %v4288, %v4400
    %v4417 = vmul.f32 %v4289, %v4401
    %v4418 = vmul.f32 %v4290, %v4402
    %v4419 = vmul.f32 %v4403, %v4209
    %v4420 = vmul.f32 %v4404, %v4209
    %v4421 = vmul.f32 %v4405, %v4209
    %v4422 = vmul.f32 %v4406, %v4209
    %v4423 = vmul.f32 %v4407, %v4209
    %v4424 = vmul.f32 %v4408, %v4209
    %v4425 = vmul.f32 %v4409, %v4209
    %v4426 = vmul.f32 %v4410, %v4209
    %v4427 = vmul.f32 %v4411, %v4209
    %v4428 = vmul.f32 %v4412, %v4209
    %v4429 = vmul.f32 %v4413, %v4209
    %v4430 = vmul.f32 %v4414, %v4209
    %v4431 = vmul.f32 %v4415, %v4209
    %v4432 = vmul.f32 %v4416, %v4209
    %v4433 = vmul.f32 %v4417, %v4209
    %v4434 = vmul.f32 %v4418, %v4209
    %v4435 = vadd.f32 %v4419, %v4210
    %v4436 = vadd.f32 %v4420, %v4210
    %v4437 = vadd.f32 %v4421, %v4210
    %v4438 = vadd.f32 %v4422, %v4210
    %v4439 = vadd.f32 %v4423, %v4210
    %v4440 = vadd.f32 %v4424, %v4210
    %v4441 = vadd.f32 %v4425, %v4210
    %v4442 = vadd.f32 %v4426, %v4210
    %v4443 = vadd.f32 %v4427, %v4210
    %v4444 = vadd.f32 %v4428, %v4210
    %v4445 = vadd.f32 %v4429, %v4210
    %v4446 = vadd.f32 %v4430, %v4210
    %v4447 = vadd.f32 %v4431, %v4210
    %v4448 = vadd.f32 %v4432, %v4210
    %v4449 = vadd.f32 %v4433, %v4210
    %v4450 = vadd.f32 %v4434, %v4210
    %v4451 = vld [vmem:[%s57] sm:$0x1]
    %v4452 = vmul.f32 %v4435, %v4451
    %v4453 = vmul.f32 %v4436, %v4451
    %v4454 = vmul.f32 %v4437, %v4451
    %v4455 = vmul.f32 %v4438, %v4451
    %v4456 = vmul.f32 %v4439, %v4451
    %v4457 = vmul.f32 %v4440, %v4451
    %v4458 = vmul.f32 %v4441, %v4451
    %v4459 = vmul.f32 %v4442, %v4451
    %v4460 = vmul.f32 %v4443, %v4451
    %v4461 = vmul.f32 %v4444, %v4451
    %v4462 = vmul.f32 %v4445, %v4451
    %v4463 = vmul.f32 %v4446, %v4451
    %v4464 = vmul.f32 %v4447, %v4451
    %v4465 = vmul.f32 %v4448, %v4451
    %v4466 = vmul.f32 %v4449, %v4451
    %v4467 = vmul.f32 %v4450, %v4451
    %v4468 = vsel %vm2175, %v4452, 0.0
    %4469 = vadd.xlane.f32.xlu0 %v4468
    %v4470 = vpop.xlane.xlu0 %4469
    %v4471 = vsel %vm2175, %v4453, 0.0
    %4472 = vadd.xlane.f32.xlu0 %v4471
    %v4473 = vpop.xlane.xlu0 %4472
    %v4474 = vsel %vm2175, %v4454, 0.0
    %4475 = vadd.xlane.f32.xlu0 %v4474
    %v4476 = vpop.xlane.xlu0 %4475
    %v4477 = vsel %vm2175, %v4455, 0.0
    %4478 = vadd.xlane.f32.xlu0 %v4477
    %v4479 = vpop.xlane.xlu0 %4478
    %v4480 = vsel %vm2175, %v4456, 0.0
    %4481 = vadd.xlane.f32.xlu0 %v4480
    %v4482 = vpop.xlane.xlu0 %4481
    %v4483 = vsel %vm2175, %v4457, 0.0
    %4484 = vadd.xlane.f32.xlu0 %v4483
    %v4485 = vpop.xlane.xlu0 %4484
    %v4486 = vsel %vm2175, %v4458, 0.0
    %4487 = vadd.xlane.f32.xlu0 %v4486
    %v4488 = vpop.xlane.xlu0 %4487
    %v4489 = vsel %vm2175, %v4459, 0.0
    %4490 = vadd.xlane.f32.xlu0 %v4489
    %v4491 = vpop.xlane.xlu0 %4490
    %v4492 = vsel %vm2175, %v4460, 0.0
    %4493 = vadd.xlane.f32.xlu0 %v4492
    %v4494 = vpop.xlane.xlu0 %4493
    %v4495 = vsel %vm2175, %v4461, 0.0
    %4496 = vadd.xlane.f32.xlu0 %v4495
    %v4497 = vpop.xlane.xlu0 %4496
    %v4498 = vsel %vm2175, %v4462, 0.0
    %4499 = vadd.xlane.f32.xlu0 %v4498
    %v4500 = vpop.xlane.xlu0 %4499
    %v4501 = vsel %vm2175, %v4463, 0.0
    %4502 = vadd.xlane.f32.xlu0 %v4501
    %v4503 = vpop.xlane.xlu0 %4502
    %v4504 = vsel %vm2175, %v4464, 0.0
    %4505 = vadd.xlane.f32.xlu0 %v4504
    %v4506 = vpop.xlane.xlu0 %4505
    %v4507 = vsel %vm2175, %v4465, 0.0
    %4508 = vadd.xlane.f32.xlu0 %v4507
    %v4509 = vpop.xlane.xlu0 %4508
    %v4510 = vsel %vm2175, %v4466, 0.0
    %4511 = vadd.xlane.f32.xlu0 %v4510
    %v4512 = vpop.xlane.xlu0 %4511
    %v4513 = vsel %vm2175, %v4467, 0.0
    %4514 = vadd.xlane.f32.xlu0 %v4513
    %v4515 = vpop.xlane.xlu0 %4514
    %v4516 = vld [vmem:[#allocation2] sm:$0x1]
    %v4518 = vlaneseq
    %v4519 = vshrl.u32 %v4518, 7
    %v4520 = vsub.s32 0, %v4519
    %v4521 = vrot.slane %v4516, %v4520
    %4523 = vbcast.lane.b32.xlu0 %v4521, 256
    %v4524 = vpop.permute.xlu0 %4523
    %v4526 = vadd.f32 %v4470, %v4524
    %v4527 = vadd.f32 %v4473, %v4524
    %v4528 = vadd.f32 %v4476, %v4524
    %v4529 = vadd.f32 %v4479, %v4524
    %v4530 = vadd.f32 %v4482, %v4524
    %v4531 = vadd.f32 %v4485, %v4524
    %v4532 = vadd.f32 %v4488, %v4524
    %v4533 = vadd.f32 %v4491, %v4524
    %v4534 = vadd.f32 %v4494, %v4524
    %v4535 = vadd.f32 %v4497, %v4524
    %v4536 = vadd.f32 %v4500, %v4524
    %v4537 = vadd.f32 %v4503, %v4524
    %v4538 = vadd.f32 %v4506, %v4524
    %v4539 = vadd.f32 %v4509, %v4524
    %v4540 = vadd.f32 %v4512, %v4524
    %v4541 = vadd.f32 %v4515, %v4524
    %v4542 = vld [vmem:[%s61] sm:$0x1]
    %v4543 = vmul.f32 %v4435, %v4542
    %v4544 = vmul.f32 %v4436, %v4542
    %v4545 = vmul.f32 %v4437, %v4542
    %v4546 = vmul.f32 %v4438, %v4542
    %v4547 = vmul.f32 %v4439, %v4542
    %v4548 = vmul.f32 %v4440, %v4542
    %v4549 = vmul.f32 %v4441, %v4542
    %v4550 = vmul.f32 %v4442, %v4542
    %v4551 = vmul.f32 %v4443, %v4542
    %v4552 = vmul.f32 %v4444, %v4542
    %v4553 = vmul.f32 %v4445, %v4542
    %v4554 = vmul.f32 %v4446, %v4542
    %v4555 = vmul.f32 %v4447, %v4542
    %v4556 = vmul.f32 %v4448, %v4542
    %v4557 = vmul.f32 %v4449, %v4542
    %v4558 = vmul.f32 %v4450, %v4542
    %v4559 = vsel %vm2175, %v4543, 0.0
    %4560 = vadd.xlane.f32.xlu0 %v4559
    %v4561 = vpop.xlane.xlu0 %4560
    %v4562 = vsel %vm2175, %v4544, 0.0
    %4563 = vadd.xlane.f32.xlu0 %v4562
    %v4564 = vpop.xlane.xlu0 %4563
    %v4565 = vsel %vm2175, %v4545, 0.0
    %4566 = vadd.xlane.f32.xlu0 %v4565
    %v4567 = vpop.xlane.xlu0 %4566
    %v4568 = vsel %vm2175, %v4546, 0.0
    %4569 = vadd.xlane.f32.xlu0 %v4568
    %v4570 = vpop.xlane.xlu0 %4569
    %v4571 = vsel %vm2175, %v4547, 0.0
    %4572 = vadd.xlane.f32.xlu0 %v4571
    %v4573 = vpop.xlane.xlu0 %4572
    %v4574 = vsel %vm2175, %v4548, 0.0
    %4575 = vadd.xlane.f32.xlu0 %v4574
    %v4576 = vpop.xlane.xlu0 %4575
    %v4577 = vsel %vm2175, %v4549, 0.0
    %4578 = vadd.xlane.f32.xlu0 %v4577
    %v4579 = vpop.xlane.xlu0 %4578
    %v4580 = vsel %vm2175, %v4550, 0.0
    %4581 = vadd.xlane.f32.xlu0 %v4580
    %v4582 = vpop.xlane.xlu0 %4581
    %v4583 = vsel %vm2175, %v4551, 0.0
    %4584 = vadd.xlane.f32.xlu0 %v4583
    %v4585 = vpop.xlane.xlu0 %4584
    %v4586 = vsel %vm2175, %v4552, 0.0
    %4587 = vadd.xlane.f32.xlu0 %v4586
    %v4588 = vpop.xlane.xlu0 %4587
    %v4589 = vsel %vm2175, %v4553, 0.0
    %4590 = vadd.xlane.f32.xlu0 %v4589
    %v4591 = vpop.xlane.xlu0 %4590
    %v4592 = vsel %vm2175, %v4554, 0.0
    %4593 = vadd.xlane.f32.xlu0 %v4592
    %v4594 = vpop.xlane.xlu0 %4593
    %v4595 = vsel %vm2175, %v4555, 0.0
    %4596 = vadd.xlane.f32.xlu0 %v4595
    %v4597 = vpop.xlane.xlu0 %4596
    %v4598 = vsel %vm2175, %v4556, 0.0
    %4599 = vadd.xlane.f32.xlu0 %v4598
    %v4600 = vpop.xlane.xlu0 %4599
    %v4601 = vsel %vm2175, %v4557, 0.0
    %4602 = vadd.xlane.f32.xlu0 %v4601
    %v4603 = vpop.xlane.xlu0 %4602
    %v4604 = vsel %vm2175, %v4558, 0.0
    %4605 = vadd.xlane.f32.xlu0 %v4604
    %v4606 = vpop.xlane.xlu0 %4605
    %v4607 = vld [vmem:[#allocation3] sm:$0x1]
    %v4609 = vlaneseq
    %v4610 = vshrl.u32 %v4609, 7
    %v4611 = vsub.s32 0, %v4610
    %v4612 = vrot.slane %v4607, %v4611
    %4614 = vbcast.lane.b32.xlu0 %v4612, 256
    %v4615 = vpop.permute.xlu0 %4614
    %v4617 = vadd.f32 %v4561, %v4615
    %v4618 = vadd.f32 %v4564, %v4615
    %v4619 = vadd.f32 %v4567, %v4615
    %v4620 = vadd.f32 %v4570, %v4615
    %v4621 = vadd.f32 %v4573, %v4615
    %v4622 = vadd.f32 %v4576, %v4615
    %v4623 = vadd.f32 %v4579, %v4615
    %v4624 = vadd.f32 %v4582, %v4615
    %v4625 = vadd.f32 %v4585, %v4615
    %v4626 = vadd.f32 %v4588, %v4615
    %v4627 = vadd.f32 %v4591, %v4615
    %v4628 = vadd.f32 %v4594, %v4615
    %v4629 = vadd.f32 %v4597, %v4615
    %v4630 = vadd.f32 %v4600, %v4615
    %v4631 = vadd.f32 %v4603, %v4615
    %v4632 = vadd.f32 %v4606, %v4615
    %v4633 = vmul.f32 %v4526, 20.0
    %v4634 = vmul.f32 %v4527, 20.0
    %v4635 = vmul.f32 %v4528, 20.0
    %v4636 = vmul.f32 %v4529, 20.0
    %v4637 = vmul.f32 %v4530, 20.0
    %v4638 = vmul.f32 %v4531, 20.0
    %v4639 = vmul.f32 %v4532, 20.0
    %v4640 = vmul.f32 %v4533, 20.0
    %v4641 = vmul.f32 %v4534, 20.0
    %v4642 = vmul.f32 %v4535, 20.0
    %v4643 = vmul.f32 %v4536, 20.0
    %v4644 = vmul.f32 %v4537, 20.0
    %v4645 = vmul.f32 %v4538, 20.0
    %v4646 = vmul.f32 %v4539, 20.0
    %v4647 = vmul.f32 %v4540, 20.0
    %v4648 = vmul.f32 %v4541, 20.0
    %vm4649 = vcmask 0
    %v4650 = vsel %vm4649, %v4633, -inf
    %v4651 = vsel %vm4649, %v4634, -inf
    %v4652 = vsel %vm4649, %v4635, -inf
    %v4653 = vsel %vm4649, %v4636, -inf
    %v4654 = vsel %vm4649, %v4637, -inf
    %v4655 = vmax.f32 %v4650, %v4654
    %v4656 = vsel %vm4649, %v4638, -inf
    %v4657 = vmax.f32 %v4651, %v4656
    %v4658 = vsel %vm4649, %v4639, -inf
    %v4659 = vmax.f32 %v4652, %v4658
    %v4660 = vsel %vm4649, %v4640, -inf
    %v4661 = vmax.f32 %v4653, %v4660
    %v4662 = vsel %vm4649, %v4641, -inf
    %v4663 = vmax.f32 %v4655, %v4662
    %v4664 = vsel %vm4649, %v4642, -inf
    %v4665 = vmax.f32 %v4657, %v4664
    %v4666 = vsel %vm4649, %v4643, -inf
    %v4667 = vmax.f32 %v4659, %v4666
    %v4668 = vsel %vm4649, %v4644, -inf
    %v4669 = vmax.f32 %v4661, %v4668
    %v4670 = vsel %vm4649, %v4645, -inf
    %v4671 = vmax.f32 %v4663, %v4670
    %v4672 = vsel %vm4649, %v4646, -inf
    %v4673 = vmax.f32 %v4665, %v4672
    %v4674 = vsel %vm4649, %v4647, -inf
    %v4675 = vmax.f32 %v4667, %v4674
    %v4676 = vsel %vm4649, %v4648, -inf
    %v4677 = vmax.f32 %v4669, %v4676
    %v4678 = vmax.f32 %v4671, %v4673
    %v4679 = vmax.f32 %v4675, %v4677
    %v4680 = vmax.f32 %v4678, %v4679
    %v4681 = vlaneseq
    %v4682 = vshrl.u32 %v4681, 7
    %v4683 = vsub.s32 0, %v4682
    %v4684 = vrot.slane %v4680, %v4683
    %4687 = vbcast.lane.b32.xlu0 %v4684, 256
    %v4688 = vpop.permute.xlu0 %4687
    %v4690 = vsub.f32 %v4633, %v4688
    %v4691 = vsub.f32 %v4634, %v4688
    %v4692 = vsub.f32 %v4635, %v4688
    %v4693 = vsub.f32 %v4636, %v4688
    %v4694 = vsub.f32 %v4637, %v4688
    %v4695 = vsub.f32 %v4638, %v4688
    %v4696 = vsub.f32 %v4639, %v4688
    %v4697 = vsub.f32 %v4640, %v4688
    %v4698 = vsub.f32 %v4641, %v4688
    %v4699 = vsub.f32 %v4642, %v4688
    %v4700 = vsub.f32 %v4643, %v4688
    %v4701 = vsub.f32 %v4644, %v4688
    %v4702 = vsub.f32 %v4645, %v4688
    %v4703 = vsub.f32 %v4646, %v4688
    %v4704 = vsub.f32 %v4647, %v4688
    %v4705 = vsub.f32 %v4648, %v4688
    %v4706 = vmul.f32 %v4690, 1.442695
    %v4707 = vpow.pop %v4706
    %v4708 = vmul.f32 %v4691, 1.442695
    %v4709 = vpow.pop %v4708
    %v4710 = vmul.f32 %v4692, 1.442695
    %v4711 = vpow.pop %v4710
    %v4712 = vmul.f32 %v4693, 1.442695
    %v4713 = vpow.pop %v4712
    %v4714 = vmul.f32 %v4694, 1.442695
    %v4715 = vpow.pop %v4714
    %v4716 = vmul.f32 %v4695, 1.442695
    %v4717 = vpow.pop %v4716
    %v4718 = vmul.f32 %v4696, 1.442695
    %v4719 = vpow.pop %v4718
    %v4720 = vmul.f32 %v4697, 1.442695
    %v4721 = vpow.pop %v4720
    %v4722 = vmul.f32 %v4698, 1.442695
    %v4723 = vpow.pop %v4722
    %v4724 = vmul.f32 %v4699, 1.442695
    %v4725 = vpow.pop %v4724
    %v4726 = vmul.f32 %v4700, 1.442695
    %v4727 = vpow.pop %v4726
    %v4728 = vmul.f32 %v4701, 1.442695
    %v4729 = vpow.pop %v4728
    %v4730 = vmul.f32 %v4702, 1.442695
    %v4731 = vpow.pop %v4730
    %v4732 = vmul.f32 %v4703, 1.442695
    %v4733 = vpow.pop %v4732
    %v4734 = vmul.f32 %v4704, 1.442695
    %v4735 = vpow.pop %v4734
    %v4736 = vmul.f32 %v4705, 1.442695
    %v4737 = vpow.pop %v4736
    %v4738 = vld [vmem:[%s13] sm:$0xff]
    %v4739 = vld [vmem:[%s13 + $0x8] sm:$0xff]
    %v4756 = vrot.slane %v4709, 7
    %v4757 = vsel %vm1922, %v4756, %v4707
    %v4758 = vrot.slane %v4711, 6
    %v4759 = vsel %vm1924, %v4758, %v4757
    %v4760 = vrot.slane %v4713, 5
    %v4761 = vsel %vm1926, %v4760, %v4759
    %v4762 = vrot.slane %v4715, 4
    %v4763 = vsel %vm1928, %v4762, %v4761
    %v4764 = vrot.slane %v4717, 3
    %v4765 = vsel %vm1930, %v4764, %v4763
    %v4766 = vrot.slane %v4719, 2
    %v4767 = vsel %vm1932, %v4766, %v4765
    %v4768 = vrot.slane %v4721, 1
    %v4769 = vsel %vm1934, %v4768, %v4767
    %v4770 = vrot.slane %v4725, 7
    %v4771 = vsel %vm1922, %v4770, %v4723
    %v4772 = vrot.slane %v4727, 6
    %v4773 = vsel %vm1924, %v4772, %v4771
    %v4774 = vrot.slane %v4729, 5
    %v4775 = vsel %vm1926, %v4774, %v4773
    %v4776 = vrot.slane %v4731, 4
    %v4777 = vsel %vm1928, %v4776, %v4775
    %v4778 = vrot.slane %v4733, 3
    %v4779 = vsel %vm1930, %v4778, %v4777
    %v4780 = vrot.slane %v4735, 2
    %v4781 = vsel %vm1932, %v4780, %v4779
    %v4782 = vrot.slane %v4737, 1
    %v4783 = vsel %vm1934, %v4782, %v4781
    %v4786 = vmul.f32 %v4738, %v4769
    %v4787 = vmul.f32 %v4739, %v4783
    %v4788 = vld [vmem:[%s15] sm:$0xf]
    %v4789 = vld [vmem:[%s17] sm:$0xf]
    %vm4790 = vcmask 130048
    %v4792 = vsel %vm4790, %v4788, 0
    %4794 = vmatprep.subr.mxu0 0.0
    %4795 = vmatpush1.msra.mxu0 %v4769
    %4796 = vmatprep.subr.mxu0 0.0
    %4797 = vmatpush1.msra.mxu0 %v4783
    %4798 = vmatprep.subr.mxu0 0.0
    %4799 = vmatpush1.msra.mxu0 0.0
    %4800 = vmatprep.subr.mxu0 0.0
    %4801 = vmatpush1.msra.mxu0 0.0
    %4802 = vmatprep.subr.mxu0 0.0
    %4803 = vmatpush1.msra.mxu0 0.0
    %4804 = vmatprep.subr.mxu0 0.0
    %4805 = vmatpush1.msra.mxu0 0.0
    %4806 = vmatprep.subr.mxu0 0.0
    %4807 = vmatpush1.msra.mxu0 0.0
    %4808 = vmatprep.subr.mxu0 0.0
    %4809 = vmatpush1.msra.mxu0 0.0
    %4810 = vmatprep.subr.mxu0 0.0
    %4811 = vmatpush1.msra.mxu0 0.0
    %4812 = vmatprep.subr.mxu0 0.0
    %4813 = vmatpush1.msra.mxu0 0.0
    %4814 = vmatprep.subr.mxu0 0.0
    %4815 = vmatpush1.msra.mxu0 0.0
    %4816 = vmatprep.subr.mxu0 0.0
    %4817 = vmatpush1.msra.mxu0 0.0
    %4818 = vmatprep.subr.mxu0 0.0
    %4819 = vmatpush1.msra.mxu0 0.0
    %4820 = vmatprep.subr.mxu0 0.0
    %4821 = vmatpush1.msra.mxu0 0.0
    %4822 = vmatprep.subr.mxu0 0.0
    %4823 = vmatpush1.msra.mxu0 0.0
    %4824 = vmatprep.subr.mxu0 0.0
    %4825 = vmatpush1.msra.mxu0 0.0
    %4826 = vmatprep.subr.mxu0 0.0
    %4827 = vmatpush1.msra.mxu0 0.0
    %4828 = vmatprep.subr.mxu0 0.0
    %4829 = vmatpush1.msra.mxu0 0.0
    %4830 = vmatprep.subr.mxu0 0.0
    %4831 = vmatpush1.msra.mxu0 0.0
    %4832 = vmatprep.subr.mxu0 0.0
    %4833 = vmatpush1.msra.mxu0 0.0
    %4834 = vmatprep.subr.mxu0 0.0
    %4835 = vmatpush1.msra.mxu0 0.0
    %4836 = vmatprep.subr.mxu0 0.0
    %4837 = vmatpush1.msra.mxu0 0.0
    %4838 = vmatprep.subr.mxu0 0.0
    %4839 = vmatpush1.msra.mxu0 0.0
    %4840 = vmatprep.subr.mxu0 0.0
    %4841 = vmatpush1.msra.mxu0 0.0
    %4842 = vmatprep.subr.mxu0 0.0
    %4843 = vmatpush1.msra.mxu0 0.0
    %4844 = vmatprep.subr.mxu0 0.0
    %4845 = vmatpush1.msra.mxu0 0.0
    %4846 = vmatprep.subr.mxu0 0.0
    %4847 = vmatpush1.msra.mxu0 0.0
    %4848 = vmatprep.subr.mxu0 0.0
    %4849 = vmatpush1.msra.mxu0 0.0
    %4850 = vmatprep.subr.mxu0 0.0
    %4851 = vmatpush1.msra.mxu0 0.0
    %4852 = vmatprep.subr.mxu0 0.0
    %4853 = vmatpush1.msra.mxu0 0.0
    %4854 = vmatprep.subr.mxu0 0.0
    %4855 = vmatpush1.msra.mxu0 0.0
    %4856 = vmatprep.subr.mxu0 0.0
    %4857 = vmatpush1.msra.mxu0 0.0
    %4858 = vmatprep.mubr.f32.mxu0 0.0
    %4859 = vmatmul.mubr.f32.gmra.mrb[0].mxu0 %v4792
    %v4860 = vpop.f32.mrb[0].mxu0
    %v4861 = vadd.f32 0.0, %v4860
    %v4862 = vpop.f32.mrb[0].mxu0
    %4863 = vdwg.mxu0
    %4864 = vmatprep.subr.mxu0 0.0
    %4865 = vmatpush1.msra.mxu0 %v4786
    %4866 = vmatprep.subr.mxu0 0.0
    %4867 = vmatpush1.msra.mxu0 %v4787
    %4868 = vmatprep.subr.mxu0 0.0
    %4869 = vmatpush1.msra.mxu0 0.0
    %4870 = vmatprep.subr.mxu0 0.0
    %4871 = vmatpush1.msra.mxu0 0.0
    %4872 = vmatprep.subr.mxu0 0.0
    %4873 = vmatpush1.msra.mxu0 0.0
    %4874 = vmatprep.subr.mxu0 0.0
    %4875 = vmatpush1.msra.mxu0 0.0
    %4876 = vmatprep.subr.mxu0 0.0
    %4877 = vmatpush1.msra.mxu0 0.0
    %4878 = vmatprep.subr.mxu0 0.0
    %4879 = vmatpush1.msra.mxu0 0.0
    %4880 = vmatprep.subr.mxu0 0.0
    %4881 = vmatpush1.msra.mxu0 0.0
    %4882 = vmatprep.subr.mxu0 0.0
    %4883 = vmatpush1.msra.mxu0 0.0
    %4884 = vmatprep.subr.mxu0 0.0
    %4885 = vmatpush1.msra.mxu0 0.0
    %4886 = vmatprep.subr.mxu0 0.0
    %4887 = vmatpush1.msra.mxu0 0.0
    %4888 = vmatprep.subr.mxu0 0.0
    %4889 = vmatpush1.msra.mxu0 0.0
    %4890 = vmatprep.subr.mxu0 0.0
    %4891 = vmatpush1.msra.mxu0 0.0
    %4892 = vmatprep.subr.mxu0 0.0
    %4893 = vmatpush1.msra.mxu0 0.0
    %4894 = vmatprep.subr.mxu0 0.0
    %4895 = vmatpush1.msra.mxu0 0.0
    %4896 = vmatprep.subr.mxu0 0.0
    %4897 = vmatpush1.msra.mxu0 0.0
    %4898 = vmatprep.subr.mxu0 0.0
    %4899 = vmatpush1.msra.mxu0 0.0
    %4900 = vmatprep.subr.mxu0 0.0
    %4901 = vmatpush1.msra.mxu0 0.0
    %4902 = vmatprep.subr.mxu0 0.0
    %4903 = vmatpush1.msra.mxu0 0.0
    %4904 = vmatprep.subr.mxu0 0.0
    %4905 = vmatpush1.msra.mxu0 0.0
    %4906 = vmatprep.subr.mxu0 0.0
    %4907 = vmatpush1.msra.mxu0 0.0
    %4908 = vmatprep.subr.mxu0 0.0
    %4909 = vmatpush1.msra.mxu0 0.0
    %4910 = vmatprep.subr.mxu0 0.0
    %4911 = vmatpush1.msra.mxu0 0.0
    %4912 = vmatprep.subr.mxu0 0.0
    %4913 = vmatpush1.msra.mxu0 0.0
    %4914 = vmatprep.subr.mxu0 0.0
    %4915 = vmatpush1.msra.mxu0 0.0
    %4916 = vmatprep.subr.mxu0 0.0
    %4917 = vmatpush1.msra.mxu0 0.0
    %4918 = vmatprep.subr.mxu0 0.0
    %4919 = vmatpush1.msra.mxu0 0.0
    %4920 = vmatprep.subr.mxu0 0.0
    %4921 = vmatpush1.msra.mxu0 0.0
    %4922 = vmatprep.subr.mxu0 0.0
    %4923 = vmatpush1.msra.mxu0 0.0
    %4924 = vmatprep.subr.mxu0 0.0
    %4925 = vmatpush1.msra.mxu0 0.0
    %4926 = vmatprep.subr.mxu0 0.0
    %4927 = vmatpush1.msra.mxu0 0.0
    %4928 = vmatprep.mubr.f32.mxu0 0.0
    %4929 = vmatmul.mubr.f32.gmra.mrb[0].mxu0 %v4792
    %v4930 = vpop.f32.mrb[0].mxu0
    %v4931 = vadd.f32 0.0, %v4930
    %v4932 = vpop.f32.mrb[0].mxu0
    %4933 = vdwg.mxu0
    %v4935 = vsel %vm4790, %v4789, 0
    %4937 = vmatprep.subr.mxu0 0.0
    %4938 = vmatpush1.msra.mxu0 %v4769
    %4939 = vmatprep.subr.mxu0 0.0
    %4940 = vmatpush1.msra.mxu0 %v4783
    %4941 = vmatprep.subr.mxu0 0.0
    %4942 = vmatpush1.msra.mxu0 0.0
    %4943 = vmatprep.subr.mxu0 0.0
    %4944 = vmatpush1.msra.mxu0 0.0
    %4945 = vmatprep.subr.mxu0 0.0
    %4946 = vmatpush1.msra.mxu0 0.0
    %4947 = vmatprep.subr.mxu0 0.0
    %4948 = vmatpush1.msra.mxu0 0.0
    %4949 = vmatprep.subr.mxu0 0.0
    %4950 = vmatpush1.msra.mxu0 0.0
    %4951 = vmatprep.subr.mxu0 0.0
    %4952 = vmatpush1.msra.mxu0 0.0
    %4953 = vmatprep.subr.mxu0 0.0
    %4954 = vmatpush1.msra.mxu0 0.0
    %4955 = vmatprep.subr.mxu0 0.0
    %4956 = vmatpush1.msra.mxu0 0.0
    %4957 = vmatprep.subr.mxu0 0.0
    %4958 = vmatpush1.msra.mxu0 0.0
    %4959 = vmatprep.subr.mxu0 0.0
    %4960 = vmatpush1.msra.mxu0 0.0
    %4961 = vmatprep.subr.mxu0 0.0
    %4962 = vmatpush1.msra.mxu0 0.0
    %4963 = vmatprep.subr.mxu0 0.0
    %4964 = vmatpush1.msra.mxu0 0.0
    %4965 = vmatprep.subr.mxu0 0.0
    %4966 = vmatpush1.msra.mxu0 0.0
    %4967 = vmatprep.subr.mxu0 0.0
    %4968 = vmatpush1.msra.mxu0 0.0
    %4969 = vmatprep.subr.mxu0 0.0
    %4970 = vmatpush1.msra.mxu0 0.0
    %4971 = vmatprep.subr.mxu0 0.0
    %4972 = vmatpush1.msra.mxu0 0.0
    %4973 = vmatprep.subr.mxu0 0.0
    %4974 = vmatpush1.msra.mxu0 0.0
    %4975 = vmatprep.subr.mxu0 0.0
    %4976 = vmatpush1.msra.mxu0 0.0
    %4977 = vmatprep.subr.mxu0 0.0
    %4978 = vmatpush1.msra.mxu0 0.0
    %4979 = vmatprep.subr.mxu0 0.0
    %4980 = vmatpush1.msra.mxu0 0.0
    %4981 = vmatprep.subr.mxu0 0.0
    %4982 = vmatpush1.msra.mxu0 0.0
    %4983 = vmatprep.subr.mxu0 0.0
    %4984 = vmatpush1.msra.mxu0 0.0
    %4985 = vmatprep.subr.mxu0 0.0
    %4986 = vmatpush1.msra.mxu0 0.0
    %4987 = vmatprep.subr.mxu0 0.0
    %4988 = vmatpush1.msra.mxu0 0.0
    %4989 = vmatprep.subr.mxu0 0.0
    %4990 = vmatpush1.msra.mxu0 0.0
    %4991 = vmatprep.subr.mxu0 0.0
    %4992 = vmatpush1.msra.mxu0 0.0
    %4993 = vmatprep.subr.mxu0 0.0
    %4994 = vmatpush1.msra.mxu0 0.0
    %4995 = vmatprep.subr.mxu0 0.0
    %4996 = vmatpush1.msra.mxu0 0.0
    %4997 = vmatprep.subr.mxu0 0.0
    %4998 = vmatpush1.msra.mxu0 0.0
    %4999 = vmatprep.subr.mxu0 0.0
    %5000 = vmatpush1.msra.mxu0 0.0
    %5001 = vmatprep.mubr.f32.mxu0 0.0
    %5002 = vmatmul.mubr.f32.gmra.mrb[0].mxu0 %v4935
    %v5003 = vpop.f32.mrb[0].mxu0
    %v5004 = vadd.f32 0.0, %v5003
    %v5005 = vpop.f32.mrb[0].mxu0
    %5006 = vdwg.mxu0
    %5007 = vmatprep.subr.mxu0 0.0
    %5008 = vmatpush1.msra.mxu0 %v4786
    %5009 = vmatprep.subr.mxu0 0.0
    %5010 = vmatpush1.msra.mxu0 %v4787
    %5011 = vmatprep.subr.mxu0 0.0
    %5012 = vmatpush1.msra.mxu0 0.0
    %5013 = vmatprep.subr.mxu0 0.0
    %5014 = vmatpush1.msra.mxu0 0.0
    %5015 = vmatprep.subr.mxu0 0.0
    %5016 = vmatpush1.msra.mxu0 0.0
    %5017 = vmatprep.subr.mxu0 0.0
    %5018 = vmatpush1.msra.mxu0 0.0
    %5019 = vmatprep.subr.mxu0 0.0
    %5020 = vmatpush1.msra.mxu0 0.0
    %5021 = vmatprep.subr.mxu0 0.0
    %5022 = vmatpush1.msra.mxu0 0.0
    %5023 = vmatprep.subr.mxu0 0.0
    %5024 = vmatpush1.msra.mxu0 0.0
    %5025 = vmatprep.subr.mxu0 0.0
    %5026 = vmatpush1.msra.mxu0 0.0
    %5027 = vmatprep.subr.mxu0 0.0
    %5028 = vmatpush1.msra.mxu0 0.0
    %5029 = vmatprep.subr.mxu0 0.0
    %5030 = vmatpush1.msra.mxu0 0.0
    %5031 = vmatprep.subr.mxu0 0.0
    %5032 = vmatpush1.msra.mxu0 0.0
    %5033 = vmatprep.subr.mxu0 0.0
    %5034 = vmatpush1.msra.mxu0 0.0
    %5035 = vmatprep.subr.mxu0 0.0
    %5036 = vmatpush1.msra.mxu0 0.0
    %5037 = vmatprep.subr.mxu0 0.0
    %5038 = vmatpush1.msra.mxu0 0.0
    %5039 = vmatprep.subr.mxu0 0.0
    %5040 = vmatpush1.msra.mxu0 0.0
    %5041 = vmatprep.subr.mxu0 0.0
    %5042 = vmatpush1.msra.mxu0 0.0
    %5043 = vmatprep.subr.mxu0 0.0
    %5044 = vmatpush1.msra.mxu0 0.0
    %5045 = vmatprep.subr.mxu0 0.0
    %5046 = vmatpush1.msra.mxu0 0.0
    %5047 = vmatprep.subr.mxu0 0.0
    %5048 = vmatpush1.msra.mxu0 0.0
    %5049 = vmatprep.subr.mxu0 0.0
    %5050 = vmatpush1.msra.mxu0 0.0
    %5051 = vmatprep.subr.mxu0 0.0
    %5052 = vmatpush1.msra.mxu0 0.0
    %5053 = vmatprep.subr.mxu0 0.0
    %5054 = vmatpush1.msra.mxu0 0.0
    %5055 = vmatprep.subr.mxu0 0.0
    %5056 = vmatpush1.msra.mxu0 0.0
    %5057 = vmatprep.subr.mxu0 0.0
    %5058 = vmatpush1.msra.mxu0 0.0
    %5059 = vmatprep.subr.mxu0 0.0
    %5060 = vmatpush1.msra.mxu0 0.0
    %5061 = vmatprep.subr.mxu0 0.0
    %5062 = vmatpush1.msra.mxu0 0.0
    %5063 = vmatprep.subr.mxu0 0.0
    %5064 = vmatpush1.msra.mxu0 0.0
    %5065 = vmatprep.subr.mxu0 0.0
    %5066 = vmatpush1.msra.mxu0 0.0
    %5067 = vmatprep.subr.mxu0 0.0
    %5068 = vmatpush1.msra.mxu0 0.0
    %5069 = vmatprep.subr.mxu0 0.0
    %5070 = vmatpush1.msra.mxu0 0.0
    %5071 = vmatprep.mubr.f32.mxu0 0.0
    %5072 = vmatmul.mubr.f32.gmra.mrb[0].mxu0 %v4935
    %v5073 = vpop.f32.mrb[0].mxu0
    %v5074 = vadd.f32 0.0, %v5073
    %v5075 = vpop.f32.mrb[0].mxu0
    %5076 = vdwg.mxu0
    %v5077 = vrcp.pop %v4861
    %v5078 = vmul.f32 %v4931, %v5077
    %v5079 = vlog2.pop %v5078
    %v5080 = vmul.f32 %v5079, 0.6931472
    %vm5081 = vcmask 3072
    %v5082 = vsel %vm5081, %v5080, 0.0
    %v5083 = vrot.slane %v5082, 4
    %v5084 = vadd.f32 %v5082, %v5083
    %v5085 = vrot.slane %v5084, 2
    %v5086 = vadd.f32 %v5084, %v5085
    %v5087 = vrot.slane %v5086, 1
    %v5088 = vadd.f32 %v5086, %v5087
    %v5089 = vrcp.pop %v5004
    %v5090 = vmul.f32 %v5074, %v5089
    %v5091 = vlog2.pop %v5090
    %v5092 = vmul.f32 %v5091, 0.6931472
    %v5093 = vsel %vm5081, %v5092, 0.0
    %v5094 = vrot.slane %v5093, 4
    %v5095 = vadd.f32 %v5093, %v5094
    %v5096 = vrot.slane %v5095, 2
    %v5097 = vadd.f32 %v5095, %v5096
    %v5098 = vrot.slane %v5097, 1
    %v5099 = vadd.f32 %v5097, %v5098
    %v5100 = vadd.f32 %v5088, %v5099
    %v5101 = vsub.f32 0.0, %v5100
    %v5102 = vld [vmem:[%s19] sm:$0xf]
    %v5119 = vrot.slane %v4527, 7
    %v5120 = vsel %vm1922, %v5119, %v4526
    %v5121 = vrot.slane %v4528, 6
    %v5122 = vsel %vm1924, %v5121, %v5120
    %v5123 = vrot.slane %v4529, 5
    %v5124 = vsel %vm1926, %v5123, %v5122
    %v5125 = vrot.slane %v4530, 4
    %v5126 = vsel %vm1928, %v5125, %v5124
    %v5127 = vrot.slane %v4531, 3
    %v5128 = vsel %vm1930, %v5127, %v5126
    %v5129 = vrot.slane %v4532, 2
    %v5130 = vsel %vm1932, %v5129, %v5128
    %v5131 = vrot.slane %v4533, 1
    %v5132 = vsel %vm1934, %v5131, %v5130
    %v5133 = vrot.slane %v4535, 7
    %v5134 = vsel %vm1922, %v5133, %v4534
    %v5135 = vrot.slane %v4536, 6
    %v5136 = vsel %vm1924, %v5135, %v5134
    %v5137 = vrot.slane %v4537, 5
    %v5138 = vsel %vm1926, %v5137, %v5136
    %v5139 = vrot.slane %v4538, 4
    %v5140 = vsel %vm1928, %v5139, %v5138
    %v5141 = vrot.slane %v4539, 3
    %v5142 = vsel %vm1930, %v5141, %v5140
    %v5143 = vrot.slane %v4540, 2
    %v5144 = vsel %vm1932, %v5143, %v5142
    %v5145 = vrot.slane %v4541, 1
    %v5146 = vsel %vm1934, %v5145, %v5144
    %v5150 = vsel %vm4790, %v5102, 0
    %5152 = vmatprep.subr.mxu0 0.0
    %5153 = vmatpush1.msra.mxu0 %v5132
    %5154 = vmatprep.subr.mxu0 0.0
    %5155 = vmatpush1.msra.mxu0 %v5146
    %5156 = vmatprep.subr.mxu0 0.0
    %5157 = vmatpush1.msra.mxu0 0.0
    %5158 = vmatprep.subr.mxu0 0.0
    %5159 = vmatpush1.msra.mxu0 0.0
    %5160 = vmatprep.subr.mxu0 0.0
    %5161 = vmatpush1.msra.mxu0 0.0
    %5162 = vmatprep.subr.mxu0 0.0
    %5163 = vmatpush1.msra.mxu0 0.0
    %5164 = vmatprep.subr.mxu0 0.0
    %5165 = vmatpush1.msra.mxu0 0.0
    %5166 = vmatprep.subr.mxu0 0.0
    %5167 = vmatpush1.msra.mxu0 0.0
    %5168 = vmatprep.subr.mxu0 0.0
    %5169 = vmatpush1.msra.mxu0 0.0
    %5170 = vmatprep.subr.mxu0 0.0
    %5171 = vmatpush1.msra.mxu0 0.0
    %5172 = vmatprep.subr.mxu0 0.0
    %5173 = vmatpush1.msra.mxu0 0.0
    %5174 = vmatprep.subr.mxu0 0.0
    %5175 = vmatpush1.msra.mxu0 0.0
    %5176 = vmatprep.subr.mxu0 0.0
    %5177 = vmatpush1.msra.mxu0 0.0
    %5178 = vmatprep.subr.mxu0 0.0
    %5179 = vmatpush1.msra.mxu0 0.0
    %5180 = vmatprep.subr.mxu0 0.0
    %5181 = vmatpush1.msra.mxu0 0.0
    %5182 = vmatprep.subr.mxu0 0.0
    %5183 = vmatpush1.msra.mxu0 0.0
    %5184 = vmatprep.subr.mxu0 0.0
    %5185 = vmatpush1.msra.mxu0 0.0
    %5186 = vmatprep.subr.mxu0 0.0
    %5187 = vmatpush1.msra.mxu0 0.0
    %5188 = vmatprep.subr.mxu0 0.0
    %5189 = vmatpush1.msra.mxu0 0.0
    %5190 = vmatprep.subr.mxu0 0.0
    %5191 = vmatpush1.msra.mxu0 0.0
    %5192 = vmatprep.subr.mxu0 0.0
    %5193 = vmatpush1.msra.mxu0 0.0
    %5194 = vmatprep.subr.mxu0 0.0
    %5195 = vmatpush1.msra.mxu0 0.0
    %5196 = vmatprep.subr.mxu0 0.0
    %5197 = vmatpush1.msra.mxu0 0.0
    %5198 = vmatprep.subr.mxu0 0.0
    %5199 = vmatpush1.msra.mxu0 0.0
    %5200 = vmatprep.subr.mxu0 0.0
    %5201 = vmatpush1.msra.mxu0 0.0
    %5202 = vmatprep.subr.mxu0 0.0
    %5203 = vmatpush1.msra.mxu0 0.0
    %5204 = vmatprep.subr.mxu0 0.0
    %5205 = vmatpush1.msra.mxu0 0.0
    %5206 = vmatprep.subr.mxu0 0.0
    %5207 = vmatpush1.msra.mxu0 0.0
    %5208 = vmatprep.subr.mxu0 0.0
    %5209 = vmatpush1.msra.mxu0 0.0
    %5210 = vmatprep.subr.mxu0 0.0
    %5211 = vmatpush1.msra.mxu0 0.0
    %5212 = vmatprep.subr.mxu0 0.0
    %5213 = vmatpush1.msra.mxu0 0.0
    %5214 = vmatprep.subr.mxu0 0.0
    %5215 = vmatpush1.msra.mxu0 0.0
    %5216 = vmatprep.mubr.f32.mxu0 0.0
    %5217 = vmatmul.mubr.f32.gmra.mrb[0].mxu0 %v5150
    %v5218 = vpop.f32.mrb[0].mxu0
    %v5219 = vadd.f32 0.0, %v5218
    %v5220 = vpop.f32.mrb[0].mxu0
    %5221 = vdwg.mxu0
    %v5238 = vrot.slane %v4618, 7
    %v5239 = vsel %vm1922, %v5238, %v4617
    %v5240 = vrot.slane %v4619, 6
    %v5241 = vsel %vm1924, %v5240, %v5239
    %v5242 = vrot.slane %v4620, 5
    %v5243 = vsel %vm1926, %v5242, %v5241
    %v5244 = vrot.slane %v4621, 4
    %v5245 = vsel %vm1928, %v5244, %v5243
    %v5246 = vrot.slane %v4622, 3
    %v5247 = vsel %vm1930, %v5246, %v5245
    %v5248 = vrot.slane %v4623, 2
    %v5249 = vsel %vm1932, %v5248, %v5247
    %v5250 = vrot.slane %v4624, 1
    %v5251 = vsel %vm1934, %v5250, %v5249
    %v5252 = vrot.slane %v4626, 7
    %v5253 = vsel %vm1922, %v5252, %v4625
    %v5254 = vrot.slane %v4627, 6
    %v5255 = vsel %vm1924, %v5254, %v5253
    %v5256 = vrot.slane %v4628, 5
    %v5257 = vsel %vm1926, %v5256, %v5255
    %v5258 = vrot.slane %v4629, 4
    %v5259 = vsel %vm1928, %v5258, %v5257
    %v5260 = vrot.slane %v4630, 3
    %v5261 = vsel %vm1930, %v5260, %v5259
    %v5262 = vrot.slane %v4631, 2
    %v5263 = vsel %vm1932, %v5262, %v5261
    %v5264 = vrot.slane %v4632, 1
    %v5265 = vsel %vm1934, %v5264, %v5263
    %5268 = vmatprep.subr.mxu0 0.0
    %5269 = vmatpush1.msra.mxu0 %v5251
    %5270 = vmatprep.subr.mxu0 0.0
    %5271 = vmatpush1.msra.mxu0 %v5265
    %5272 = vmatprep.subr.mxu0 0.0
    %5273 = vmatpush1.msra.mxu0 0.0
    %5274 = vmatprep.subr.mxu0 0.0
    %5275 = vmatpush1.msra.mxu0 0.0
    %5276 = vmatprep.subr.mxu0 0.0
    %5277 = vmatpush1.msra.mxu0 0.0
    %5278 = vmatprep.subr.mxu0 0.0
    %5279 = vmatpush1.msra.mxu0 0.0
    %5280 = vmatprep.subr.mxu0 0.0
    %5281 = vmatpush1.msra.mxu0 0.0
    %5282 = vmatprep.subr.mxu0 0.0
    %5283 = vmatpush1.msra.mxu0 0.0
    %5284 = vmatprep.subr.mxu0 0.0
    %5285 = vmatpush1.msra.mxu0 0.0
    %5286 = vmatprep.subr.mxu0 0.0
    %5287 = vmatpush1.msra.mxu0 0.0
    %5288 = vmatprep.subr.mxu0 0.0
    %5289 = vmatpush1.msra.mxu0 0.0
    %5290 = vmatprep.subr.mxu0 0.0
    %5291 = vmatpush1.msra.mxu0 0.0
    %5292 = vmatprep.subr.mxu0 0.0
    %5293 = vmatpush1.msra.mxu0 0.0
    %5294 = vmatprep.subr.mxu0 0.0
    %5295 = vmatpush1.msra.mxu0 0.0
    %5296 = vmatprep.subr.mxu0 0.0
    %5297 = vmatpush1.msra.mxu0 0.0
    %5298 = vmatprep.subr.mxu0 0.0
    %5299 = vmatpush1.msra.mxu0 0.0
    %5300 = vmatprep.subr.mxu0 0.0
    %5301 = vmatpush1.msra.mxu0 0.0
    %5302 = vmatprep.subr.mxu0 0.0
    %5303 = vmatpush1.msra.mxu0 0.0
    %5304 = vmatprep.subr.mxu0 0.0
    %5305 = vmatpush1.msra.mxu0 0.0
    %5306 = vmatprep.subr.mxu0 0.0
    %5307 = vmatpush1.msra.mxu0 0.0
    %5308 = vmatprep.subr.mxu0 0.0
    %5309 = vmatpush1.msra.mxu0 0.0
    %5310 = vmatprep.subr.mxu0 0.0
    %5311 = vmatpush1.msra.mxu0 0.0
    %5312 = vmatprep.subr.mxu0 0.0
    %5313 = vmatpush1.msra.mxu0 0.0
    %5314 = vmatprep.subr.mxu0 0.0
    %5315 = vmatpush1.msra.mxu0 0.0
    %5316 = vmatprep.subr.mxu0 0.0
    %5317 = vmatpush1.msra.mxu0 0.0
    %5318 = vmatprep.subr.mxu0 0.0
    %5319 = vmatpush1.msra.mxu0 0.0
    %5320 = vmatprep.subr.mxu0 0.0
    %5321 = vmatpush1.msra.mxu0 0.0
    %5322 = vmatprep.subr.mxu0 0.0
    %5323 = vmatpush1.msra.mxu0 0.0
    %5324 = vmatprep.subr.mxu0 0.0
    %5325 = vmatpush1.msra.mxu0 0.0
    %5326 = vmatprep.subr.mxu0 0.0
    %5327 = vmatpush1.msra.mxu0 0.0
    %5328 = vmatprep.subr.mxu0 0.0
    %5329 = vmatpush1.msra.mxu0 0.0
    %5330 = vmatprep.subr.mxu0 0.0
    %5331 = vmatpush1.msra.mxu0 0.0
    %5332 = vmatprep.mubr.f32.mxu0 0.0
    %5333 = vmatmul.mubr.f32.gmra.mrb[0].mxu0 %v5150
    %v5334 = vpop.f32.mrb[0].mxu0
    %v5335 = vadd.f32 0.0, %v5334
    %v5336 = vpop.f32.mrb[0].mxu0
    %5337 = vdwg.mxu0
    %v5338 = vmax.f32 %v5335, %v5219
    %v5339 = vsub.f32 %v5335, %v5338
    %v5340 = vmul.f32 %v5339, 1.442695
    %v5341 = vpow.pop %v5340
    %v5342 = vsub.f32 %v5219, %v5338
    %v5343 = vmul.f32 %v5342, 1.442695
    %v5344 = vpow.pop %v5343
    %v5345 = vadd.f32 %v5341, %v5344
    %v5346 = vlog2.pop %v5345
    %v5347 = vmul.f32 %v5346, 0.6931472
    %v5348 = vadd.f32 %v5338, %v5347
    %v5349 = vsub.f32 %v5348, %v5219
    %v5350 = vsel %vm5081, %v5349, 0.0
    %v5351 = vrot.slane %v5350, 4
    %v5352 = vadd.f32 %v5350, %v5351
    %v5353 = vrot.slane %v5352, 2
    %v5354 = vadd.f32 %v5352, %v5353
    %v5355 = vrot.slane %v5354, 1
    %v5356 = vadd.f32 %v5354, %v5355
    %v5357 = vmul.f32 %v5356, 0.25
    %v5358 = vld [vmem:[%s7] sm:$0xf]
    %v5359 = vld [vmem:[%s9] sm:$0xf]
    %v5360 = vld [vmem:[%s11] sm:$0xf]
    %v5362 = vsel %vm325, %v5358, 0
    %v5365 = vsel %vm325, %v5359, 0
    %5367 = vmatprep.subr.mxu0 0.0
    %5368 = vmatpush1.xpose.msra.mxu0 %v5365
    %5369 = vmatprep.subr.mxu0 0.0
    %5370 = vmatpush1.xpose.msra.mxu0 0.0
    %5371 = vmatprep.subr.mxu0 0.0
    %5372 = vmatpush1.xpose.msra.mxu0 0.0
    %5373 = vmatprep.subr.mxu0 0.0
    %5374 = vmatpush1.xpose.msra.mxu0 0.0
    %5375 = vmatprep.subr.mxu0 0.0
    %5376 = vmatpush1.xpose.msra.mxu0 0.0
    %5377 = vmatprep.subr.mxu0 0.0
    %5378 = vmatpush1.xpose.msra.mxu0 0.0
    %5379 = vmatprep.subr.mxu0 0.0
    %5380 = vmatpush1.xpose.msra.mxu0 0.0
    %5381 = vmatprep.subr.mxu0 0.0
    %5382 = vmatpush1.xpose.msra.mxu0 0.0
    %5383 = vmatprep.subr.mxu0 0.0
    %5384 = vmatpush1.xpose.msra.mxu0 0.0
    %5385 = vmatprep.subr.mxu0 0.0
    %5386 = vmatpush1.xpose.msra.mxu0 0.0
    %5387 = vmatprep.subr.mxu0 0.0
    %5388 = vmatpush1.xpose.msra.mxu0 0.0
    %5389 = vmatprep.subr.mxu0 0.0
    %5390 = vmatpush1.xpose.msra.mxu0 0.0
    %5391 = vmatprep.subr.mxu0 0.0
    %5392 = vmatpush1.xpose.msra.mxu0 0.0
    %5393 = vmatprep.subr.mxu0 0.0
    %5394 = vmatpush1.xpose.msra.mxu0 0.0
    %5395 = vmatprep.subr.mxu0 0.0
    %5396 = vmatpush1.xpose.msra.mxu0 0.0
    %5397 = vmatprep.subr.mxu0 0.0
    %5398 = vmatpush1.xpose.msra.mxu0 0.0
    %5399 = vmatprep.subr.mxu0 0.0
    %5400 = vmatpush1.xpose.msra.mxu0 0.0
    %5401 = vmatprep.subr.mxu0 0.0
    %5402 = vmatpush1.xpose.msra.mxu0 0.0
    %5403 = vmatprep.subr.mxu0 0.0
    %5404 = vmatpush1.xpose.msra.mxu0 0.0
    %5405 = vmatprep.subr.mxu0 0.0
    %5406 = vmatpush1.xpose.msra.mxu0 0.0
    %5407 = vmatprep.subr.mxu0 0.0
    %5408 = vmatpush1.xpose.msra.mxu0 0.0
    %5409 = vmatprep.subr.mxu0 0.0
    %5410 = vmatpush1.xpose.msra.mxu0 0.0
    %5411 = vmatprep.subr.mxu0 0.0
    %5412 = vmatpush1.xpose.msra.mxu0 0.0
    %5413 = vmatprep.subr.mxu0 0.0
    %5414 = vmatpush1.xpose.msra.mxu0 0.0
    %5415 = vmatprep.subr.mxu0 0.0
    %5416 = vmatpush1.xpose.msra.mxu0 0.0
    %5417 = vmatprep.subr.mxu0 0.0
    %5418 = vmatpush1.xpose.msra.mxu0 0.0
    %5419 = vmatprep.subr.mxu0 0.0
    %5420 = vmatpush1.xpose.msra.mxu0 0.0
    %5421 = vmatprep.subr.mxu0 0.0
    %5422 = vmatpush1.xpose.msra.mxu0 0.0
    %5423 = vmatprep.subr.mxu0 0.0
    %5424 = vmatpush1.xpose.msra.mxu0 0.0
    %5425 = vmatprep.subr.mxu0 0.0
    %5426 = vmatpush1.xpose.msra.mxu0 0.0
    %5427 = vmatprep.subr.mxu0 0.0
    %5428 = vmatpush1.xpose.msra.mxu0 0.0
    %5429 = vmatprep.subr.mxu0 0.0
    %5430 = vmatpush1.xpose.msra.mxu0 0.0
    %5431 = vmatprep.mubr.f32.mxu0 0.0
    %5432 = vmatmul.mubr.f32.gmra.mrb[0].mxu0 %v5362
    %v5433 = vpop.f32.mrb[0].mxu0
    %v5434 = vadd.f32 0.0, %v5433
    %v5435 = vpop.f32.mrb[0].mxu0
    %5436 = vdwg.mxu0
    %v5437 = vmul.f32 %v5358, %v5358
    %vm5438 = vcmask 257024
    %v5439 = vsel %vm5438, %v5437, 0.0
    %5440 = vadd.xlane.f32.xlu0 %v5439
    %v5441 = vpop.xlane.xlu0 %5440
    %v5442 = vrsqrt.pop %v5441
    %v5443 = vmul.f32 %v5441, %v5442
    %vm5444 = vcmp.eq.f32.partialorder %v5441, inf
    %v5445 = vsel %vm5444, %v5441, %v5443
    %vm5446 = vcmp.eq.f32.partialorder %v5441, 0.0
    %v5447 = vand.u32 %v5441, 2147483648
    %v5448 = vsel %vm5446, %v5447, %v5445
    %v5449 = vmax.f32 %v5448, 1e-08
    %v5450 = vmul.f32 %v5359, %v5359
    %v5451 = vsel %vm5438, %v5450, 0.0
    %5452 = vadd.xlane.f32.xlu0 %v5451
    %v5453 = vpop.xlane.xlu0 %5452
    %v5454 = vrsqrt.pop %v5453
    %v5455 = vmul.f32 %v5453, %v5454
    %vm5456 = vcmp.eq.f32.partialorder %v5453, inf
    %v5457 = vsel %vm5456, %v5453, %v5455
    %vm5458 = vcmp.eq.f32.partialorder %v5453, 0.0
    %v5459 = vand.u32 %v5453, 2147483648
    %v5460 = vsel %vm5458, %v5459, %v5457
    %v5461 = vmax.f32 %v5460, 1e-08
    %vm5462 = vcmask 7168
    %v5464 = vsel %vm5462, %v5449, 0
    %v5467 = vsel %vm5462, %v5461, 0
    %5469 = vmatprep.subr.mxu0 0.0
    %5470 = vmatpush1.xpose.msra.mxu0 %v5467
    %5471 = vmatprep.subr.mxu0 0.0
    %5472 = vmatpush1.xpose.msra.mxu0 0.0
    %5473 = vmatprep.subr.mxu0 0.0
    %5474 = vmatpush1.xpose.msra.mxu0 0.0
    %5475 = vmatprep.subr.mxu0 0.0
    %5476 = vmatpush1.xpose.msra.mxu0 0.0
    %5477 = vmatprep.subr.mxu0 0.0
    %5478 = vmatpush1.xpose.msra.mxu0 0.0
    %5479 = vmatprep.subr.mxu0 0.0
    %5480 = vmatpush1.xpose.msra.mxu0 0.0
    %5481 = vmatprep.subr.mxu0 0.0
    %5482 = vmatpush1.xpose.msra.mxu0 0.0
    %5483 = vmatprep.subr.mxu0 0.0
    %5484 = vmatpush1.xpose.msra.mxu0 0.0
    %5485 = vmatprep.subr.mxu0 0.0
    %5486 = vmatpush1.xpose.msra.mxu0 0.0
    %5487 = vmatprep.subr.mxu0 0.0
    %5488 = vmatpush1.xpose.msra.mxu0 0.0
    %5489 = vmatprep.subr.mxu0 0.0
    %5490 = vmatpush1.xpose.msra.mxu0 0.0
    %5491 = vmatprep.subr.mxu0 0.0
    %5492 = vmatpush1.xpose.msra.mxu0 0.0
    %5493 = vmatprep.subr.mxu0 0.0
    %5494 = vmatpush1.xpose.msra.mxu0 0.0
    %5495 = vmatprep.subr.mxu0 0.0
    %5496 = vmatpush1.xpose.msra.mxu0 0.0
    %5497 = vmatprep.subr.mxu0 0.0
    %5498 = vmatpush1.xpose.msra.mxu0 0.0
    %5499 = vmatprep.subr.mxu0 0.0
    %5500 = vmatpush1.xpose.msra.mxu0 0.0
    %5501 = vmatprep.subr.mxu0 0.0
    %5502 = vmatpush1.xpose.msra.mxu0 0.0
    %5503 = vmatprep.subr.mxu0 0.0
    %5504 = vmatpush1.xpose.msra.mxu0 0.0
    %5505 = vmatprep.subr.mxu0 0.0
    %5506 = vmatpush1.xpose.msra.mxu0 0.0
    %5507 = vmatprep.subr.mxu0 0.0
    %5508 = vmatpush1.xpose.msra.mxu0 0.0
    %5509 = vmatprep.subr.mxu0 0.0
    %5510 = vmatpush1.xpose.msra.mxu0 0.0
    %5511 = vmatprep.subr.mxu0 0.0
    %5512 = vmatpush1.xpose.msra.mxu0 0.0
    %5513 = vmatprep.subr.mxu0 0.0
    %5514 = vmatpush1.xpose.msra.mxu0 0.0
    %5515 = vmatprep.subr.mxu0 0.0
    %5516 = vmatpush1.xpose.msra.mxu0 0.0
    %5517 = vmatprep.subr.mxu0 0.0
    %5518 = vmatpush1.xpose.msra.mxu0 0.0
    %5519 = vmatprep.subr.mxu0 0.0
    %5520 = vmatpush1.xpose.msra.mxu0 0.0
    %5521 = vmatprep.subr.mxu0 0.0
    %5522 = vmatpush1.xpose.msra.mxu0 0.0
    %5523 = vmatprep.subr.mxu0 0.0
    %5524 = vmatpush1.xpose.msra.mxu0 0.0
    %5525 = vmatprep.subr.mxu0 0.0
    %5526 = vmatpush1.xpose.msra.mxu0 0.0
    %5527 = vmatprep.subr.mxu0 0.0
    %5528 = vmatpush1.xpose.msra.mxu0 0.0
    %5529 = vmatprep.subr.mxu0 0.0
    %5530 = vmatpush1.xpose.msra.mxu0 0.0
    %5531 = vmatprep.subr.mxu0 0.0
    %5532 = vmatpush1.xpose.msra.mxu0 0.0
    %5533 = vmatprep.mubr.f32.mxu0 0.0
    %5534 = vmatmul.mubr.f32.gmra.mrb[0].mxu0 %v5464
    %v5535 = vpop.f32.mrb[0].mxu0
    %v5536 = vadd.f32 0.0, %v5535
    %v5537 = vpop.f32.mrb[0].mxu0
    %5538 = vdwg.mxu0
    %v5539 = vrcp.pop %v5536
    %v5540 = vmul.f32 %v5434, %v5539
    %v5541 = vmul.f32 %v5540, 20.0
    %vm5542 = vcmask 27648
    %v5543 = vsel %vm5542, %v5541, -inf
    %5544 = vmax.xlane.f32.xlu0 %v5543
    %v5545 = vpop.xlane.xlu0 %5544
    %v5546 = vsub.f32 %v5541, %v5545
    %v5547 = vmul.f32 %v5546, 1.442695
    %v5548 = vpow.pop %v5547
    %v5549 = vmul.f32 %v5360, %v5548
    %v5550 = vsel %vm5542, %v5549, 0.0
    %5551 = vadd.xlane.f32.xlu0 %v5550
    %v5552 = vpop.xlane.xlu0 %5551
    %v5553 = vsel %vm5542, %v5548, 0.0
    %5554 = vadd.xlane.f32.xlu0 %v5553
    %v5555 = vpop.xlane.xlu0 %5554
    %v5556 = vrcp.pop %v5555
    %v5557 = vmul.f32 %v5552, %v5556
    %v5558 = vlog2.pop %v5557
    %v5559 = vmul.f32 %v5558, 0.6931472
    %v5560 = vsel %vm1624, %v5559, 0.0
    %v5561 = vrot.slane %v5560, 4
    %v5562 = vadd.f32 %v5560, %v5561
    %v5563 = vrot.slane %v5562, 2
    %v5564 = vadd.f32 %v5562, %v5563
    %v5565 = vrot.slane %v5564, 1
    %v5566 = vadd.f32 %v5564, %v5565
    %v5567 = vsub.f32 0.0, %v5566
    %v5568 = vrot.slane %v5543, 4
    %v5569 = vmax.f32 %v5543, %v5568
    %v5570 = vrot.slane %v5569, 2
    %v5571 = vmax.f32 %v5569, %v5570
    %v5572 = vrot.slane %v5571, 1
    %v5573 = vmax.f32 %v5571, %v5572
    %v5574 = vsub.f32 %v5541, %v5573
    %v5575 = vmul.f32 %v5574, 1.442695
    %v5576 = vpow.pop %v5575
    %v5577 = vmul.f32 %v5360, %v5576
    %v5578 = vsel %vm5542, %v5577, 0.0
    %v5579 = vrot.slane %v5578, 4
    %v5580 = vadd.f32 %v5578, %v5579
    %v5581 = vrot.slane %v5580, 2
    %v5582 = vadd.f32 %v5580, %v5581
    %v5583 = vrot.slane %v5582, 1
    %v5584 = vadd.f32 %v5582, %v5583
    %v5585 = vsel %vm5542, %v5576, 0.0
    %v5586 = vrot.slane %v5585, 4
    %v5587 = vadd.f32 %v5585, %v5586
    %v5588 = vrot.slane %v5587, 2
    %v5589 = vadd.f32 %v5587, %v5588
    %v5590 = vrot.slane %v5589, 1
    %v5591 = vadd.f32 %v5589, %v5590
    %v5592 = vrcp.pop %v5591
    %v5593 = vmul.f32 %v5584, %v5592
    %v5594 = vlog2.pop %v5593
    %v5595 = vmul.f32 %v5594, 0.6931472
    %v5596 = vsel %vm1270, %v5595, 0.0
    %5597 = vadd.xlane.f32.xlu0 %v5596
    %v5598 = vpop.xlane.xlu0 %5597
    %v5599 = vsub.f32 0.0, %v5598
    %v5600 = vadd.f32 %v5567, %v5599
    %v5601 = vadd.f32 %v5600, %v5101
    %v5602 = vadd.f32 %v5601, %v5357
    %5603 = vst.msk [vmem:[#allocation4] sm:$0x1] %vm4649, %v5602
    // Predicated region
    $region130: #{classifier_forward.5} parent=1 // pred_check
      _
    $region131: #{classifier_forward.5} parent=1 // pred_check_branch
      %5605 = sbr.rel (0) target = $region133
    $region132: #{classifier_forward.5} parent=1 // pred_region
      %s5607 = ssub.s32 16, 16
      %5608 = vsyncadd [#allocation5], %s5607
      %s5610 = sshll.u32 [#allocation4], 4
      %s5611 = int_to_ptr.vmem [resolvable:$true] %s5610
      %5613 = dma.vmem_to_hbm [thread:$0]  %s5611, 16, %s65, [#allocation5]
    $region133: #{classifier_forward.5} parent=1 // pred_fallthru
      _
    // Predicated region
    $region134: #{classifier_forward.5} parent=1 // pred_check
      _
    $region135: #{classifier_forward.5} parent=1 // pred_check_branch
      %5615 = sbr.rel (0) target = $region137
    $region136: #{classifier_forward.5} parent=1 // pred_region
      %5616 = dma.done [#allocation5], 16
    $region137: #{classifier_forward.5} parent=1 // pred_fallthru
      _
    %5617 = vsyncpa [#allocation5], 1

</llo_original>
